<compile_context>
chip_gen: v7x
topology: tpu7x:2x2x1
jax: 0.10.0
libtpu: 0.0.40
codegen_flags: <defaults>
</compile_context>

<pallas_src>
import functools

import jax
import jax.numpy as jnp
from jax.experimental import pallas as pl
from jax.experimental.pallas import tpu as pltpu


def _round_up(x, m):
    return (x + m - 1) // m * m


# ----------------------------------------------------------------------------
# Pallas kernel 1: conv-as-matmul  (optional input scale) -> matmul -> ReLU
#   x: [tm, Kp] bf16, w: [Kp, Np] bf16, out: [tm, Np] bf16 (f32 accumulation)
# ----------------------------------------------------------------------------
def _conv_mm_kernel(x_ref, w_ref, o_ref, *, scale):
    x = x_ref[...]
    if scale != 1.0:
        x = x * scale                      # fused x/255 for conv1 (bf16 VPU op)
    acc = jnp.dot(x, w_ref[...], preferred_element_type=jnp.float32)
    acc = jnp.maximum(acc, 0.0)
    o_ref[...] = acc.astype(o_ref.dtype)


def conv_matmul(x, w_padded, *, n_valid, scale=1.0):
    """x: [M, K] bf16 patches, w_padded: [Kp, Np] bf16 (pre-padded at init).

    Returns relu(scale*x @ w)[:M, :n_valid] in bf16.
    """
    M, K = x.shape
    Kp, Np = w_padded.shape
    assert K <= Kp

    num_m_tiles = 2 if M >= 256 else 1              # parallel grid: feeds v7x's 2 TCs
    tm = _round_up(-(-M // num_m_tiles), 16)        # bf16 sublane tile = 16
    Mp = tm * num_m_tiles

    pad_m, pad_k = Mp - M, Kp - K
    if pad_m or pad_k:                              # only materialize pad if needed
        x = jnp.pad(x, ((0, pad_m), (0, pad_k)))

    out = pl.pallas_call(
        functools.partial(_conv_mm_kernel, scale=scale),
        out_shape=jax.ShapeDtypeStruct((Mp, Np), jnp.bfloat16),
        grid=(num_m_tiles,),
        in_specs=[
            pl.BlockSpec((tm, Kp), lambda i: (i, 0)),
            pl.BlockSpec((Kp, Np), lambda i: (0, 0)),     # weight resident in VMEM
        ],
        out_specs=pl.BlockSpec((tm, Np), lambda i: (i, 0)),
        compiler_params=pltpu.CompilerParams(dimension_semantics=("parallel",)),
    )(x, w_padded)
    return out[:M, :n_valid]


# ----------------------------------------------------------------------------
# Pallas kernel 2: fused FC head   out = relu(x@W1 + b1) @ W2 + b2
#   x: [Mp, K1p] bf16, W1: [K1p, N1p] bf16, W2: [N1p, N2p] bf16, biases f32
# ----------------------------------------------------------------------------
def _fc_fused_kernel(x_ref, w1_ref, b1_ref, w2_ref, b2_ref, o_ref):
    h = jnp.dot(x_ref[...], w1_ref[...], preferred_element_type=jnp.float32)
    h = jnp.maximum(h + b1_ref[...], 0.0)                       # fc1 act stays in VMEM
    out = jnp.dot(h.astype(w2_ref.dtype), w2_ref[...],
                  preferred_element_type=jnp.float32)
    o_ref[...] = out + b2_ref[...]


def fc_head(x, w1, b1, w2, b2, n_out):
    M, K = x.shape
    K1p = w1.shape[0]
    Mp = _round_up(M, 8)
    if Mp != M or K1p != K:
        x = jnp.pad(x, ((0, Mp - M), (0, K1p - K)))
    out = pl.pallas_call(
        _fc_fused_kernel,
        out_shape=jax.ShapeDtypeStruct((Mp, w2.shape[1]), jnp.float32),
        in_specs=[pl.BlockSpec(memory_space=pltpu.MemorySpace.VMEM)] * 5,
        out_specs=pl.BlockSpec(memory_space=pltpu.MemorySpace.VMEM),
    )(x, w1, b1, w2, b2)
    return out[:M, :n_out]


# ----------------------------------------------------------------------------
# im2col (plain-JAX glue, fused under jit) — operates on NHWC activations.
# ----------------------------------------------------------------------------
def _im2col(x_nhwc, kh, kw, stride):
    B, H, W, C = x_nhwc.shape
    oh = (H - kh) // stride + 1
    ow = (W - kw) // stride + 1
    cols = []
    for i in range(kh):
        for j in range(kw):
            cols.append(
                x_nhwc[:, i:i + stride * oh:stride, j:j + stride * ow:stride, :]
            )
    p = jnp.stack(cols, axis=3)                       # [B, oh, ow, kh*kw, C]
    return p.reshape(B * oh * ow, kh * kw * C), oh, ow


# ----------------------------------------------------------------------------
# Parameters
# ----------------------------------------------------------------------------
def init_dqn_params(key, action_dim):
    """Torch-layout f32 parameters (kaiming-normal-like), as in nn.Module."""
    ks = jax.random.split(key, 5)

    def kaiming(k, shape, fan_in):
        return jax.random.normal(k, shape, jnp.float32) * jnp.sqrt(2.0 / fan_in)

    return {
        "conv1_w": kaiming(ks[0], (32, 4, 8, 8), 4 * 8 * 8),     # OIHW
        "conv2_w": kaiming(ks[1], (64, 32, 4, 4), 32 * 4 * 4),
        "conv3_w": kaiming(ks[2], (64, 64, 3, 3), 64 * 3 * 3),
        "fc1_w": kaiming(ks[3], (512, 64 * 7 * 7), 64 * 7 * 7),  # torch Linear: [out, in]
        "fc1_b": jnp.zeros((512,), jnp.float32),
        "fc2_w": kaiming(ks[4], (action_dim, 512), 512),
        "fc2_b": jnp.zeros((action_dim,), jnp.float32),
    }


def prepare_params(params, dtype=jnp.bfloat16):
    """One-time weight preprocessing: im2col layout, flatten-permutation,
    tile padding and bf16 cast. Done once; never redone inside the forward."""
    def conv_w(w_oihw):
        OC, IC, KH, KW = w_oihw.shape
        w = jnp.transpose(w_oihw, (2, 3, 1, 0)).reshape(KH * KW * IC, OC)
        Kp, Np = _round_up(KH * KW * IC, 128), _round_up(OC, 128)
        return jnp.zeros((Kp, Np), dtype).at[:KH * KW * IC, :OC].set(w.astype(dtype))

    C3, H3, W3 = 64, 7, 7                        # conv3 output (NCHW): 64 x 7 x 7

    # fc1: torch rows index the NCHW flatten (c*49 + h*7 + w). Our activations
    # are NHWC-flattened (h*7*64 + w*64 + c) -> permute the weight rows once.
    fc1 = params["fc1_w"]                         # [512, 3136]
    OC1 = fc1.shape[0]
    w1 = fc1.T.reshape(C3, H3, W3, OC1)           # (c, h, w, out)
    w1 = jnp.transpose(w1, (1, 2, 0, 3)).reshape(H3 * W3 * C3, OC1)   # (h, w, c, out)
    K1p, N1p = _round_up(H3 * W3 * C3, 128), _round_up(OC1, 128)
    w1p = jnp.zeros((K1p, N1p), dtype).at[:H3 * W3 * C3, :OC1].set(w1.astype(dtype))
    b1p = jnp.zeros((1, N1p), jnp.float32).at[0, :OC1].set(
        params["fc1_b"].astype(jnp.float32))

    fc2 = params["fc2_w"]                         # [A, 512]
    A = fc2.shape[0]
    N2p = _round_up(A, 128)
    w2p = jnp.zeros((N1p, N2p), dtype).at[:OC1, :A].set(fc2.T.astype(dtype))
    b2p = jnp.zeros((1, N2p), jnp.float32).at[0, :A].set(
        params["fc2_b"].astype(jnp.float32))

    return {"c1": conv_w(params["conv1_w"]),
            "c2": conv_w(params["conv2_w"]),
            "c3": conv_w(params["conv3_w"]),
            "w1": w1p, "b1": b1p, "w2": w2p, "b2": b2p}


# ----------------------------------------------------------------------------
# Forward pass (jit this)
# ----------------------------------------------------------------------------
def dqn_forward(prepped, x_nchw, *, action_dim):
    """x_nchw: [B, 4, 84, 84] f32 in [0, 255] (PyTorch NCHW convention)."""
    B = x_nchw.shape[0]
    # single NCHW->NHWC transpose of the (small) input; NHWC kept thereafter.
    x = jnp.transpose(x_nchw, (0, 2, 3, 1)).astype(jnp.bfloat16)

    p, oh, ow = _im2col(x, 8, 8, 4)                                   # [800, 256]
    x = conv_matmul(p, prepped["c1"], n_valid=32,
                    scale=1.0 / 255.0).reshape(B, oh, ow, 32)         # [B,20,20,32]

    p, oh, ow = _im2col(x, 4, 4, 2)                                   # [162, 512]
    x = conv_matmul(p, prepped["c2"], n_valid=64).reshape(B, oh, ow, 64)  # [B,9,9,64]

    p, oh, ow = _im2col(x, 3, 3, 1)                                   # [98, 576]
    x = conv_matmul(p, prepped["c3"], n_valid=64).reshape(B, oh * ow * 64)  # [B,3136] NHWC order

    # fc1(+ReLU)+fc2 fused in one kernel; fc1 rows were pre-permuted to NHWC
    # order so this matches torch's NCHW .view(B, -1) exactly.
    return fc_head(x, prepped["w1"], prepped["b1"],
                   prepped["w2"], prepped["b2"], action_dim)


# ----------------------------------------------------------------------------
# Pure-JAX f32 reference (for correctness check only)
# ----------------------------------------------------------------------------
def dqn_reference(params, x):
    dn = ("NCHW", "OIHW", "NCHW")
    x = x / 255.0
    x = jax.nn.relu(jax.lax.conv_general_dilated(
        x, params["conv1_w"], (4, 4), "VALID", dimension_numbers=dn))
    x = jax.nn.relu(jax.lax.conv_general_dilated(
        x, params["conv2_w"], (2, 2), "VALID", dimension_numbers=dn))
    x = jax.nn.relu(jax.lax.conv_general_dilated(
        x, params["conv3_w"], (1, 1), "VALID", dimension_numbers=dn))
    x = x.reshape(x.shape[0], -1)
    x = jax.nn.relu(x @ params["fc1_w"].T + params["fc1_b"])
    return x @ params["fc2_w"].T + params["fc2_b"]


if __name__ == "__main__":
    key = jax.random.PRNGKey(0)
    k_param, k_input = jax.random.split(key)

    batch, action_dim = 2, 6
    # 84x84 is required by the module: the 64*7*7 flatten implies 84x84 input.
    x = jax.random.uniform(k_input, (batch, 4, 84, 84), jnp.float32, 0.0, 255.0)

    params = init_dqn_params(k_param, action_dim)
    prepped = jax.tree_util.tree_map(jax.block_until_ready, prepare_params(params))

    fwd = jax.jit(functools.partial(dqn_forward, action_dim=action_dim))
    q_values = jax.block_until_ready(fwd(prepped, x))

    assert q_values.shape == (batch, action_dim), q_values.shape
    assert q_values.dtype == jnp.float32
    assert bool(jnp.all(jnp.isfinite(q_values)))

    # Loose tolerance: Pallas path uses bf16 operands with f32 accumulation.
    q_ref = dqn_reference(params, x)
    assert bool(jnp.allclose(q_values, q_ref, rtol=0.1, atol=0.2)), (q_values, q_ref)

    print("KERNEL_OK")
</pallas_src>

<mosaic_0001>
module attributes {stable_mosaic.version = 11 : i64} {
  func.func @_conv_mm_kernel(%arg0: i32, %arg1: memref<400x256xbf16, #tpu.memory_space<vmem>>, %arg2: memref<256x128xbf16, #tpu.memory_space<vmem>>, %arg3: memref<400x128xbf16, #tpu.memory_space<vmem>>) attributes {dimension_semantics = [#tpu.dimension_semantics<parallel>], iteration_bounds = array<i64: 2>, scalar_prefetch = 0 : i64, scratch_operands = 0 : i64, tpu.core_type = #tpu.core_type<tc>, window_params = [{transform_indices = @transform_0, window_bounds = array<i64: 400, 256>}, {pipeline_mode = #tpu.pipeline_mode<synchronous>, transform_indices = @transform_1, window_bounds = array<i64: 256, 128>}, {transform_indices = @transform_2, window_bounds = array<i64: 400, 128>}]} {
    %c0 = arith.constant 0 : index
    %c0_0 = arith.constant 0 : index
    %0 = vector.load %arg1[%c0, %c0_0] : memref<400x256xbf16, #tpu.memory_space<vmem>>, vector<400x256xbf16>
    %cst = arith.constant 3.936770e-03 : bf16
    %1 = vector.broadcast %cst : bf16 to vector<400x256xbf16>
    %2 = arith.mulf %0, %1 : vector<400x256xbf16>
    %c0_1 = arith.constant 0 : index
    %c0_2 = arith.constant 0 : index
    %3 = vector.load %arg2[%c0_1, %c0_2] : memref<256x128xbf16, #tpu.memory_space<vmem>>, vector<256x128xbf16>
    %cst_3 = arith.constant dense<0.000000e+00> : vector<400x128xf32>
    %4 = tpu.matmul %2, %3, %cst_3 {dimension_numbers = #tpu.dot_dimension_numbers<[1], [0], [0], [1], [0, 0, 1, 1], [], []>} : vector<400x256xbf16>, vector<256x128xbf16>, vector<400x128xf32> -> vector<400x128xf32>
    %cst_4 = arith.constant 0.000000e+00 : f32
    %5 = vector.broadcast %cst_4 : f32 to vector<400x128xf32>
    %6 = arith.maximumf %4, %5 : vector<400x128xf32>
    %7 = arith.truncf %6 : vector<400x128xf32> to vector<400x128xbf16>
    %c0_5 = arith.constant 0 : index
    %c0_6 = arith.constant 0 : index
    %8 = vector.load %arg3[%c0_5, %c0_6] : memref<400x128xbf16, #tpu.memory_space<vmem>>, vector<400x128xbf16>
    tpu.vector_store %arg3[%c0_5, %c0_6], %7 {strides = array<i32>} : memref<400x128xbf16, #tpu.memory_space<vmem>>, vector<400x128xbf16>,
    return
  }
  func.func @transform_0(%arg0: i32) -> (i32, i32) {
    %c0_i32 = arith.constant 0 : i32
    %c0_i32_0 = arith.constant 0 : i32
    return %arg0, %c0_i32 : i32, i32
  }
  func.func @transform_1(%arg0: i32) -> (i32, i32) {
    %c0_i32 = arith.constant 0 : i32
    %c0_i32_0 = arith.constant 0 : i32
    %c0_i32_1 = arith.constant 0 : i32
    return %c0_i32, %c0_i32_0 : i32, i32
  }
  func.func @transform_2(%arg0: i32) -> (i32, i32) {
    %c0_i32 = arith.constant 0 : i32
    %c0_i32_0 = arith.constant 0 : i32
    return %arg0, %c0_i32 : i32, i32
  }
}

module attributes {stable_mosaic.version = 11 : i64} {
  func.func @_conv_mm_kernel(%arg0: i32, %arg1: memref<176x512xbf16, #tpu.memory_space<vmem>>, %arg2: memref<512x128xbf16, #tpu.memory_space<vmem>>, %arg3: memref<176x128xbf16, #tpu.memory_space<vmem>>) attributes {dimension_semantics = [#tpu.dimension_semantics<parallel>], iteration_bounds = array<i64: 1>, scalar_prefetch = 0 : i64, scratch_operands = 0 : i64, tpu.core_type = #tpu.core_type<tc>, window_params = [{transform_indices = @transform_0, window_bounds = array<i64: 176, 512>}, {pipeline_mode = #tpu.pipeline_mode<synchronous>, transform_indices = @transform_1, window_bounds = array<i64: 512, 128>}, {transform_indices = @transform_2, window_bounds = array<i64: 176, 128>}]} {
    %c0 = arith.constant 0 : index
    %c0_0 = arith.constant 0 : index
    %0 = vector.load %arg1[%c0, %c0_0] : memref<176x512xbf16, #tpu.memory_space<vmem>>, vector<176x512xbf16>
    %c0_1 = arith.constant 0 : index
    %c0_2 = arith.constant 0 : index
    %1 = vector.load %arg2[%c0_1, %c0_2] : memref<512x128xbf16, #tpu.memory_space<vmem>>, vector<512x128xbf16>
    %cst = arith.constant dense<0.000000e+00> : vector<176x128xf32>
    %2 = tpu.matmul %0, %1, %cst {dimension_numbers = #tpu.dot_dimension_numbers<[1], [0], [0], [1], [0, 0, 1, 1], [], []>} : vector<176x512xbf16>, vector<512x128xbf16>, vector<176x128xf32> -> vector<176x128xf32>
    %cst_3 = arith.constant 0.000000e+00 : f32
    %3 = vector.broadcast %cst_3 : f32 to vector<176x128xf32>
    %4 = arith.maximumf %2, %3 : vector<176x128xf32>
    %5 = arith.truncf %4 : vector<176x128xf32> to vector<176x128xbf16>
    %c0_4 = arith.constant 0 : index
    %c0_5 = arith.constant 0 : index
    %6 = vector.load %arg3[%c0_4, %c0_5] : memref<176x128xbf16, #tpu.memory_space<vmem>>, vector<176x128xbf16>
    tpu.vector_store %arg3[%c0_4, %c0_5], %5 {strides = array<i32>} : memref<176x128xbf16, #tpu.memory_space<vmem>>, vector<176x128xbf16>,
    return
  }
  func.func @transform_0(%arg0: i32) -> (i32, i32) {
    %c0_i32 = arith.constant 0 : i32
    %c0_i32_0 = arith.constant 0 : i32
    return %arg0, %c0_i32 : i32, i32
  }
  func.func @transform_1(%arg0: i32) -> (i32, i32) {
    %c0_i32 = arith.constant 0 : i32
    %c0_i32_0 = arith.constant 0 : i32
    %c0_i32_1 = arith.constant 0 : i32
    return %c0_i32, %c0_i32_0 : i32, i32
  }
  func.func @transform_2(%arg0: i32) -> (i32, i32) {
    %c0_i32 = arith.constant 0 : i32
    %c0_i32_0 = arith.constant 0 : i32
    return %arg0, %c0_i32 : i32, i32
  }
}

module attributes {stable_mosaic.version = 11 : i64} {
  func.func @_conv_mm_kernel(%arg0: i32, %arg1: memref<112x640xbf16, #tpu.memory_space<vmem>>, %arg2: memref<640x128xbf16, #tpu.memory_space<vmem>>, %arg3: memref<112x128xbf16, #tpu.memory_space<vmem>>) attributes {dimension_semantics = [#tpu.dimension_semantics<parallel>], iteration_bounds = array<i64: 1>, scalar_prefetch = 0 : i64, scratch_operands = 0 : i64, tpu.core_type = #tpu.core_type<tc>, window_params = [{transform_indices = @transform_0, window_bounds = array<i64: 112, 640>}, {pipeline_mode = #tpu.pipeline_mode<synchronous>, transform_indices = @transform_1, window_bounds = array<i64: 640, 128>}, {transform_indices = @transform_2, window_bounds = array<i64: 112, 128>}]} {
    %c0 = arith.constant 0 : index
    %c0_0 = arith.constant 0 : index
    %0 = vector.load %arg1[%c0, %c0_0] : memref<112x640xbf16, #tpu.memory_space<vmem>>, vector<112x640xbf16>
    %c0_1 = arith.constant 0 : index
    %c0_2 = arith.constant 0 : index
    %1 = vector.load %arg2[%c0_1, %c0_2] : memref<640x128xbf16, #tpu.memory_space<vmem>>, vector<640x128xbf16>
    %cst = arith.constant dense<0.000000e+00> : vector<112x128xf32>
    %2 = tpu.matmul %0, %1, %cst {dimension_numbers = #tpu.dot_dimension_numbers<[1], [0], [0], [1], [0, 0, 1, 1], [], []>} : vector<112x640xbf16>, vector<640x128xbf16>, vector<112x128xf32> -> vector<112x128xf32>
    %cst_3 = arith.constant 0.000000e+00 : f32
    %3 = vector.broadcast %cst_3 : f32 to vector<112x128xf32>
    %4 = arith.maximumf %2, %3 : vector<112x128xf32>
    %5 = arith.truncf %4 : vector<112x128xf32> to vector<112x128xbf16>
    %c0_4 = arith.constant 0 : index
    %c0_5 = arith.constant 0 : index
    %6 = vector.load %arg3[%c0_4, %c0_5] : memref<112x128xbf16, #tpu.memory_space<vmem>>, vector<112x128xbf16>
    tpu.vector_store %arg3[%c0_4, %c0_5], %5 {strides = array<i32>} : memref<112x128xbf16, #tpu.memory_space<vmem>>, vector<112x128xbf16>,
    return
  }
  func.func @transform_0(%arg0: i32) -> (i32, i32) {
    %c0_i32 = arith.constant 0 : i32
    %c0_i32_0 = arith.constant 0 : i32
    return %arg0, %c0_i32 : i32, i32
  }
  func.func @transform_1(%arg0: i32) -> (i32, i32) {
    %c0_i32 = arith.constant 0 : i32
    %c0_i32_0 = arith.constant 0 : i32
    %c0_i32_1 = arith.constant 0 : i32
    return %c0_i32, %c0_i32_0 : i32, i32
  }
  func.func @transform_2(%arg0: i32) -> (i32, i32) {
    %c0_i32 = arith.constant 0 : i32
    %c0_i32_0 = arith.constant 0 : i32
    return %arg0, %c0_i32 : i32, i32
  }
}

module attributes {stable_mosaic.version = 11 : i64} {
  func.func @_fc_fused_kernel(%arg0: memref<8x3200xbf16, #tpu.memory_space<vmem>>, %arg1: memref<3200x512xbf16, #tpu.memory_space<vmem>>, %arg2: memref<1x512xf32, #tpu.memory_space<vmem>>, %arg3: memref<512x128xbf16, #tpu.memory_space<vmem>>, %arg4: memref<1x128xf32, #tpu.memory_space<vmem>>, %arg5: memref<8x128xf32, #tpu.memory_space<vmem>>) attributes {dimension_semantics = [], scalar_prefetch = 0 : i64, scratch_operands = 0 : i64, tpu.core_type = #tpu.core_type<tc>} {
    %c0 = arith.constant 0 : index
    %c0_0 = arith.constant 0 : index
    %0 = vector.load %arg0[%c0, %c0_0] : memref<8x3200xbf16, #tpu.memory_space<vmem>>, vector<8x3200xbf16>
    %c0_1 = arith.constant 0 : index
    %c0_2 = arith.constant 0 : index
    %1 = vector.load %arg1[%c0_1, %c0_2] : memref<3200x512xbf16, #tpu.memory_space<vmem>>, vector<3200x512xbf16>
    %cst = arith.constant dense<0.000000e+00> : vector<8x512xf32>
    %2 = tpu.matmul %0, %1, %cst {dimension_numbers = #tpu.dot_dimension_numbers<[1], [0], [0], [1], [0, 0, 1, 1], [], []>} : vector<8x3200xbf16>, vector<3200x512xbf16>, vector<8x512xf32> -> vector<8x512xf32>
    %c0_3 = arith.constant 0 : index
    %c0_4 = arith.constant 0 : index
    %3 = vector.load %arg2[%c0_3, %c0_4] : memref<1x512xf32, #tpu.memory_space<vmem>>, vector<1x512xf32>
    %4 = vector.broadcast %3 : vector<1x512xf32> to vector<8x512xf32>
    %5 = arith.addf %2, %4 : vector<8x512xf32>
    %cst_5 = arith.constant 0.000000e+00 : f32
    %6 = vector.broadcast %cst_5 : f32 to vector<8x512xf32>
    %7 = arith.maximumf %5, %6 : vector<8x512xf32>
    %8 = arith.truncf %7 : vector<8x512xf32> to vector<8x512xbf16>
    %c0_6 = arith.constant 0 : index
    %c0_7 = arith.constant 0 : index
    %9 = vector.load %arg3[%c0_6, %c0_7] : memref<512x128xbf16, #tpu.memory_space<vmem>>, vector<512x128xbf16>
    %cst_8 = arith.constant dense<0.000000e+00> : vector<8x128xf32>
    %10 = tpu.matmul %8, %9, %cst_8 {dimension_numbers = #tpu.dot_dimension_numbers<[1], [0], [0], [1], [0, 0, 1, 1], [], []>} : vector<8x512xbf16>, vector<512x128xbf16>, vector<8x128xf32> -> vector<8x128xf32>
    %c0_9 = arith.constant 0 : index
    %c0_10 = arith.constant 0 : index
    %11 = vector.load %arg4[%c0_9, %c0_10] : memref<1x128xf32, #tpu.memory_space<vmem>>, vector<1x128xf32>
    %12 = vector.broadcast %11 : vector<1x128xf32> to vector<8x128xf32>
    %13 = arith.addf %10, %12 : vector<8x128xf32>
    %c0_11 = arith.constant 0 : index
    %c0_12 = arith.constant 0 : index
    %14 = vector.load %arg5[%c0_11, %c0_12] : memref<8x128xf32, #tpu.memory_space<vmem>>, vector<8x128xf32>
    tpu.vector_store %arg5[%c0_11, %c0_12], %13 {strides = array<i32>} : memref<8x128xf32, #tpu.memory_space<vmem>>, vector<8x128xf32>,
    return
  }
}

</mosaic_0001>

<llo_original>
// kernel: dqn_forward.4
$region0: #{dqn_forward.4}
  #allocation0 [shape = 'u32[]', space=smem, size = 0x4, offset = 0x4, fixed_abs, tag = 'smem constant byte address 0x4 - core index']
  #allocation1 [shape = 'u32[144,128]{1,0:T(1,128)}', space=vmem, size = 0x12000, scoped, tag = 'internal scratch']
  %s0 = inlined_call_operand.vmem [shape: bf16[800,256], index: 0, kind: input, shape index: {}]
  %s1 = inlined_call_operand.vmem [shape: bf16[256,128], index: 1, kind: input, shape index: {}]
  %s2 = inlined_call_operand.vmem [shape: bf16[800,128], index: 2, kind: output, shape index: {}]
  %s3 = sld [smem:[#allocation0]]
  $region41: #{dqn_forward.4} parent=0
    _
  %s5 = ssub.s32 1, %s3
  %s6 = scalar_select 0, %s5, %s3
  loop: start=0, step=1, limit=4
  $region2: #{dqn_forward.4} parent=0 // loop_pre_header
    _
  $region3: #{dqn_forward.4} parent=0 // loop_header
    %s8 = sphi 0, %s12
    %p9 = scmp.ge.s32.totalorder %s8, 4
    %s18 = sphi 0, %s20
    %s21 = sphi 0, %s18
    %s22 = sphi 0, %s21
    %s38 = sphi 0, %s22
    %s42 = sphi 0, %s42
    %s44 = sphi 0, %s42
    %s45 = sphi 0, %s44
    %s59 = sphi 0, %s45
    %s65 = sphi 0, %s67
    %s68 = sphi 0, %s65
    %s69 = sphi 0, %s68
    %s85 = sphi 0, %s69
  $region4: #{dqn_forward.4} parent=0 // loop_header_branch
    %11 = sbr.rel (%p9) target = $region8
  $region5: #{dqn_forward.4} parent=0 // loop_body
    %s13 = ssub.s32 %s8, 1
    %s14 = ssub.s32 %s8, 2
    %s15 = sadd.s32 %s8, 1
    %s16 = ssub.s32 %s8, %s15
    %p17 = scmp.eq.s32.totalorder %s16, 0
    %s19 = sadd.s32 %s18, 1
    %s20 = scalar_select %p17, %s18, %s19
    %p23 = pneg %p17
    %p24 = scmp.eq.s32.totalorder %s8, 1
    %p25 = por %p23, %p24
    %p26 = scmp.ne.s32.totalorder %s18, %s21
    %p27 = scmp.eq.s32.totalorder %s8, 0
    %p28 = por %p26, %p27
    %p29 = scmp.ne.s32.totalorder %s18, %s21
    %p30 = scmp.eq.s32.totalorder %s13, 1
    %p31 = por %p29, %p30
    %p32 = scmp.ne.s32.totalorder %s21, %s22
    %p33 = scmp.eq.s32.totalorder %s13, 0
    %p34 = por %p32, %p33
    %p35 = scmp.ne.s32.totalorder %s21, %s22
    %p36 = scmp.eq.s32.totalorder %s14, 1
    %p37 = por %p35, %p36
    %p39 = scmp.ne.s32.totalorder %s22, %s38
    %p40 = scmp.eq.s32.totalorder %s14, 0
    %p41 = por %p39, %p40
    %s43 = sadd.s32 %s42, 1
    %p46 = scmp.eq.s32.totalorder %s8, 1
    %p47 = scmp.ne.s32.totalorder %s42, %s44
    %p48 = scmp.eq.s32.totalorder %s8, 0
    %p49 = por %p47, %p48
    %p50 = scmp.ne.s32.totalorder %s42, %s44
    %p51 = scmp.eq.s32.totalorder %s13, 1
    %p52 = por %p50, %p51
    %p53 = scmp.ne.s32.totalorder %s44, %s45
    %p54 = scmp.eq.s32.totalorder %s13, 0
    %p55 = por %p53, %p54
    %p56 = scmp.ne.s32.totalorder %s44, %s45
    %p57 = scmp.eq.s32.totalorder %s14, 1
    %p58 = por %p56, %p57
    %p60 = scmp.ne.s32.totalorder %s45, %s59
    %p61 = scmp.eq.s32.totalorder %s14, 0
    %p62 = por %p60, %p61
    %s63 = ssub.s32 %s8, %s15
    %p64 = scmp.eq.s32.totalorder %s63, 0
    %s66 = sadd.s32 %s65, 1
    %s67 = scalar_select %p64, %s65, %s66
    %p70 = pneg %p64
    %p71 = scmp.eq.s32.totalorder %s8, 1
    %p72 = por %p70, %p71
    %p73 = scmp.ne.s32.totalorder %s65, %s68
    %p74 = scmp.eq.s32.totalorder %s8, 0
    %p75 = por %p73, %p74
    %p76 = scmp.ne.s32.totalorder %s65, %s68
    %p77 = scmp.eq.s32.totalorder %s13, 1
    %p78 = por %p76, %p77
    %p79 = scmp.ne.s32.totalorder %s68, %s69
    %p80 = scmp.eq.s32.totalorder %s13, 0
    %p81 = por %p79, %p80
    %p82 = scmp.ne.s32.totalorder %s68, %s69
    %p83 = scmp.eq.s32.totalorder %s14, 1
    %p84 = por %p82, %p83
    %p86 = scmp.ne.s32.totalorder %s69, %s85
    %p87 = scmp.eq.s32.totalorder %s14, 0
    %p88 = por %p86, %p87
    %p89 = scmp.le.s32.totalorder 1, %s8
    %p90 = scmp.lt.s32.totalorder %s8, 3
    %p91 = pnand %p89, %p90
    %p92 = pneg %p91
    // Predicated region
    $region9: #{dqn_forward.4} parent=5 // pred_check
      _
    $region10: #{dqn_forward.4} parent=5 // pred_check_branch
      %94 = sbr.rel (%p91) target = $region12
    $region11: #{dqn_forward.4} parent=5 // pred_region
      %s95 = ssub.s32 %s8, 1
      // Predicated region
      $region13: #{dqn_forward.4} parent=11 // pred_check
        %p96 = pneg %p55
      $region14: #{dqn_forward.4} parent=11 // pred_check_branch
        %98 = sbr.rel (%p96) target = $region16
      $region15: #{dqn_forward.4} parent=11 // pred_region
        _
      $region16: #{dqn_forward.4} parent=11 // pred_fallthru
        _
    $region12: #{dqn_forward.4} parent=5 // pred_fallthru
      _
    %p99 = scmp.lt.s32.totalorder %s8, 2
    // Predicated region
    $region17: #{dqn_forward.4} parent=5 // pred_check
      %p100 = pneg %p99
    $region18: #{dqn_forward.4} parent=5 // pred_check_branch
      %102 = sbr.rel (%p100) target = $region20
    $region19: #{dqn_forward.4} parent=5 // pred_region
      // Predicated region
      $region21: #{dqn_forward.4} parent=19 // pred_check
        %p103 = pneg %p28
      $region22: #{dqn_forward.4} parent=19 // pred_check_branch
        %105 = sbr.rel (%p103) target = $region24
      $region23: #{dqn_forward.4} parent=19 // pred_region
        %s106 = smul.u32 50, %s8
        %p107 = scmp.lt.s32.totalorder %s106, 99
        %s108 = scalar_select %p107, %s106, 99
        %s109 = smul.addr %s108, 2
        %s110 = smul.addr %s109, 4
        %s111 = scalar_lea.vmem %s0, %s110
        %s112 = smul.u32 50, %s8
      $region24: #{dqn_forward.4} parent=19 // pred_fallthru
        _
    $region20: #{dqn_forward.4} parent=5 // pred_fallthru
      _
    %p113 = scmp.le.s32.totalorder 1, %s8
    %p114 = scmp.lt.s32.totalorder %s8, 3
    %p115 = pnand %p113, %p114
    %p116 = pneg %p115
    // Predicated region
    $region25: #{dqn_forward.4} parent=5 // pred_check
      _
    $region26: #{dqn_forward.4} parent=5 // pred_check_branch
      %118 = sbr.rel (%p115) target = $region28
    $region27: #{dqn_forward.4} parent=5 // pred_region
      %s119 = ssub.s32 %s8, 1
      %s120 = smul.u32 50, %s13
      %p121 = scmp.lt.s32.totalorder %s120, 99
      %s122 = scalar_select %p121, %s120, 99
      %s123 = smul.addr %s122, 2
      %s124 = smul.addr %s123, 4
      %s125 = scalar_lea.vmem %s0, %s124
      %p126 = pneg %p34
      %p127 = pneg %p31
      %p128 = pneg %p55
      %p129 = pneg %p52
      %p130 = pneg %p81
      %p131 = pneg %p78
      %s132 = smul.u32 50, %s13
      %p133 = scmp.lt.s32.totalorder %s132, 99
      %s134 = scalar_select %p133, %s132, 99
      %s135 = smul.addr %s134, 4
      %s136 = scalar_lea.vmem %s2, %s135
      %s137 = smul.u32 50, %s13
      %p138 = scmp.lt.s32.totalorder %s137, 99
      %s139 = scalar_select %p138, %s137, 99
      %s140 = smul.addr %s139, 2
      %s141 = smul.addr %s140, 4
      %s142 = scalar_lea.vmem %s0, %s141
      %s143 = smul.u32 50, %s13
      %s144 = smul.u32 50, %s13
      %p145 = scmp.lt.s32.totalorder %s144, 99
      %s146 = scalar_select %p145, %s144, 99
      %s147 = smul.addr %s146, 4
      %s148 = scalar_lea.vmem %s2, %s147
      %s149 = smul.u32 50, %s13
      %v152 = vld [vmem:[%s142] sm:$0xff]
      %v153 = vld [vmem:[%s142 + $0x8] sm:$0xff]
      %v154 = vld [vmem:[%s142 + $0x10] sm:$0xff]
      %v155 = vld [vmem:[%s142 + $0x18] sm:$0xff]
      %v156 = vld [vmem:[%s142 + $0x20] sm:$0xff]
      %v157 = vld [vmem:[%s142 + $0x28] sm:$0xff]
      %v158 = vld [vmem:[%s142 + $0x30] sm:$0xff]
      %v159 = vld [vmem:[%s142 + $0x38] sm:$0xff]
      %v160 = vld [vmem:[%s142 + $0x40] sm:$0xff]
      %v161 = vld [vmem:[%s142 + $0x48] sm:$0xff]
      %v162 = vld [vmem:[%s142 + $0x50] sm:$0xff]
      %v163 = vld [vmem:[%s142 + $0x58] sm:$0xff]
      %v164 = vld [vmem:[%s142 + $0x60] sm:$0xff]
      %v165 = vld [vmem:[%s142 + $0x68] sm:$0xff]
      %v166 = vld [vmem:[%s142 + $0x70] sm:$0xff]
      %v167 = vld [vmem:[%s142 + $0x78] sm:$0xff]
      %v168 = vld [vmem:[%s142 + $0x80] sm:$0xff]
      %v169 = vld [vmem:[%s142 + $0x88] sm:$0xff]
      %v170 = vld [vmem:[%s142 + $0x90] sm:$0xff]
      %v171 = vld [vmem:[%s142 + $0x98] sm:$0xff]
      %v172 = vld [vmem:[%s142 + $0xa0] sm:$0xff]
      %v173 = vld [vmem:[%s142 + $0xa8] sm:$0xff]
      %v174 = vld [vmem:[%s142 + $0xb0] sm:$0xff]
      %v175 = vld [vmem:[%s142 + $0xb8] sm:$0xff]
      %v176 = vld [vmem:[%s142 + $0xc0] sm:$0xff]
      %v177 = vld [vmem:[%s142 + $0xc8] sm:$0xff]
      %v178 = vld [vmem:[%s142 + $0xd0] sm:$0xff]
      %v179 = vld [vmem:[%s142 + $0xd8] sm:$0xff]
      %v180 = vld [vmem:[%s142 + $0xe0] sm:$0xff]
      %v181 = vld [vmem:[%s142 + $0xe8] sm:$0xff]
      %v182 = vld [vmem:[%s142 + $0xf0] sm:$0xff]
      %v183 = vld [vmem:[%s142 + $0xf8] sm:$0xff]
      %v184 = vld [vmem:[%s142 + $0x100] sm:$0xff]
      %v185 = vld [vmem:[%s142 + $0x108] sm:$0xff]
      %v186 = vld [vmem:[%s142 + $0x110] sm:$0xff]
      %v187 = vld [vmem:[%s142 + $0x118] sm:$0xff]
      %v188 = vld [vmem:[%s142 + $0x120] sm:$0xff]
      %v189 = vld [vmem:[%s142 + $0x128] sm:$0xff]
      %v190 = vld [vmem:[%s142 + $0x130] sm:$0xff]
      %v191 = vld [vmem:[%s142 + $0x138] sm:$0xff]
      %v192 = vld [vmem:[%s142 + $0x140] sm:$0xff]
      %v193 = vld [vmem:[%s142 + $0x148] sm:$0xff]
      %v194 = vld [vmem:[%s142 + $0x150] sm:$0xff]
      %v195 = vld [vmem:[%s142 + $0x158] sm:$0xff]
      %v196 = vld [vmem:[%s142 + $0x160] sm:$0xff]
      %v197 = vld [vmem:[%s142 + $0x168] sm:$0xff]
      %v198 = vld [vmem:[%s142 + $0x170] sm:$0xff]
      %v199 = vld [vmem:[%s142 + $0x178] sm:$0xff]
      %v200 = vld [vmem:[%s142 + $0x180] sm:$0xff]
      %v201 = vld [vmem:[%s142 + $0x188] sm:$0xff]
      %v202 = vmul.bf16 %v152, 998325121
      %v203 = vmul.bf16 %v153, 998325121
      %v204 = vmul.bf16 %v154, 998325121
      %v205 = vmul.bf16 %v155, 998325121
      %v206 = vmul.bf16 %v156, 998325121
      %v207 = vmul.bf16 %v157, 998325121
      %v208 = vmul.bf16 %v158, 998325121
      %v209 = vmul.bf16 %v159, 998325121
      %v210 = vmul.bf16 %v160, 998325121
      %v211 = vmul.bf16 %v161, 998325121
      %v212 = vmul.bf16 %v162, 998325121
      %v213 = vmul.bf16 %v163, 998325121
      %v214 = vmul.bf16 %v164, 998325121
      %v215 = vmul.bf16 %v165, 998325121
      %v216 = vmul.bf16 %v166, 998325121
      %v217 = vmul.bf16 %v167, 998325121
      %v218 = vmul.bf16 %v168, 998325121
      %v219 = vmul.bf16 %v169, 998325121
      %v220 = vmul.bf16 %v170, 998325121
      %v221 = vmul.bf16 %v171, 998325121
      %v222 = vmul.bf16 %v172, 998325121
      %v223 = vmul.bf16 %v173, 998325121
      %v224 = vmul.bf16 %v174, 998325121
      %v225 = vmul.bf16 %v175, 998325121
      %v226 = vmul.bf16 %v176, 998325121
      %v227 = vmul.bf16 %v177, 998325121
      %v228 = vmul.bf16 %v178, 998325121
      %v229 = vmul.bf16 %v179, 998325121
      %v230 = vmul.bf16 %v180, 998325121
      %v231 = vmul.bf16 %v181, 998325121
      %v232 = vmul.bf16 %v182, 998325121
      %v233 = vmul.bf16 %v183, 998325121
      %v234 = vmul.bf16 %v184, 998325121
      %v235 = vmul.bf16 %v185, 998325121
      %v236 = vmul.bf16 %v186, 998325121
      %v237 = vmul.bf16 %v187, 998325121
      %v238 = vmul.bf16 %v188, 998325121
      %v239 = vmul.bf16 %v189, 998325121
      %v240 = vmul.bf16 %v190, 998325121
      %v241 = vmul.bf16 %v191, 998325121
      %v242 = vmul.bf16 %v192, 998325121
      %v243 = vmul.bf16 %v193, 998325121
      %v244 = vmul.bf16 %v194, 998325121
      %v245 = vmul.bf16 %v195, 998325121
      %v246 = vmul.bf16 %v196, 998325121
      %v247 = vmul.bf16 %v197, 998325121
      %v248 = vmul.bf16 %v198, 998325121
      %v249 = vmul.bf16 %v199, 998325121
      %v250 = vmul.bf16 %v200, 998325121
      %v251 = vmul.bf16 %v201, 998325121
      %v252 = vld [vmem:[%s1] sm:$0xf]
      %v253 = vld [vmem:[%s1 + $0x4] sm:$0xf]
      %v254 = vld [vmem:[%s1 + $0x8] sm:$0xf]
      %v255 = vld [vmem:[%s1 + $0xc] sm:$0xf]
      %v256 = vld [vmem:[%s1 + $0x10] sm:$0xf]
      %v257 = vld [vmem:[%s1 + $0x14] sm:$0xf]
      %v258 = vld [vmem:[%s1 + $0x18] sm:$0xf]
      %v259 = vld [vmem:[%s1 + $0x1c] sm:$0xf]
      %v260 = vld [vmem:[%s1 + $0x20] sm:$0xf]
      %v261 = vld [vmem:[%s1 + $0x24] sm:$0xf]
      %v262 = vld [vmem:[%s1 + $0x28] sm:$0xf]
      %v263 = vld [vmem:[%s1 + $0x2c] sm:$0xf]
      %v264 = vld [vmem:[%s1 + $0x30] sm:$0xf]
      %v265 = vld [vmem:[%s1 + $0x34] sm:$0xf]
      %v266 = vld [vmem:[%s1 + $0x38] sm:$0xf]
      %v267 = vld [vmem:[%s1 + $0x3c] sm:$0xf]
      %v268 = vld [vmem:[%s1 + $0x40] sm:$0xf]
      %v269 = vld [vmem:[%s1 + $0x44] sm:$0xf]
      %v270 = vld [vmem:[%s1 + $0x48] sm:$0xf]
      %v271 = vld [vmem:[%s1 + $0x4c] sm:$0xf]
      %v272 = vld [vmem:[%s1 + $0x50] sm:$0xf]
      %v273 = vld [vmem:[%s1 + $0x54] sm:$0xf]
      %v274 = vld [vmem:[%s1 + $0x58] sm:$0xf]
      %v275 = vld [vmem:[%s1 + $0x5c] sm:$0xf]
      %v276 = vld [vmem:[%s1 + $0x60] sm:$0xf]
      %v277 = vld [vmem:[%s1 + $0x64] sm:$0xf]
      %v278 = vld [vmem:[%s1 + $0x68] sm:$0xf]
      %v279 = vld [vmem:[%s1 + $0x6c] sm:$0xf]
      %v280 = vld [vmem:[%s1 + $0x70] sm:$0xf]
      %v281 = vld [vmem:[%s1 + $0x74] sm:$0xf]
      %v282 = vld [vmem:[%s1 + $0x78] sm:$0xf]
      %v283 = vld [vmem:[%s1 + $0x7c] sm:$0xf]
      %v334 = vunpack.c.l.b16 %v202
      %v335 = vunpack.c.h.b16 %v202
      %v336 = vunpack.c.l.b16 %v203
      %v337 = vunpack.c.h.b16 %v203
      %v338 = vunpack.c.l.b16 %v204
      %v339 = vunpack.c.h.b16 %v204
      %v340 = vunpack.c.l.b16 %v205
      %v341 = vunpack.c.h.b16 %v205
      %v342 = vunpack.c.l.b16 %v206
      %v343 = vunpack.c.h.b16 %v206
      %v344 = vunpack.c.l.b16 %v207
      %v345 = vunpack.c.h.b16 %v207
      %v346 = vunpack.c.l.b16 %v208
      %v347 = vunpack.c.h.b16 %v208
      %v348 = vunpack.c.l.b16 %v209
      %v349 = vunpack.c.h.b16 %v209
      %v350 = vunpack.c.l.b16 %v210
      %v351 = vunpack.c.h.b16 %v210
      %v352 = vunpack.c.l.b16 %v211
      %v353 = vunpack.c.h.b16 %v211
      %v354 = vunpack.c.l.b16 %v212
      %v355 = vunpack.c.h.b16 %v212
      %v356 = vunpack.c.l.b16 %v213
      %v357 = vunpack.c.h.b16 %v213
      %v358 = vunpack.c.l.b16 %v214
      %v359 = vunpack.c.h.b16 %v214
      %v360 = vunpack.c.l.b16 %v215
      %v361 = vunpack.c.h.b16 %v215
      %v362 = vunpack.c.l.b16 %v216
      %v363 = vunpack.c.h.b16 %v216
      %v364 = vunpack.c.l.b16 %v217
      %v365 = vunpack.c.h.b16 %v217
      %v366 = vunpack.c.l.b16 %v218
      %v367 = vunpack.c.h.b16 %v218
      %v368 = vunpack.c.l.b16 %v219
      %v369 = vunpack.c.h.b16 %v219
      %v370 = vunpack.c.l.b16 %v220
      %v371 = vunpack.c.h.b16 %v220
      %v372 = vunpack.c.l.b16 %v221
      %v373 = vunpack.c.h.b16 %v221
      %v374 = vunpack.c.l.b16 %v222
      %v375 = vunpack.c.h.b16 %v222
      %v376 = vunpack.c.l.b16 %v223
      %v377 = vunpack.c.h.b16 %v223
      %v378 = vunpack.c.l.b16 %v224
      %v379 = vunpack.c.h.b16 %v224
      %v380 = vunpack.c.l.b16 %v225
      %v381 = vunpack.c.h.b16 %v225
      %v382 = vunpack.c.l.b16 %v226
      %v383 = vunpack.c.h.b16 %v226
      %v384 = vunpack.c.l.b16 %v227
      %v385 = vunpack.c.h.b16 %v227
      %v386 = vunpack.c.l.b16 %v228
      %v387 = vunpack.c.h.b16 %v228
      %v388 = vunpack.c.l.b16 %v229
      %v389 = vunpack.c.h.b16 %v229
      %v390 = vunpack.c.l.b16 %v230
      %v391 = vunpack.c.h.b16 %v230
      %v392 = vunpack.c.l.b16 %v231
      %v393 = vunpack.c.h.b16 %v231
      %v394 = vunpack.c.l.b16 %v232
      %v395 = vunpack.c.h.b16 %v232
      %v396 = vunpack.c.l.b16 %v233
      %v397 = vunpack.c.h.b16 %v233
      %v398 = vunpack.c.l.b16 %v234
      %v399 = vunpack.c.h.b16 %v234
      %v400 = vunpack.c.l.b16 %v235
      %v401 = vunpack.c.h.b16 %v235
      %v402 = vunpack.c.l.b16 %v236
      %v403 = vunpack.c.h.b16 %v236
      %v404 = vunpack.c.l.b16 %v237
      %v405 = vunpack.c.h.b16 %v237
      %v406 = vunpack.c.l.b16 %v238
      %v407 = vunpack.c.h.b16 %v238
      %v408 = vunpack.c.l.b16 %v239
      %v409 = vunpack.c.h.b16 %v239
      %v410 = vunpack.c.l.b16 %v240
      %v411 = vunpack.c.h.b16 %v240
      %v412 = vunpack.c.l.b16 %v241
      %v413 = vunpack.c.h.b16 %v241
      %v414 = vunpack.c.l.b16 %v242
      %v415 = vunpack.c.h.b16 %v242
      %v416 = vunpack.c.l.b16 %v243
      %v417 = vunpack.c.h.b16 %v243
      %v418 = vunpack.c.l.b16 %v244
      %v419 = vunpack.c.h.b16 %v244
      %v420 = vunpack.c.l.b16 %v245
      %v421 = vunpack.c.h.b16 %v245
      %v422 = vunpack.c.l.b16 %v246
      %v423 = vunpack.c.h.b16 %v246
      %v424 = vunpack.c.l.b16 %v247
      %v425 = vunpack.c.h.b16 %v247
      %v426 = vunpack.c.l.b16 %v248
      %v427 = vunpack.c.h.b16 %v248
      %v428 = vunpack.c.l.b16 %v249
      %v429 = vunpack.c.h.b16 %v249
      %v430 = vunpack.c.l.b16 %v250
      %v431 = vunpack.c.h.b16 %v250
      %v432 = vunpack.c.l.b16 %v251
      %v433 = vunpack.c.h.b16 %v251
      %v434 = vpack.c.b16 %v336, %v334
      %v435 = vpack.c.b16 %v337, %v335
      %v436 = vpack.c.b16 %v340, %v338
      %v437 = vpack.c.b16 %v341, %v339
      %v438 = vpack.c.b16 %v344, %v342
      %v439 = vpack.c.b16 %v345, %v343
      %v440 = vpack.c.b16 %v348, %v346
      %v441 = vpack.c.b16 %v349, %v347
      %v442 = vpack.c.b16 %v352, %v350
      %v443 = vpack.c.b16 %v353, %v351
      %v444 = vpack.c.b16 %v356, %v354
      %v445 = vpack.c.b16 %v357, %v355
      %v446 = vpack.c.b16 %v360, %v358
      %v447 = vpack.c.b16 %v361, %v359
      %v448 = vpack.c.b16 %v364, %v362
      %v449 = vpack.c.b16 %v365, %v363
      %v450 = vpack.c.b16 %v368, %v366
      %v451 = vpack.c.b16 %v369, %v367
      %v452 = vpack.c.b16 %v372, %v370
      %v453 = vpack.c.b16 %v373, %v371
      %v454 = vpack.c.b16 %v376, %v374
      %v455 = vpack.c.b16 %v377, %v375
      %v456 = vpack.c.b16 %v380, %v378
      %v457 = vpack.c.b16 %v381, %v379
      %v458 = vpack.c.b16 %v384, %v382
      %v459 = vpack.c.b16 %v385, %v383
      %v460 = vpack.c.b16 %v388, %v386
      %v461 = vpack.c.b16 %v389, %v387
      %v462 = vpack.c.b16 %v392, %v390
      %v463 = vpack.c.b16 %v393, %v391
      %v464 = vpack.c.b16 %v396, %v394
      %v465 = vpack.c.b16 %v397, %v395
      %v466 = vpack.c.b16 %v400, %v398
      %v467 = vpack.c.b16 %v401, %v399
      %v468 = vpack.c.b16 %v404, %v402
      %v469 = vpack.c.b16 %v405, %v403
      %v470 = vpack.c.b16 %v408, %v406
      %v471 = vpack.c.b16 %v409, %v407
      %v472 = vpack.c.b16 %v412, %v410
      %v473 = vpack.c.b16 %v413, %v411
      %v474 = vpack.c.b16 %v416, %v414
      %v475 = vpack.c.b16 %v417, %v415
      %v476 = vpack.c.b16 %v420, %v418
      %v477 = vpack.c.b16 %v421, %v419
      %v478 = vpack.c.b16 %v424, %v422
      %v479 = vpack.c.b16 %v425, %v423
      %v480 = vpack.c.b16 %v428, %v426
      %v481 = vpack.c.b16 %v429, %v427
      %v482 = vpack.c.b16 %v432, %v430
      %v483 = vpack.c.b16 %v433, %v431
      %v566 = vunpack.c.l.b16 %v252
      %v567 = vunpack.c.l.b16 %v253
      %v568 = vunpack.c.l.b16 %v254
      %v569 = vunpack.c.l.b16 %v255
      %v570 = vunpack.c.l.b16 %v256
      %v571 = vunpack.c.l.b16 %v257
      %v572 = vunpack.c.l.b16 %v258
      %v573 = vunpack.c.l.b16 %v259
      %v574 = vunpack.c.l.b16 %v260
      %v575 = vunpack.c.l.b16 %v261
      %v576 = vunpack.c.l.b16 %v262
      %v577 = vunpack.c.l.b16 %v263
      %v578 = vunpack.c.l.b16 %v264
      %v579 = vunpack.c.l.b16 %v265
      %v580 = vunpack.c.l.b16 %v266
      %v581 = vunpack.c.l.b16 %v267
      %v582 = vunpack.c.l.b16 %v268
      %v583 = vunpack.c.l.b16 %v269
      %v584 = vunpack.c.l.b16 %v270
      %v585 = vunpack.c.l.b16 %v271
      %v586 = vunpack.c.l.b16 %v272
      %v587 = vunpack.c.l.b16 %v273
      %v588 = vunpack.c.l.b16 %v274
      %v589 = vunpack.c.l.b16 %v275
      %v590 = vunpack.c.l.b16 %v276
      %v591 = vunpack.c.l.b16 %v277
      %v592 = vunpack.c.l.b16 %v278
      %v593 = vunpack.c.l.b16 %v279
      %v594 = vunpack.c.l.b16 %v280
      %v595 = vunpack.c.l.b16 %v281
      %v596 = vunpack.c.l.b16 %v282
      %v597 = vunpack.c.l.b16 %v283
      %v598 = vpack.c.b16 %v567, %v566
      %v599 = vpack.c.b16 %v569, %v568
      %v600 = vpack.c.b16 %v571, %v570
      %v601 = vpack.c.b16 %v573, %v572
      %v602 = vpack.c.b16 %v575, %v574
      %v603 = vpack.c.b16 %v577, %v576
      %v604 = vpack.c.b16 %v579, %v578
      %v605 = vpack.c.b16 %v581, %v580
      %v606 = vpack.c.b16 %v583, %v582
      %v607 = vpack.c.b16 %v585, %v584
      %v608 = vpack.c.b16 %v587, %v586
      %v609 = vpack.c.b16 %v589, %v588
      %v610 = vpack.c.b16 %v591, %v590
      %v611 = vpack.c.b16 %v593, %v592
      %v612 = vpack.c.b16 %v595, %v594
      %v613 = vpack.c.b16 %v597, %v596
      %630 = vmatprep.subr.bf16.mxu0 0
      %631 = vmatpush1.bf16.msra.mxu0 %v598
      %632 = vmatprep.subr.bf16.mxu0 0
      %633 = vmatpush1.bf16.msra.mxu0 %v599
      %634 = vmatprep.subr.bf16.mxu0 0
      %635 = vmatpush1.bf16.msra.mxu0 %v600
      %636 = vmatprep.subr.bf16.mxu0 0
      %637 = vmatpush1.bf16.msra.mxu0 %v601
      %638 = vmatprep.subr.bf16.mxu0 0
      %639 = vmatpush1.bf16.msra.mxu0 %v602
      %640 = vmatprep.subr.bf16.mxu0 0
      %641 = vmatpush1.bf16.msra.mxu0 %v603
      %642 = vmatprep.subr.bf16.mxu0 0
      %643 = vmatpush1.bf16.msra.mxu0 %v604
      %644 = vmatprep.subr.bf16.mxu0 0
      %645 = vmatpush1.bf16.msra.mxu0 %v605
      %646 = vmatprep.subr.bf16.mxu0 0
      %647 = vmatpush1.bf16.msra.mxu0 %v606
      %648 = vmatprep.subr.bf16.mxu0 0
      %649 = vmatpush1.bf16.msra.mxu0 %v607
      %650 = vmatprep.subr.bf16.mxu0 0
      %651 = vmatpush1.bf16.msra.mxu0 %v608
      %652 = vmatprep.subr.bf16.mxu0 0
      %653 = vmatpush1.bf16.msra.mxu0 %v609
      %654 = vmatprep.subr.bf16.mxu0 0
      %655 = vmatpush1.bf16.msra.mxu0 %v610
      %656 = vmatprep.subr.bf16.mxu0 0
      %657 = vmatpush1.bf16.msra.mxu0 %v611
      %658 = vmatprep.subr.bf16.mxu0 0
      %659 = vmatpush1.bf16.msra.mxu0 %v612
      %660 = vmatprep.subr.bf16.mxu0 0
      %661 = vmatpush1.bf16.msra.mxu0 %v613
      %662 = vmatprep.mubr.bf16.mxu0 %v435
      %663 = vmatmul.mubr.bf16.gmra.mrb[0].mxu0 %v434
      %v664 = vpop.f32.mrb[0].mxu0
      %v665 = vadd.f32 0.0, %v664
      %v666 = vpop.f32.mrb[0].mxu0
      %v667 = vpop.f32.mrb[0].mxu0
      %v668 = vadd.f32 0.0, %v667
      %v669 = vpop.f32.mrb[0].mxu0
      %670 = vmatprep.mubr.bf16.mxu0 %v437
      %671 = vmatmul.mubr.bf16.gmra.mrb[0].mxu0 %v436
      %v672 = vpop.f32.mrb[0].mxu0
      %v673 = vadd.f32 0.0, %v672
      %v674 = vpop.f32.mrb[0].mxu0
      %v675 = vpop.f32.mrb[0].mxu0
      %v676 = vadd.f32 0.0, %v675
      %v677 = vpop.f32.mrb[0].mxu0
      %678 = vmatprep.mubr.bf16.mxu0 %v439
      %679 = vmatmul.mubr.bf16.gmra.mrb[0].mxu0 %v438
      %v680 = vpop.f32.mrb[0].mxu0
      %v681 = vadd.f32 0.0, %v680
      %v682 = vpop.f32.mrb[0].mxu0
      %v683 = vpop.f32.mrb[0].mxu0
      %v684 = vadd.f32 0.0, %v683
      %v685 = vpop.f32.mrb[0].mxu0
      %686 = vmatprep.mubr.bf16.mxu0 %v441
      %687 = vmatmul.mubr.bf16.gmra.mrb[0].mxu0 %v440
      %v688 = vpop.f32.mrb[0].mxu0
      %v689 = vadd.f32 0.0, %v688
      %v690 = vpop.f32.mrb[0].mxu0
      %v691 = vpop.f32.mrb[0].mxu0
      %v692 = vadd.f32 0.0, %v691
      %v693 = vpop.f32.mrb[0].mxu0
      %694 = vmatprep.mubr.bf16.mxu0 %v443
      %695 = vmatmul.mubr.bf16.gmra.mrb[0].mxu0 %v442
      %v696 = vpop.f32.mrb[0].mxu0
      %v697 = vadd.f32 0.0, %v696
      %v698 = vpop.f32.mrb[0].mxu0
      %v699 = vpop.f32.mrb[0].mxu0
      %v700 = vadd.f32 0.0, %v699
      %v701 = vpop.f32.mrb[0].mxu0
      %702 = vmatprep.mubr.bf16.mxu0 %v445
      %703 = vmatmul.mubr.bf16.gmra.mrb[0].mxu0 %v444
      %v704 = vpop.f32.mrb[0].mxu0
      %v705 = vadd.f32 0.0, %v704
      %v706 = vpop.f32.mrb[0].mxu0
      %v707 = vpop.f32.mrb[0].mxu0
      %v708 = vadd.f32 0.0, %v707
      %v709 = vpop.f32.mrb[0].mxu0
      %710 = vmatprep.mubr.bf16.mxu0 %v447
      %711 = vmatmul.mubr.bf16.gmra.mrb[0].mxu0 %v446
      %v712 = vpop.f32.mrb[0].mxu0
      %v713 = vadd.f32 0.0, %v712
      %v714 = vpop.f32.mrb[0].mxu0
      %v715 = vpop.f32.mrb[0].mxu0
      %v716 = vadd.f32 0.0, %v715
      %v717 = vpop.f32.mrb[0].mxu0
      %718 = vmatprep.mubr.bf16.mxu0 %v449
      %719 = vmatmul.mubr.bf16.gmra.mrb[0].mxu0 %v448
      %v720 = vpop.f32.mrb[0].mxu0
      %v721 = vadd.f32 0.0, %v720
      %v722 = vpop.f32.mrb[0].mxu0
      %v723 = vpop.f32.mrb[0].mxu0
      %v724 = vadd.f32 0.0, %v723
      %v725 = vpop.f32.mrb[0].mxu0
      %726 = vmatprep.mubr.bf16.mxu0 %v451
      %727 = vmatmul.mubr.bf16.gmra.mrb[0].mxu0 %v450
      %v728 = vpop.f32.mrb[0].mxu0
      %v729 = vadd.f32 0.0, %v728
      %v730 = vpop.f32.mrb[0].mxu0
      %v731 = vpop.f32.mrb[0].mxu0
      %v732 = vadd.f32 0.0, %v731
      %v733 = vpop.f32.mrb[0].mxu0
      %734 = vmatprep.mubr.bf16.mxu0 %v453
      %735 = vmatmul.mubr.bf16.gmra.mrb[0].mxu0 %v452
      %v736 = vpop.f32.mrb[0].mxu0
      %v737 = vadd.f32 0.0, %v736
      %v738 = vpop.f32.mrb[0].mxu0
      %v739 = vpop.f32.mrb[0].mxu0
      %v740 = vadd.f32 0.0, %v739
      %v741 = vpop.f32.mrb[0].mxu0
      %742 = vmatprep.mubr.bf16.mxu0 %v455
      %743 = vmatmul.mubr.bf16.gmra.mrb[0].mxu0 %v454
      %v744 = vpop.f32.mrb[0].mxu0
      %v745 = vadd.f32 0.0, %v744
      %v746 = vpop.f32.mrb[0].mxu0
      %v747 = vpop.f32.mrb[0].mxu0
      %v748 = vadd.f32 0.0, %v747
      %v749 = vpop.f32.mrb[0].mxu0
      %750 = vmatprep.mubr.bf16.mxu0 %v457
      %751 = vmatmul.mubr.bf16.gmra.mrb[0].mxu0 %v456
      %v752 = vpop.f32.mrb[0].mxu0
      %v753 = vadd.f32 0.0, %v752
      %v754 = vpop.f32.mrb[0].mxu0
      %v755 = vpop.f32.mrb[0].mxu0
      %v756 = vadd.f32 0.0, %v755
      %v757 = vpop.f32.mrb[0].mxu0
      %758 = vmatprep.mubr.bf16.mxu0 %v459
      %759 = vmatmul.mubr.bf16.gmra.mrb[0].mxu0 %v458
      %v760 = vpop.f32.mrb[0].mxu0
      %v761 = vadd.f32 0.0, %v760
      %v762 = vpop.f32.mrb[0].mxu0
      %v763 = vpop.f32.mrb[0].mxu0
      %v764 = vadd.f32 0.0, %v763
      %v765 = vpop.f32.mrb[0].mxu0
      %766 = vmatprep.mubr.bf16.mxu0 %v461
      %767 = vmatmul.mubr.bf16.gmra.mrb[0].mxu0 %v460
      %v768 = vpop.f32.mrb[0].mxu0
      %v769 = vadd.f32 0.0, %v768
      %v770 = vpop.f32.mrb[0].mxu0
      %v771 = vpop.f32.mrb[0].mxu0
      %v772 = vadd.f32 0.0, %v771
      %v773 = vpop.f32.mrb[0].mxu0
      %774 = vmatprep.mubr.bf16.mxu0 %v463
      %775 = vmatmul.mubr.bf16.gmra.mrb[0].mxu0 %v462
      %v776 = vpop.f32.mrb[0].mxu0
      %v777 = vadd.f32 0.0, %v776
      %v778 = vpop.f32.mrb[0].mxu0
      %v779 = vpop.f32.mrb[0].mxu0
      %v780 = vadd.f32 0.0, %v779
      %v781 = vpop.f32.mrb[0].mxu0
      %782 = vmatprep.mubr.bf16.mxu0 %v465
      %783 = vmatmul.mubr.bf16.gmra.mrb[0].mxu0 %v464
      %v784 = vpop.f32.mrb[0].mxu0
      %v785 = vadd.f32 0.0, %v784
      %v786 = vpop.f32.mrb[0].mxu0
      %v787 = vpop.f32.mrb[0].mxu0
      %v788 = vadd.f32 0.0, %v787
      %v789 = vpop.f32.mrb[0].mxu0
      %790 = vmatprep.mubr.bf16.mxu0 %v467
      %791 = vmatmul.mubr.bf16.gmra.mrb[0].mxu0 %v466
      %v792 = vpop.f32.mrb[0].mxu0
      %v793 = vadd.f32 0.0, %v792
      %v794 = vpop.f32.mrb[0].mxu0
      %v795 = vpop.f32.mrb[0].mxu0
      %v796 = vadd.f32 0.0, %v795
      %v797 = vpop.f32.mrb[0].mxu0
      %798 = vmatprep.mubr.bf16.mxu0 %v469
      %799 = vmatmul.mubr.bf16.gmra.mrb[0].mxu0 %v468
      %v800 = vpop.f32.mrb[0].mxu0
      %v801 = vadd.f32 0.0, %v800
      %v802 = vpop.f32.mrb[0].mxu0
      %v803 = vpop.f32.mrb[0].mxu0
      %v804 = vadd.f32 0.0, %v803
      %v805 = vpop.f32.mrb[0].mxu0
      %806 = vmatprep.mubr.bf16.mxu0 %v471
      %807 = vmatmul.mubr.bf16.gmra.mrb[0].mxu0 %v470
      %v808 = vpop.f32.mrb[0].mxu0
      %v809 = vadd.f32 0.0, %v808
      %v810 = vpop.f32.mrb[0].mxu0
      %v811 = vpop.f32.mrb[0].mxu0
      %v812 = vadd.f32 0.0, %v811
      %v813 = vpop.f32.mrb[0].mxu0
      %814 = vmatprep.mubr.bf16.mxu0 %v473
      %815 = vmatmul.mubr.bf16.gmra.mrb[0].mxu0 %v472
      %v816 = vpop.f32.mrb[0].mxu0
      %v817 = vadd.f32 0.0, %v816
      %v818 = vpop.f32.mrb[0].mxu0
      %v819 = vpop.f32.mrb[0].mxu0
      %v820 = vadd.f32 0.0, %v819
      %v821 = vpop.f32.mrb[0].mxu0
      %822 = vmatprep.mubr.bf16.mxu0 %v475
      %823 = vmatmul.mubr.bf16.gmra.mrb[0].mxu0 %v474
      %v824 = vpop.f32.mrb[0].mxu0
      %v825 = vadd.f32 0.0, %v824
      %v826 = vpop.f32.mrb[0].mxu0
      %v827 = vpop.f32.mrb[0].mxu0
      %v828 = vadd.f32 0.0, %v827
      %v829 = vpop.f32.mrb[0].mxu0
      %830 = vmatprep.mubr.bf16.mxu0 %v477
      %831 = vmatmul.mubr.bf16.gmra.mrb[0].mxu0 %v476
      %v832 = vpop.f32.mrb[0].mxu0
      %v833 = vadd.f32 0.0, %v832
      %v834 = vpop.f32.mrb[0].mxu0
      %v835 = vpop.f32.mrb[0].mxu0
      %v836 = vadd.f32 0.0, %v835
      %v837 = vpop.f32.mrb[0].mxu0
      %838 = vmatprep.mubr.bf16.mxu0 %v479
      %839 = vmatmul.mubr.bf16.gmra.mrb[0].mxu0 %v478
      %v840 = vpop.f32.mrb[0].mxu0
      %v841 = vadd.f32 0.0, %v840
      %v842 = vpop.f32.mrb[0].mxu0
      %v843 = vpop.f32.mrb[0].mxu0
      %v844 = vadd.f32 0.0, %v843
      %v845 = vpop.f32.mrb[0].mxu0
      %846 = vmatprep.mubr.bf16.mxu0 %v481
      %847 = vmatmul.mubr.bf16.gmra.mrb[0].mxu0 %v480
      %v848 = vpop.f32.mrb[0].mxu0
      %v849 = vadd.f32 0.0, %v848
      %v850 = vpop.f32.mrb[0].mxu0
      %v851 = vpop.f32.mrb[0].mxu0
      %v852 = vadd.f32 0.0, %v851
      %v853 = vpop.f32.mrb[0].mxu0
      %854 = vmatprep.mubr.bf16.mxu0 %v483
      %855 = vmatmul.mubr.bf16.gmra.mrb[0].mxu0 %v482
      %v856 = vpop.f32.mrb[0].mxu0
      %v857 = vadd.f32 0.0, %v856
      %v858 = vpop.f32.mrb[0].mxu0
      %v859 = vpop.f32.mrb[0].mxu0
      %v860 = vadd.f32 0.0, %v859
      %v861 = vpop.f32.mrb[0].mxu0
      %862 = vdwg.mxu0
      %v863 = vmax.f32 %v665, 0.0
      %v864 = vmax.f32 %v668, 0.0
      %v865 = vmax.f32 %v673, 0.0
      %v866 = vmax.f32 %v676, 0.0
      %v867 = vmax.f32 %v681, 0.0
      %v868 = vmax.f32 %v684, 0.0
      %v869 = vmax.f32 %v689, 0.0
      %v870 = vmax.f32 %v692, 0.0
      %v871 = vmax.f32 %v697, 0.0
      %v872 = vmax.f32 %v700, 0.0
      %v873 = vmax.f32 %v705, 0.0
      %v874 = vmax.f32 %v708, 0.0
      %v875 = vmax.f32 %v713, 0.0
      %v876 = vmax.f32 %v716, 0.0
      %v877 = vmax.f32 %v721, 0.0
      %v878 = vmax.f32 %v724, 0.0
      %v879 = vmax.f32 %v729, 0.0
      %v880 = vmax.f32 %v732, 0.0
      %v881 = vmax.f32 %v737, 0.0
      %v882 = vmax.f32 %v740, 0.0
      %v883 = vmax.f32 %v745, 0.0
      %v884 = vmax.f32 %v748, 0.0
      %v885 = vmax.f32 %v753, 0.0
      %v886 = vmax.f32 %v756, 0.0
      %v887 = vmax.f32 %v761, 0.0
      %v888 = vmax.f32 %v764, 0.0
      %v889 = vmax.f32 %v769, 0.0
      %v890 = vmax.f32 %v772, 0.0
      %v891 = vmax.f32 %v777, 0.0
      %v892 = vmax.f32 %v780, 0.0
      %v893 = vmax.f32 %v785, 0.0
      %v894 = vmax.f32 %v788, 0.0
      %v895 = vmax.f32 %v793, 0.0
      %v896 = vmax.f32 %v796, 0.0
      %v897 = vmax.f32 %v801, 0.0
      %v898 = vmax.f32 %v804, 0.0
      %v899 = vmax.f32 %v809, 0.0
      %v900 = vmax.f32 %v812, 0.0
      %v901 = vmax.f32 %v817, 0.0
      %v902 = vmax.f32 %v820, 0.0
      %v903 = vmax.f32 %v825, 0.0
      %v904 = vmax.f32 %v828, 0.0
      %v905 = vmax.f32 %v833, 0.0
      %v906 = vmax.f32 %v836, 0.0
      %v907 = vmax.f32 %v841, 0.0
      %v908 = vmax.f32 %v844, 0.0
      %v909 = vmax.f32 %v849, 0.0
      %v910 = vmax.f32 %v852, 0.0
      %v911 = vmax.f32 %v857, 0.0
      %v912 = vmax.f32 %v860, 0.0
      %v913 = vpack.c.bf16 %v864, %v863
      %v914 = vpack.c.bf16 %v866, %v865
      %v915 = vpack.c.bf16 %v868, %v867
      %v916 = vpack.c.bf16 %v870, %v869
      %v917 = vpack.c.bf16 %v872, %v871
      %v918 = vpack.c.bf16 %v874, %v873
      %v919 = vpack.c.bf16 %v876, %v875
      %v920 = vpack.c.bf16 %v878, %v877
      %v921 = vpack.c.bf16 %v880, %v879
      %v922 = vpack.c.bf16 %v882, %v881
      %v923 = vpack.c.bf16 %v884, %v883
      %v924 = vpack.c.bf16 %v886, %v885
      %v925 = vpack.c.bf16 %v888, %v887
      %v926 = vpack.c.bf16 %v890, %v889
      %v927 = vpack.c.bf16 %v892, %v891
      %v928 = vpack.c.bf16 %v894, %v893
      %v929 = vpack.c.bf16 %v896, %v895
      %v930 = vpack.c.bf16 %v898, %v897
      %v931 = vpack.c.bf16 %v900, %v899
      %v932 = vpack.c.bf16 %v902, %v901
      %v933 = vpack.c.bf16 %v904, %v903
      %v934 = vpack.c.bf16 %v906, %v905
      %v935 = vpack.c.bf16 %v908, %v907
      %v936 = vpack.c.bf16 %v910, %v909
      %v937 = vpack.c.bf16 %v912, %v911
      %v963 = vunpack.c.l.b16 %v913
      %v964 = vunpack.c.h.b16 %v913
      %v965 = vunpack.c.l.b16 %v914
      %v966 = vunpack.c.h.b16 %v914
      %v967 = vunpack.c.l.b16 %v915
      %v968 = vunpack.c.h.b16 %v915
      %v969 = vunpack.c.l.b16 %v916
      %v970 = vunpack.c.h.b16 %v916
      %v971 = vunpack.c.l.b16 %v917
      %v972 = vunpack.c.h.b16 %v917
      %v973 = vunpack.c.l.b16 %v918
      %v974 = vunpack.c.h.b16 %v918
      %v975 = vunpack.c.l.b16 %v919
      %v976 = vunpack.c.h.b16 %v919
      %v977 = vunpack.c.l.b16 %v920
      %v978 = vunpack.c.h.b16 %v920
      %v979 = vunpack.c.l.b16 %v921
      %v980 = vunpack.c.h.b16 %v921
      %v981 = vunpack.c.l.b16 %v922
      %v982 = vunpack.c.h.b16 %v922
      %v983 = vunpack.c.l.b16 %v923
      %v984 = vunpack.c.h.b16 %v923
      %v985 = vunpack.c.l.b16 %v924
      %v986 = vunpack.c.h.b16 %v924
      %v987 = vunpack.c.l.b16 %v925
      %v988 = vunpack.c.h.b16 %v925
      %v989 = vunpack.c.l.b16 %v926
      %v990 = vunpack.c.h.b16 %v926
      %v991 = vunpack.c.l.b16 %v927
      %v992 = vunpack.c.h.b16 %v927
      %v993 = vunpack.c.l.b16 %v928
      %v994 = vunpack.c.h.b16 %v928
      %v995 = vunpack.c.l.b16 %v929
      %v996 = vunpack.c.h.b16 %v929
      %v997 = vunpack.c.l.b16 %v930
      %v998 = vunpack.c.h.b16 %v930
      %v999 = vunpack.c.l.b16 %v931
      %v1000 = vunpack.c.h.b16 %v931
      %v1001 = vunpack.c.l.b16 %v932
      %v1002 = vunpack.c.h.b16 %v932
      %v1003 = vunpack.c.l.b16 %v933
      %v1004 = vunpack.c.h.b16 %v933
      %v1005 = vunpack.c.l.b16 %v934
      %v1006 = vunpack.c.h.b16 %v934
      %v1007 = vunpack.c.l.b16 %v935
      %v1008 = vunpack.c.h.b16 %v935
      %v1009 = vunpack.c.l.b16 %v936
      %v1010 = vunpack.c.h.b16 %v936
      %v1011 = vunpack.c.l.b16 %v937
      %v1012 = vunpack.c.h.b16 %v937
      %v1013 = vpack.c.b16 %v963, %v963
      %v1014 = vpack.c.b16 %v964, %v964
      %v1015 = vpack.c.b16 %v965, %v965
      %v1016 = vpack.c.b16 %v966, %v966
      %v1017 = vpack.c.b16 %v967, %v967
      %v1018 = vpack.c.b16 %v968, %v968
      %v1019 = vpack.c.b16 %v969, %v969
      %v1020 = vpack.c.b16 %v970, %v970
      %v1021 = vpack.c.b16 %v971, %v971
      %v1022 = vpack.c.b16 %v972, %v972
      %v1023 = vpack.c.b16 %v973, %v973
      %v1024 = vpack.c.b16 %v974, %v974
      %v1025 = vpack.c.b16 %v975, %v975
      %v1026 = vpack.c.b16 %v976, %v976
      %v1027 = vpack.c.b16 %v977, %v977
      %v1028 = vpack.c.b16 %v978, %v978
      %v1029 = vpack.c.b16 %v979, %v979
      %v1030 = vpack.c.b16 %v980, %v980
      %v1031 = vpack.c.b16 %v981, %v981
      %v1032 = vpack.c.b16 %v982, %v982
      %v1033 = vpack.c.b16 %v983, %v983
      %v1034 = vpack.c.b16 %v984, %v984
      %v1035 = vpack.c.b16 %v985, %v985
      %v1036 = vpack.c.b16 %v986, %v986
      %v1037 = vpack.c.b16 %v987, %v987
      %v1038 = vpack.c.b16 %v988, %v988
      %v1039 = vpack.c.b16 %v989, %v989
      %v1040 = vpack.c.b16 %v990, %v990
      %v1041 = vpack.c.b16 %v991, %v991
      %v1042 = vpack.c.b16 %v992, %v992
      %v1043 = vpack.c.b16 %v993, %v993
      %v1044 = vpack.c.b16 %v994, %v994
      %v1045 = vpack.c.b16 %v995, %v995
      %v1046 = vpack.c.b16 %v996, %v996
      %v1047 = vpack.c.b16 %v997, %v997
      %v1048 = vpack.c.b16 %v998, %v998
      %v1049 = vpack.c.b16 %v999, %v999
      %v1050 = vpack.c.b16 %v1000, %v1000
      %v1051 = vpack.c.b16 %v1001, %v1001
      %v1052 = vpack.c.b16 %v1002, %v1002
      %v1053 = vpack.c.b16 %v1003, %v1003
      %v1054 = vpack.c.b16 %v1004, %v1004
      %v1055 = vpack.c.b16 %v1005, %v1005
      %v1056 = vpack.c.b16 %v1006, %v1006
      %v1057 = vpack.c.b16 %v1007, %v1007
      %v1058 = vpack.c.b16 %v1008, %v1008
      %v1059 = vpack.c.b16 %v1009, %v1009
      %v1060 = vpack.c.b16 %v1010, %v1010
      %v1061 = vpack.c.b16 %v1011, %v1011
      %v1062 = vpack.c.b16 %v1012, %v1012
      %1113 = vst [vmem:[%s148] sm:$0xf] %v1013
      %1114 = vst [vmem:[%s148 + $0x4] sm:$0xf] %v1014
      %1115 = vst [vmem:[%s148 + $0x8] sm:$0xf] %v1015
      %1116 = vst [vmem:[%s148 + $0xc] sm:$0xf] %v1016
      %1117 = vst [vmem:[%s148 + $0x10] sm:$0xf] %v1017
      %1118 = vst [vmem:[%s148 + $0x14] sm:$0xf] %v1018
      %1119 = vst [vmem:[%s148 + $0x18] sm:$0xf] %v1019
      %1120 = vst [vmem:[%s148 + $0x1c] sm:$0xf] %v1020
      %1121 = vst [vmem:[%s148 + $0x20] sm:$0xf] %v1021
      %1122 = vst [vmem:[%s148 + $0x24] sm:$0xf] %v1022
      %1123 = vst [vmem:[%s148 + $0x28] sm:$0xf] %v1023
      %1124 = vst [vmem:[%s148 + $0x2c] sm:$0xf] %v1024
      %1125 = vst [vmem:[%s148 + $0x30] sm:$0xf] %v1025
      %1126 = vst [vmem:[%s148 + $0x34] sm:$0xf] %v1026
      %1127 = vst [vmem:[%s148 + $0x38] sm:$0xf] %v1027
      %1128 = vst [vmem:[%s148 + $0x3c] sm:$0xf] %v1028
      %1129 = vst [vmem:[%s148 + $0x40] sm:$0xf] %v1029
      %1130 = vst [vmem:[%s148 + $0x44] sm:$0xf] %v1030
      %1131 = vst [vmem:[%s148 + $0x48] sm:$0xf] %v1031
      %1132 = vst [vmem:[%s148 + $0x4c] sm:$0xf] %v1032
      %1133 = vst [vmem:[%s148 + $0x50] sm:$0xf] %v1033
      %1134 = vst [vmem:[%s148 + $0x54] sm:$0xf] %v1034
      %1135 = vst [vmem:[%s148 + $0x58] sm:$0xf] %v1035
      %1136 = vst [vmem:[%s148 + $0x5c] sm:$0xf] %v1036
      %1137 = vst [vmem:[%s148 + $0x60] sm:$0xf] %v1037
      %1138 = vst [vmem:[%s148 + $0x64] sm:$0xf] %v1038
      %1139 = vst [vmem:[%s148 + $0x68] sm:$0xf] %v1039
      %1140 = vst [vmem:[%s148 + $0x6c] sm:$0xf] %v1040
      %1141 = vst [vmem:[%s148 + $0x70] sm:$0xf] %v1041
      %1142 = vst [vmem:[%s148 + $0x74] sm:$0xf] %v1042
      %1143 = vst [vmem:[%s148 + $0x78] sm:$0xf] %v1043
      %1144 = vst [vmem:[%s148 + $0x7c] sm:$0xf] %v1044
      %1145 = vst [vmem:[%s148 + $0x80] sm:$0xf] %v1045
      %1146 = vst [vmem:[%s148 + $0x84] sm:$0xf] %v1046
      %1147 = vst [vmem:[%s148 + $0x88] sm:$0xf] %v1047
      %1148 = vst [vmem:[%s148 + $0x8c] sm:$0xf] %v1048
      %1149 = vst [vmem:[%s148 + $0x90] sm:$0xf] %v1049
      %1150 = vst [vmem:[%s148 + $0x94] sm:$0xf] %v1050
      %1151 = vst [vmem:[%s148 + $0x98] sm:$0xf] %v1051
      %1152 = vst [vmem:[%s148 + $0x9c] sm:$0xf] %v1052
      %1153 = vst [vmem:[%s148 + $0xa0] sm:$0xf] %v1053
      %1154 = vst [vmem:[%s148 + $0xa4] sm:$0xf] %v1054
      %1155 = vst [vmem:[%s148 + $0xa8] sm:$0xf] %v1055
      %1156 = vst [vmem:[%s148 + $0xac] sm:$0xf] %v1056
      %1157 = vst [vmem:[%s148 + $0xb0] sm:$0xf] %v1057
      %1158 = vst [vmem:[%s148 + $0xb4] sm:$0xf] %v1058
      %1159 = vst [vmem:[%s148 + $0xb8] sm:$0xf] %v1059
      %1160 = vst [vmem:[%s148 + $0xbc] sm:$0xf] %v1060
      %1161 = vst [vmem:[%s148 + $0xc0] sm:$0xf] %v1061
      %1162 = vst [vmem:[%s148 + $0xc4] sm:$0xf] %v1062
      %s1163 = smul.u32 50, %s13
      %p1164 = scmp.lt.s32.totalorder %s1163, 99
      %s1165 = scalar_select %p1164, %s1163, 99
      %s1166 = smul.addr %s1165, 4
      %s1167 = scalar_lea.vmem %s2, %s1166
      // Predicated region
      $region29: #{dqn_forward.4} parent=27 // pred_check
        %p1168 = pneg %p78
      $region30: #{dqn_forward.4} parent=27 // pred_check_branch
        %1170 = sbr.rel (%p1168) target = $region32
      $region31: #{dqn_forward.4} parent=27 // pred_region
        %s1171 = smul.u32 50, %s13
      $region32: #{dqn_forward.4} parent=27 // pred_fallthru
        _
    $region28: #{dqn_forward.4} parent=5 // pred_fallthru
      _
    %p1172 = scmp.le.s32.totalorder 2, %s8
    // Predicated region
    $region33: #{dqn_forward.4} parent=5 // pred_check
      %p1173 = pneg %p1172
    $region34: #{dqn_forward.4} parent=5 // pred_check_branch
      %1175 = sbr.rel (%p1173) target = $region36
    $region35: #{dqn_forward.4} parent=5 // pred_region
      %s1176 = ssub.s32 %s8, 2
      // Predicated region
      $region37: #{dqn_forward.4} parent=35 // pred_check
        %p1177 = pneg %p84
      $region38: #{dqn_forward.4} parent=35 // pred_check_branch
        %1179 = sbr.rel (%p1177) target = $region40
      $region39: #{dqn_forward.4} parent=35 // pred_region
        %s1180 = smul.u32 50, %s14
        %p1181 = scmp.lt.s32.totalorder %s1180, 99
        %s1182 = scalar_select %p1181, %s1180, 99
        %s1183 = smul.addr %s1182, 4
        %s1184 = scalar_lea.vmem %s2, %s1183
      $region40: #{dqn_forward.4} parent=35 // pred_fallthru
        _
    $region36: #{dqn_forward.4} parent=5 // pred_fallthru
      _
  $region6: #{dqn_forward.4} parent=0 // loop_footer
    %s12 = sadd.s32 1, %s8
  $region7: #{dqn_forward.4} parent=0 // loop_footer_branch
    %7 = sbr.rel target = $region3
  $region8: #{dqn_forward.4} parent=0 // loop_exit
    _

// kernel: dqn_forward.5
$region0: #{dqn_forward.5}
  #allocation0 [shape = 'u32[]', space=smem, size = 0x4, offset = 0x4, fixed_abs, tag = 'smem constant byte address 0x4 - core index']
  #allocation1 [shape = 'u32[144,128]{1,0:T(1,128)}', space=vmem, size = 0x12000, scoped, tag = 'internal scratch']
  %s0 = inlined_call_operand.vmem [shape: bf16[176,512], index: 0, kind: input, shape index: {}]
  %s1 = inlined_call_operand.vmem [shape: bf16[512,128], index: 1, kind: input, shape index: {}]
  %s2 = inlined_call_operand.vmem [shape: bf16[176,128], index: 2, kind: output, shape index: {}]
  %s3 = sld [smem:[#allocation0]]
  $region18: #{dqn_forward.5} parent=0
    _
  %s5 = ssub.s32 1, %s3
  %s6 = scalar_select 0, %s5, %s3
  // Predicated region
  $region2: #{dqn_forward.5} parent=0 // pred_check
    _
  $region3: #{dqn_forward.5} parent=0 // pred_check_branch
    %8 = sbr.rel (0) target = $region5
  $region4: #{dqn_forward.5} parent=0 // pred_region
    _
  $region5: #{dqn_forward.5} parent=0 // pred_fallthru
    _
  // Predicated region
  $region6: #{dqn_forward.5} parent=0 // pred_check
    _
  $region7: #{dqn_forward.5} parent=0 // pred_check_branch
    %10 = sbr.rel (0) target = $region9
  $region8: #{dqn_forward.5} parent=0 // pred_region
    _
  $region9: #{dqn_forward.5} parent=0 // pred_fallthru
    _
  %v12 = vld [vmem:[%s0] sm:$0xff]
  %v13 = vld [vmem:[%s0 + $0x8] sm:$0xff]
  %v14 = vld [vmem:[%s0 + $0x10] sm:$0xff]
  %v15 = vld [vmem:[%s0 + $0x18] sm:$0xff]
  %v16 = vld [vmem:[%s0 + $0x20] sm:$0xff]
  %v17 = vld [vmem:[%s0 + $0x28] sm:$0xff]
  %v18 = vld [vmem:[%s0 + $0x30] sm:$0xff]
  %v19 = vld [vmem:[%s0 + $0x38] sm:$0xff]
  %v20 = vld [vmem:[%s0 + $0x40] sm:$0xff]
  %v21 = vld [vmem:[%s0 + $0x48] sm:$0xff]
  %v22 = vld [vmem:[%s0 + $0x50] sm:$0xff]
  %v23 = vld [vmem:[%s0 + $0x58] sm:$0xff]
  %v24 = vld [vmem:[%s0 + $0x60] sm:$0xff]
  %v25 = vld [vmem:[%s0 + $0x68] sm:$0xff]
  %v26 = vld [vmem:[%s0 + $0x70] sm:$0xff]
  %v27 = vld [vmem:[%s0 + $0x78] sm:$0xff]
  %v28 = vld [vmem:[%s0 + $0x80] sm:$0xff]
  %v29 = vld [vmem:[%s0 + $0x88] sm:$0xff]
  %v30 = vld [vmem:[%s0 + $0x90] sm:$0xff]
  %v31 = vld [vmem:[%s0 + $0x98] sm:$0xff]
  %v32 = vld [vmem:[%s0 + $0xa0] sm:$0xff]
  %v33 = vld [vmem:[%s0 + $0xa8] sm:$0xff]
  %v34 = vld [vmem:[%s0 + $0xb0] sm:$0xff]
  %v35 = vld [vmem:[%s0 + $0xb8] sm:$0xff]
  %v36 = vld [vmem:[%s0 + $0xc0] sm:$0xff]
  %v37 = vld [vmem:[%s0 + $0xc8] sm:$0xff]
  %v38 = vld [vmem:[%s0 + $0xd0] sm:$0xff]
  %v39 = vld [vmem:[%s0 + $0xd8] sm:$0xff]
  %v40 = vld [vmem:[%s0 + $0xe0] sm:$0xff]
  %v41 = vld [vmem:[%s0 + $0xe8] sm:$0xff]
  %v42 = vld [vmem:[%s0 + $0xf0] sm:$0xff]
  %v43 = vld [vmem:[%s0 + $0xf8] sm:$0xff]
  %v44 = vld [vmem:[%s0 + $0x100] sm:$0xff]
  %v45 = vld [vmem:[%s0 + $0x108] sm:$0xff]
  %v46 = vld [vmem:[%s0 + $0x110] sm:$0xff]
  %v47 = vld [vmem:[%s0 + $0x118] sm:$0xff]
  %v48 = vld [vmem:[%s0 + $0x120] sm:$0xff]
  %v49 = vld [vmem:[%s0 + $0x128] sm:$0xff]
  %v50 = vld [vmem:[%s0 + $0x130] sm:$0xff]
  %v51 = vld [vmem:[%s0 + $0x138] sm:$0xff]
  %v52 = vld [vmem:[%s0 + $0x140] sm:$0xff]
  %v53 = vld [vmem:[%s0 + $0x148] sm:$0xff]
  %v54 = vld [vmem:[%s0 + $0x150] sm:$0xff]
  %v55 = vld [vmem:[%s0 + $0x158] sm:$0xff]
  %v56 = vld [vmem:[%s1] sm:$0xf]
  %v57 = vld [vmem:[%s1 + $0x4] sm:$0xf]
  %v58 = vld [vmem:[%s1 + $0x8] sm:$0xf]
  %v59 = vld [vmem:[%s1 + $0xc] sm:$0xf]
  %v60 = vld [vmem:[%s1 + $0x10] sm:$0xf]
  %v61 = vld [vmem:[%s1 + $0x14] sm:$0xf]
  %v62 = vld [vmem:[%s1 + $0x18] sm:$0xf]
  %v63 = vld [vmem:[%s1 + $0x1c] sm:$0xf]
  %v64 = vld [vmem:[%s1 + $0x20] sm:$0xf]
  %v65 = vld [vmem:[%s1 + $0x24] sm:$0xf]
  %v66 = vld [vmem:[%s1 + $0x28] sm:$0xf]
  %v67 = vld [vmem:[%s1 + $0x2c] sm:$0xf]
  %v68 = vld [vmem:[%s1 + $0x30] sm:$0xf]
  %v69 = vld [vmem:[%s1 + $0x34] sm:$0xf]
  %v70 = vld [vmem:[%s1 + $0x38] sm:$0xf]
  %v71 = vld [vmem:[%s1 + $0x3c] sm:$0xf]
  %v72 = vld [vmem:[%s1 + $0x40] sm:$0xf]
  %v73 = vld [vmem:[%s1 + $0x44] sm:$0xf]
  %v74 = vld [vmem:[%s1 + $0x48] sm:$0xf]
  %v75 = vld [vmem:[%s1 + $0x4c] sm:$0xf]
  %v76 = vld [vmem:[%s1 + $0x50] sm:$0xf]
  %v77 = vld [vmem:[%s1 + $0x54] sm:$0xf]
  %v78 = vld [vmem:[%s1 + $0x58] sm:$0xf]
  %v79 = vld [vmem:[%s1 + $0x5c] sm:$0xf]
  %v80 = vld [vmem:[%s1 + $0x60] sm:$0xf]
  %v81 = vld [vmem:[%s1 + $0x64] sm:$0xf]
  %v82 = vld [vmem:[%s1 + $0x68] sm:$0xf]
  %v83 = vld [vmem:[%s1 + $0x6c] sm:$0xf]
  %v84 = vld [vmem:[%s1 + $0x70] sm:$0xf]
  %v85 = vld [vmem:[%s1 + $0x74] sm:$0xf]
  %v86 = vld [vmem:[%s1 + $0x78] sm:$0xf]
  %v87 = vld [vmem:[%s1 + $0x7c] sm:$0xf]
  %v88 = vld [vmem:[%s1 + $0x80] sm:$0xf]
  %v89 = vld [vmem:[%s1 + $0x84] sm:$0xf]
  %v90 = vld [vmem:[%s1 + $0x88] sm:$0xf]
  %v91 = vld [vmem:[%s1 + $0x8c] sm:$0xf]
  %v92 = vld [vmem:[%s1 + $0x90] sm:$0xf]
  %v93 = vld [vmem:[%s1 + $0x94] sm:$0xf]
  %v94 = vld [vmem:[%s1 + $0x98] sm:$0xf]
  %v95 = vld [vmem:[%s1 + $0x9c] sm:$0xf]
  %v96 = vld [vmem:[%s1 + $0xa0] sm:$0xf]
  %v97 = vld [vmem:[%s1 + $0xa4] sm:$0xf]
  %v98 = vld [vmem:[%s1 + $0xa8] sm:$0xf]
  %v99 = vld [vmem:[%s1 + $0xac] sm:$0xf]
  %v100 = vld [vmem:[%s1 + $0xb0] sm:$0xf]
  %v101 = vld [vmem:[%s1 + $0xb4] sm:$0xf]
  %v102 = vld [vmem:[%s1 + $0xb8] sm:$0xf]
  %v103 = vld [vmem:[%s1 + $0xbc] sm:$0xf]
  %v104 = vld [vmem:[%s1 + $0xc0] sm:$0xf]
  %v105 = vld [vmem:[%s1 + $0xc4] sm:$0xf]
  %v106 = vld [vmem:[%s1 + $0xc8] sm:$0xf]
  %v107 = vld [vmem:[%s1 + $0xcc] sm:$0xf]
  %v108 = vld [vmem:[%s1 + $0xd0] sm:$0xf]
  %v109 = vld [vmem:[%s1 + $0xd4] sm:$0xf]
  %v110 = vld [vmem:[%s1 + $0xd8] sm:$0xf]
  %v111 = vld [vmem:[%s1 + $0xdc] sm:$0xf]
  %v112 = vld [vmem:[%s1 + $0xe0] sm:$0xf]
  %v113 = vld [vmem:[%s1 + $0xe4] sm:$0xf]
  %v114 = vld [vmem:[%s1 + $0xe8] sm:$0xf]
  %v115 = vld [vmem:[%s1 + $0xec] sm:$0xf]
  %v116 = vld [vmem:[%s1 + $0xf0] sm:$0xf]
  %v117 = vld [vmem:[%s1 + $0xf4] sm:$0xf]
  %v118 = vld [vmem:[%s1 + $0xf8] sm:$0xf]
  %v119 = vld [vmem:[%s1 + $0xfc] sm:$0xf]
  %v164 = vunpack.c.l.b16 %v12
  %v165 = vunpack.c.h.b16 %v12
  %v166 = vunpack.c.l.b16 %v13
  %v167 = vunpack.c.h.b16 %v13
  %v168 = vunpack.c.l.b16 %v14
  %v169 = vunpack.c.h.b16 %v14
  %v170 = vunpack.c.l.b16 %v15
  %v171 = vunpack.c.h.b16 %v15
  %v172 = vunpack.c.l.b16 %v16
  %v173 = vunpack.c.h.b16 %v16
  %v174 = vunpack.c.l.b16 %v17
  %v175 = vunpack.c.h.b16 %v17
  %v176 = vunpack.c.l.b16 %v18
  %v177 = vunpack.c.h.b16 %v18
  %v178 = vunpack.c.l.b16 %v19
  %v179 = vunpack.c.h.b16 %v19
  %v180 = vunpack.c.l.b16 %v20
  %v181 = vunpack.c.h.b16 %v20
  %v182 = vunpack.c.l.b16 %v21
  %v183 = vunpack.c.h.b16 %v21
  %v184 = vunpack.c.l.b16 %v22
  %v185 = vunpack.c.h.b16 %v22
  %v186 = vunpack.c.l.b16 %v23
  %v187 = vunpack.c.h.b16 %v23
  %v188 = vunpack.c.l.b16 %v24
  %v189 = vunpack.c.h.b16 %v24
  %v190 = vunpack.c.l.b16 %v25
  %v191 = vunpack.c.h.b16 %v25
  %v192 = vunpack.c.l.b16 %v26
  %v193 = vunpack.c.h.b16 %v26
  %v194 = vunpack.c.l.b16 %v27
  %v195 = vunpack.c.h.b16 %v27
  %v196 = vunpack.c.l.b16 %v28
  %v197 = vunpack.c.h.b16 %v28
  %v198 = vunpack.c.l.b16 %v29
  %v199 = vunpack.c.h.b16 %v29
  %v200 = vunpack.c.l.b16 %v30
  %v201 = vunpack.c.h.b16 %v30
  %v202 = vunpack.c.l.b16 %v31
  %v203 = vunpack.c.h.b16 %v31
  %v204 = vunpack.c.l.b16 %v32
  %v205 = vunpack.c.h.b16 %v32
  %v206 = vunpack.c.l.b16 %v33
  %v207 = vunpack.c.h.b16 %v33
  %v208 = vunpack.c.l.b16 %v34
  %v209 = vunpack.c.h.b16 %v34
  %v210 = vunpack.c.l.b16 %v35
  %v211 = vunpack.c.h.b16 %v35
  %v212 = vunpack.c.l.b16 %v36
  %v213 = vunpack.c.h.b16 %v36
  %v214 = vunpack.c.l.b16 %v37
  %v215 = vunpack.c.h.b16 %v37
  %v216 = vunpack.c.l.b16 %v38
  %v217 = vunpack.c.h.b16 %v38
  %v218 = vunpack.c.l.b16 %v39
  %v219 = vunpack.c.h.b16 %v39
  %v220 = vunpack.c.l.b16 %v40
  %v221 = vunpack.c.h.b16 %v40
  %v222 = vunpack.c.l.b16 %v41
  %v223 = vunpack.c.h.b16 %v41
  %v224 = vunpack.c.l.b16 %v42
  %v225 = vunpack.c.h.b16 %v42
  %v226 = vunpack.c.l.b16 %v43
  %v227 = vunpack.c.h.b16 %v43
  %v228 = vunpack.c.l.b16 %v44
  %v229 = vunpack.c.h.b16 %v44
  %v230 = vunpack.c.l.b16 %v45
  %v231 = vunpack.c.h.b16 %v45
  %v232 = vunpack.c.l.b16 %v46
  %v233 = vunpack.c.h.b16 %v46
  %v234 = vunpack.c.l.b16 %v47
  %v235 = vunpack.c.h.b16 %v47
  %v236 = vunpack.c.l.b16 %v48
  %v237 = vunpack.c.h.b16 %v48
  %v238 = vunpack.c.l.b16 %v49
  %v239 = vunpack.c.h.b16 %v49
  %v240 = vunpack.c.l.b16 %v50
  %v241 = vunpack.c.h.b16 %v50
  %v242 = vunpack.c.l.b16 %v51
  %v243 = vunpack.c.h.b16 %v51
  %v244 = vunpack.c.l.b16 %v52
  %v245 = vunpack.c.h.b16 %v52
  %v246 = vunpack.c.l.b16 %v53
  %v247 = vunpack.c.h.b16 %v53
  %v248 = vunpack.c.l.b16 %v54
  %v249 = vunpack.c.h.b16 %v54
  %v250 = vunpack.c.l.b16 %v55
  %v251 = vunpack.c.h.b16 %v55
  %v252 = vpack.c.b16 %v168, %v164
  %v253 = vpack.c.b16 %v169, %v165
  %v254 = vpack.c.b16 %v170, %v166
  %v255 = vpack.c.b16 %v171, %v167
  %v256 = vpack.c.b16 %v176, %v172
  %v257 = vpack.c.b16 %v177, %v173
  %v258 = vpack.c.b16 %v178, %v174
  %v259 = vpack.c.b16 %v179, %v175
  %v260 = vpack.c.b16 %v184, %v180
  %v261 = vpack.c.b16 %v185, %v181
  %v262 = vpack.c.b16 %v186, %v182
  %v263 = vpack.c.b16 %v187, %v183
  %v264 = vpack.c.b16 %v192, %v188
  %v265 = vpack.c.b16 %v193, %v189
  %v266 = vpack.c.b16 %v194, %v190
  %v267 = vpack.c.b16 %v195, %v191
  %v268 = vpack.c.b16 %v200, %v196
  %v269 = vpack.c.b16 %v201, %v197
  %v270 = vpack.c.b16 %v202, %v198
  %v271 = vpack.c.b16 %v203, %v199
  %v272 = vpack.c.b16 %v208, %v204
  %v273 = vpack.c.b16 %v209, %v205
  %v274 = vpack.c.b16 %v210, %v206
  %v275 = vpack.c.b16 %v211, %v207
  %v276 = vpack.c.b16 %v216, %v212
  %v277 = vpack.c.b16 %v217, %v213
  %v278 = vpack.c.b16 %v218, %v214
  %v279 = vpack.c.b16 %v219, %v215
  %v280 = vpack.c.b16 %v224, %v220
  %v281 = vpack.c.b16 %v225, %v221
  %v282 = vpack.c.b16 %v226, %v222
  %v283 = vpack.c.b16 %v227, %v223
  %v284 = vpack.c.b16 %v232, %v228
  %v285 = vpack.c.b16 %v233, %v229
  %v286 = vpack.c.b16 %v234, %v230
  %v287 = vpack.c.b16 %v235, %v231
  %v288 = vpack.c.b16 %v240, %v236
  %v289 = vpack.c.b16 %v241, %v237
  %v290 = vpack.c.b16 %v242, %v238
  %v291 = vpack.c.b16 %v243, %v239
  %v292 = vpack.c.b16 %v248, %v244
  %v293 = vpack.c.b16 %v249, %v245
  %v294 = vpack.c.b16 %v250, %v246
  %v295 = vpack.c.b16 %v251, %v247
  %v404 = vunpack.c.l.b16 %v56
  %v405 = vunpack.c.l.b16 %v57
  %v406 = vunpack.c.l.b16 %v58
  %v407 = vunpack.c.l.b16 %v59
  %v408 = vunpack.c.l.b16 %v60
  %v409 = vunpack.c.l.b16 %v61
  %v410 = vunpack.c.l.b16 %v62
  %v411 = vunpack.c.l.b16 %v63
  %v412 = vunpack.c.l.b16 %v64
  %v413 = vunpack.c.l.b16 %v65
  %v414 = vunpack.c.l.b16 %v66
  %v415 = vunpack.c.l.b16 %v67
  %v416 = vunpack.c.l.b16 %v68
  %v417 = vunpack.c.l.b16 %v69
  %v418 = vunpack.c.l.b16 %v70
  %v419 = vunpack.c.l.b16 %v71
  %v420 = vunpack.c.l.b16 %v72
  %v421 = vunpack.c.l.b16 %v73
  %v422 = vunpack.c.l.b16 %v74
  %v423 = vunpack.c.l.b16 %v75
  %v424 = vunpack.c.l.b16 %v76
  %v425 = vunpack.c.l.b16 %v77
  %v426 = vunpack.c.l.b16 %v78
  %v427 = vunpack.c.l.b16 %v79
  %v428 = vunpack.c.l.b16 %v80
  %v429 = vunpack.c.l.b16 %v81
  %v430 = vunpack.c.l.b16 %v82
  %v431 = vunpack.c.l.b16 %v83
  %v432 = vunpack.c.l.b16 %v84
  %v433 = vunpack.c.l.b16 %v85
  %v434 = vunpack.c.l.b16 %v86
  %v435 = vunpack.c.l.b16 %v87
  %v436 = vunpack.c.l.b16 %v88
  %v437 = vunpack.c.l.b16 %v89
  %v438 = vunpack.c.l.b16 %v90
  %v439 = vunpack.c.l.b16 %v91
  %v440 = vunpack.c.l.b16 %v92
  %v441 = vunpack.c.l.b16 %v93
  %v442 = vunpack.c.l.b16 %v94
  %v443 = vunpack.c.l.b16 %v95
  %v444 = vunpack.c.l.b16 %v96
  %v445 = vunpack.c.l.b16 %v97
  %v446 = vunpack.c.l.b16 %v98
  %v447 = vunpack.c.l.b16 %v99
  %v448 = vunpack.c.l.b16 %v100
  %v449 = vunpack.c.l.b16 %v101
  %v450 = vunpack.c.l.b16 %v102
  %v451 = vunpack.c.l.b16 %v103
  %v452 = vunpack.c.l.b16 %v104
  %v453 = vunpack.c.l.b16 %v105
  %v454 = vunpack.c.l.b16 %v106
  %v455 = vunpack.c.l.b16 %v107
  %v456 = vunpack.c.l.b16 %v108
  %v457 = vunpack.c.l.b16 %v109
  %v458 = vunpack.c.l.b16 %v110
  %v459 = vunpack.c.l.b16 %v111
  %v460 = vunpack.c.l.b16 %v112
  %v461 = vunpack.c.l.b16 %v113
  %v462 = vunpack.c.l.b16 %v114
  %v463 = vunpack.c.l.b16 %v115
  %v464 = vunpack.c.l.b16 %v116
  %v465 = vunpack.c.l.b16 %v117
  %v466 = vunpack.c.l.b16 %v118
  %v467 = vunpack.c.l.b16 %v119
  %v468 = vpack.c.b16 %v405, %v404
  %v469 = vpack.c.b16 %v407, %v406
  %v470 = vpack.c.b16 %v409, %v408
  %v471 = vpack.c.b16 %v411, %v410
  %v472 = vpack.c.b16 %v413, %v412
  %v473 = vpack.c.b16 %v415, %v414
  %v474 = vpack.c.b16 %v417, %v416
  %v475 = vpack.c.b16 %v419, %v418
  %v476 = vpack.c.b16 %v421, %v420
  %v477 = vpack.c.b16 %v423, %v422
  %v478 = vpack.c.b16 %v425, %v424
  %v479 = vpack.c.b16 %v427, %v426
  %v480 = vpack.c.b16 %v429, %v428
  %v481 = vpack.c.b16 %v431, %v430
  %v482 = vpack.c.b16 %v433, %v432
  %v483 = vpack.c.b16 %v435, %v434
  %v484 = vpack.c.b16 %v437, %v436
  %v485 = vpack.c.b16 %v439, %v438
  %v486 = vpack.c.b16 %v441, %v440
  %v487 = vpack.c.b16 %v443, %v442
  %v488 = vpack.c.b16 %v445, %v444
  %v489 = vpack.c.b16 %v447, %v446
  %v490 = vpack.c.b16 %v449, %v448
  %v491 = vpack.c.b16 %v451, %v450
  %v492 = vpack.c.b16 %v453, %v452
  %v493 = vpack.c.b16 %v455, %v454
  %v494 = vpack.c.b16 %v457, %v456
  %v495 = vpack.c.b16 %v459, %v458
  %v496 = vpack.c.b16 %v461, %v460
  %v497 = vpack.c.b16 %v463, %v462
  %v498 = vpack.c.b16 %v465, %v464
  %v499 = vpack.c.b16 %v467, %v466
  %532 = vmatprep.subr.bf16.mxu0 0
  %533 = vmatpush1.bf16.msra.mxu0 %v468
  %534 = vmatprep.subr.bf16.mxu0 0
  %535 = vmatpush1.bf16.msra.mxu0 %v469
  %536 = vmatprep.subr.bf16.mxu0 0
  %537 = vmatpush1.bf16.msra.mxu0 %v470
  %538 = vmatprep.subr.bf16.mxu0 0
  %539 = vmatpush1.bf16.msra.mxu0 %v471
  %540 = vmatprep.subr.bf16.mxu0 0
  %541 = vmatpush1.bf16.msra.mxu0 %v472
  %542 = vmatprep.subr.bf16.mxu0 0
  %543 = vmatpush1.bf16.msra.mxu0 %v473
  %544 = vmatprep.subr.bf16.mxu0 0
  %545 = vmatpush1.bf16.msra.mxu0 %v474
  %546 = vmatprep.subr.bf16.mxu0 0
  %547 = vmatpush1.bf16.msra.mxu0 %v475
  %548 = vmatprep.subr.bf16.mxu0 0
  %549 = vmatpush1.bf16.msra.mxu0 %v476
  %550 = vmatprep.subr.bf16.mxu0 0
  %551 = vmatpush1.bf16.msra.mxu0 %v477
  %552 = vmatprep.subr.bf16.mxu0 0
  %553 = vmatpush1.bf16.msra.mxu0 %v478
  %554 = vmatprep.subr.bf16.mxu0 0
  %555 = vmatpush1.bf16.msra.mxu0 %v479
  %556 = vmatprep.subr.bf16.mxu0 0
  %557 = vmatpush1.bf16.msra.mxu0 %v480
  %558 = vmatprep.subr.bf16.mxu0 0
  %559 = vmatpush1.bf16.msra.mxu0 %v481
  %560 = vmatprep.subr.bf16.mxu0 0
  %561 = vmatpush1.bf16.msra.mxu0 %v482
  %562 = vmatprep.subr.bf16.mxu0 0
  %563 = vmatpush1.bf16.msra.mxu0 %v483
  %564 = vmatprep.mubr.bf16.mxu0 %v253
  %565 = vmatmul.mubr.bf16.gmra.mrb[0].mxu0 %v252
  %v566 = vpop.f32.mrb[0].mxu0
  %v567 = vadd.f32 0.0, %v566
  %v568 = vpop.f32.mrb[0].mxu0
  %v569 = vpop.f32.mrb[0].mxu0
  %v570 = vadd.f32 0.0, %v569
  %v571 = vpop.f32.mrb[0].mxu0
  %572 = vmatprep.mubr.bf16.mxu0 %v257
  %573 = vmatmul.mubr.bf16.gmra.mrb[0].mxu0 %v256
  %v574 = vpop.f32.mrb[0].mxu0
  %v575 = vadd.f32 0.0, %v574
  %v576 = vpop.f32.mrb[0].mxu0
  %v577 = vpop.f32.mrb[0].mxu0
  %v578 = vadd.f32 0.0, %v577
  %v579 = vpop.f32.mrb[0].mxu0
  %580 = vmatprep.mubr.bf16.mxu0 %v261
  %581 = vmatmul.mubr.bf16.gmra.mrb[0].mxu0 %v260
  %v582 = vpop.f32.mrb[0].mxu0
  %v583 = vadd.f32 0.0, %v582
  %v584 = vpop.f32.mrb[0].mxu0
  %v585 = vpop.f32.mrb[0].mxu0
  %v586 = vadd.f32 0.0, %v585
  %v587 = vpop.f32.mrb[0].mxu0
  %588 = vmatprep.mubr.bf16.mxu0 %v265
  %589 = vmatmul.mubr.bf16.gmra.mrb[0].mxu0 %v264
  %v590 = vpop.f32.mrb[0].mxu0
  %v591 = vadd.f32 0.0, %v590
  %v592 = vpop.f32.mrb[0].mxu0
  %v593 = vpop.f32.mrb[0].mxu0
  %v594 = vadd.f32 0.0, %v593
  %v595 = vpop.f32.mrb[0].mxu0
  %596 = vmatprep.mubr.bf16.mxu0 %v269
  %597 = vmatmul.mubr.bf16.gmra.mrb[0].mxu0 %v268
  %v598 = vpop.f32.mrb[0].mxu0
  %v599 = vadd.f32 0.0, %v598
  %v600 = vpop.f32.mrb[0].mxu0
  %v601 = vpop.f32.mrb[0].mxu0
  %v602 = vadd.f32 0.0, %v601
  %v603 = vpop.f32.mrb[0].mxu0
  %604 = vmatprep.mubr.bf16.mxu0 %v273
  %605 = vmatmul.mubr.bf16.gmra.mrb[0].mxu0 %v272
  %v606 = vpop.f32.mrb[0].mxu0
  %v607 = vadd.f32 0.0, %v606
  %v608 = vpop.f32.mrb[0].mxu0
  %v609 = vpop.f32.mrb[0].mxu0
  %v610 = vadd.f32 0.0, %v609
  %v611 = vpop.f32.mrb[0].mxu0
  %612 = vmatprep.mubr.bf16.mxu0 %v277
  %613 = vmatmul.mubr.bf16.gmra.mrb[0].mxu0 %v276
  %v614 = vpop.f32.mrb[0].mxu0
  %v615 = vadd.f32 0.0, %v614
  %v616 = vpop.f32.mrb[0].mxu0
  %v617 = vpop.f32.mrb[0].mxu0
  %v618 = vadd.f32 0.0, %v617
  %v619 = vpop.f32.mrb[0].mxu0
  %620 = vmatprep.mubr.bf16.mxu0 %v281
  %621 = vmatmul.mubr.bf16.gmra.mrb[0].mxu0 %v280
  %v622 = vpop.f32.mrb[0].mxu0
  %v623 = vadd.f32 0.0, %v622
  %v624 = vpop.f32.mrb[0].mxu0
  %v625 = vpop.f32.mrb[0].mxu0
  %v626 = vadd.f32 0.0, %v625
  %v627 = vpop.f32.mrb[0].mxu0
  %628 = vmatprep.mubr.bf16.mxu0 %v285
  %629 = vmatmul.mubr.bf16.gmra.mrb[0].mxu0 %v284
  %v630 = vpop.f32.mrb[0].mxu0
  %v631 = vadd.f32 0.0, %v630
  %v632 = vpop.f32.mrb[0].mxu0
  %v633 = vpop.f32.mrb[0].mxu0
  %v634 = vadd.f32 0.0, %v633
  %v635 = vpop.f32.mrb[0].mxu0
  %636 = vmatprep.mubr.bf16.mxu0 %v289
  %637 = vmatmul.mubr.bf16.gmra.mrb[0].mxu0 %v288
  %v638 = vpop.f32.mrb[0].mxu0
  %v639 = vadd.f32 0.0, %v638
  %v640 = vpop.f32.mrb[0].mxu0
  %v641 = vpop.f32.mrb[0].mxu0
  %v642 = vadd.f32 0.0, %v641
  %v643 = vpop.f32.mrb[0].mxu0
  %644 = vmatprep.mubr.bf16.mxu0 %v293
  %645 = vmatmul.mubr.bf16.gmra.mrb[0].mxu0 %v292
  %v646 = vpop.f32.mrb[0].mxu0
  %v647 = vadd.f32 0.0, %v646
  %v648 = vpop.f32.mrb[0].mxu0
  %v649 = vpop.f32.mrb[0].mxu0
  %v650 = vadd.f32 0.0, %v649
  %v651 = vpop.f32.mrb[0].mxu0
  %652 = vdwg.mxu0
  %653 = vmatprep.subr.bf16.mxu0 0
  %654 = vmatpush1.bf16.msra.mxu0 %v484
  %655 = vmatprep.subr.bf16.mxu0 0
  %656 = vmatpush1.bf16.msra.mxu0 %v485
  %657 = vmatprep.subr.bf16.mxu0 0
  %658 = vmatpush1.bf16.msra.mxu0 %v486
  %659 = vmatprep.subr.bf16.mxu0 0
  %660 = vmatpush1.bf16.msra.mxu0 %v487
  %661 = vmatprep.subr.bf16.mxu0 0
  %662 = vmatpush1.bf16.msra.mxu0 %v488
  %663 = vmatprep.subr.bf16.mxu0 0
  %664 = vmatpush1.bf16.msra.mxu0 %v489
  %665 = vmatprep.subr.bf16.mxu0 0
  %666 = vmatpush1.bf16.msra.mxu0 %v490
  %667 = vmatprep.subr.bf16.mxu0 0
  %668 = vmatpush1.bf16.msra.mxu0 %v491
  %669 = vmatprep.subr.bf16.mxu0 0
  %670 = vmatpush1.bf16.msra.mxu0 %v492
  %671 = vmatprep.subr.bf16.mxu0 0
  %672 = vmatpush1.bf16.msra.mxu0 %v493
  %673 = vmatprep.subr.bf16.mxu0 0
  %674 = vmatpush1.bf16.msra.mxu0 %v494
  %675 = vmatprep.subr.bf16.mxu0 0
  %676 = vmatpush1.bf16.msra.mxu0 %v495
  %677 = vmatprep.subr.bf16.mxu0 0
  %678 = vmatpush1.bf16.msra.mxu0 %v496
  %679 = vmatprep.subr.bf16.mxu0 0
  %680 = vmatpush1.bf16.msra.mxu0 %v497
  %681 = vmatprep.subr.bf16.mxu0 0
  %682 = vmatpush1.bf16.msra.mxu0 %v498
  %683 = vmatprep.subr.bf16.mxu0 0
  %684 = vmatpush1.bf16.msra.mxu0 %v499
  %685 = vmatprep.mubr.bf16.mxu0 %v255
  %686 = vmatmul.mubr.bf16.gmra.mrb[0].mxu0 %v254
  %v687 = vpop.f32.mrb[0].mxu0
  %v688 = vadd.f32 %v567, %v687
  %v689 = vpop.f32.mrb[0].mxu0
  %v690 = vpop.f32.mrb[0].mxu0
  %v691 = vadd.f32 %v570, %v690
  %v692 = vpop.f32.mrb[0].mxu0
  %693 = vmatprep.mubr.bf16.mxu0 %v259
  %694 = vmatmul.mubr.bf16.gmra.mrb[0].mxu0 %v258
  %v695 = vpop.f32.mrb[0].mxu0
  %v696 = vadd.f32 %v575, %v695
  %v697 = vpop.f32.mrb[0].mxu0
  %v698 = vpop.f32.mrb[0].mxu0
  %v699 = vadd.f32 %v578, %v698
  %v700 = vpop.f32.mrb[0].mxu0
  %701 = vmatprep.mubr.bf16.mxu0 %v263
  %702 = vmatmul.mubr.bf16.gmra.mrb[0].mxu0 %v262
  %v703 = vpop.f32.mrb[0].mxu0
  %v704 = vadd.f32 %v583, %v703
  %v705 = vpop.f32.mrb[0].mxu0
  %v706 = vpop.f32.mrb[0].mxu0
  %v707 = vadd.f32 %v586, %v706
  %v708 = vpop.f32.mrb[0].mxu0
  %709 = vmatprep.mubr.bf16.mxu0 %v267
  %710 = vmatmul.mubr.bf16.gmra.mrb[0].mxu0 %v266
  %v711 = vpop.f32.mrb[0].mxu0
  %v712 = vadd.f32 %v591, %v711
  %v713 = vpop.f32.mrb[0].mxu0
  %v714 = vpop.f32.mrb[0].mxu0
  %v715 = vadd.f32 %v594, %v714
  %v716 = vpop.f32.mrb[0].mxu0
  %717 = vmatprep.mubr.bf16.mxu0 %v271
  %718 = vmatmul.mubr.bf16.gmra.mrb[0].mxu0 %v270
  %v719 = vpop.f32.mrb[0].mxu0
  %v720 = vadd.f32 %v599, %v719
  %v721 = vpop.f32.mrb[0].mxu0
  %v722 = vpop.f32.mrb[0].mxu0
  %v723 = vadd.f32 %v602, %v722
  %v724 = vpop.f32.mrb[0].mxu0
  %725 = vmatprep.mubr.bf16.mxu0 %v275
  %726 = vmatmul.mubr.bf16.gmra.mrb[0].mxu0 %v274
  %v727 = vpop.f32.mrb[0].mxu0
  %v728 = vadd.f32 %v607, %v727
  %v729 = vpop.f32.mrb[0].mxu0
  %v730 = vpop.f32.mrb[0].mxu0
  %v731 = vadd.f32 %v610, %v730
  %v732 = vpop.f32.mrb[0].mxu0
  %733 = vmatprep.mubr.bf16.mxu0 %v279
  %734 = vmatmul.mubr.bf16.gmra.mrb[0].mxu0 %v278
  %v735 = vpop.f32.mrb[0].mxu0
  %v736 = vadd.f32 %v615, %v735
  %v737 = vpop.f32.mrb[0].mxu0
  %v738 = vpop.f32.mrb[0].mxu0
  %v739 = vadd.f32 %v618, %v738
  %v740 = vpop.f32.mrb[0].mxu0
  %741 = vmatprep.mubr.bf16.mxu0 %v283
  %742 = vmatmul.mubr.bf16.gmra.mrb[0].mxu0 %v282
  %v743 = vpop.f32.mrb[0].mxu0
  %v744 = vadd.f32 %v623, %v743
  %v745 = vpop.f32.mrb[0].mxu0
  %v746 = vpop.f32.mrb[0].mxu0
  %v747 = vadd.f32 %v626, %v746
  %v748 = vpop.f32.mrb[0].mxu0
  %749 = vmatprep.mubr.bf16.mxu0 %v287
  %750 = vmatmul.mubr.bf16.gmra.mrb[0].mxu0 %v286
  %v751 = vpop.f32.mrb[0].mxu0
  %v752 = vadd.f32 %v631, %v751
  %v753 = vpop.f32.mrb[0].mxu0
  %v754 = vpop.f32.mrb[0].mxu0
  %v755 = vadd.f32 %v634, %v754
  %v756 = vpop.f32.mrb[0].mxu0
  %757 = vmatprep.mubr.bf16.mxu0 %v291
  %758 = vmatmul.mubr.bf16.gmra.mrb[0].mxu0 %v290
  %v759 = vpop.f32.mrb[0].mxu0
  %v760 = vadd.f32 %v639, %v759
  %v761 = vpop.f32.mrb[0].mxu0
  %v762 = vpop.f32.mrb[0].mxu0
  %v763 = vadd.f32 %v642, %v762
  %v764 = vpop.f32.mrb[0].mxu0
  %765 = vmatprep.mubr.bf16.mxu0 %v295
  %766 = vmatmul.mubr.bf16.gmra.mrb[0].mxu0 %v294
  %v767 = vpop.f32.mrb[0].mxu0
  %v768 = vadd.f32 %v647, %v767
  %v769 = vpop.f32.mrb[0].mxu0
  %v770 = vpop.f32.mrb[0].mxu0
  %v771 = vadd.f32 %v650, %v770
  %v772 = vpop.f32.mrb[0].mxu0
  %773 = vdwg.mxu0
  %v774 = vmax.f32 %v688, 0.0
  %v775 = vmax.f32 %v691, 0.0
  %v776 = vmax.f32 %v696, 0.0
  %v777 = vmax.f32 %v699, 0.0
  %v778 = vmax.f32 %v704, 0.0
  %v779 = vmax.f32 %v707, 0.0
  %v780 = vmax.f32 %v712, 0.0
  %v781 = vmax.f32 %v715, 0.0
  %v782 = vmax.f32 %v720, 0.0
  %v783 = vmax.f32 %v723, 0.0
  %v784 = vmax.f32 %v728, 0.0
  %v785 = vmax.f32 %v731, 0.0
  %v786 = vmax.f32 %v736, 0.0
  %v787 = vmax.f32 %v739, 0.0
  %v788 = vmax.f32 %v744, 0.0
  %v789 = vmax.f32 %v747, 0.0
  %v790 = vmax.f32 %v752, 0.0
  %v791 = vmax.f32 %v755, 0.0
  %v792 = vmax.f32 %v760, 0.0
  %v793 = vmax.f32 %v763, 0.0
  %v794 = vmax.f32 %v768, 0.0
  %v795 = vmax.f32 %v771, 0.0
  %v796 = vpack.c.bf16 %v775, %v774
  %v797 = vpack.c.bf16 %v777, %v776
  %v798 = vpack.c.bf16 %v779, %v778
  %v799 = vpack.c.bf16 %v781, %v780
  %v800 = vpack.c.bf16 %v783, %v782
  %v801 = vpack.c.bf16 %v785, %v784
  %v802 = vpack.c.bf16 %v787, %v786
  %v803 = vpack.c.bf16 %v789, %v788
  %v804 = vpack.c.bf16 %v791, %v790
  %v805 = vpack.c.bf16 %v793, %v792
  %v806 = vpack.c.bf16 %v795, %v794
  %v818 = vunpack.c.l.b16 %v796
  %v819 = vunpack.c.h.b16 %v796
  %v820 = vunpack.c.l.b16 %v797
  %v821 = vunpack.c.h.b16 %v797
  %v822 = vunpack.c.l.b16 %v798
  %v823 = vunpack.c.h.b16 %v798
  %v824 = vunpack.c.l.b16 %v799
  %v825 = vunpack.c.h.b16 %v799
  %v826 = vunpack.c.l.b16 %v800
  %v827 = vunpack.c.h.b16 %v800
  %v828 = vunpack.c.l.b16 %v801
  %v829 = vunpack.c.h.b16 %v801
  %v830 = vunpack.c.l.b16 %v802
  %v831 = vunpack.c.h.b16 %v802
  %v832 = vunpack.c.l.b16 %v803
  %v833 = vunpack.c.h.b16 %v803
  %v834 = vunpack.c.l.b16 %v804
  %v835 = vunpack.c.h.b16 %v804
  %v836 = vunpack.c.l.b16 %v805
  %v837 = vunpack.c.h.b16 %v805
  %v838 = vunpack.c.l.b16 %v806
  %v839 = vunpack.c.h.b16 %v806
  %v840 = vpack.c.b16 %v818, %v818
  %v841 = vpack.c.b16 %v819, %v819
  %v842 = vpack.c.b16 %v820, %v820
  %v843 = vpack.c.b16 %v821, %v821
  %v844 = vpack.c.b16 %v822, %v822
  %v845 = vpack.c.b16 %v823, %v823
  %v846 = vpack.c.b16 %v824, %v824
  %v847 = vpack.c.b16 %v825, %v825
  %v848 = vpack.c.b16 %v826, %v826
  %v849 = vpack.c.b16 %v827, %v827
  %v850 = vpack.c.b16 %v828, %v828
  %v851 = vpack.c.b16 %v829, %v829
  %v852 = vpack.c.b16 %v830, %v830
  %v853 = vpack.c.b16 %v831, %v831
  %v854 = vpack.c.b16 %v832, %v832
  %v855 = vpack.c.b16 %v833, %v833
  %v856 = vpack.c.b16 %v834, %v834
  %v857 = vpack.c.b16 %v835, %v835
  %v858 = vpack.c.b16 %v836, %v836
  %v859 = vpack.c.b16 %v837, %v837
  %v860 = vpack.c.b16 %v838, %v838
  %v861 = vpack.c.b16 %v839, %v839
  %884 = vst [vmem:[%s2] sm:$0xf] %v840
  %885 = vst [vmem:[%s2 + $0x4] sm:$0xf] %v841
  %886 = vst [vmem:[%s2 + $0x8] sm:$0xf] %v842
  %887 = vst [vmem:[%s2 + $0xc] sm:$0xf] %v843
  %888 = vst [vmem:[%s2 + $0x10] sm:$0xf] %v844
  %889 = vst [vmem:[%s2 + $0x14] sm:$0xf] %v845
  %890 = vst [vmem:[%s2 + $0x18] sm:$0xf] %v846
  %891 = vst [vmem:[%s2 + $0x1c] sm:$0xf] %v847
  %892 = vst [vmem:[%s2 + $0x20] sm:$0xf] %v848
  %893 = vst [vmem:[%s2 + $0x24] sm:$0xf] %v849
  %894 = vst [vmem:[%s2 + $0x28] sm:$0xf] %v850
  %895 = vst [vmem:[%s2 + $0x2c] sm:$0xf] %v851
  %896 = vst [vmem:[%s2 + $0x30] sm:$0xf] %v852
  %897 = vst [vmem:[%s2 + $0x34] sm:$0xf] %v853
  %898 = vst [vmem:[%s2 + $0x38] sm:$0xf] %v854
  %899 = vst [vmem:[%s2 + $0x3c] sm:$0xf] %v855
  %900 = vst [vmem:[%s2 + $0x40] sm:$0xf] %v856
  %901 = vst [vmem:[%s2 + $0x44] sm:$0xf] %v857
  %902 = vst [vmem:[%s2 + $0x48] sm:$0xf] %v858
  %903 = vst [vmem:[%s2 + $0x4c] sm:$0xf] %v859
  %904 = vst [vmem:[%s2 + $0x50] sm:$0xf] %v860
  %905 = vst [vmem:[%s2 + $0x54] sm:$0xf] %v861
  // Predicated region
  $region10: #{dqn_forward.5} parent=0 // pred_check
    _
  $region11: #{dqn_forward.5} parent=0 // pred_check_branch
    %907 = sbr.rel (0) target = $region13
  $region12: #{dqn_forward.5} parent=0 // pred_region
    _
  $region13: #{dqn_forward.5} parent=0 // pred_fallthru
    _
  // Predicated region
  $region14: #{dqn_forward.5} parent=0 // pred_check
    _
  $region15: #{dqn_forward.5} parent=0 // pred_check_branch
    %909 = sbr.rel (0) target = $region17
  $region16: #{dqn_forward.5} parent=0 // pred_region
    _
  $region17: #{dqn_forward.5} parent=0 // pred_fallthru
    _

// kernel: dqn_forward.6
$region0: #{dqn_forward.6}
  #allocation0 [shape = 'u32[]', space=smem, size = 0x4, offset = 0x4, fixed_abs, tag = 'smem constant byte address 0x4 - core index']
  #allocation1 [shape = 'u32[144,128]{1,0:T(1,128)}', space=vmem, size = 0x12000, scoped, tag = 'internal scratch']
  %s0 = inlined_call_operand.vmem [shape: bf16[112,640], index: 0, kind: input, shape index: {}]
  %s1 = inlined_call_operand.vmem [shape: bf16[640,128], index: 1, kind: input, shape index: {}]
  %s2 = inlined_call_operand.vmem [shape: bf16[112,128], index: 2, kind: output, shape index: {}]
  %s3 = sld [smem:[#allocation0]]
  $region18: #{dqn_forward.6} parent=0
    _
  %s5 = ssub.s32 1, %s3
  %s6 = scalar_select 0, %s5, %s3
  // Predicated region
  $region2: #{dqn_forward.6} parent=0 // pred_check
    _
  $region3: #{dqn_forward.6} parent=0 // pred_check_branch
    %8 = sbr.rel (0) target = $region5
  $region4: #{dqn_forward.6} parent=0 // pred_region
    _
  $region5: #{dqn_forward.6} parent=0 // pred_fallthru
    _
  // Predicated region
  $region6: #{dqn_forward.6} parent=0 // pred_check
    _
  $region7: #{dqn_forward.6} parent=0 // pred_check_branch
    %10 = sbr.rel (0) target = $region9
  $region8: #{dqn_forward.6} parent=0 // pred_region
    _
  $region9: #{dqn_forward.6} parent=0 // pred_fallthru
    _
  %v12 = vld [vmem:[%s0] sm:$0xff]
  %v13 = vld [vmem:[%s0 + $0x8] sm:$0xff]
  %v14 = vld [vmem:[%s0 + $0x10] sm:$0xf]
  %v15 = vld [vmem:[%s0 + $0x14] sm:$0xff]
  %v16 = vld [vmem:[%s0 + $0x1c] sm:$0xff]
  %v17 = vld [vmem:[%s0 + $0x24] sm:$0xf]
  %v18 = vld [vmem:[%s0 + $0x28] sm:$0xff]
  %v19 = vld [vmem:[%s0 + $0x30] sm:$0xff]
  %v20 = vld [vmem:[%s0 + $0x38] sm:$0xf]
  %v21 = vld [vmem:[%s0 + $0x3c] sm:$0xff]
  %v22 = vld [vmem:[%s0 + $0x44] sm:$0xff]
  %v23 = vld [vmem:[%s0 + $0x4c] sm:$0xf]
  %v24 = vld [vmem:[%s0 + $0x50] sm:$0xff]
  %v25 = vld [vmem:[%s0 + $0x58] sm:$0xff]
  %v26 = vld [vmem:[%s0 + $0x60] sm:$0xf]
  %v27 = vld [vmem:[%s0 + $0x64] sm:$0xff]
  %v28 = vld [vmem:[%s0 + $0x6c] sm:$0xff]
  %v29 = vld [vmem:[%s0 + $0x74] sm:$0xf]
  %v30 = vld [vmem:[%s0 + $0x78] sm:$0xff]
  %v31 = vld [vmem:[%s0 + $0x80] sm:$0xff]
  %v32 = vld [vmem:[%s0 + $0x88] sm:$0xf]
  %v33 = vld [vmem:[%s0 + $0x8c] sm:$0xff]
  %v34 = vld [vmem:[%s0 + $0x94] sm:$0xff]
  %v35 = vld [vmem:[%s0 + $0x9c] sm:$0xf]
  %v36 = vld [vmem:[%s0 + $0xa0] sm:$0xff]
  %v37 = vld [vmem:[%s0 + $0xa8] sm:$0xff]
  %v38 = vld [vmem:[%s0 + $0xb0] sm:$0xf]
  %v39 = vld [vmem:[%s0 + $0xb4] sm:$0xff]
  %v40 = vld [vmem:[%s0 + $0xbc] sm:$0xff]
  %v41 = vld [vmem:[%s0 + $0xc4] sm:$0xf]
  %v42 = vld [vmem:[%s0 + $0xc8] sm:$0xff]
  %v43 = vld [vmem:[%s0 + $0xd0] sm:$0xff]
  %v44 = vld [vmem:[%s0 + $0xd8] sm:$0xf]
  %v45 = vld [vmem:[%s0 + $0xdc] sm:$0xff]
  %v46 = vld [vmem:[%s0 + $0xe4] sm:$0xff]
  %v47 = vld [vmem:[%s0 + $0xec] sm:$0xf]
  %v48 = vld [vmem:[%s0 + $0xf0] sm:$0xff]
  %v49 = vld [vmem:[%s0 + $0xf8] sm:$0xff]
  %v50 = vld [vmem:[%s0 + $0x100] sm:$0xf]
  %v51 = vld [vmem:[%s0 + $0x104] sm:$0xff]
  %v52 = vld [vmem:[%s0 + $0x10c] sm:$0xff]
  %v53 = vld [vmem:[%s0 + $0x114] sm:$0xf]
  %v54 = vld [vmem:[%s1] sm:$0xf]
  %v55 = vld [vmem:[%s1 + $0x4] sm:$0xf]
  %v56 = vld [vmem:[%s1 + $0x8] sm:$0xf]
  %v57 = vld [vmem:[%s1 + $0xc] sm:$0xf]
  %v58 = vld [vmem:[%s1 + $0x10] sm:$0xf]
  %v59 = vld [vmem:[%s1 + $0x14] sm:$0xf]
  %v60 = vld [vmem:[%s1 + $0x18] sm:$0xf]
  %v61 = vld [vmem:[%s1 + $0x1c] sm:$0xf]
  %v62 = vld [vmem:[%s1 + $0x20] sm:$0xf]
  %v63 = vld [vmem:[%s1 + $0x24] sm:$0xf]
  %v64 = vld [vmem:[%s1 + $0x28] sm:$0xf]
  %v65 = vld [vmem:[%s1 + $0x2c] sm:$0xf]
  %v66 = vld [vmem:[%s1 + $0x30] sm:$0xf]
  %v67 = vld [vmem:[%s1 + $0x34] sm:$0xf]
  %v68 = vld [vmem:[%s1 + $0x38] sm:$0xf]
  %v69 = vld [vmem:[%s1 + $0x3c] sm:$0xf]
  %v70 = vld [vmem:[%s1 + $0x40] sm:$0xf]
  %v71 = vld [vmem:[%s1 + $0x44] sm:$0xf]
  %v72 = vld [vmem:[%s1 + $0x48] sm:$0xf]
  %v73 = vld [vmem:[%s1 + $0x4c] sm:$0xf]
  %v74 = vld [vmem:[%s1 + $0x50] sm:$0xf]
  %v75 = vld [vmem:[%s1 + $0x54] sm:$0xf]
  %v76 = vld [vmem:[%s1 + $0x58] sm:$0xf]
  %v77 = vld [vmem:[%s1 + $0x5c] sm:$0xf]
  %v78 = vld [vmem:[%s1 + $0x60] sm:$0xf]
  %v79 = vld [vmem:[%s1 + $0x64] sm:$0xf]
  %v80 = vld [vmem:[%s1 + $0x68] sm:$0xf]
  %v81 = vld [vmem:[%s1 + $0x6c] sm:$0xf]
  %v82 = vld [vmem:[%s1 + $0x70] sm:$0xf]
  %v83 = vld [vmem:[%s1 + $0x74] sm:$0xf]
  %v84 = vld [vmem:[%s1 + $0x78] sm:$0xf]
  %v85 = vld [vmem:[%s1 + $0x7c] sm:$0xf]
  %v86 = vld [vmem:[%s1 + $0x80] sm:$0xf]
  %v87 = vld [vmem:[%s1 + $0x84] sm:$0xf]
  %v88 = vld [vmem:[%s1 + $0x88] sm:$0xf]
  %v89 = vld [vmem:[%s1 + $0x8c] sm:$0xf]
  %v90 = vld [vmem:[%s1 + $0x90] sm:$0xf]
  %v91 = vld [vmem:[%s1 + $0x94] sm:$0xf]
  %v92 = vld [vmem:[%s1 + $0x98] sm:$0xf]
  %v93 = vld [vmem:[%s1 + $0x9c] sm:$0xf]
  %v94 = vld [vmem:[%s1 + $0xa0] sm:$0xf]
  %v95 = vld [vmem:[%s1 + $0xa4] sm:$0xf]
  %v96 = vld [vmem:[%s1 + $0xa8] sm:$0xf]
  %v97 = vld [vmem:[%s1 + $0xac] sm:$0xf]
  %v98 = vld [vmem:[%s1 + $0xb0] sm:$0xf]
  %v99 = vld [vmem:[%s1 + $0xb4] sm:$0xf]
  %v100 = vld [vmem:[%s1 + $0xb8] sm:$0xf]
  %v101 = vld [vmem:[%s1 + $0xbc] sm:$0xf]
  %v102 = vld [vmem:[%s1 + $0xc0] sm:$0xf]
  %v103 = vld [vmem:[%s1 + $0xc4] sm:$0xf]
  %v104 = vld [vmem:[%s1 + $0xc8] sm:$0xf]
  %v105 = vld [vmem:[%s1 + $0xcc] sm:$0xf]
  %v106 = vld [vmem:[%s1 + $0xd0] sm:$0xf]
  %v107 = vld [vmem:[%s1 + $0xd4] sm:$0xf]
  %v108 = vld [vmem:[%s1 + $0xd8] sm:$0xf]
  %v109 = vld [vmem:[%s1 + $0xdc] sm:$0xf]
  %v110 = vld [vmem:[%s1 + $0xe0] sm:$0xf]
  %v111 = vld [vmem:[%s1 + $0xe4] sm:$0xf]
  %v112 = vld [vmem:[%s1 + $0xe8] sm:$0xf]
  %v113 = vld [vmem:[%s1 + $0xec] sm:$0xf]
  %v114 = vld [vmem:[%s1 + $0xf0] sm:$0xf]
  %v115 = vld [vmem:[%s1 + $0xf4] sm:$0xf]
  %v116 = vld [vmem:[%s1 + $0xf8] sm:$0xf]
  %v117 = vld [vmem:[%s1 + $0xfc] sm:$0xf]
  %v118 = vld [vmem:[%s1 + $0x100] sm:$0xf]
  %v119 = vld [vmem:[%s1 + $0x104] sm:$0xf]
  %v120 = vld [vmem:[%s1 + $0x108] sm:$0xf]
  %v121 = vld [vmem:[%s1 + $0x10c] sm:$0xf]
  %v122 = vld [vmem:[%s1 + $0x110] sm:$0xf]
  %v123 = vld [vmem:[%s1 + $0x114] sm:$0xf]
  %v124 = vld [vmem:[%s1 + $0x118] sm:$0xf]
  %v125 = vld [vmem:[%s1 + $0x11c] sm:$0xf]
  %v126 = vld [vmem:[%s1 + $0x120] sm:$0xf]
  %v127 = vld [vmem:[%s1 + $0x124] sm:$0xf]
  %v128 = vld [vmem:[%s1 + $0x128] sm:$0xf]
  %v129 = vld [vmem:[%s1 + $0x12c] sm:$0xf]
  %v130 = vld [vmem:[%s1 + $0x130] sm:$0xf]
  %v131 = vld [vmem:[%s1 + $0x134] sm:$0xf]
  %v132 = vld [vmem:[%s1 + $0x138] sm:$0xf]
  %v133 = vld [vmem:[%s1 + $0x13c] sm:$0xf]
  %v176 = vunpack.c.l.b16 %v12
  %v177 = vunpack.c.h.b16 %v12
  %v178 = vunpack.c.l.b16 %v13
  %v179 = vunpack.c.h.b16 %v13
  %v180 = vunpack.c.l.b16 %v14
  %v181 = vunpack.c.l.b16 %v15
  %v182 = vunpack.c.h.b16 %v15
  %v183 = vunpack.c.l.b16 %v16
  %v184 = vunpack.c.h.b16 %v16
  %v185 = vunpack.c.l.b16 %v17
  %v186 = vunpack.c.l.b16 %v18
  %v187 = vunpack.c.h.b16 %v18
  %v188 = vunpack.c.l.b16 %v19
  %v189 = vunpack.c.h.b16 %v19
  %v190 = vunpack.c.l.b16 %v20
  %v191 = vunpack.c.l.b16 %v21
  %v192 = vunpack.c.h.b16 %v21
  %v193 = vunpack.c.l.b16 %v22
  %v194 = vunpack.c.h.b16 %v22
  %v195 = vunpack.c.l.b16 %v23
  %v196 = vunpack.c.l.b16 %v24
  %v197 = vunpack.c.h.b16 %v24
  %v198 = vunpack.c.l.b16 %v25
  %v199 = vunpack.c.h.b16 %v25
  %v200 = vunpack.c.l.b16 %v26
  %v201 = vunpack.c.l.b16 %v27
  %v202 = vunpack.c.h.b16 %v27
  %v203 = vunpack.c.l.b16 %v28
  %v204 = vunpack.c.h.b16 %v28
  %v205 = vunpack.c.l.b16 %v29
  %v206 = vunpack.c.l.b16 %v30
  %v207 = vunpack.c.h.b16 %v30
  %v208 = vunpack.c.l.b16 %v31
  %v209 = vunpack.c.h.b16 %v31
  %v210 = vunpack.c.l.b16 %v32
  %v211 = vunpack.c.l.b16 %v33
  %v212 = vunpack.c.h.b16 %v33
  %v213 = vunpack.c.l.b16 %v34
  %v214 = vunpack.c.h.b16 %v34
  %v215 = vunpack.c.l.b16 %v35
  %v216 = vunpack.c.l.b16 %v36
  %v217 = vunpack.c.h.b16 %v36
  %v218 = vunpack.c.l.b16 %v37
  %v219 = vunpack.c.h.b16 %v37
  %v220 = vunpack.c.l.b16 %v38
  %v221 = vunpack.c.l.b16 %v39
  %v222 = vunpack.c.h.b16 %v39
  %v223 = vunpack.c.l.b16 %v40
  %v224 = vunpack.c.h.b16 %v40
  %v225 = vunpack.c.l.b16 %v41
  %v226 = vunpack.c.l.b16 %v42
  %v227 = vunpack.c.h.b16 %v42
  %v228 = vunpack.c.l.b16 %v43
  %v229 = vunpack.c.h.b16 %v43
  %v230 = vunpack.c.l.b16 %v44
  %v231 = vunpack.c.l.b16 %v45
  %v232 = vunpack.c.h.b16 %v45
  %v233 = vunpack.c.l.b16 %v46
  %v234 = vunpack.c.h.b16 %v46
  %v235 = vunpack.c.l.b16 %v47
  %v236 = vunpack.c.l.b16 %v48
  %v237 = vunpack.c.h.b16 %v48
  %v238 = vunpack.c.l.b16 %v49
  %v239 = vunpack.c.h.b16 %v49
  %v240 = vunpack.c.l.b16 %v50
  %v241 = vunpack.c.l.b16 %v51
  %v242 = vunpack.c.h.b16 %v51
  %v243 = vunpack.c.l.b16 %v52
  %v244 = vunpack.c.h.b16 %v52
  %v245 = vunpack.c.l.b16 %v53
  %v246 = vpack.c.b16 %v181, %v176
  %v247 = vpack.c.b16 %v182, %v177
  %v248 = vpack.c.b16 %v183, %v178
  %v249 = vpack.c.b16 %v184, %v179
  %v250 = vpack.c.b16 %v185, %v180
  %v251 = vpack.c.b16 %v191, %v186
  %v252 = vpack.c.b16 %v192, %v187
  %v253 = vpack.c.b16 %v193, %v188
  %v254 = vpack.c.b16 %v194, %v189
  %v255 = vpack.c.b16 %v195, %v190
  %v256 = vpack.c.b16 %v201, %v196
  %v257 = vpack.c.b16 %v202, %v197
  %v258 = vpack.c.b16 %v203, %v198
  %v259 = vpack.c.b16 %v204, %v199
  %v260 = vpack.c.b16 %v205, %v200
  %v261 = vpack.c.b16 %v211, %v206
  %v262 = vpack.c.b16 %v212, %v207
  %v263 = vpack.c.b16 %v213, %v208
  %v264 = vpack.c.b16 %v214, %v209
  %v265 = vpack.c.b16 %v215, %v210
  %v266 = vpack.c.b16 %v221, %v216
  %v267 = vpack.c.b16 %v222, %v217
  %v268 = vpack.c.b16 %v223, %v218
  %v269 = vpack.c.b16 %v224, %v219
  %v270 = vpack.c.b16 %v225, %v220
  %v271 = vpack.c.b16 %v231, %v226
  %v272 = vpack.c.b16 %v232, %v227
  %v273 = vpack.c.b16 %v233, %v228
  %v274 = vpack.c.b16 %v234, %v229
  %v275 = vpack.c.b16 %v235, %v230
  %v276 = vpack.c.b16 %v241, %v236
  %v277 = vpack.c.b16 %v242, %v237
  %v278 = vpack.c.b16 %v243, %v238
  %v279 = vpack.c.b16 %v244, %v239
  %v280 = vpack.c.b16 %v245, %v240
  %v396 = vunpack.c.l.b16 %v54
  %v397 = vunpack.c.l.b16 %v55
  %v398 = vunpack.c.l.b16 %v56
  %v399 = vunpack.c.l.b16 %v57
  %v400 = vunpack.c.l.b16 %v58
  %v401 = vunpack.c.l.b16 %v59
  %v402 = vunpack.c.l.b16 %v60
  %v403 = vunpack.c.l.b16 %v61
  %v404 = vunpack.c.l.b16 %v62
  %v405 = vunpack.c.l.b16 %v63
  %v406 = vunpack.c.l.b16 %v64
  %v407 = vunpack.c.l.b16 %v65
  %v408 = vunpack.c.l.b16 %v66
  %v409 = vunpack.c.l.b16 %v67
  %v410 = vunpack.c.l.b16 %v68
  %v411 = vunpack.c.l.b16 %v69
  %v412 = vunpack.c.l.b16 %v70
  %v413 = vunpack.c.l.b16 %v71
  %v414 = vunpack.c.l.b16 %v72
  %v415 = vunpack.c.l.b16 %v73
  %v416 = vunpack.c.l.b16 %v74
  %v417 = vunpack.c.l.b16 %v75
  %v418 = vunpack.c.l.b16 %v76
  %v419 = vunpack.c.l.b16 %v77
  %v420 = vunpack.c.l.b16 %v78
  %v421 = vunpack.c.l.b16 %v79
  %v422 = vunpack.c.l.b16 %v80
  %v423 = vunpack.c.l.b16 %v81
  %v424 = vunpack.c.l.b16 %v82
  %v425 = vunpack.c.l.b16 %v83
  %v426 = vunpack.c.l.b16 %v84
  %v427 = vunpack.c.l.b16 %v85
  %v428 = vunpack.c.l.b16 %v86
  %v429 = vunpack.c.l.b16 %v87
  %v430 = vunpack.c.l.b16 %v88
  %v431 = vunpack.c.l.b16 %v89
  %v432 = vunpack.c.l.b16 %v90
  %v433 = vunpack.c.l.b16 %v91
  %v434 = vunpack.c.l.b16 %v92
  %v435 = vunpack.c.l.b16 %v93
  %v436 = vunpack.c.l.b16 %v94
  %v437 = vunpack.c.l.b16 %v95
  %v438 = vunpack.c.l.b16 %v96
  %v439 = vunpack.c.l.b16 %v97
  %v440 = vunpack.c.l.b16 %v98
  %v441 = vunpack.c.l.b16 %v99
  %v442 = vunpack.c.l.b16 %v100
  %v443 = vunpack.c.l.b16 %v101
  %v444 = vunpack.c.l.b16 %v102
  %v445 = vunpack.c.l.b16 %v103
  %v446 = vunpack.c.l.b16 %v104
  %v447 = vunpack.c.l.b16 %v105
  %v448 = vunpack.c.l.b16 %v106
  %v449 = vunpack.c.l.b16 %v107
  %v450 = vunpack.c.l.b16 %v108
  %v451 = vunpack.c.l.b16 %v109
  %v452 = vunpack.c.l.b16 %v110
  %v453 = vunpack.c.l.b16 %v111
  %v454 = vunpack.c.l.b16 %v112
  %v455 = vunpack.c.l.b16 %v113
  %v456 = vunpack.c.l.b16 %v114
  %v457 = vunpack.c.l.b16 %v115
  %v458 = vunpack.c.l.b16 %v116
  %v459 = vunpack.c.l.b16 %v117
  %v460 = vunpack.c.l.b16 %v118
  %v461 = vunpack.c.l.b16 %v119
  %v462 = vunpack.c.l.b16 %v120
  %v463 = vunpack.c.l.b16 %v121
  %v464 = vunpack.c.l.b16 %v122
  %v465 = vunpack.c.l.b16 %v123
  %v466 = vunpack.c.l.b16 %v124
  %v467 = vunpack.c.l.b16 %v125
  %v468 = vunpack.c.l.b16 %v126
  %v469 = vunpack.c.l.b16 %v127
  %v470 = vunpack.c.l.b16 %v128
  %v471 = vunpack.c.l.b16 %v129
  %v472 = vunpack.c.l.b16 %v130
  %v473 = vunpack.c.l.b16 %v131
  %v474 = vunpack.c.l.b16 %v132
  %v475 = vunpack.c.l.b16 %v133
  %v476 = vpack.c.b16 %v397, %v396
  %v477 = vpack.c.b16 %v399, %v398
  %v478 = vpack.c.b16 %v401, %v400
  %v479 = vpack.c.b16 %v403, %v402
  %v480 = vpack.c.b16 %v405, %v404
  %v481 = vpack.c.b16 %v407, %v406
  %v482 = vpack.c.b16 %v409, %v408
  %v483 = vpack.c.b16 %v411, %v410
  %v484 = vpack.c.b16 %v413, %v412
  %v485 = vpack.c.b16 %v415, %v414
  %v486 = vpack.c.b16 %v417, %v416
  %v487 = vpack.c.b16 %v419, %v418
  %v488 = vpack.c.b16 %v421, %v420
  %v489 = vpack.c.b16 %v423, %v422
  %v490 = vpack.c.b16 %v425, %v424
  %v491 = vpack.c.b16 %v427, %v426
  %v492 = vpack.c.b16 %v429, %v428
  %v493 = vpack.c.b16 %v431, %v430
  %v494 = vpack.c.b16 %v433, %v432
  %v495 = vpack.c.b16 %v435, %v434
  %v496 = vpack.c.b16 %v437, %v436
  %v497 = vpack.c.b16 %v439, %v438
  %v498 = vpack.c.b16 %v441, %v440
  %v499 = vpack.c.b16 %v443, %v442
  %v500 = vpack.c.b16 %v445, %v444
  %v501 = vpack.c.b16 %v447, %v446
  %v502 = vpack.c.b16 %v449, %v448
  %v503 = vpack.c.b16 %v451, %v450
  %v504 = vpack.c.b16 %v453, %v452
  %v505 = vpack.c.b16 %v455, %v454
  %v506 = vpack.c.b16 %v457, %v456
  %v507 = vpack.c.b16 %v459, %v458
  %v508 = vpack.c.b16 %v461, %v460
  %v509 = vpack.c.b16 %v463, %v462
  %v510 = vpack.c.b16 %v465, %v464
  %v511 = vpack.c.b16 %v467, %v466
  %v512 = vpack.c.b16 %v469, %v468
  %v513 = vpack.c.b16 %v471, %v470
  %v514 = vpack.c.b16 %v473, %v472
  %v515 = vpack.c.b16 %v475, %v474
  %556 = vmatprep.subr.bf16.mxu0 0
  %557 = vmatpush1.bf16.msra.mxu0 %v476
  %558 = vmatprep.subr.bf16.mxu0 0
  %559 = vmatpush1.bf16.msra.mxu0 %v477
  %560 = vmatprep.subr.bf16.mxu0 0
  %561 = vmatpush1.bf16.msra.mxu0 %v478
  %562 = vmatprep.subr.bf16.mxu0 0
  %563 = vmatpush1.bf16.msra.mxu0 %v479
  %564 = vmatprep.subr.bf16.mxu0 0
  %565 = vmatpush1.bf16.msra.mxu0 %v480
  %566 = vmatprep.subr.bf16.mxu0 0
  %567 = vmatpush1.bf16.msra.mxu0 %v481
  %568 = vmatprep.subr.bf16.mxu0 0
  %569 = vmatpush1.bf16.msra.mxu0 %v482
  %570 = vmatprep.subr.bf16.mxu0 0
  %571 = vmatpush1.bf16.msra.mxu0 %v483
  %572 = vmatprep.subr.bf16.mxu0 0
  %573 = vmatpush1.bf16.msra.mxu0 %v484
  %574 = vmatprep.subr.bf16.mxu0 0
  %575 = vmatpush1.bf16.msra.mxu0 %v485
  %576 = vmatprep.subr.bf16.mxu0 0
  %577 = vmatpush1.bf16.msra.mxu0 %v486
  %578 = vmatprep.subr.bf16.mxu0 0
  %579 = vmatpush1.bf16.msra.mxu0 %v487
  %580 = vmatprep.subr.bf16.mxu0 0
  %581 = vmatpush1.bf16.msra.mxu0 %v488
  %582 = vmatprep.subr.bf16.mxu0 0
  %583 = vmatpush1.bf16.msra.mxu0 %v489
  %584 = vmatprep.subr.bf16.mxu0 0
  %585 = vmatpush1.bf16.msra.mxu0 %v490
  %586 = vmatprep.subr.bf16.mxu0 0
  %587 = vmatpush1.bf16.msra.mxu0 %v491
  %588 = vmatprep.mubr.bf16.mxu0 %v247
  %589 = vmatmul.mubr.bf16.gmra.mrb[0].mxu0 %v246
  %v590 = vpop.f32.mrb[0].mxu0
  %v591 = vadd.f32 0.0, %v590
  %v592 = vpop.f32.mrb[0].mxu0
  %v593 = vpop.f32.mrb[0].mxu0
  %v594 = vadd.f32 0.0, %v593
  %v595 = vpop.f32.mrb[0].mxu0
  %596 = vmatprep.mubr.bf16.mxu0 %v252
  %597 = vmatmul.mubr.bf16.gmra.mrb[0].mxu0 %v251
  %v598 = vpop.f32.mrb[0].mxu0
  %v599 = vadd.f32 0.0, %v598
  %v600 = vpop.f32.mrb[0].mxu0
  %v601 = vpop.f32.mrb[0].mxu0
  %v602 = vadd.f32 0.0, %v601
  %v603 = vpop.f32.mrb[0].mxu0
  %604 = vmatprep.mubr.bf16.mxu0 %v257
  %605 = vmatmul.mubr.bf16.gmra.mrb[0].mxu0 %v256
  %v606 = vpop.f32.mrb[0].mxu0
  %v607 = vadd.f32 0.0, %v606
  %v608 = vpop.f32.mrb[0].mxu0
  %v609 = vpop.f32.mrb[0].mxu0
  %v610 = vadd.f32 0.0, %v609
  %v611 = vpop.f32.mrb[0].mxu0
  %612 = vmatprep.mubr.bf16.mxu0 %v262
  %613 = vmatmul.mubr.bf16.gmra.mrb[0].mxu0 %v261
  %v614 = vpop.f32.mrb[0].mxu0
  %v615 = vadd.f32 0.0, %v614
  %v616 = vpop.f32.mrb[0].mxu0
  %v617 = vpop.f32.mrb[0].mxu0
  %v618 = vadd.f32 0.0, %v617
  %v619 = vpop.f32.mrb[0].mxu0
  %620 = vmatprep.mubr.bf16.mxu0 %v267
  %621 = vmatmul.mubr.bf16.gmra.mrb[0].mxu0 %v266
  %v622 = vpop.f32.mrb[0].mxu0
  %v623 = vadd.f32 0.0, %v622
  %v624 = vpop.f32.mrb[0].mxu0
  %v625 = vpop.f32.mrb[0].mxu0
  %v626 = vadd.f32 0.0, %v625
  %v627 = vpop.f32.mrb[0].mxu0
  %628 = vmatprep.mubr.bf16.mxu0 %v272
  %629 = vmatmul.mubr.bf16.gmra.mrb[0].mxu0 %v271
  %v630 = vpop.f32.mrb[0].mxu0
  %v631 = vadd.f32 0.0, %v630
  %v632 = vpop.f32.mrb[0].mxu0
  %v633 = vpop.f32.mrb[0].mxu0
  %v634 = vadd.f32 0.0, %v633
  %v635 = vpop.f32.mrb[0].mxu0
  %636 = vmatprep.mubr.bf16.mxu0 %v277
  %637 = vmatmul.mubr.bf16.gmra.mrb[0].mxu0 %v276
  %v638 = vpop.f32.mrb[0].mxu0
  %v639 = vadd.f32 0.0, %v638
  %v640 = vpop.f32.mrb[0].mxu0
  %v641 = vpop.f32.mrb[0].mxu0
  %v642 = vadd.f32 0.0, %v641
  %v643 = vpop.f32.mrb[0].mxu0
  %644 = vdwg.mxu0
  %645 = vmatprep.subr.bf16.mxu0 0
  %646 = vmatpush1.bf16.msra.mxu0 %v492
  %647 = vmatprep.subr.bf16.mxu0 0
  %648 = vmatpush1.bf16.msra.mxu0 %v493
  %649 = vmatprep.subr.bf16.mxu0 0
  %650 = vmatpush1.bf16.msra.mxu0 %v494
  %651 = vmatprep.subr.bf16.mxu0 0
  %652 = vmatpush1.bf16.msra.mxu0 %v495
  %653 = vmatprep.subr.bf16.mxu0 0
  %654 = vmatpush1.bf16.msra.mxu0 %v496
  %655 = vmatprep.subr.bf16.mxu0 0
  %656 = vmatpush1.bf16.msra.mxu0 %v497
  %657 = vmatprep.subr.bf16.mxu0 0
  %658 = vmatpush1.bf16.msra.mxu0 %v498
  %659 = vmatprep.subr.bf16.mxu0 0
  %660 = vmatpush1.bf16.msra.mxu0 %v499
  %661 = vmatprep.subr.bf16.mxu0 0
  %662 = vmatpush1.bf16.msra.mxu0 %v500
  %663 = vmatprep.subr.bf16.mxu0 0
  %664 = vmatpush1.bf16.msra.mxu0 %v501
  %665 = vmatprep.subr.bf16.mxu0 0
  %666 = vmatpush1.bf16.msra.mxu0 %v502
  %667 = vmatprep.subr.bf16.mxu0 0
  %668 = vmatpush1.bf16.msra.mxu0 %v503
  %669 = vmatprep.subr.bf16.mxu0 0
  %670 = vmatpush1.bf16.msra.mxu0 %v504
  %671 = vmatprep.subr.bf16.mxu0 0
  %672 = vmatpush1.bf16.msra.mxu0 %v505
  %673 = vmatprep.subr.bf16.mxu0 0
  %674 = vmatpush1.bf16.msra.mxu0 %v506
  %675 = vmatprep.subr.bf16.mxu0 0
  %676 = vmatpush1.bf16.msra.mxu0 %v507
  %677 = vmatprep.mubr.bf16.mxu0 %v249
  %678 = vmatmul.mubr.bf16.gmra.mrb[0].mxu0 %v248
  %v679 = vpop.f32.mrb[0].mxu0
  %v680 = vadd.f32 %v591, %v679
  %v681 = vpop.f32.mrb[0].mxu0
  %v682 = vpop.f32.mrb[0].mxu0
  %v683 = vadd.f32 %v594, %v682
  %v684 = vpop.f32.mrb[0].mxu0
  %685 = vmatprep.mubr.bf16.mxu0 %v254
  %686 = vmatmul.mubr.bf16.gmra.mrb[0].mxu0 %v253
  %v687 = vpop.f32.mrb[0].mxu0
  %v688 = vadd.f32 %v599, %v687
  %v689 = vpop.f32.mrb[0].mxu0
  %v690 = vpop.f32.mrb[0].mxu0
  %v691 = vadd.f32 %v602, %v690
  %v692 = vpop.f32.mrb[0].mxu0
  %693 = vmatprep.mubr.bf16.mxu0 %v259
  %694 = vmatmul.mubr.bf16.gmra.mrb[0].mxu0 %v258
  %v695 = vpop.f32.mrb[0].mxu0
  %v696 = vadd.f32 %v607, %v695
  %v697 = vpop.f32.mrb[0].mxu0
  %v698 = vpop.f32.mrb[0].mxu0
  %v699 = vadd.f32 %v610, %v698
  %v700 = vpop.f32.mrb[0].mxu0
  %701 = vmatprep.mubr.bf16.mxu0 %v264
  %702 = vmatmul.mubr.bf16.gmra.mrb[0].mxu0 %v263
  %v703 = vpop.f32.mrb[0].mxu0
  %v704 = vadd.f32 %v615, %v703
  %v705 = vpop.f32.mrb[0].mxu0
  %v706 = vpop.f32.mrb[0].mxu0
  %v707 = vadd.f32 %v618, %v706
  %v708 = vpop.f32.mrb[0].mxu0
  %709 = vmatprep.mubr.bf16.mxu0 %v269
  %710 = vmatmul.mubr.bf16.gmra.mrb[0].mxu0 %v268
  %v711 = vpop.f32.mrb[0].mxu0
  %v712 = vadd.f32 %v623, %v711
  %v713 = vpop.f32.mrb[0].mxu0
  %v714 = vpop.f32.mrb[0].mxu0
  %v715 = vadd.f32 %v626, %v714
  %v716 = vpop.f32.mrb[0].mxu0
  %717 = vmatprep.mubr.bf16.mxu0 %v274
  %718 = vmatmul.mubr.bf16.gmra.mrb[0].mxu0 %v273
  %v719 = vpop.f32.mrb[0].mxu0
  %v720 = vadd.f32 %v631, %v719
  %v721 = vpop.f32.mrb[0].mxu0
  %v722 = vpop.f32.mrb[0].mxu0
  %v723 = vadd.f32 %v634, %v722
  %v724 = vpop.f32.mrb[0].mxu0
  %725 = vmatprep.mubr.bf16.mxu0 %v279
  %726 = vmatmul.mubr.bf16.gmra.mrb[0].mxu0 %v278
  %v727 = vpop.f32.mrb[0].mxu0
  %v728 = vadd.f32 %v639, %v727
  %v729 = vpop.f32.mrb[0].mxu0
  %v730 = vpop.f32.mrb[0].mxu0
  %v731 = vadd.f32 %v642, %v730
  %v732 = vpop.f32.mrb[0].mxu0
  %733 = vdwg.mxu0
  %734 = vmatprep.subr.bf16.mxu0 0
  %735 = vmatpush1.bf16.msra.mxu0 %v508
  %736 = vmatprep.subr.bf16.mxu0 0
  %737 = vmatpush1.bf16.msra.mxu0 %v509
  %738 = vmatprep.subr.bf16.mxu0 0
  %739 = vmatpush1.bf16.msra.mxu0 %v510
  %740 = vmatprep.subr.bf16.mxu0 0
  %741 = vmatpush1.bf16.msra.mxu0 %v511
  %742 = vmatprep.subr.bf16.mxu0 0
  %743 = vmatpush1.bf16.msra.mxu0 %v512
  %744 = vmatprep.subr.bf16.mxu0 0
  %745 = vmatpush1.bf16.msra.mxu0 %v513
  %746 = vmatprep.subr.bf16.mxu0 0
  %747 = vmatpush1.bf16.msra.mxu0 %v514
  %748 = vmatprep.subr.bf16.mxu0 0
  %749 = vmatpush1.bf16.msra.mxu0 %v515
  %750 = vmatprep.subr.bf16.mxu0 0
  %751 = vmatpush1.bf16.msra.mxu0 0
  %752 = vmatprep.subr.bf16.mxu0 0
  %753 = vmatpush1.bf16.msra.mxu0 0
  %754 = vmatprep.subr.bf16.mxu0 0
  %755 = vmatpush1.bf16.msra.mxu0 0
  %756 = vmatprep.subr.bf16.mxu0 0
  %757 = vmatpush1.bf16.msra.mxu0 0
  %758 = vmatprep.subr.bf16.mxu0 0
  %759 = vmatpush1.bf16.msra.mxu0 0
  %760 = vmatprep.subr.bf16.mxu0 0
  %761 = vmatpush1.bf16.msra.mxu0 0
  %762 = vmatprep.subr.bf16.mxu0 0
  %763 = vmatpush1.bf16.msra.mxu0 0
  %764 = vmatprep.subr.bf16.mxu0 0
  %765 = vmatpush1.bf16.msra.mxu0 0
  %766 = vmatprep.mubr.bf16.mxu0 0
  %767 = vmatmul.mubr.bf16.gmra.mrb[0].mxu0 %v250
  %v768 = vpop.f32.mrb[0].mxu0
  %v769 = vadd.f32 %v680, %v768
  %v770 = vpop.f32.mrb[0].mxu0
  %v771 = vpop.f32.mrb[0].mxu0
  %v772 = vadd.f32 %v683, %v771
  %v773 = vpop.f32.mrb[0].mxu0
  %774 = vmatprep.mubr.bf16.mxu0 0
  %775 = vmatmul.mubr.bf16.gmra.mrb[0].mxu0 %v255
  %v776 = vpop.f32.mrb[0].mxu0
  %v777 = vadd.f32 %v688, %v776
  %v778 = vpop.f32.mrb[0].mxu0
  %v779 = vpop.f32.mrb[0].mxu0
  %v780 = vadd.f32 %v691, %v779
  %v781 = vpop.f32.mrb[0].mxu0
  %782 = vmatprep.mubr.bf16.mxu0 0
  %783 = vmatmul.mubr.bf16.gmra.mrb[0].mxu0 %v260
  %v784 = vpop.f32.mrb[0].mxu0
  %v785 = vadd.f32 %v696, %v784
  %v786 = vpop.f32.mrb[0].mxu0
  %v787 = vpop.f32.mrb[0].mxu0
  %v788 = vadd.f32 %v699, %v787
  %v789 = vpop.f32.mrb[0].mxu0
  %790 = vmatprep.mubr.bf16.mxu0 0
  %791 = vmatmul.mubr.bf16.gmra.mrb[0].mxu0 %v265
  %v792 = vpop.f32.mrb[0].mxu0
  %v793 = vadd.f32 %v704, %v792
  %v794 = vpop.f32.mrb[0].mxu0
  %v795 = vpop.f32.mrb[0].mxu0
  %v796 = vadd.f32 %v707, %v795
  %v797 = vpop.f32.mrb[0].mxu0
  %798 = vmatprep.mubr.bf16.mxu0 0
  %799 = vmatmul.mubr.bf16.gmra.mrb[0].mxu0 %v270
  %v800 = vpop.f32.mrb[0].mxu0
  %v801 = vadd.f32 %v712, %v800
  %v802 = vpop.f32.mrb[0].mxu0
  %v803 = vpop.f32.mrb[0].mxu0
  %v804 = vadd.f32 %v715, %v803
  %v805 = vpop.f32.mrb[0].mxu0
  %806 = vmatprep.mubr.bf16.mxu0 0
  %807 = vmatmul.mubr.bf16.gmra.mrb[0].mxu0 %v275
  %v808 = vpop.f32.mrb[0].mxu0
  %v809 = vadd.f32 %v720, %v808
  %v810 = vpop.f32.mrb[0].mxu0
  %v811 = vpop.f32.mrb[0].mxu0
  %v812 = vadd.f32 %v723, %v811
  %v813 = vpop.f32.mrb[0].mxu0
  %814 = vmatprep.mubr.bf16.mxu0 0
  %815 = vmatmul.mubr.bf16.gmra.mrb[0].mxu0 %v280
  %v816 = vpop.f32.mrb[0].mxu0
  %v817 = vadd.f32 %v728, %v816
  %v818 = vpop.f32.mrb[0].mxu0
  %v819 = vpop.f32.mrb[0].mxu0
  %v820 = vadd.f32 %v731, %v819
  %v821 = vpop.f32.mrb[0].mxu0
  %822 = vdwg.mxu0
  %v823 = vmax.f32 %v769, 0.0
  %v824 = vmax.f32 %v772, 0.0
  %v825 = vmax.f32 %v777, 0.0
  %v826 = vmax.f32 %v780, 0.0
  %v827 = vmax.f32 %v785, 0.0
  %v828 = vmax.f32 %v788, 0.0
  %v829 = vmax.f32 %v793, 0.0
  %v830 = vmax.f32 %v796, 0.0
  %v831 = vmax.f32 %v801, 0.0
  %v832 = vmax.f32 %v804, 0.0
  %v833 = vmax.f32 %v809, 0.0
  %v834 = vmax.f32 %v812, 0.0
  %v835 = vmax.f32 %v817, 0.0
  %v836 = vmax.f32 %v820, 0.0
  %v837 = vpack.c.bf16 %v824, %v823
  %v838 = vpack.c.bf16 %v826, %v825
  %v839 = vpack.c.bf16 %v828, %v827
  %v840 = vpack.c.bf16 %v830, %v829
  %v841 = vpack.c.bf16 %v832, %v831
  %v842 = vpack.c.bf16 %v834, %v833
  %v843 = vpack.c.bf16 %v836, %v835
  %v851 = vunpack.c.l.b16 %v837
  %v852 = vunpack.c.h.b16 %v837
  %v853 = vunpack.c.l.b16 %v838
  %v854 = vunpack.c.h.b16 %v838
  %v855 = vunpack.c.l.b16 %v839
  %v856 = vunpack.c.h.b16 %v839
  %v857 = vunpack.c.l.b16 %v840
  %v858 = vunpack.c.h.b16 %v840
  %v859 = vunpack.c.l.b16 %v841
  %v860 = vunpack.c.h.b16 %v841
  %v861 = vunpack.c.l.b16 %v842
  %v862 = vunpack.c.h.b16 %v842
  %v863 = vunpack.c.l.b16 %v843
  %v864 = vunpack.c.h.b16 %v843
  %v865 = vpack.c.b16 %v851, %v851
  %v866 = vpack.c.b16 %v852, %v852
  %v867 = vpack.c.b16 %v853, %v853
  %v868 = vpack.c.b16 %v854, %v854
  %v869 = vpack.c.b16 %v855, %v855
  %v870 = vpack.c.b16 %v856, %v856
  %v871 = vpack.c.b16 %v857, %v857
  %v872 = vpack.c.b16 %v858, %v858
  %v873 = vpack.c.b16 %v859, %v859
  %v874 = vpack.c.b16 %v860, %v860
  %v875 = vpack.c.b16 %v861, %v861
  %v876 = vpack.c.b16 %v862, %v862
  %v877 = vpack.c.b16 %v863, %v863
  %v878 = vpack.c.b16 %v864, %v864
  %893 = vst [vmem:[%s2] sm:$0xf] %v865
  %894 = vst [vmem:[%s2 + $0x4] sm:$0xf] %v866
  %895 = vst [vmem:[%s2 + $0x8] sm:$0xf] %v867
  %896 = vst [vmem:[%s2 + $0xc] sm:$0xf] %v868
  %897 = vst [vmem:[%s2 + $0x10] sm:$0xf] %v869
  %898 = vst [vmem:[%s2 + $0x14] sm:$0xf] %v870
  %899 = vst [vmem:[%s2 + $0x18] sm:$0xf] %v871
  %900 = vst [vmem:[%s2 + $0x1c] sm:$0xf] %v872
  %901 = vst [vmem:[%s2 + $0x20] sm:$0xf] %v873
  %902 = vst [vmem:[%s2 + $0x24] sm:$0xf] %v874
  %903 = vst [vmem:[%s2 + $0x28] sm:$0xf] %v875
  %904 = vst [vmem:[%s2 + $0x2c] sm:$0xf] %v876
  %905 = vst [vmem:[%s2 + $0x30] sm:$0xf] %v877
  %906 = vst [vmem:[%s2 + $0x34] sm:$0xf] %v878
  // Predicated region
  $region10: #{dqn_forward.6} parent=0 // pred_check
    _
  $region11: #{dqn_forward.6} parent=0 // pred_check_branch
    %908 = sbr.rel (0) target = $region13
  $region12: #{dqn_forward.6} parent=0 // pred_region
    _
  $region13: #{dqn_forward.6} parent=0 // pred_fallthru
    _
  // Predicated region
  $region14: #{dqn_forward.6} parent=0 // pred_check
    _
  $region15: #{dqn_forward.6} parent=0 // pred_check_branch
    %910 = sbr.rel (0) target = $region17
  $region16: #{dqn_forward.6} parent=0 // pred_region
    _
  $region17: #{dqn_forward.6} parent=0 // pred_fallthru
    _

// kernel: dqn_forward.7
$region0: #{dqn_forward.7}
  #allocation0 [shape = 'u32[]', space=smem, size = 0x4, offset = 0x4, fixed_abs, tag = 'smem constant byte address 0x4 - core index']
  #allocation1 [shape = 'u32[144,128]{1,0:T(1,128)}', space=vmem, size = 0x12000, scoped, tag = 'internal scratch']
  %s0 = inlined_call_operand.vmem [shape: bf16[8,3200], index: 0, kind: input, shape index: {}]
  %s1 = inlined_call_operand.vmem [shape: bf16[3200,512], index: 1, kind: input, shape index: {}]
  %s2 = inlined_call_operand.vmem [shape: f32[1,512], index: 2, kind: input, shape index: {}]
  %s3 = inlined_call_operand.vmem [shape: bf16[512,128], index: 3, kind: input, shape index: {}]
  %s4 = inlined_call_operand.vmem [shape: f32[1,128], index: 4, kind: input, shape index: {}]
  %s5 = inlined_call_operand.vmem [shape: f32[8,128], index: 5, kind: output, shape index: {}]
  %s6 = sld [smem:[#allocation0]]
  $region30: #{dqn_forward.7} parent=0
    _
  %s8 = ssub.s32 1, %s6
  %s9 = scalar_select 0, %s8, %s6
  // Predicated region
  $region2: #{dqn_forward.7} parent=0 // pred_check
    _
  $region3: #{dqn_forward.7} parent=0 // pred_check_branch
    %11 = sbr.rel (0) target = $region5
  $region4: #{dqn_forward.7} parent=0 // pred_region
    _
  $region5: #{dqn_forward.7} parent=0 // pred_fallthru
    _
  // Predicated region
  $region6: #{dqn_forward.7} parent=0 // pred_check
    _
  $region7: #{dqn_forward.7} parent=0 // pred_check_branch
    %13 = sbr.rel (0) target = $region9
  $region8: #{dqn_forward.7} parent=0 // pred_region
    _
  $region9: #{dqn_forward.7} parent=0 // pred_fallthru
    _
  // Predicated region
  $region10: #{dqn_forward.7} parent=0 // pred_check
    _
  $region11: #{dqn_forward.7} parent=0 // pred_check_branch
    %15 = sbr.rel (0) target = $region13
  $region12: #{dqn_forward.7} parent=0 // pred_region
    _
  $region13: #{dqn_forward.7} parent=0 // pred_fallthru
    _
  // Predicated region
  $region14: #{dqn_forward.7} parent=0 // pred_check
    _
  $region15: #{dqn_forward.7} parent=0 // pred_check_branch
    %17 = sbr.rel (0) target = $region17
  $region16: #{dqn_forward.7} parent=0 // pred_region
    _
  $region17: #{dqn_forward.7} parent=0 // pred_fallthru
    _
  // Predicated region
  $region18: #{dqn_forward.7} parent=0 // pred_check
    _
  $region19: #{dqn_forward.7} parent=0 // pred_check_branch
    %19 = sbr.rel (0) target = $region21
  $region20: #{dqn_forward.7} parent=0 // pred_region
    _
  $region21: #{dqn_forward.7} parent=0 // pred_fallthru
    _
  %v21 = vld [vmem:[%s0] sm:$0xff]
  %v22 = vld [vmem:[%s0 + $0x8] sm:$0xff]
  %v23 = vld [vmem:[%s0 + $0x10] sm:$0xff]
  %v24 = vld [vmem:[%s0 + $0x18] sm:$0xff]
  %v25 = vld [vmem:[%s0 + $0x20] sm:$0xff]
  %v26 = vld [vmem:[%s0 + $0x28] sm:$0xff]
  %v27 = vld [vmem:[%s0 + $0x30] sm:$0xff]
  %v28 = vld [vmem:[%s0 + $0x38] sm:$0xff]
  %v29 = vld [vmem:[%s0 + $0x40] sm:$0xff]
  %v30 = vld [vmem:[%s0 + $0x48] sm:$0xff]
  %v31 = vld [vmem:[%s0 + $0x50] sm:$0xff]
  %v32 = vld [vmem:[%s0 + $0x58] sm:$0xff]
  %v33 = vld [vmem:[%s0 + $0x60] sm:$0xf]
  %v34 = vld [vmem:[%s1] sm:$0xff]
  %v35 = vld [vmem:[%s1 + $0x8] sm:$0xff]
  %v36 = vld [vmem:[%s1 + $0x10] sm:$0xff]
  %v37 = vld [vmem:[%s1 + $0x18] sm:$0xff]
  %v38 = vld [vmem:[%s1 + $0x20] sm:$0xff]
  %v39 = vld [vmem:[%s1 + $0x28] sm:$0xff]
  %v40 = vld [vmem:[%s1 + $0x30] sm:$0xff]
  %v41 = vld [vmem:[%s1 + $0x38] sm:$0xff]
  %v42 = vld [vmem:[%s1 + $0x40] sm:$0xff]
  %v43 = vld [vmem:[%s1 + $0x48] sm:$0xff]
  %v44 = vld [vmem:[%s1 + $0x50] sm:$0xff]
  %v45 = vld [vmem:[%s1 + $0x58] sm:$0xff]
  %v46 = vld [vmem:[%s1 + $0x60] sm:$0xff]
  %v47 = vld [vmem:[%s1 + $0x68] sm:$0xff]
  %v48 = vld [vmem:[%s1 + $0x70] sm:$0xff]
  %v49 = vld [vmem:[%s1 + $0x78] sm:$0xff]
  %v50 = vld [vmem:[%s1 + $0x80] sm:$0xff]
  %v51 = vld [vmem:[%s1 + $0x88] sm:$0xff]
  %v52 = vld [vmem:[%s1 + $0x90] sm:$0xff]
  %v53 = vld [vmem:[%s1 + $0x98] sm:$0xff]
  %v54 = vld [vmem:[%s1 + $0xa0] sm:$0xff]
  %v55 = vld [vmem:[%s1 + $0xa8] sm:$0xff]
  %v56 = vld [vmem:[%s1 + $0xb0] sm:$0xff]
  %v57 = vld [vmem:[%s1 + $0xb8] sm:$0xff]
  %v58 = vld [vmem:[%s1 + $0xc0] sm:$0xff]
  %v59 = vld [vmem:[%s1 + $0xc8] sm:$0xff]
  %v60 = vld [vmem:[%s1 + $0xd0] sm:$0xff]
  %v61 = vld [vmem:[%s1 + $0xd8] sm:$0xff]
  %v62 = vld [vmem:[%s1 + $0xe0] sm:$0xff]
  %v63 = vld [vmem:[%s1 + $0xe8] sm:$0xff]
  %v64 = vld [vmem:[%s1 + $0xf0] sm:$0xff]
  %v65 = vld [vmem:[%s1 + $0xf8] sm:$0xff]
  %v66 = vld [vmem:[%s1 + $0x100] sm:$0xff]
  %v67 = vld [vmem:[%s1 + $0x108] sm:$0xff]
  %v68 = vld [vmem:[%s1 + $0x110] sm:$0xff]
  %v69 = vld [vmem:[%s1 + $0x118] sm:$0xff]
  %v70 = vld [vmem:[%s1 + $0x120] sm:$0xff]
  %v71 = vld [vmem:[%s1 + $0x128] sm:$0xff]
  %v72 = vld [vmem:[%s1 + $0x130] sm:$0xff]
  %v73 = vld [vmem:[%s1 + $0x138] sm:$0xff]
  %v74 = vld [vmem:[%s1 + $0x140] sm:$0xff]
  %v75 = vld [vmem:[%s1 + $0x148] sm:$0xff]
  %v76 = vld [vmem:[%s1 + $0x150] sm:$0xff]
  %v77 = vld [vmem:[%s1 + $0x158] sm:$0xff]
  %v78 = vld [vmem:[%s1 + $0x160] sm:$0xff]
  %v79 = vld [vmem:[%s1 + $0x168] sm:$0xff]
  %v80 = vld [vmem:[%s1 + $0x170] sm:$0xff]
  %v81 = vld [vmem:[%s1 + $0x178] sm:$0xff]
  %v82 = vld [vmem:[%s1 + $0x180] sm:$0xff]
  %v83 = vld [vmem:[%s1 + $0x188] sm:$0xff]
  %v84 = vld [vmem:[%s1 + $0x190] sm:$0xff]
  %v85 = vld [vmem:[%s1 + $0x198] sm:$0xff]
  %v86 = vld [vmem:[%s1 + $0x1a0] sm:$0xff]
  %v87 = vld [vmem:[%s1 + $0x1a8] sm:$0xff]
  %v88 = vld [vmem:[%s1 + $0x1b0] sm:$0xff]
  %v89 = vld [vmem:[%s1 + $0x1b8] sm:$0xff]
  %v90 = vld [vmem:[%s1 + $0x1c0] sm:$0xff]
  %v91 = vld [vmem:[%s1 + $0x1c8] sm:$0xff]
  %v92 = vld [vmem:[%s1 + $0x1d0] sm:$0xff]
  %v93 = vld [vmem:[%s1 + $0x1d8] sm:$0xff]
  %v94 = vld [vmem:[%s1 + $0x1e0] sm:$0xff]
  %v95 = vld [vmem:[%s1 + $0x1e8] sm:$0xff]
  %v96 = vld [vmem:[%s1 + $0x1f0] sm:$0xff]
  %v97 = vld [vmem:[%s1 + $0x1f8] sm:$0xff]
  %v98 = vld [vmem:[%s1 + $0x200] sm:$0xff]
  %v99 = vld [vmem:[%s1 + $0x208] sm:$0xff]
  %v100 = vld [vmem:[%s1 + $0x210] sm:$0xff]
  %v101 = vld [vmem:[%s1 + $0x218] sm:$0xff]
  %v102 = vld [vmem:[%s1 + $0x220] sm:$0xff]
  %v103 = vld [vmem:[%s1 + $0x228] sm:$0xff]
  %v104 = vld [vmem:[%s1 + $0x230] sm:$0xff]
  %v105 = vld [vmem:[%s1 + $0x238] sm:$0xff]
  %v106 = vld [vmem:[%s1 + $0x240] sm:$0xff]
  %v107 = vld [vmem:[%s1 + $0x248] sm:$0xff]
  %v108 = vld [vmem:[%s1 + $0x250] sm:$0xff]
  %v109 = vld [vmem:[%s1 + $0x258] sm:$0xff]
  %v110 = vld [vmem:[%s1 + $0x260] sm:$0xff]
  %v111 = vld [vmem:[%s1 + $0x268] sm:$0xff]
  %v112 = vld [vmem:[%s1 + $0x270] sm:$0xff]
  %v113 = vld [vmem:[%s1 + $0x278] sm:$0xff]
  %v114 = vld [vmem:[%s1 + $0x280] sm:$0xff]
  %v115 = vld [vmem:[%s1 + $0x288] sm:$0xff]
  %v116 = vld [vmem:[%s1 + $0x290] sm:$0xff]
  %v117 = vld [vmem:[%s1 + $0x298] sm:$0xff]
  %v118 = vld [vmem:[%s1 + $0x2a0] sm:$0xff]
  %v119 = vld [vmem:[%s1 + $0x2a8] sm:$0xff]
  %v120 = vld [vmem:[%s1 + $0x2b0] sm:$0xff]
  %v121 = vld [vmem:[%s1 + $0x2b8] sm:$0xff]
  %v122 = vld [vmem:[%s1 + $0x2c0] sm:$0xff]
  %v123 = vld [vmem:[%s1 + $0x2c8] sm:$0xff]
  %v124 = vld [vmem:[%s1 + $0x2d0] sm:$0xff]
  %v125 = vld [vmem:[%s1 + $0x2d8] sm:$0xff]
  %v126 = vld [vmem:[%s1 + $0x2e0] sm:$0xff]
  %v127 = vld [vmem:[%s1 + $0x2e8] sm:$0xff]
  %v128 = vld [vmem:[%s1 + $0x2f0] sm:$0xff]
  %v129 = vld [vmem:[%s1 + $0x2f8] sm:$0xff]
  %v130 = vld [vmem:[%s1 + $0x300] sm:$0xff]
  %v131 = vld [vmem:[%s1 + $0x308] sm:$0xff]
  %v132 = vld [vmem:[%s1 + $0x310] sm:$0xff]
  %v133 = vld [vmem:[%s1 + $0x318] sm:$0xff]
  %v134 = vld [vmem:[%s1 + $0x320] sm:$0xff]
  %v135 = vld [vmem:[%s1 + $0x328] sm:$0xff]
  %v136 = vld [vmem:[%s1 + $0x330] sm:$0xff]
  %v137 = vld [vmem:[%s1 + $0x338] sm:$0xff]
  %v138 = vld [vmem:[%s1 + $0x340] sm:$0xff]
  %v139 = vld [vmem:[%s1 + $0x348] sm:$0xff]
  %v140 = vld [vmem:[%s1 + $0x350] sm:$0xff]
  %v141 = vld [vmem:[%s1 + $0x358] sm:$0xff]
  %v142 = vld [vmem:[%s1 + $0x360] sm:$0xff]
  %v143 = vld [vmem:[%s1 + $0x368] sm:$0xff]
  %v144 = vld [vmem:[%s1 + $0x370] sm:$0xff]
  %v145 = vld [vmem:[%s1 + $0x378] sm:$0xff]
  %v146 = vld [vmem:[%s1 + $0x380] sm:$0xff]
  %v147 = vld [vmem:[%s1 + $0x388] sm:$0xff]
  %v148 = vld [vmem:[%s1 + $0x390] sm:$0xff]
  %v149 = vld [vmem:[%s1 + $0x398] sm:$0xff]
  %v150 = vld [vmem:[%s1 + $0x3a0] sm:$0xff]
  %v151 = vld [vmem:[%s1 + $0x3a8] sm:$0xff]
  %v152 = vld [vmem:[%s1 + $0x3b0] sm:$0xff]
  %v153 = vld [vmem:[%s1 + $0x3b8] sm:$0xff]
  %v154 = vld [vmem:[%s1 + $0x3c0] sm:$0xff]
  %v155 = vld [vmem:[%s1 + $0x3c8] sm:$0xff]
  %v156 = vld [vmem:[%s1 + $0x3d0] sm:$0xff]
  %v157 = vld [vmem:[%s1 + $0x3d8] sm:$0xff]
  %v158 = vld [vmem:[%s1 + $0x3e0] sm:$0xff]
  %v159 = vld [vmem:[%s1 + $0x3e8] sm:$0xff]
  %v160 = vld [vmem:[%s1 + $0x3f0] sm:$0xff]
  %v161 = vld [vmem:[%s1 + $0x3f8] sm:$0xff]
  %v162 = vld [vmem:[%s1 + $0x400] sm:$0xff]
  %v163 = vld [vmem:[%s1 + $0x408] sm:$0xff]
  %v164 = vld [vmem:[%s1 + $0x410] sm:$0xff]
  %v165 = vld [vmem:[%s1 + $0x418] sm:$0xff]
  %v166 = vld [vmem:[%s1 + $0x420] sm:$0xff]
  %v167 = vld [vmem:[%s1 + $0x428] sm:$0xff]
  %v168 = vld [vmem:[%s1 + $0x430] sm:$0xff]
  %v169 = vld [vmem:[%s1 + $0x438] sm:$0xff]
  %v170 = vld [vmem:[%s1 + $0x440] sm:$0xff]
  %v171 = vld [vmem:[%s1 + $0x448] sm:$0xff]
  %v172 = vld [vmem:[%s1 + $0x450] sm:$0xff]
  %v173 = vld [vmem:[%s1 + $0x458] sm:$0xff]
  %v174 = vld [vmem:[%s1 + $0x460] sm:$0xff]
  %v175 = vld [vmem:[%s1 + $0x468] sm:$0xff]
  %v176 = vld [vmem:[%s1 + $0x470] sm:$0xff]
  %v177 = vld [vmem:[%s1 + $0x478] sm:$0xff]
  %v178 = vld [vmem:[%s1 + $0x480] sm:$0xff]
  %v179 = vld [vmem:[%s1 + $0x488] sm:$0xff]
  %v180 = vld [vmem:[%s1 + $0x490] sm:$0xff]
  %v181 = vld [vmem:[%s1 + $0x498] sm:$0xff]
  %v182 = vld [vmem:[%s1 + $0x4a0] sm:$0xff]
  %v183 = vld [vmem:[%s1 + $0x4a8] sm:$0xff]
  %v184 = vld [vmem:[%s1 + $0x4b0] sm:$0xff]
  %v185 = vld [vmem:[%s1 + $0x4b8] sm:$0xff]
  %v186 = vld [vmem:[%s1 + $0x4c0] sm:$0xff]
  %v187 = vld [vmem:[%s1 + $0x4c8] sm:$0xff]
  %v188 = vld [vmem:[%s1 + $0x4d0] sm:$0xff]
  %v189 = vld [vmem:[%s1 + $0x4d8] sm:$0xff]
  %v190 = vld [vmem:[%s1 + $0x4e0] sm:$0xff]
  %v191 = vld [vmem:[%s1 + $0x4e8] sm:$0xff]
  %v192 = vld [vmem:[%s1 + $0x4f0] sm:$0xff]
  %v193 = vld [vmem:[%s1 + $0x4f8] sm:$0xff]
  %v194 = vld [vmem:[%s1 + $0x500] sm:$0xff]
  %v195 = vld [vmem:[%s1 + $0x508] sm:$0xff]
  %v196 = vld [vmem:[%s1 + $0x510] sm:$0xff]
  %v197 = vld [vmem:[%s1 + $0x518] sm:$0xff]
  %v198 = vld [vmem:[%s1 + $0x520] sm:$0xff]
  %v199 = vld [vmem:[%s1 + $0x528] sm:$0xff]
  %v200 = vld [vmem:[%s1 + $0x530] sm:$0xff]
  %v201 = vld [vmem:[%s1 + $0x538] sm:$0xff]
  %v202 = vld [vmem:[%s1 + $0x540] sm:$0xff]
  %v203 = vld [vmem:[%s1 + $0x548] sm:$0xff]
  %v204 = vld [vmem:[%s1 + $0x550] sm:$0xff]
  %v205 = vld [vmem:[%s1 + $0x558] sm:$0xff]
  %v206 = vld [vmem:[%s1 + $0x560] sm:$0xff]
  %v207 = vld [vmem:[%s1 + $0x568] sm:$0xff]
  %v208 = vld [vmem:[%s1 + $0x570] sm:$0xff]
  %v209 = vld [vmem:[%s1 + $0x578] sm:$0xff]
  %v210 = vld [vmem:[%s1 + $0x580] sm:$0xff]
  %v211 = vld [vmem:[%s1 + $0x588] sm:$0xff]
  %v212 = vld [vmem:[%s1 + $0x590] sm:$0xff]
  %v213 = vld [vmem:[%s1 + $0x598] sm:$0xff]
  %v214 = vld [vmem:[%s1 + $0x5a0] sm:$0xff]
  %v215 = vld [vmem:[%s1 + $0x5a8] sm:$0xff]
  %v216 = vld [vmem:[%s1 + $0x5b0] sm:$0xff]
  %v217 = vld [vmem:[%s1 + $0x5b8] sm:$0xff]
  %v218 = vld [vmem:[%s1 + $0x5c0] sm:$0xff]
  %v219 = vld [vmem:[%s1 + $0x5c8] sm:$0xff]
  %v220 = vld [vmem:[%s1 + $0x5d0] sm:$0xff]
  %v221 = vld [vmem:[%s1 + $0x5d8] sm:$0xff]
  %v222 = vld [vmem:[%s1 + $0x5e0] sm:$0xff]
  %v223 = vld [vmem:[%s1 + $0x5e8] sm:$0xff]
  %v224 = vld [vmem:[%s1 + $0x5f0] sm:$0xff]
  %v225 = vld [vmem:[%s1 + $0x5f8] sm:$0xff]
  %v226 = vld [vmem:[%s1 + $0x600] sm:$0xff]
  %v227 = vld [vmem:[%s1 + $0x608] sm:$0xff]
  %v228 = vld [vmem:[%s1 + $0x610] sm:$0xff]
  %v229 = vld [vmem:[%s1 + $0x618] sm:$0xff]
  %v230 = vld [vmem:[%s1 + $0x620] sm:$0xff]
  %v231 = vld [vmem:[%s1 + $0x628] sm:$0xff]
  %v232 = vld [vmem:[%s1 + $0x630] sm:$0xff]
  %v233 = vld [vmem:[%s1 + $0x638] sm:$0xff]
  %v234 = vld [vmem:[%s1 + $0x640] sm:$0xff]
  %v235 = vld [vmem:[%s1 + $0x648] sm:$0xff]
  %v236 = vld [vmem:[%s1 + $0x650] sm:$0xff]
  %v237 = vld [vmem:[%s1 + $0x658] sm:$0xff]
  %v238 = vld [vmem:[%s1 + $0x660] sm:$0xff]
  %v239 = vld [vmem:[%s1 + $0x668] sm:$0xff]
  %v240 = vld [vmem:[%s1 + $0x670] sm:$0xff]
  %v241 = vld [vmem:[%s1 + $0x678] sm:$0xff]
  %v242 = vld [vmem:[%s1 + $0x680] sm:$0xff]
  %v243 = vld [vmem:[%s1 + $0x688] sm:$0xff]
  %v244 = vld [vmem:[%s1 + $0x690] sm:$0xff]
  %v245 = vld [vmem:[%s1 + $0x698] sm:$0xff]
  %v246 = vld [vmem:[%s1 + $0x6a0] sm:$0xff]
  %v247 = vld [vmem:[%s1 + $0x6a8] sm:$0xff]
  %v248 = vld [vmem:[%s1 + $0x6b0] sm:$0xff]
  %v249 = vld [vmem:[%s1 + $0x6b8] sm:$0xff]
  %v250 = vld [vmem:[%s1 + $0x6c0] sm:$0xff]
  %v251 = vld [vmem:[%s1 + $0x6c8] sm:$0xff]
  %v252 = vld [vmem:[%s1 + $0x6d0] sm:$0xff]
  %v253 = vld [vmem:[%s1 + $0x6d8] sm:$0xff]
  %v254 = vld [vmem:[%s1 + $0x6e0] sm:$0xff]
  %v255 = vld [vmem:[%s1 + $0x6e8] sm:$0xff]
  %v256 = vld [vmem:[%s1 + $0x6f0] sm:$0xff]
  %v257 = vld [vmem:[%s1 + $0x6f8] sm:$0xff]
  %v258 = vld [vmem:[%s1 + $0x700] sm:$0xff]
  %v259 = vld [vmem:[%s1 + $0x708] sm:$0xff]
  %v260 = vld [vmem:[%s1 + $0x710] sm:$0xff]
  %v261 = vld [vmem:[%s1 + $0x718] sm:$0xff]
  %v262 = vld [vmem:[%s1 + $0x720] sm:$0xff]
  %v263 = vld [vmem:[%s1 + $0x728] sm:$0xff]
  %v264 = vld [vmem:[%s1 + $0x730] sm:$0xff]
  %v265 = vld [vmem:[%s1 + $0x738] sm:$0xff]
  %v266 = vld [vmem:[%s1 + $0x740] sm:$0xff]
  %v267 = vld [vmem:[%s1 + $0x748] sm:$0xff]
  %v268 = vld [vmem:[%s1 + $0x750] sm:$0xff]
  %v269 = vld [vmem:[%s1 + $0x758] sm:$0xff]
  %v270 = vld [vmem:[%s1 + $0x760] sm:$0xff]
  %v271 = vld [vmem:[%s1 + $0x768] sm:$0xff]
  %v272 = vld [vmem:[%s1 + $0x770] sm:$0xff]
  %v273 = vld [vmem:[%s1 + $0x778] sm:$0xff]
  %v274 = vld [vmem:[%s1 + $0x780] sm:$0xff]
  %v275 = vld [vmem:[%s1 + $0x788] sm:$0xff]
  %v276 = vld [vmem:[%s1 + $0x790] sm:$0xff]
  %v277 = vld [vmem:[%s1 + $0x798] sm:$0xff]
  %v278 = vld [vmem:[%s1 + $0x7a0] sm:$0xff]
  %v279 = vld [vmem:[%s1 + $0x7a8] sm:$0xff]
  %v280 = vld [vmem:[%s1 + $0x7b0] sm:$0xff]
  %v281 = vld [vmem:[%s1 + $0x7b8] sm:$0xff]
  %v282 = vld [vmem:[%s1 + $0x7c0] sm:$0xff]
  %v283 = vld [vmem:[%s1 + $0x7c8] sm:$0xff]
  %v284 = vld [vmem:[%s1 + $0x7d0] sm:$0xff]
  %v285 = vld [vmem:[%s1 + $0x7d8] sm:$0xff]
  %v286 = vld [vmem:[%s1 + $0x7e0] sm:$0xff]
  %v287 = vld [vmem:[%s1 + $0x7e8] sm:$0xff]
  %v288 = vld [vmem:[%s1 + $0x7f0] sm:$0xff]
  %v289 = vld [vmem:[%s1 + $0x7f8] sm:$0xff]
  %v290 = vld [vmem:[%s1 + $0x800] sm:$0xff]
  %v291 = vld [vmem:[%s1 + $0x808] sm:$0xff]
  %v292 = vld [vmem:[%s1 + $0x810] sm:$0xff]
  %v293 = vld [vmem:[%s1 + $0x818] sm:$0xff]
  %v294 = vld [vmem:[%s1 + $0x820] sm:$0xff]
  %v295 = vld [vmem:[%s1 + $0x828] sm:$0xff]
  %v296 = vld [vmem:[%s1 + $0x830] sm:$0xff]
  %v297 = vld [vmem:[%s1 + $0x838] sm:$0xff]
  %v298 = vld [vmem:[%s1 + $0x840] sm:$0xff]
  %v299 = vld [vmem:[%s1 + $0x848] sm:$0xff]
  %v300 = vld [vmem:[%s1 + $0x850] sm:$0xff]
  %v301 = vld [vmem:[%s1 + $0x858] sm:$0xff]
  %v302 = vld [vmem:[%s1 + $0x860] sm:$0xff]
  %v303 = vld [vmem:[%s1 + $0x868] sm:$0xff]
  %v304 = vld [vmem:[%s1 + $0x870] sm:$0xff]
  %v305 = vld [vmem:[%s1 + $0x878] sm:$0xff]
  %v306 = vld [vmem:[%s1 + $0x880] sm:$0xff]
  %v307 = vld [vmem:[%s1 + $0x888] sm:$0xff]
  %v308 = vld [vmem:[%s1 + $0x890] sm:$0xff]
  %v309 = vld [vmem:[%s1 + $0x898] sm:$0xff]
  %v310 = vld [vmem:[%s1 + $0x8a0] sm:$0xff]
  %v311 = vld [vmem:[%s1 + $0x8a8] sm:$0xff]
  %v312 = vld [vmem:[%s1 + $0x8b0] sm:$0xff]
  %v313 = vld [vmem:[%s1 + $0x8b8] sm:$0xff]
  %v314 = vld [vmem:[%s1 + $0x8c0] sm:$0xff]
  %v315 = vld [vmem:[%s1 + $0x8c8] sm:$0xff]
  %v316 = vld [vmem:[%s1 + $0x8d0] sm:$0xff]
  %v317 = vld [vmem:[%s1 + $0x8d8] sm:$0xff]
  %v318 = vld [vmem:[%s1 + $0x8e0] sm:$0xff]
  %v319 = vld [vmem:[%s1 + $0x8e8] sm:$0xff]
  %v320 = vld [vmem:[%s1 + $0x8f0] sm:$0xff]
  %v321 = vld [vmem:[%s1 + $0x8f8] sm:$0xff]
  %v322 = vld [vmem:[%s1 + $0x900] sm:$0xff]
  %v323 = vld [vmem:[%s1 + $0x908] sm:$0xff]
  %v324 = vld [vmem:[%s1 + $0x910] sm:$0xff]
  %v325 = vld [vmem:[%s1 + $0x918] sm:$0xff]
  %v326 = vld [vmem:[%s1 + $0x920] sm:$0xff]
  %v327 = vld [vmem:[%s1 + $0x928] sm:$0xff]
  %v328 = vld [vmem:[%s1 + $0x930] sm:$0xff]
  %v329 = vld [vmem:[%s1 + $0x938] sm:$0xff]
  %v330 = vld [vmem:[%s1 + $0x940] sm:$0xff]
  %v331 = vld [vmem:[%s1 + $0x948] sm:$0xff]
  %v332 = vld [vmem:[%s1 + $0x950] sm:$0xff]
  %v333 = vld [vmem:[%s1 + $0x958] sm:$0xff]
  %v334 = vld [vmem:[%s1 + $0x960] sm:$0xff]
  %v335 = vld [vmem:[%s1 + $0x968] sm:$0xff]
  %v336 = vld [vmem:[%s1 + $0x970] sm:$0xff]
  %v337 = vld [vmem:[%s1 + $0x978] sm:$0xff]
  %v338 = vld [vmem:[%s1 + $0x980] sm:$0xff]
  %v339 = vld [vmem:[%s1 + $0x988] sm:$0xff]
  %v340 = vld [vmem:[%s1 + $0x990] sm:$0xff]
  %v341 = vld [vmem:[%s1 + $0x998] sm:$0xff]
  %v342 = vld [vmem:[%s1 + $0x9a0] sm:$0xff]
  %v343 = vld [vmem:[%s1 + $0x9a8] sm:$0xff]
  %v344 = vld [vmem:[%s1 + $0x9b0] sm:$0xff]
  %v345 = vld [vmem:[%s1 + $0x9b8] sm:$0xff]
  %v346 = vld [vmem:[%s1 + $0x9c0] sm:$0xff]
  %v347 = vld [vmem:[%s1 + $0x9c8] sm:$0xff]
  %v348 = vld [vmem:[%s1 + $0x9d0] sm:$0xff]
  %v349 = vld [vmem:[%s1 + $0x9d8] sm:$0xff]
  %v350 = vld [vmem:[%s1 + $0x9e0] sm:$0xff]
  %v351 = vld [vmem:[%s1 + $0x9e8] sm:$0xff]
  %v352 = vld [vmem:[%s1 + $0x9f0] sm:$0xff]
  %v353 = vld [vmem:[%s1 + $0x9f8] sm:$0xff]
  %v354 = vld [vmem:[%s1 + $0xa00] sm:$0xff]
  %v355 = vld [vmem:[%s1 + $0xa08] sm:$0xff]
  %v356 = vld [vmem:[%s1 + $0xa10] sm:$0xff]
  %v357 = vld [vmem:[%s1 + $0xa18] sm:$0xff]
  %v358 = vld [vmem:[%s1 + $0xa20] sm:$0xff]
  %v359 = vld [vmem:[%s1 + $0xa28] sm:$0xff]
  %v360 = vld [vmem:[%s1 + $0xa30] sm:$0xff]
  %v361 = vld [vmem:[%s1 + $0xa38] sm:$0xff]
  %v362 = vld [vmem:[%s1 + $0xa40] sm:$0xff]
  %v363 = vld [vmem:[%s1 + $0xa48] sm:$0xff]
  %v364 = vld [vmem:[%s1 + $0xa50] sm:$0xff]
  %v365 = vld [vmem:[%s1 + $0xa58] sm:$0xff]
  %v366 = vld [vmem:[%s1 + $0xa60] sm:$0xff]
  %v367 = vld [vmem:[%s1 + $0xa68] sm:$0xff]
  %v368 = vld [vmem:[%s1 + $0xa70] sm:$0xff]
  %v369 = vld [vmem:[%s1 + $0xa78] sm:$0xff]
  %v370 = vld [vmem:[%s1 + $0xa80] sm:$0xff]
  %v371 = vld [vmem:[%s1 + $0xa88] sm:$0xff]
  %v372 = vld [vmem:[%s1 + $0xa90] sm:$0xff]
  %v373 = vld [vmem:[%s1 + $0xa98] sm:$0xff]
  %v374 = vld [vmem:[%s1 + $0xaa0] sm:$0xff]
  %v375 = vld [vmem:[%s1 + $0xaa8] sm:$0xff]
  %v376 = vld [vmem:[%s1 + $0xab0] sm:$0xff]
  %v377 = vld [vmem:[%s1 + $0xab8] sm:$0xff]
  %v378 = vld [vmem:[%s1 + $0xac0] sm:$0xff]
  %v379 = vld [vmem:[%s1 + $0xac8] sm:$0xff]
  %v380 = vld [vmem:[%s1 + $0xad0] sm:$0xff]
  %v381 = vld [vmem:[%s1 + $0xad8] sm:$0xff]
  %v382 = vld [vmem:[%s1 + $0xae0] sm:$0xff]
  %v383 = vld [vmem:[%s1 + $0xae8] sm:$0xff]
  %v384 = vld [vmem:[%s1 + $0xaf0] sm:$0xff]
  %v385 = vld [vmem:[%s1 + $0xaf8] sm:$0xff]
  %v386 = vld [vmem:[%s1 + $0xb00] sm:$0xff]
  %v387 = vld [vmem:[%s1 + $0xb08] sm:$0xff]
  %v388 = vld [vmem:[%s1 + $0xb10] sm:$0xff]
  %v389 = vld [vmem:[%s1 + $0xb18] sm:$0xff]
  %v390 = vld [vmem:[%s1 + $0xb20] sm:$0xff]
  %v391 = vld [vmem:[%s1 + $0xb28] sm:$0xff]
  %v392 = vld [vmem:[%s1 + $0xb30] sm:$0xff]
  %v393 = vld [vmem:[%s1 + $0xb38] sm:$0xff]
  %v394 = vld [vmem:[%s1 + $0xb40] sm:$0xff]
  %v395 = vld [vmem:[%s1 + $0xb48] sm:$0xff]
  %v396 = vld [vmem:[%s1 + $0xb50] sm:$0xff]
  %v397 = vld [vmem:[%s1 + $0xb58] sm:$0xff]
  %v398 = vld [vmem:[%s1 + $0xb60] sm:$0xff]
  %v399 = vld [vmem:[%s1 + $0xb68] sm:$0xff]
  %v400 = vld [vmem:[%s1 + $0xb70] sm:$0xff]
  %v401 = vld [vmem:[%s1 + $0xb78] sm:$0xff]
  %v402 = vld [vmem:[%s1 + $0xb80] sm:$0xff]
  %v403 = vld [vmem:[%s1 + $0xb88] sm:$0xff]
  %v404 = vld [vmem:[%s1 + $0xb90] sm:$0xff]
  %v405 = vld [vmem:[%s1 + $0xb98] sm:$0xff]
  %v406 = vld [vmem:[%s1 + $0xba0] sm:$0xff]
  %v407 = vld [vmem:[%s1 + $0xba8] sm:$0xff]
  %v408 = vld [vmem:[%s1 + $0xbb0] sm:$0xff]
  %v409 = vld [vmem:[%s1 + $0xbb8] sm:$0xff]
  %v410 = vld [vmem:[%s1 + $0xbc0] sm:$0xff]
  %v411 = vld [vmem:[%s1 + $0xbc8] sm:$0xff]
  %v412 = vld [vmem:[%s1 + $0xbd0] sm:$0xff]
  %v413 = vld [vmem:[%s1 + $0xbd8] sm:$0xff]
  %v414 = vld [vmem:[%s1 + $0xbe0] sm:$0xff]
  %v415 = vld [vmem:[%s1 + $0xbe8] sm:$0xff]
  %v416 = vld [vmem:[%s1 + $0xbf0] sm:$0xff]
  %v417 = vld [vmem:[%s1 + $0xbf8] sm:$0xff]
  %v418 = vld [vmem:[%s1 + $0xc00] sm:$0xff]
  %v419 = vld [vmem:[%s1 + $0xc08] sm:$0xff]
  %v420 = vld [vmem:[%s1 + $0xc10] sm:$0xff]
  %v421 = vld [vmem:[%s1 + $0xc18] sm:$0xff]
  %v422 = vld [vmem:[%s1 + $0xc20] sm:$0xff]
  %v423 = vld [vmem:[%s1 + $0xc28] sm:$0xff]
  %v424 = vld [vmem:[%s1 + $0xc30] sm:$0xff]
  %v425 = vld [vmem:[%s1 + $0xc38] sm:$0xff]
  %v426 = vld [vmem:[%s1 + $0xc40] sm:$0xff]
  %v427 = vld [vmem:[%s1 + $0xc48] sm:$0xff]
  %v428 = vld [vmem:[%s1 + $0xc50] sm:$0xff]
  %v429 = vld [vmem:[%s1 + $0xc58] sm:$0xff]
  %v430 = vld [vmem:[%s1 + $0xc60] sm:$0xff]
  %v431 = vld [vmem:[%s1 + $0xc68] sm:$0xff]
  %v432 = vld [vmem:[%s1 + $0xc70] sm:$0xff]
  %v433 = vld [vmem:[%s1 + $0xc78] sm:$0xff]
  %v434 = vld [vmem:[%s1 + $0xc80] sm:$0xff]
  %v435 = vld [vmem:[%s1 + $0xc88] sm:$0xff]
  %v436 = vld [vmem:[%s1 + $0xc90] sm:$0xff]
  %v437 = vld [vmem:[%s1 + $0xc98] sm:$0xff]
  %v438 = vld [vmem:[%s1 + $0xca0] sm:$0xff]
  %v439 = vld [vmem:[%s1 + $0xca8] sm:$0xff]
  %v440 = vld [vmem:[%s1 + $0xcb0] sm:$0xff]
  %v441 = vld [vmem:[%s1 + $0xcb8] sm:$0xff]
  %v442 = vld [vmem:[%s1 + $0xcc0] sm:$0xff]
  %v443 = vld [vmem:[%s1 + $0xcc8] sm:$0xff]
  %v444 = vld [vmem:[%s1 + $0xcd0] sm:$0xff]
  %v445 = vld [vmem:[%s1 + $0xcd8] sm:$0xff]
  %v446 = vld [vmem:[%s1 + $0xce0] sm:$0xff]
  %v447 = vld [vmem:[%s1 + $0xce8] sm:$0xff]
  %v448 = vld [vmem:[%s1 + $0xcf0] sm:$0xff]
  %v449 = vld [vmem:[%s1 + $0xcf8] sm:$0xff]
  %v450 = vld [vmem:[%s1 + $0xd00] sm:$0xff]
  %v451 = vld [vmem:[%s1 + $0xd08] sm:$0xff]
  %v452 = vld [vmem:[%s1 + $0xd10] sm:$0xff]
  %v453 = vld [vmem:[%s1 + $0xd18] sm:$0xff]
  %v454 = vld [vmem:[%s1 + $0xd20] sm:$0xff]
  %v455 = vld [vmem:[%s1 + $0xd28] sm:$0xff]
  %v456 = vld [vmem:[%s1 + $0xd30] sm:$0xff]
  %v457 = vld [vmem:[%s1 + $0xd38] sm:$0xff]
  %v458 = vld [vmem:[%s1 + $0xd40] sm:$0xff]
  %v459 = vld [vmem:[%s1 + $0xd48] sm:$0xff]
  %v460 = vld [vmem:[%s1 + $0xd50] sm:$0xff]
  %v461 = vld [vmem:[%s1 + $0xd58] sm:$0xff]
  %v462 = vld [vmem:[%s1 + $0xd60] sm:$0xff]
  %v463 = vld [vmem:[%s1 + $0xd68] sm:$0xff]
  %v464 = vld [vmem:[%s1 + $0xd70] sm:$0xff]
  %v465 = vld [vmem:[%s1 + $0xd78] sm:$0xff]
  %v466 = vld [vmem:[%s1 + $0xd80] sm:$0xff]
  %v467 = vld [vmem:[%s1 + $0xd88] sm:$0xff]
  %v468 = vld [vmem:[%s1 + $0xd90] sm:$0xff]
  %v469 = vld [vmem:[%s1 + $0xd98] sm:$0xff]
  %v470 = vld [vmem:[%s1 + $0xda0] sm:$0xff]
  %v471 = vld [vmem:[%s1 + $0xda8] sm:$0xff]
  %v472 = vld [vmem:[%s1 + $0xdb0] sm:$0xff]
  %v473 = vld [vmem:[%s1 + $0xdb8] sm:$0xff]
  %v474 = vld [vmem:[%s1 + $0xdc0] sm:$0xff]
  %v475 = vld [vmem:[%s1 + $0xdc8] sm:$0xff]
  %v476 = vld [vmem:[%s1 + $0xdd0] sm:$0xff]
  %v477 = vld [vmem:[%s1 + $0xdd8] sm:$0xff]
  %v478 = vld [vmem:[%s1 + $0xde0] sm:$0xff]
  %v479 = vld [vmem:[%s1 + $0xde8] sm:$0xff]
  %v480 = vld [vmem:[%s1 + $0xdf0] sm:$0xff]
  %v481 = vld [vmem:[%s1 + $0xdf8] sm:$0xff]
  %v482 = vld [vmem:[%s1 + $0xe00] sm:$0xff]
  %v483 = vld [vmem:[%s1 + $0xe08] sm:$0xff]
  %v484 = vld [vmem:[%s1 + $0xe10] sm:$0xff]
  %v485 = vld [vmem:[%s1 + $0xe18] sm:$0xff]
  %v486 = vld [vmem:[%s1 + $0xe20] sm:$0xff]
  %v487 = vld [vmem:[%s1 + $0xe28] sm:$0xff]
  %v488 = vld [vmem:[%s1 + $0xe30] sm:$0xff]
  %v489 = vld [vmem:[%s1 + $0xe38] sm:$0xff]
  %v490 = vld [vmem:[%s1 + $0xe40] sm:$0xff]
  %v491 = vld [vmem:[%s1 + $0xe48] sm:$0xff]
  %v492 = vld [vmem:[%s1 + $0xe50] sm:$0xff]
  %v493 = vld [vmem:[%s1 + $0xe58] sm:$0xff]
  %v494 = vld [vmem:[%s1 + $0xe60] sm:$0xff]
  %v495 = vld [vmem:[%s1 + $0xe68] sm:$0xff]
  %v496 = vld [vmem:[%s1 + $0xe70] sm:$0xff]
  %v497 = vld [vmem:[%s1 + $0xe78] sm:$0xff]
  %v498 = vld [vmem:[%s1 + $0xe80] sm:$0xff]
  %v499 = vld [vmem:[%s1 + $0xe88] sm:$0xff]
  %v500 = vld [vmem:[%s1 + $0xe90] sm:$0xff]
  %v501 = vld [vmem:[%s1 + $0xe98] sm:$0xff]
  %v502 = vld [vmem:[%s1 + $0xea0] sm:$0xff]
  %v503 = vld [vmem:[%s1 + $0xea8] sm:$0xff]
  %v504 = vld [vmem:[%s1 + $0xeb0] sm:$0xff]
  %v505 = vld [vmem:[%s1 + $0xeb8] sm:$0xff]
  %v506 = vld [vmem:[%s1 + $0xec0] sm:$0xff]
  %v507 = vld [vmem:[%s1 + $0xec8] sm:$0xff]
  %v508 = vld [vmem:[%s1 + $0xed0] sm:$0xff]
  %v509 = vld [vmem:[%s1 + $0xed8] sm:$0xff]
  %v510 = vld [vmem:[%s1 + $0xee0] sm:$0xff]
  %v511 = vld [vmem:[%s1 + $0xee8] sm:$0xff]
  %v512 = vld [vmem:[%s1 + $0xef0] sm:$0xff]
  %v513 = vld [vmem:[%s1 + $0xef8] sm:$0xff]
  %v514 = vld [vmem:[%s1 + $0xf00] sm:$0xff]
  %v515 = vld [vmem:[%s1 + $0xf08] sm:$0xff]
  %v516 = vld [vmem:[%s1 + $0xf10] sm:$0xff]
  %v517 = vld [vmem:[%s1 + $0xf18] sm:$0xff]
  %v518 = vld [vmem:[%s1 + $0xf20] sm:$0xff]
  %v519 = vld [vmem:[%s1 + $0xf28] sm:$0xff]
  %v520 = vld [vmem:[%s1 + $0xf30] sm:$0xff]
  %v521 = vld [vmem:[%s1 + $0xf38] sm:$0xff]
  %v522 = vld [vmem:[%s1 + $0xf40] sm:$0xff]
  %v523 = vld [vmem:[%s1 + $0xf48] sm:$0xff]
  %v524 = vld [vmem:[%s1 + $0xf50] sm:$0xff]
  %v525 = vld [vmem:[%s1 + $0xf58] sm:$0xff]
  %v526 = vld [vmem:[%s1 + $0xf60] sm:$0xff]
  %v527 = vld [vmem:[%s1 + $0xf68] sm:$0xff]
  %v528 = vld [vmem:[%s1 + $0xf70] sm:$0xff]
  %v529 = vld [vmem:[%s1 + $0xf78] sm:$0xff]
  %v530 = vld [vmem:[%s1 + $0xf80] sm:$0xff]
  %v531 = vld [vmem:[%s1 + $0xf88] sm:$0xff]
  %v532 = vld [vmem:[%s1 + $0xf90] sm:$0xff]
  %v533 = vld [vmem:[%s1 + $0xf98] sm:$0xff]
  %v534 = vld [vmem:[%s1 + $0xfa0] sm:$0xff]
  %v535 = vld [vmem:[%s1 + $0xfa8] sm:$0xff]
  %v536 = vld [vmem:[%s1 + $0xfb0] sm:$0xff]
  %v537 = vld [vmem:[%s1 + $0xfb8] sm:$0xff]
  %v538 = vld [vmem:[%s1 + $0xfc0] sm:$0xff]
  %v539 = vld [vmem:[%s1 + $0xfc8] sm:$0xff]
  %v540 = vld [vmem:[%s1 + $0xfd0] sm:$0xff]
  %v541 = vld [vmem:[%s1 + $0xfd8] sm:$0xff]
  %v542 = vld [vmem:[%s1 + $0xfe0] sm:$0xff]
  %v543 = vld [vmem:[%s1 + $0xfe8] sm:$0xff]
  %v544 = vld [vmem:[%s1 + $0xff0] sm:$0xff]
  %v545 = vld [vmem:[%s1 + $0xff8] sm:$0xff]
  %v546 = vld [vmem:[%s1 + $0x1000] sm:$0xff]
  %v547 = vld [vmem:[%s1 + $0x1008] sm:$0xff]
  %v548 = vld [vmem:[%s1 + $0x1010] sm:$0xff]
  %v549 = vld [vmem:[%s1 + $0x1018] sm:$0xff]
  %v550 = vld [vmem:[%s1 + $0x1020] sm:$0xff]
  %v551 = vld [vmem:[%s1 + $0x1028] sm:$0xff]
  %v552 = vld [vmem:[%s1 + $0x1030] sm:$0xff]
  %v553 = vld [vmem:[%s1 + $0x1038] sm:$0xff]
  %v554 = vld [vmem:[%s1 + $0x1040] sm:$0xff]
  %v555 = vld [vmem:[%s1 + $0x1048] sm:$0xff]
  %v556 = vld [vmem:[%s1 + $0x1050] sm:$0xff]
  %v557 = vld [vmem:[%s1 + $0x1058] sm:$0xff]
  %v558 = vld [vmem:[%s1 + $0x1060] sm:$0xff]
  %v559 = vld [vmem:[%s1 + $0x1068] sm:$0xff]
  %v560 = vld [vmem:[%s1 + $0x1070] sm:$0xff]
  %v561 = vld [vmem:[%s1 + $0x1078] sm:$0xff]
  %v562 = vld [vmem:[%s1 + $0x1080] sm:$0xff]
  %v563 = vld [vmem:[%s1 + $0x1088] sm:$0xff]
  %v564 = vld [vmem:[%s1 + $0x1090] sm:$0xff]
  %v565 = vld [vmem:[%s1 + $0x1098] sm:$0xff]
  %v566 = vld [vmem:[%s1 + $0x10a0] sm:$0xff]
  %v567 = vld [vmem:[%s1 + $0x10a8] sm:$0xff]
  %v568 = vld [vmem:[%s1 + $0x10b0] sm:$0xff]
  %v569 = vld [vmem:[%s1 + $0x10b8] sm:$0xff]
  %v570 = vld [vmem:[%s1 + $0x10c0] sm:$0xff]
  %v571 = vld [vmem:[%s1 + $0x10c8] sm:$0xff]
  %v572 = vld [vmem:[%s1 + $0x10d0] sm:$0xff]
  %v573 = vld [vmem:[%s1 + $0x10d8] sm:$0xff]
  %v574 = vld [vmem:[%s1 + $0x10e0] sm:$0xff]
  %v575 = vld [vmem:[%s1 + $0x10e8] sm:$0xff]
  %v576 = vld [vmem:[%s1 + $0x10f0] sm:$0xff]
  %v577 = vld [vmem:[%s1 + $0x10f8] sm:$0xff]
  %v578 = vld [vmem:[%s1 + $0x1100] sm:$0xff]
  %v579 = vld [vmem:[%s1 + $0x1108] sm:$0xff]
  %v580 = vld [vmem:[%s1 + $0x1110] sm:$0xff]
  %v581 = vld [vmem:[%s1 + $0x1118] sm:$0xff]
  %v582 = vld [vmem:[%s1 + $0x1120] sm:$0xff]
  %v583 = vld [vmem:[%s1 + $0x1128] sm:$0xff]
  %v584 = vld [vmem:[%s1 + $0x1130] sm:$0xff]
  %v585 = vld [vmem:[%s1 + $0x1138] sm:$0xff]
  %v586 = vld [vmem:[%s1 + $0x1140] sm:$0xff]
  %v587 = vld [vmem:[%s1 + $0x1148] sm:$0xff]
  %v588 = vld [vmem:[%s1 + $0x1150] sm:$0xff]
  %v589 = vld [vmem:[%s1 + $0x1158] sm:$0xff]
  %v590 = vld [vmem:[%s1 + $0x1160] sm:$0xff]
  %v591 = vld [vmem:[%s1 + $0x1168] sm:$0xff]
  %v592 = vld [vmem:[%s1 + $0x1170] sm:$0xff]
  %v593 = vld [vmem:[%s1 + $0x1178] sm:$0xff]
  %v594 = vld [vmem:[%s1 + $0x1180] sm:$0xff]
  %v595 = vld [vmem:[%s1 + $0x1188] sm:$0xff]
  %v596 = vld [vmem:[%s1 + $0x1190] sm:$0xff]
  %v597 = vld [vmem:[%s1 + $0x1198] sm:$0xff]
  %v598 = vld [vmem:[%s1 + $0x11a0] sm:$0xff]
  %v599 = vld [vmem:[%s1 + $0x11a8] sm:$0xff]
  %v600 = vld [vmem:[%s1 + $0x11b0] sm:$0xff]
  %v601 = vld [vmem:[%s1 + $0x11b8] sm:$0xff]
  %v602 = vld [vmem:[%s1 + $0x11c0] sm:$0xff]
  %v603 = vld [vmem:[%s1 + $0x11c8] sm:$0xff]
  %v604 = vld [vmem:[%s1 + $0x11d0] sm:$0xff]
  %v605 = vld [vmem:[%s1 + $0x11d8] sm:$0xff]
  %v606 = vld [vmem:[%s1 + $0x11e0] sm:$0xff]
  %v607 = vld [vmem:[%s1 + $0x11e8] sm:$0xff]
  %v608 = vld [vmem:[%s1 + $0x11f0] sm:$0xff]
  %v609 = vld [vmem:[%s1 + $0x11f8] sm:$0xff]
  %v610 = vld [vmem:[%s1 + $0x1200] sm:$0xff]
  %v611 = vld [vmem:[%s1 + $0x1208] sm:$0xff]
  %v612 = vld [vmem:[%s1 + $0x1210] sm:$0xff]
  %v613 = vld [vmem:[%s1 + $0x1218] sm:$0xff]
  %v614 = vld [vmem:[%s1 + $0x1220] sm:$0xff]
  %v615 = vld [vmem:[%s1 + $0x1228] sm:$0xff]
  %v616 = vld [vmem:[%s1 + $0x1230] sm:$0xff]
  %v617 = vld [vmem:[%s1 + $0x1238] sm:$0xff]
  %v618 = vld [vmem:[%s1 + $0x1240] sm:$0xff]
  %v619 = vld [vmem:[%s1 + $0x1248] sm:$0xff]
  %v620 = vld [vmem:[%s1 + $0x1250] sm:$0xff]
  %v621 = vld [vmem:[%s1 + $0x1258] sm:$0xff]
  %v622 = vld [vmem:[%s1 + $0x1260] sm:$0xff]
  %v623 = vld [vmem:[%s1 + $0x1268] sm:$0xff]
  %v624 = vld [vmem:[%s1 + $0x1270] sm:$0xff]
  %v625 = vld [vmem:[%s1 + $0x1278] sm:$0xff]
  %v626 = vld [vmem:[%s1 + $0x1280] sm:$0xff]
  %v627 = vld [vmem:[%s1 + $0x1288] sm:$0xff]
  %v628 = vld [vmem:[%s1 + $0x1290] sm:$0xff]
  %v629 = vld [vmem:[%s1 + $0x1298] sm:$0xff]
  %v630 = vld [vmem:[%s1 + $0x12a0] sm:$0xff]
  %v631 = vld [vmem:[%s1 + $0x12a8] sm:$0xff]
  %v632 = vld [vmem:[%s1 + $0x12b0] sm:$0xff]
  %v633 = vld [vmem:[%s1 + $0x12b8] sm:$0xff]
  %v634 = vld [vmem:[%s1 + $0x12c0] sm:$0xff]
  %v635 = vld [vmem:[%s1 + $0x12c8] sm:$0xff]
  %v636 = vld [vmem:[%s1 + $0x12d0] sm:$0xff]
  %v637 = vld [vmem:[%s1 + $0x12d8] sm:$0xff]
  %v638 = vld [vmem:[%s1 + $0x12e0] sm:$0xff]
  %v639 = vld [vmem:[%s1 + $0x12e8] sm:$0xff]
  %v640 = vld [vmem:[%s1 + $0x12f0] sm:$0xff]
  %v641 = vld [vmem:[%s1 + $0x12f8] sm:$0xff]
  %v642 = vld [vmem:[%s1 + $0x1300] sm:$0xff]
  %v643 = vld [vmem:[%s1 + $0x1308] sm:$0xff]
  %v644 = vld [vmem:[%s1 + $0x1310] sm:$0xff]
  %v645 = vld [vmem:[%s1 + $0x1318] sm:$0xff]
  %v646 = vld [vmem:[%s1 + $0x1320] sm:$0xff]
  %v647 = vld [vmem:[%s1 + $0x1328] sm:$0xff]
  %v648 = vld [vmem:[%s1 + $0x1330] sm:$0xff]
  %v649 = vld [vmem:[%s1 + $0x1338] sm:$0xff]
  %v650 = vld [vmem:[%s1 + $0x1340] sm:$0xff]
  %v651 = vld [vmem:[%s1 + $0x1348] sm:$0xff]
  %v652 = vld [vmem:[%s1 + $0x1350] sm:$0xff]
  %v653 = vld [vmem:[%s1 + $0x1358] sm:$0xff]
  %v654 = vld [vmem:[%s1 + $0x1360] sm:$0xff]
  %v655 = vld [vmem:[%s1 + $0x1368] sm:$0xff]
  %v656 = vld [vmem:[%s1 + $0x1370] sm:$0xff]
  %v657 = vld [vmem:[%s1 + $0x1378] sm:$0xff]
  %v658 = vld [vmem:[%s1 + $0x1380] sm:$0xff]
  %v659 = vld [vmem:[%s1 + $0x1388] sm:$0xff]
  %v660 = vld [vmem:[%s1 + $0x1390] sm:$0xff]
  %v661 = vld [vmem:[%s1 + $0x1398] sm:$0xff]
  %v662 = vld [vmem:[%s1 + $0x13a0] sm:$0xff]
  %v663 = vld [vmem:[%s1 + $0x13a8] sm:$0xff]
  %v664 = vld [vmem:[%s1 + $0x13b0] sm:$0xff]
  %v665 = vld [vmem:[%s1 + $0x13b8] sm:$0xff]
  %v666 = vld [vmem:[%s1 + $0x13c0] sm:$0xff]
  %v667 = vld [vmem:[%s1 + $0x13c8] sm:$0xff]
  %v668 = vld [vmem:[%s1 + $0x13d0] sm:$0xff]
  %v669 = vld [vmem:[%s1 + $0x13d8] sm:$0xff]
  %v670 = vld [vmem:[%s1 + $0x13e0] sm:$0xff]
  %v671 = vld [vmem:[%s1 + $0x13e8] sm:$0xff]
  %v672 = vld [vmem:[%s1 + $0x13f0] sm:$0xff]
  %v673 = vld [vmem:[%s1 + $0x13f8] sm:$0xff]
  %v674 = vld [vmem:[%s1 + $0x1400] sm:$0xff]
  %v675 = vld [vmem:[%s1 + $0x1408] sm:$0xff]
  %v676 = vld [vmem:[%s1 + $0x1410] sm:$0xff]
  %v677 = vld [vmem:[%s1 + $0x1418] sm:$0xff]
  %v678 = vld [vmem:[%s1 + $0x1420] sm:$0xff]
  %v679 = vld [vmem:[%s1 + $0x1428] sm:$0xff]
  %v680 = vld [vmem:[%s1 + $0x1430] sm:$0xff]
  %v681 = vld [vmem:[%s1 + $0x1438] sm:$0xff]
  %v682 = vld [vmem:[%s1 + $0x1440] sm:$0xff]
  %v683 = vld [vmem:[%s1 + $0x1448] sm:$0xff]
  %v684 = vld [vmem:[%s1 + $0x1450] sm:$0xff]
  %v685 = vld [vmem:[%s1 + $0x1458] sm:$0xff]
  %v686 = vld [vmem:[%s1 + $0x1460] sm:$0xff]
  %v687 = vld [vmem:[%s1 + $0x1468] sm:$0xff]
  %v688 = vld [vmem:[%s1 + $0x1470] sm:$0xff]
  %v689 = vld [vmem:[%s1 + $0x1478] sm:$0xff]
  %v690 = vld [vmem:[%s1 + $0x1480] sm:$0xff]
  %v691 = vld [vmem:[%s1 + $0x1488] sm:$0xff]
  %v692 = vld [vmem:[%s1 + $0x1490] sm:$0xff]
  %v693 = vld [vmem:[%s1 + $0x1498] sm:$0xff]
  %v694 = vld [vmem:[%s1 + $0x14a0] sm:$0xff]
  %v695 = vld [vmem:[%s1 + $0x14a8] sm:$0xff]
  %v696 = vld [vmem:[%s1 + $0x14b0] sm:$0xff]
  %v697 = vld [vmem:[%s1 + $0x14b8] sm:$0xff]
  %v698 = vld [vmem:[%s1 + $0x14c0] sm:$0xff]
  %v699 = vld [vmem:[%s1 + $0x14c8] sm:$0xff]
  %v700 = vld [vmem:[%s1 + $0x14d0] sm:$0xff]
  %v701 = vld [vmem:[%s1 + $0x14d8] sm:$0xff]
  %v702 = vld [vmem:[%s1 + $0x14e0] sm:$0xff]
  %v703 = vld [vmem:[%s1 + $0x14e8] sm:$0xff]
  %v704 = vld [vmem:[%s1 + $0x14f0] sm:$0xff]
  %v705 = vld [vmem:[%s1 + $0x14f8] sm:$0xff]
  %v706 = vld [vmem:[%s1 + $0x1500] sm:$0xff]
  %v707 = vld [vmem:[%s1 + $0x1508] sm:$0xff]
  %v708 = vld [vmem:[%s1 + $0x1510] sm:$0xff]
  %v709 = vld [vmem:[%s1 + $0x1518] sm:$0xff]
  %v710 = vld [vmem:[%s1 + $0x1520] sm:$0xff]
  %v711 = vld [vmem:[%s1 + $0x1528] sm:$0xff]
  %v712 = vld [vmem:[%s1 + $0x1530] sm:$0xff]
  %v713 = vld [vmem:[%s1 + $0x1538] sm:$0xff]
  %v714 = vld [vmem:[%s1 + $0x1540] sm:$0xff]
  %v715 = vld [vmem:[%s1 + $0x1548] sm:$0xff]
  %v716 = vld [vmem:[%s1 + $0x1550] sm:$0xff]
  %v717 = vld [vmem:[%s1 + $0x1558] sm:$0xff]
  %v718 = vld [vmem:[%s1 + $0x1560] sm:$0xff]
  %v719 = vld [vmem:[%s1 + $0x1568] sm:$0xff]
  %v720 = vld [vmem:[%s1 + $0x1570] sm:$0xff]
  %v721 = vld [vmem:[%s1 + $0x1578] sm:$0xff]
  %v722 = vld [vmem:[%s1 + $0x1580] sm:$0xff]
  %v723 = vld [vmem:[%s1 + $0x1588] sm:$0xff]
  %v724 = vld [vmem:[%s1 + $0x1590] sm:$0xff]
  %v725 = vld [vmem:[%s1 + $0x1598] sm:$0xff]
  %v726 = vld [vmem:[%s1 + $0x15a0] sm:$0xff]
  %v727 = vld [vmem:[%s1 + $0x15a8] sm:$0xff]
  %v728 = vld [vmem:[%s1 + $0x15b0] sm:$0xff]
  %v729 = vld [vmem:[%s1 + $0x15b8] sm:$0xff]
  %v730 = vld [vmem:[%s1 + $0x15c0] sm:$0xff]
  %v731 = vld [vmem:[%s1 + $0x15c8] sm:$0xff]
  %v732 = vld [vmem:[%s1 + $0x15d0] sm:$0xff]
  %v733 = vld [vmem:[%s1 + $0x15d8] sm:$0xff]
  %v734 = vld [vmem:[%s1 + $0x15e0] sm:$0xff]
  %v735 = vld [vmem:[%s1 + $0x15e8] sm:$0xff]
  %v736 = vld [vmem:[%s1 + $0x15f0] sm:$0xff]
  %v737 = vld [vmem:[%s1 + $0x15f8] sm:$0xff]
  %v738 = vld [vmem:[%s1 + $0x1600] sm:$0xff]
  %v739 = vld [vmem:[%s1 + $0x1608] sm:$0xff]
  %v740 = vld [vmem:[%s1 + $0x1610] sm:$0xff]
  %v741 = vld [vmem:[%s1 + $0x1618] sm:$0xff]
  %v742 = vld [vmem:[%s1 + $0x1620] sm:$0xff]
  %v743 = vld [vmem:[%s1 + $0x1628] sm:$0xff]
  %v744 = vld [vmem:[%s1 + $0x1630] sm:$0xff]
  %v745 = vld [vmem:[%s1 + $0x1638] sm:$0xff]
  %v746 = vld [vmem:[%s1 + $0x1640] sm:$0xff]
  %v747 = vld [vmem:[%s1 + $0x1648] sm:$0xff]
  %v748 = vld [vmem:[%s1 + $0x1650] sm:$0xff]
  %v749 = vld [vmem:[%s1 + $0x1658] sm:$0xff]
  %v750 = vld [vmem:[%s1 + $0x1660] sm:$0xff]
  %v751 = vld [vmem:[%s1 + $0x1668] sm:$0xff]
  %v752 = vld [vmem:[%s1 + $0x1670] sm:$0xff]
  %v753 = vld [vmem:[%s1 + $0x1678] sm:$0xff]
  %v754 = vld [vmem:[%s1 + $0x1680] sm:$0xff]
  %v755 = vld [vmem:[%s1 + $0x1688] sm:$0xff]
  %v756 = vld [vmem:[%s1 + $0x1690] sm:$0xff]
  %v757 = vld [vmem:[%s1 + $0x1698] sm:$0xff]
  %v758 = vld [vmem:[%s1 + $0x16a0] sm:$0xff]
  %v759 = vld [vmem:[%s1 + $0x16a8] sm:$0xff]
  %v760 = vld [vmem:[%s1 + $0x16b0] sm:$0xff]
  %v761 = vld [vmem:[%s1 + $0x16b8] sm:$0xff]
  %v762 = vld [vmem:[%s1 + $0x16c0] sm:$0xff]
  %v763 = vld [vmem:[%s1 + $0x16c8] sm:$0xff]
  %v764 = vld [vmem:[%s1 + $0x16d0] sm:$0xff]
  %v765 = vld [vmem:[%s1 + $0x16d8] sm:$0xff]
  %v766 = vld [vmem:[%s1 + $0x16e0] sm:$0xff]
  %v767 = vld [vmem:[%s1 + $0x16e8] sm:$0xff]
  %v768 = vld [vmem:[%s1 + $0x16f0] sm:$0xff]
  %v769 = vld [vmem:[%s1 + $0x16f8] sm:$0xff]
  %v770 = vld [vmem:[%s1 + $0x1700] sm:$0xff]
  %v771 = vld [vmem:[%s1 + $0x1708] sm:$0xff]
  %v772 = vld [vmem:[%s1 + $0x1710] sm:$0xff]
  %v773 = vld [vmem:[%s1 + $0x1718] sm:$0xff]
  %v774 = vld [vmem:[%s1 + $0x1720] sm:$0xff]
  %v775 = vld [vmem:[%s1 + $0x1728] sm:$0xff]
  %v776 = vld [vmem:[%s1 + $0x1730] sm:$0xff]
  %v777 = vld [vmem:[%s1 + $0x1738] sm:$0xff]
  %v778 = vld [vmem:[%s1 + $0x1740] sm:$0xff]
  %v779 = vld [vmem:[%s1 + $0x1748] sm:$0xff]
  %v780 = vld [vmem:[%s1 + $0x1750] sm:$0xff]
  %v781 = vld [vmem:[%s1 + $0x1758] sm:$0xff]
  %v782 = vld [vmem:[%s1 + $0x1760] sm:$0xff]
  %v783 = vld [vmem:[%s1 + $0x1768] sm:$0xff]
  %v784 = vld [vmem:[%s1 + $0x1770] sm:$0xff]
  %v785 = vld [vmem:[%s1 + $0x1778] sm:$0xff]
  %v786 = vld [vmem:[%s1 + $0x1780] sm:$0xff]
  %v787 = vld [vmem:[%s1 + $0x1788] sm:$0xff]
  %v788 = vld [vmem:[%s1 + $0x1790] sm:$0xff]
  %v789 = vld [vmem:[%s1 + $0x1798] sm:$0xff]
  %v790 = vld [vmem:[%s1 + $0x17a0] sm:$0xff]
  %v791 = vld [vmem:[%s1 + $0x17a8] sm:$0xff]
  %v792 = vld [vmem:[%s1 + $0x17b0] sm:$0xff]
  %v793 = vld [vmem:[%s1 + $0x17b8] sm:$0xff]
  %v794 = vld [vmem:[%s1 + $0x17c0] sm:$0xff]
  %v795 = vld [vmem:[%s1 + $0x17c8] sm:$0xff]
  %v796 = vld [vmem:[%s1 + $0x17d0] sm:$0xff]
  %v797 = vld [vmem:[%s1 + $0x17d8] sm:$0xff]
  %v798 = vld [vmem:[%s1 + $0x17e0] sm:$0xff]
  %v799 = vld [vmem:[%s1 + $0x17e8] sm:$0xff]
  %v800 = vld [vmem:[%s1 + $0x17f0] sm:$0xff]
  %v801 = vld [vmem:[%s1 + $0x17f8] sm:$0xff]
  %v802 = vld [vmem:[%s1 + $0x1800] sm:$0xff]
  %v803 = vld [vmem:[%s1 + $0x1808] sm:$0xff]
  %v804 = vld [vmem:[%s1 + $0x1810] sm:$0xff]
  %v805 = vld [vmem:[%s1 + $0x1818] sm:$0xff]
  %v806 = vld [vmem:[%s1 + $0x1820] sm:$0xff]
  %v807 = vld [vmem:[%s1 + $0x1828] sm:$0xff]
  %v808 = vld [vmem:[%s1 + $0x1830] sm:$0xff]
  %v809 = vld [vmem:[%s1 + $0x1838] sm:$0xff]
  %v810 = vld [vmem:[%s1 + $0x1840] sm:$0xff]
  %v811 = vld [vmem:[%s1 + $0x1848] sm:$0xff]
  %v812 = vld [vmem:[%s1 + $0x1850] sm:$0xff]
  %v813 = vld [vmem:[%s1 + $0x1858] sm:$0xff]
  %v814 = vld [vmem:[%s1 + $0x1860] sm:$0xff]
  %v815 = vld [vmem:[%s1 + $0x1868] sm:$0xff]
  %v816 = vld [vmem:[%s1 + $0x1870] sm:$0xff]
  %v817 = vld [vmem:[%s1 + $0x1878] sm:$0xff]
  %v818 = vld [vmem:[%s1 + $0x1880] sm:$0xff]
  %v819 = vld [vmem:[%s1 + $0x1888] sm:$0xff]
  %v820 = vld [vmem:[%s1 + $0x1890] sm:$0xff]
  %v821 = vld [vmem:[%s1 + $0x1898] sm:$0xff]
  %v822 = vld [vmem:[%s1 + $0x18a0] sm:$0xff]
  %v823 = vld [vmem:[%s1 + $0x18a8] sm:$0xff]
  %v824 = vld [vmem:[%s1 + $0x18b0] sm:$0xff]
  %v825 = vld [vmem:[%s1 + $0x18b8] sm:$0xff]
  %v826 = vld [vmem:[%s1 + $0x18c0] sm:$0xff]
  %v827 = vld [vmem:[%s1 + $0x18c8] sm:$0xff]
  %v828 = vld [vmem:[%s1 + $0x18d0] sm:$0xff]
  %v829 = vld [vmem:[%s1 + $0x18d8] sm:$0xff]
  %v830 = vld [vmem:[%s1 + $0x18e0] sm:$0xff]
  %v831 = vld [vmem:[%s1 + $0x18e8] sm:$0xff]
  %v832 = vld [vmem:[%s1 + $0x18f0] sm:$0xff]
  %v833 = vld [vmem:[%s1 + $0x18f8] sm:$0xff]
  %v834 = vld [vmem:[%s2] sm:$0xf]
  %v836 = vlaneseq
  %v837 = vshrl.u32 %v836, 7
  %v838 = vsub.s32 0, %v837
  %v839 = vrot.slane %v834, %v838
  %v840 = vlaneseq
  %v841 = vshrl.u32 %v840, 7
  %v842 = vsub.s32 1, %v841
  %v843 = vrot.slane %v834, %v842
  %v844 = vlaneseq
  %v845 = vshrl.u32 %v844, 7
  %v846 = vsub.s32 2, %v845
  %v847 = vrot.slane %v834, %v846
  %v848 = vlaneseq
  %v849 = vshrl.u32 %v848, 7
  %v850 = vsub.s32 3, %v849
  %v851 = vrot.slane %v834, %v850
  %v869 = vunpack.c.l.b16 %v21
  %v870 = vunpack.c.h.b16 %v21
  %v871 = vunpack.c.l.b16 %v22
  %v872 = vunpack.c.h.b16 %v22
  %v873 = vunpack.c.l.b16 %v23
  %v874 = vunpack.c.h.b16 %v23
  %v875 = vunpack.c.l.b16 %v24
  %v876 = vunpack.c.h.b16 %v24
  %v877 = vunpack.c.l.b16 %v25
  %v878 = vunpack.c.h.b16 %v25
  %v879 = vunpack.c.l.b16 %v26
  %v880 = vunpack.c.h.b16 %v26
  %v881 = vunpack.c.l.b16 %v27
  %v882 = vunpack.c.h.b16 %v27
  %v883 = vunpack.c.l.b16 %v28
  %v884 = vunpack.c.h.b16 %v28
  %v885 = vunpack.c.l.b16 %v29
  %v886 = vunpack.c.h.b16 %v29
  %v887 = vunpack.c.l.b16 %v30
  %v888 = vunpack.c.h.b16 %v30
  %v889 = vunpack.c.l.b16 %v31
  %v890 = vunpack.c.h.b16 %v31
  %v891 = vunpack.c.l.b16 %v32
  %v892 = vunpack.c.h.b16 %v32
  %v893 = vunpack.c.l.b16 %v33
  %v894 = vpack.c.b16 %v869, %v869
  %v895 = vpack.c.b16 %v870, %v870
  %v896 = vpack.c.b16 %v871, %v871
  %v897 = vpack.c.b16 %v872, %v872
  %v898 = vpack.c.b16 %v873, %v873
  %v899 = vpack.c.b16 %v874, %v874
  %v900 = vpack.c.b16 %v875, %v875
  %v901 = vpack.c.b16 %v876, %v876
  %v902 = vpack.c.b16 %v877, %v877
  %v903 = vpack.c.b16 %v878, %v878
  %v904 = vpack.c.b16 %v879, %v879
  %v905 = vpack.c.b16 %v880, %v880
  %v906 = vpack.c.b16 %v881, %v881
  %v907 = vpack.c.b16 %v882, %v882
  %v908 = vpack.c.b16 %v883, %v883
  %v909 = vpack.c.b16 %v884, %v884
  %v910 = vpack.c.b16 %v885, %v885
  %v911 = vpack.c.b16 %v886, %v886
  %v912 = vpack.c.b16 %v887, %v887
  %v913 = vpack.c.b16 %v888, %v888
  %v914 = vpack.c.b16 %v889, %v889
  %v915 = vpack.c.b16 %v890, %v890
  %v916 = vpack.c.b16 %v891, %v891
  %v917 = vpack.c.b16 %v892, %v892
  %v918 = vpack.c.b16 %v893, %v893
  %v1744 = vunpack.c.l.b16 %v34
  %v1745 = vunpack.c.h.b16 %v34
  %v1746 = vunpack.c.l.b16 %v35
  %v1747 = vunpack.c.h.b16 %v35
  %v1748 = vunpack.c.l.b16 %v36
  %v1749 = vunpack.c.h.b16 %v36
  %v1750 = vunpack.c.l.b16 %v37
  %v1751 = vunpack.c.h.b16 %v37
  %v1752 = vunpack.c.l.b16 %v38
  %v1753 = vunpack.c.h.b16 %v38
  %v1754 = vunpack.c.l.b16 %v39
  %v1755 = vunpack.c.h.b16 %v39
  %v1756 = vunpack.c.l.b16 %v40
  %v1757 = vunpack.c.h.b16 %v40
  %v1758 = vunpack.c.l.b16 %v41
  %v1759 = vunpack.c.h.b16 %v41
  %v1760 = vunpack.c.l.b16 %v42
  %v1761 = vunpack.c.h.b16 %v42
  %v1762 = vunpack.c.l.b16 %v43
  %v1763 = vunpack.c.h.b16 %v43
  %v1764 = vunpack.c.l.b16 %v44
  %v1765 = vunpack.c.h.b16 %v44
  %v1766 = vunpack.c.l.b16 %v45
  %v1767 = vunpack.c.h.b16 %v45
  %v1768 = vunpack.c.l.b16 %v46
  %v1769 = vunpack.c.h.b16 %v46
  %v1770 = vunpack.c.l.b16 %v47
  %v1771 = vunpack.c.h.b16 %v47
  %v1772 = vunpack.c.l.b16 %v48
  %v1773 = vunpack.c.h.b16 %v48
  %v1774 = vunpack.c.l.b16 %v49
  %v1775 = vunpack.c.h.b16 %v49
  %v1776 = vunpack.c.l.b16 %v50
  %v1777 = vunpack.c.h.b16 %v50
  %v1778 = vunpack.c.l.b16 %v51
  %v1779 = vunpack.c.h.b16 %v51
  %v1780 = vunpack.c.l.b16 %v52
  %v1781 = vunpack.c.h.b16 %v52
  %v1782 = vunpack.c.l.b16 %v53
  %v1783 = vunpack.c.h.b16 %v53
  %v1784 = vunpack.c.l.b16 %v54
  %v1785 = vunpack.c.h.b16 %v54
  %v1786 = vunpack.c.l.b16 %v55
  %v1787 = vunpack.c.h.b16 %v55
  %v1788 = vunpack.c.l.b16 %v56
  %v1789 = vunpack.c.h.b16 %v56
  %v1790 = vunpack.c.l.b16 %v57
  %v1791 = vunpack.c.h.b16 %v57
  %v1792 = vunpack.c.l.b16 %v58
  %v1793 = vunpack.c.h.b16 %v58
  %v1794 = vunpack.c.l.b16 %v59
  %v1795 = vunpack.c.h.b16 %v59
  %v1796 = vunpack.c.l.b16 %v60
  %v1797 = vunpack.c.h.b16 %v60
  %v1798 = vunpack.c.l.b16 %v61
  %v1799 = vunpack.c.h.b16 %v61
  %v1800 = vunpack.c.l.b16 %v62
  %v1801 = vunpack.c.h.b16 %v62
  %v1802 = vunpack.c.l.b16 %v63
  %v1803 = vunpack.c.h.b16 %v63
  %v1804 = vunpack.c.l.b16 %v64
  %v1805 = vunpack.c.h.b16 %v64
  %v1806 = vunpack.c.l.b16 %v65
  %v1807 = vunpack.c.h.b16 %v65
  %v1808 = vunpack.c.l.b16 %v66
  %v1809 = vunpack.c.h.b16 %v66
  %v1810 = vunpack.c.l.b16 %v67
  %v1811 = vunpack.c.h.b16 %v67
  %v1812 = vunpack.c.l.b16 %v68
  %v1813 = vunpack.c.h.b16 %v68
  %v1814 = vunpack.c.l.b16 %v69
  %v1815 = vunpack.c.h.b16 %v69
  %v1816 = vunpack.c.l.b16 %v70
  %v1817 = vunpack.c.h.b16 %v70
  %v1818 = vunpack.c.l.b16 %v71
  %v1819 = vunpack.c.h.b16 %v71
  %v1820 = vunpack.c.l.b16 %v72
  %v1821 = vunpack.c.h.b16 %v72
  %v1822 = vunpack.c.l.b16 %v73
  %v1823 = vunpack.c.h.b16 %v73
  %v1824 = vunpack.c.l.b16 %v74
  %v1825 = vunpack.c.h.b16 %v74
  %v1826 = vunpack.c.l.b16 %v75
  %v1827 = vunpack.c.h.b16 %v75
  %v1828 = vunpack.c.l.b16 %v76
  %v1829 = vunpack.c.h.b16 %v76
  %v1830 = vunpack.c.l.b16 %v77
  %v1831 = vunpack.c.h.b16 %v77
  %v1832 = vunpack.c.l.b16 %v78
  %v1833 = vunpack.c.h.b16 %v78
  %v1834 = vunpack.c.l.b16 %v79
  %v1835 = vunpack.c.h.b16 %v79
  %v1836 = vunpack.c.l.b16 %v80
  %v1837 = vunpack.c.h.b16 %v80
  %v1838 = vunpack.c.l.b16 %v81
  %v1839 = vunpack.c.h.b16 %v81
  %v1840 = vunpack.c.l.b16 %v82
  %v1841 = vunpack.c.h.b16 %v82
  %v1842 = vunpack.c.l.b16 %v83
  %v1843 = vunpack.c.h.b16 %v83
  %v1844 = vunpack.c.l.b16 %v84
  %v1845 = vunpack.c.h.b16 %v84
  %v1846 = vunpack.c.l.b16 %v85
  %v1847 = vunpack.c.h.b16 %v85
  %v1848 = vunpack.c.l.b16 %v86
  %v1849 = vunpack.c.h.b16 %v86
  %v1850 = vunpack.c.l.b16 %v87
  %v1851 = vunpack.c.h.b16 %v87
  %v1852 = vunpack.c.l.b16 %v88
  %v1853 = vunpack.c.h.b16 %v88
  %v1854 = vunpack.c.l.b16 %v89
  %v1855 = vunpack.c.h.b16 %v89
  %v1856 = vunpack.c.l.b16 %v90
  %v1857 = vunpack.c.h.b16 %v90
  %v1858 = vunpack.c.l.b16 %v91
  %v1859 = vunpack.c.h.b16 %v91
  %v1860 = vunpack.c.l.b16 %v92
  %v1861 = vunpack.c.h.b16 %v92
  %v1862 = vunpack.c.l.b16 %v93
  %v1863 = vunpack.c.h.b16 %v93
  %v1864 = vunpack.c.l.b16 %v94
  %v1865 = vunpack.c.h.b16 %v94
  %v1866 = vunpack.c.l.b16 %v95
  %v1867 = vunpack.c.h.b16 %v95
  %v1868 = vunpack.c.l.b16 %v96
  %v1869 = vunpack.c.h.b16 %v96
  %v1870 = vunpack.c.l.b16 %v97
  %v1871 = vunpack.c.h.b16 %v97
  %v1872 = vunpack.c.l.b16 %v98
  %v1873 = vunpack.c.h.b16 %v98
  %v1874 = vunpack.c.l.b16 %v99
  %v1875 = vunpack.c.h.b16 %v99
  %v1876 = vunpack.c.l.b16 %v100
  %v1877 = vunpack.c.h.b16 %v100
  %v1878 = vunpack.c.l.b16 %v101
  %v1879 = vunpack.c.h.b16 %v101
  %v1880 = vunpack.c.l.b16 %v102
  %v1881 = vunpack.c.h.b16 %v102
  %v1882 = vunpack.c.l.b16 %v103
  %v1883 = vunpack.c.h.b16 %v103
  %v1884 = vunpack.c.l.b16 %v104
  %v1885 = vunpack.c.h.b16 %v104
  %v1886 = vunpack.c.l.b16 %v105
  %v1887 = vunpack.c.h.b16 %v105
  %v1888 = vunpack.c.l.b16 %v106
  %v1889 = vunpack.c.h.b16 %v106
  %v1890 = vunpack.c.l.b16 %v107
  %v1891 = vunpack.c.h.b16 %v107
  %v1892 = vunpack.c.l.b16 %v108
  %v1893 = vunpack.c.h.b16 %v108
  %v1894 = vunpack.c.l.b16 %v109
  %v1895 = vunpack.c.h.b16 %v109
  %v1896 = vunpack.c.l.b16 %v110
  %v1897 = vunpack.c.h.b16 %v110
  %v1898 = vunpack.c.l.b16 %v111
  %v1899 = vunpack.c.h.b16 %v111
  %v1900 = vunpack.c.l.b16 %v112
  %v1901 = vunpack.c.h.b16 %v112
  %v1902 = vunpack.c.l.b16 %v113
  %v1903 = vunpack.c.h.b16 %v113
  %v1904 = vunpack.c.l.b16 %v114
  %v1905 = vunpack.c.h.b16 %v114
  %v1906 = vunpack.c.l.b16 %v115
  %v1907 = vunpack.c.h.b16 %v115
  %v1908 = vunpack.c.l.b16 %v116
  %v1909 = vunpack.c.h.b16 %v116
  %v1910 = vunpack.c.l.b16 %v117
  %v1911 = vunpack.c.h.b16 %v117
  %v1912 = vunpack.c.l.b16 %v118
  %v1913 = vunpack.c.h.b16 %v118
  %v1914 = vunpack.c.l.b16 %v119
  %v1915 = vunpack.c.h.b16 %v119
  %v1916 = vunpack.c.l.b16 %v120
  %v1917 = vunpack.c.h.b16 %v120
  %v1918 = vunpack.c.l.b16 %v121
  %v1919 = vunpack.c.h.b16 %v121
  %v1920 = vunpack.c.l.b16 %v122
  %v1921 = vunpack.c.h.b16 %v122
  %v1922 = vunpack.c.l.b16 %v123
  %v1923 = vunpack.c.h.b16 %v123
  %v1924 = vunpack.c.l.b16 %v124
  %v1925 = vunpack.c.h.b16 %v124
  %v1926 = vunpack.c.l.b16 %v125
  %v1927 = vunpack.c.h.b16 %v125
  %v1928 = vunpack.c.l.b16 %v126
  %v1929 = vunpack.c.h.b16 %v126
  %v1930 = vunpack.c.l.b16 %v127
  %v1931 = vunpack.c.h.b16 %v127
  %v1932 = vunpack.c.l.b16 %v128
  %v1933 = vunpack.c.h.b16 %v128
  %v1934 = vunpack.c.l.b16 %v129
  %v1935 = vunpack.c.h.b16 %v129
  %v1936 = vunpack.c.l.b16 %v130
  %v1937 = vunpack.c.h.b16 %v130
  %v1938 = vunpack.c.l.b16 %v131
  %v1939 = vunpack.c.h.b16 %v131
  %v1940 = vunpack.c.l.b16 %v132
  %v1941 = vunpack.c.h.b16 %v132
  %v1942 = vunpack.c.l.b16 %v133
  %v1943 = vunpack.c.h.b16 %v133
  %v1944 = vunpack.c.l.b16 %v134
  %v1945 = vunpack.c.h.b16 %v134
  %v1946 = vunpack.c.l.b16 %v135
  %v1947 = vunpack.c.h.b16 %v135
  %v1948 = vunpack.c.l.b16 %v136
  %v1949 = vunpack.c.h.b16 %v136
  %v1950 = vunpack.c.l.b16 %v137
  %v1951 = vunpack.c.h.b16 %v137
  %v1952 = vunpack.c.l.b16 %v138
  %v1953 = vunpack.c.h.b16 %v138
  %v1954 = vunpack.c.l.b16 %v139
  %v1955 = vunpack.c.h.b16 %v139
  %v1956 = vunpack.c.l.b16 %v140
  %v1957 = vunpack.c.h.b16 %v140
  %v1958 = vunpack.c.l.b16 %v141
  %v1959 = vunpack.c.h.b16 %v141
  %v1960 = vunpack.c.l.b16 %v142
  %v1961 = vunpack.c.h.b16 %v142
  %v1962 = vunpack.c.l.b16 %v143
  %v1963 = vunpack.c.h.b16 %v143
  %v1964 = vunpack.c.l.b16 %v144
  %v1965 = vunpack.c.h.b16 %v144
  %v1966 = vunpack.c.l.b16 %v145
  %v1967 = vunpack.c.h.b16 %v145
  %v1968 = vunpack.c.l.b16 %v146
  %v1969 = vunpack.c.h.b16 %v146
  %v1970 = vunpack.c.l.b16 %v147
  %v1971 = vunpack.c.h.b16 %v147
  %v1972 = vunpack.c.l.b16 %v148
  %v1973 = vunpack.c.h.b16 %v148
  %v1974 = vunpack.c.l.b16 %v149
  %v1975 = vunpack.c.h.b16 %v149
  %v1976 = vunpack.c.l.b16 %v150
  %v1977 = vunpack.c.h.b16 %v150
  %v1978 = vunpack.c.l.b16 %v151
  %v1979 = vunpack.c.h.b16 %v151
  %v1980 = vunpack.c.l.b16 %v152
  %v1981 = vunpack.c.h.b16 %v152
  %v1982 = vunpack.c.l.b16 %v153
  %v1983 = vunpack.c.h.b16 %v153
  %v1984 = vunpack.c.l.b16 %v154
  %v1985 = vunpack.c.h.b16 %v154
  %v1986 = vunpack.c.l.b16 %v155
  %v1987 = vunpack.c.h.b16 %v155
  %v1988 = vunpack.c.l.b16 %v156
  %v1989 = vunpack.c.h.b16 %v156
  %v1990 = vunpack.c.l.b16 %v157
  %v1991 = vunpack.c.h.b16 %v157
  %v1992 = vunpack.c.l.b16 %v158
  %v1993 = vunpack.c.h.b16 %v158
  %v1994 = vunpack.c.l.b16 %v159
  %v1995 = vunpack.c.h.b16 %v159
  %v1996 = vunpack.c.l.b16 %v160
  %v1997 = vunpack.c.h.b16 %v160
  %v1998 = vunpack.c.l.b16 %v161
  %v1999 = vunpack.c.h.b16 %v161
  %v2000 = vunpack.c.l.b16 %v162
  %v2001 = vunpack.c.h.b16 %v162
  %v2002 = vunpack.c.l.b16 %v163
  %v2003 = vunpack.c.h.b16 %v163
  %v2004 = vunpack.c.l.b16 %v164
  %v2005 = vunpack.c.h.b16 %v164
  %v2006 = vunpack.c.l.b16 %v165
  %v2007 = vunpack.c.h.b16 %v165
  %v2008 = vunpack.c.l.b16 %v166
  %v2009 = vunpack.c.h.b16 %v166
  %v2010 = vunpack.c.l.b16 %v167
  %v2011 = vunpack.c.h.b16 %v167
  %v2012 = vunpack.c.l.b16 %v168
  %v2013 = vunpack.c.h.b16 %v168
  %v2014 = vunpack.c.l.b16 %v169
  %v2015 = vunpack.c.h.b16 %v169
  %v2016 = vunpack.c.l.b16 %v170
  %v2017 = vunpack.c.h.b16 %v170
  %v2018 = vunpack.c.l.b16 %v171
  %v2019 = vunpack.c.h.b16 %v171
  %v2020 = vunpack.c.l.b16 %v172
  %v2021 = vunpack.c.h.b16 %v172
  %v2022 = vunpack.c.l.b16 %v173
  %v2023 = vunpack.c.h.b16 %v173
  %v2024 = vunpack.c.l.b16 %v174
  %v2025 = vunpack.c.h.b16 %v174
  %v2026 = vunpack.c.l.b16 %v175
  %v2027 = vunpack.c.h.b16 %v175
  %v2028 = vunpack.c.l.b16 %v176
  %v2029 = vunpack.c.h.b16 %v176
  %v2030 = vunpack.c.l.b16 %v177
  %v2031 = vunpack.c.h.b16 %v177
  %v2032 = vunpack.c.l.b16 %v178
  %v2033 = vunpack.c.h.b16 %v178
  %v2034 = vunpack.c.l.b16 %v179
  %v2035 = vunpack.c.h.b16 %v179
  %v2036 = vunpack.c.l.b16 %v180
  %v2037 = vunpack.c.h.b16 %v180
  %v2038 = vunpack.c.l.b16 %v181
  %v2039 = vunpack.c.h.b16 %v181
  %v2040 = vunpack.c.l.b16 %v182
  %v2041 = vunpack.c.h.b16 %v182
  %v2042 = vunpack.c.l.b16 %v183
  %v2043 = vunpack.c.h.b16 %v183
  %v2044 = vunpack.c.l.b16 %v184
  %v2045 = vunpack.c.h.b16 %v184
  %v2046 = vunpack.c.l.b16 %v185
  %v2047 = vunpack.c.h.b16 %v185
  %v2048 = vunpack.c.l.b16 %v186
  %v2049 = vunpack.c.h.b16 %v186
  %v2050 = vunpack.c.l.b16 %v187
  %v2051 = vunpack.c.h.b16 %v187
  %v2052 = vunpack.c.l.b16 %v188
  %v2053 = vunpack.c.h.b16 %v188
  %v2054 = vunpack.c.l.b16 %v189
  %v2055 = vunpack.c.h.b16 %v189
  %v2056 = vunpack.c.l.b16 %v190
  %v2057 = vunpack.c.h.b16 %v190
  %v2058 = vunpack.c.l.b16 %v191
  %v2059 = vunpack.c.h.b16 %v191
  %v2060 = vunpack.c.l.b16 %v192
  %v2061 = vunpack.c.h.b16 %v192
  %v2062 = vunpack.c.l.b16 %v193
  %v2063 = vunpack.c.h.b16 %v193
  %v2064 = vunpack.c.l.b16 %v194
  %v2065 = vunpack.c.h.b16 %v194
  %v2066 = vunpack.c.l.b16 %v195
  %v2067 = vunpack.c.h.b16 %v195
  %v2068 = vunpack.c.l.b16 %v196
  %v2069 = vunpack.c.h.b16 %v196
  %v2070 = vunpack.c.l.b16 %v197
  %v2071 = vunpack.c.h.b16 %v197
  %v2072 = vunpack.c.l.b16 %v198
  %v2073 = vunpack.c.h.b16 %v198
  %v2074 = vunpack.c.l.b16 %v199
  %v2075 = vunpack.c.h.b16 %v199
  %v2076 = vunpack.c.l.b16 %v200
  %v2077 = vunpack.c.h.b16 %v200
  %v2078 = vunpack.c.l.b16 %v201
  %v2079 = vunpack.c.h.b16 %v201
  %v2080 = vunpack.c.l.b16 %v202
  %v2081 = vunpack.c.h.b16 %v202
  %v2082 = vunpack.c.l.b16 %v203
  %v2083 = vunpack.c.h.b16 %v203
  %v2084 = vunpack.c.l.b16 %v204
  %v2085 = vunpack.c.h.b16 %v204
  %v2086 = vunpack.c.l.b16 %v205
  %v2087 = vunpack.c.h.b16 %v205
  %v2088 = vunpack.c.l.b16 %v206
  %v2089 = vunpack.c.h.b16 %v206
  %v2090 = vunpack.c.l.b16 %v207
  %v2091 = vunpack.c.h.b16 %v207
  %v2092 = vunpack.c.l.b16 %v208
  %v2093 = vunpack.c.h.b16 %v208
  %v2094 = vunpack.c.l.b16 %v209
  %v2095 = vunpack.c.h.b16 %v209
  %v2096 = vunpack.c.l.b16 %v210
  %v2097 = vunpack.c.h.b16 %v210
  %v2098 = vunpack.c.l.b16 %v211
  %v2099 = vunpack.c.h.b16 %v211
  %v2100 = vunpack.c.l.b16 %v212
  %v2101 = vunpack.c.h.b16 %v212
  %v2102 = vunpack.c.l.b16 %v213
  %v2103 = vunpack.c.h.b16 %v213
  %v2104 = vunpack.c.l.b16 %v214
  %v2105 = vunpack.c.h.b16 %v214
  %v2106 = vunpack.c.l.b16 %v215
  %v2107 = vunpack.c.h.b16 %v215
  %v2108 = vunpack.c.l.b16 %v216
  %v2109 = vunpack.c.h.b16 %v216
  %v2110 = vunpack.c.l.b16 %v217
  %v2111 = vunpack.c.h.b16 %v217
  %v2112 = vunpack.c.l.b16 %v218
  %v2113 = vunpack.c.h.b16 %v218
  %v2114 = vunpack.c.l.b16 %v219
  %v2115 = vunpack.c.h.b16 %v219
  %v2116 = vunpack.c.l.b16 %v220
  %v2117 = vunpack.c.h.b16 %v220
  %v2118 = vunpack.c.l.b16 %v221
  %v2119 = vunpack.c.h.b16 %v221
  %v2120 = vunpack.c.l.b16 %v222
  %v2121 = vunpack.c.h.b16 %v222
  %v2122 = vunpack.c.l.b16 %v223
  %v2123 = vunpack.c.h.b16 %v223
  %v2124 = vunpack.c.l.b16 %v224
  %v2125 = vunpack.c.h.b16 %v224
  %v2126 = vunpack.c.l.b16 %v225
  %v2127 = vunpack.c.h.b16 %v225
  %v2128 = vunpack.c.l.b16 %v226
  %v2129 = vunpack.c.h.b16 %v226
  %v2130 = vunpack.c.l.b16 %v227
  %v2131 = vunpack.c.h.b16 %v227
  %v2132 = vunpack.c.l.b16 %v228
  %v2133 = vunpack.c.h.b16 %v228
  %v2134 = vunpack.c.l.b16 %v229
  %v2135 = vunpack.c.h.b16 %v229
  %v2136 = vunpack.c.l.b16 %v230
  %v2137 = vunpack.c.h.b16 %v230
  %v2138 = vunpack.c.l.b16 %v231
  %v2139 = vunpack.c.h.b16 %v231
  %v2140 = vunpack.c.l.b16 %v232
  %v2141 = vunpack.c.h.b16 %v232
  %v2142 = vunpack.c.l.b16 %v233
  %v2143 = vunpack.c.h.b16 %v233
  %v2144 = vunpack.c.l.b16 %v234
  %v2145 = vunpack.c.h.b16 %v234
  %v2146 = vunpack.c.l.b16 %v235
  %v2147 = vunpack.c.h.b16 %v235
  %v2148 = vunpack.c.l.b16 %v236
  %v2149 = vunpack.c.h.b16 %v236
  %v2150 = vunpack.c.l.b16 %v237
  %v2151 = vunpack.c.h.b16 %v237
  %v2152 = vunpack.c.l.b16 %v238
  %v2153 = vunpack.c.h.b16 %v238
  %v2154 = vunpack.c.l.b16 %v239
  %v2155 = vunpack.c.h.b16 %v239
  %v2156 = vunpack.c.l.b16 %v240
  %v2157 = vunpack.c.h.b16 %v240
  %v2158 = vunpack.c.l.b16 %v241
  %v2159 = vunpack.c.h.b16 %v241
  %v2160 = vunpack.c.l.b16 %v242
  %v2161 = vunpack.c.h.b16 %v242
  %v2162 = vunpack.c.l.b16 %v243
  %v2163 = vunpack.c.h.b16 %v243
  %v2164 = vunpack.c.l.b16 %v244
  %v2165 = vunpack.c.h.b16 %v244
  %v2166 = vunpack.c.l.b16 %v245
  %v2167 = vunpack.c.h.b16 %v245
  %v2168 = vunpack.c.l.b16 %v246
  %v2169 = vunpack.c.h.b16 %v246
  %v2170 = vunpack.c.l.b16 %v247
  %v2171 = vunpack.c.h.b16 %v247
  %v2172 = vunpack.c.l.b16 %v248
  %v2173 = vunpack.c.h.b16 %v248
  %v2174 = vunpack.c.l.b16 %v249
  %v2175 = vunpack.c.h.b16 %v249
  %v2176 = vunpack.c.l.b16 %v250
  %v2177 = vunpack.c.h.b16 %v250
  %v2178 = vunpack.c.l.b16 %v251
  %v2179 = vunpack.c.h.b16 %v251
  %v2180 = vunpack.c.l.b16 %v252
  %v2181 = vunpack.c.h.b16 %v252
  %v2182 = vunpack.c.l.b16 %v253
  %v2183 = vunpack.c.h.b16 %v253
  %v2184 = vunpack.c.l.b16 %v254
  %v2185 = vunpack.c.h.b16 %v254
  %v2186 = vunpack.c.l.b16 %v255
  %v2187 = vunpack.c.h.b16 %v255
  %v2188 = vunpack.c.l.b16 %v256
  %v2189 = vunpack.c.h.b16 %v256
  %v2190 = vunpack.c.l.b16 %v257
  %v2191 = vunpack.c.h.b16 %v257
  %v2192 = vunpack.c.l.b16 %v258
  %v2193 = vunpack.c.h.b16 %v258
  %v2194 = vunpack.c.l.b16 %v259
  %v2195 = vunpack.c.h.b16 %v259
  %v2196 = vunpack.c.l.b16 %v260
  %v2197 = vunpack.c.h.b16 %v260
  %v2198 = vunpack.c.l.b16 %v261
  %v2199 = vunpack.c.h.b16 %v261
  %v2200 = vunpack.c.l.b16 %v262
  %v2201 = vunpack.c.h.b16 %v262
  %v2202 = vunpack.c.l.b16 %v263
  %v2203 = vunpack.c.h.b16 %v263
  %v2204 = vunpack.c.l.b16 %v264
  %v2205 = vunpack.c.h.b16 %v264
  %v2206 = vunpack.c.l.b16 %v265
  %v2207 = vunpack.c.h.b16 %v265
  %v2208 = vunpack.c.l.b16 %v266
  %v2209 = vunpack.c.h.b16 %v266
  %v2210 = vunpack.c.l.b16 %v267
  %v2211 = vunpack.c.h.b16 %v267
  %v2212 = vunpack.c.l.b16 %v268
  %v2213 = vunpack.c.h.b16 %v268
  %v2214 = vunpack.c.l.b16 %v269
  %v2215 = vunpack.c.h.b16 %v269
  %v2216 = vunpack.c.l.b16 %v270
  %v2217 = vunpack.c.h.b16 %v270
  %v2218 = vunpack.c.l.b16 %v271
  %v2219 = vunpack.c.h.b16 %v271
  %v2220 = vunpack.c.l.b16 %v272
  %v2221 = vunpack.c.h.b16 %v272
  %v2222 = vunpack.c.l.b16 %v273
  %v2223 = vunpack.c.h.b16 %v273
  %v2224 = vunpack.c.l.b16 %v274
  %v2225 = vunpack.c.h.b16 %v274
  %v2226 = vunpack.c.l.b16 %v275
  %v2227 = vunpack.c.h.b16 %v275
  %v2228 = vunpack.c.l.b16 %v276
  %v2229 = vunpack.c.h.b16 %v276
  %v2230 = vunpack.c.l.b16 %v277
  %v2231 = vunpack.c.h.b16 %v277
  %v2232 = vunpack.c.l.b16 %v278
  %v2233 = vunpack.c.h.b16 %v278
  %v2234 = vunpack.c.l.b16 %v279
  %v2235 = vunpack.c.h.b16 %v279
  %v2236 = vunpack.c.l.b16 %v280
  %v2237 = vunpack.c.h.b16 %v280
  %v2238 = vunpack.c.l.b16 %v281
  %v2239 = vunpack.c.h.b16 %v281
  %v2240 = vunpack.c.l.b16 %v282
  %v2241 = vunpack.c.h.b16 %v282
  %v2242 = vunpack.c.l.b16 %v283
  %v2243 = vunpack.c.h.b16 %v283
  %v2244 = vunpack.c.l.b16 %v284
  %v2245 = vunpack.c.h.b16 %v284
  %v2246 = vunpack.c.l.b16 %v285
  %v2247 = vunpack.c.h.b16 %v285
  %v2248 = vunpack.c.l.b16 %v286
  %v2249 = vunpack.c.h.b16 %v286
  %v2250 = vunpack.c.l.b16 %v287
  %v2251 = vunpack.c.h.b16 %v287
  %v2252 = vunpack.c.l.b16 %v288
  %v2253 = vunpack.c.h.b16 %v288
  %v2254 = vunpack.c.l.b16 %v289
  %v2255 = vunpack.c.h.b16 %v289
  %v2256 = vunpack.c.l.b16 %v290
  %v2257 = vunpack.c.h.b16 %v290
  %v2258 = vunpack.c.l.b16 %v291
  %v2259 = vunpack.c.h.b16 %v291
  %v2260 = vunpack.c.l.b16 %v292
  %v2261 = vunpack.c.h.b16 %v292
  %v2262 = vunpack.c.l.b16 %v293
  %v2263 = vunpack.c.h.b16 %v293
  %v2264 = vunpack.c.l.b16 %v294
  %v2265 = vunpack.c.h.b16 %v294
  %v2266 = vunpack.c.l.b16 %v295
  %v2267 = vunpack.c.h.b16 %v295
  %v2268 = vunpack.c.l.b16 %v296
  %v2269 = vunpack.c.h.b16 %v296
  %v2270 = vunpack.c.l.b16 %v297
  %v2271 = vunpack.c.h.b16 %v297
  %v2272 = vunpack.c.l.b16 %v298
  %v2273 = vunpack.c.h.b16 %v298
  %v2274 = vunpack.c.l.b16 %v299
  %v2275 = vunpack.c.h.b16 %v299
  %v2276 = vunpack.c.l.b16 %v300
  %v2277 = vunpack.c.h.b16 %v300
  %v2278 = vunpack.c.l.b16 %v301
  %v2279 = vunpack.c.h.b16 %v301
  %v2280 = vunpack.c.l.b16 %v302
  %v2281 = vunpack.c.h.b16 %v302
  %v2282 = vunpack.c.l.b16 %v303
  %v2283 = vunpack.c.h.b16 %v303
  %v2284 = vunpack.c.l.b16 %v304
  %v2285 = vunpack.c.h.b16 %v304
  %v2286 = vunpack.c.l.b16 %v305
  %v2287 = vunpack.c.h.b16 %v305
  %v2288 = vunpack.c.l.b16 %v306
  %v2289 = vunpack.c.h.b16 %v306
  %v2290 = vunpack.c.l.b16 %v307
  %v2291 = vunpack.c.h.b16 %v307
  %v2292 = vunpack.c.l.b16 %v308
  %v2293 = vunpack.c.h.b16 %v308
  %v2294 = vunpack.c.l.b16 %v309
  %v2295 = vunpack.c.h.b16 %v309
  %v2296 = vunpack.c.l.b16 %v310
  %v2297 = vunpack.c.h.b16 %v310
  %v2298 = vunpack.c.l.b16 %v311
  %v2299 = vunpack.c.h.b16 %v311
  %v2300 = vunpack.c.l.b16 %v312
  %v2301 = vunpack.c.h.b16 %v312
  %v2302 = vunpack.c.l.b16 %v313
  %v2303 = vunpack.c.h.b16 %v313
  %v2304 = vunpack.c.l.b16 %v314
  %v2305 = vunpack.c.h.b16 %v314
  %v2306 = vunpack.c.l.b16 %v315
  %v2307 = vunpack.c.h.b16 %v315
  %v2308 = vunpack.c.l.b16 %v316
  %v2309 = vunpack.c.h.b16 %v316
  %v2310 = vunpack.c.l.b16 %v317
  %v2311 = vunpack.c.h.b16 %v317
  %v2312 = vunpack.c.l.b16 %v318
  %v2313 = vunpack.c.h.b16 %v318
  %v2314 = vunpack.c.l.b16 %v319
  %v2315 = vunpack.c.h.b16 %v319
  %v2316 = vunpack.c.l.b16 %v320
  %v2317 = vunpack.c.h.b16 %v320
  %v2318 = vunpack.c.l.b16 %v321
  %v2319 = vunpack.c.h.b16 %v321
  %v2320 = vunpack.c.l.b16 %v322
  %v2321 = vunpack.c.h.b16 %v322
  %v2322 = vunpack.c.l.b16 %v323
  %v2323 = vunpack.c.h.b16 %v323
  %v2324 = vunpack.c.l.b16 %v324
  %v2325 = vunpack.c.h.b16 %v324
  %v2326 = vunpack.c.l.b16 %v325
  %v2327 = vunpack.c.h.b16 %v325
  %v2328 = vunpack.c.l.b16 %v326
  %v2329 = vunpack.c.h.b16 %v326
  %v2330 = vunpack.c.l.b16 %v327
  %v2331 = vunpack.c.h.b16 %v327
  %v2332 = vunpack.c.l.b16 %v328
  %v2333 = vunpack.c.h.b16 %v328
  %v2334 = vunpack.c.l.b16 %v329
  %v2335 = vunpack.c.h.b16 %v329
  %v2336 = vunpack.c.l.b16 %v330
  %v2337 = vunpack.c.h.b16 %v330
  %v2338 = vunpack.c.l.b16 %v331
  %v2339 = vunpack.c.h.b16 %v331
  %v2340 = vunpack.c.l.b16 %v332
  %v2341 = vunpack.c.h.b16 %v332
  %v2342 = vunpack.c.l.b16 %v333
  %v2343 = vunpack.c.h.b16 %v333
  %v2344 = vunpack.c.l.b16 %v334
  %v2345 = vunpack.c.h.b16 %v334
  %v2346 = vunpack.c.l.b16 %v335
  %v2347 = vunpack.c.h.b16 %v335
  %v2348 = vunpack.c.l.b16 %v336
  %v2349 = vunpack.c.h.b16 %v336
  %v2350 = vunpack.c.l.b16 %v337
  %v2351 = vunpack.c.h.b16 %v337
  %v2352 = vunpack.c.l.b16 %v338
  %v2353 = vunpack.c.h.b16 %v338
  %v2354 = vunpack.c.l.b16 %v339
  %v2355 = vunpack.c.h.b16 %v339
  %v2356 = vunpack.c.l.b16 %v340
  %v2357 = vunpack.c.h.b16 %v340
  %v2358 = vunpack.c.l.b16 %v341
  %v2359 = vunpack.c.h.b16 %v341
  %v2360 = vunpack.c.l.b16 %v342
  %v2361 = vunpack.c.h.b16 %v342
  %v2362 = vunpack.c.l.b16 %v343
  %v2363 = vunpack.c.h.b16 %v343
  %v2364 = vunpack.c.l.b16 %v344
  %v2365 = vunpack.c.h.b16 %v344
  %v2366 = vunpack.c.l.b16 %v345
  %v2367 = vunpack.c.h.b16 %v345
  %v2368 = vunpack.c.l.b16 %v346
  %v2369 = vunpack.c.h.b16 %v346
  %v2370 = vunpack.c.l.b16 %v347
  %v2371 = vunpack.c.h.b16 %v347
  %v2372 = vunpack.c.l.b16 %v348
  %v2373 = vunpack.c.h.b16 %v348
  %v2374 = vunpack.c.l.b16 %v349
  %v2375 = vunpack.c.h.b16 %v349
  %v2376 = vunpack.c.l.b16 %v350
  %v2377 = vunpack.c.h.b16 %v350
  %v2378 = vunpack.c.l.b16 %v351
  %v2379 = vunpack.c.h.b16 %v351
  %v2380 = vunpack.c.l.b16 %v352
  %v2381 = vunpack.c.h.b16 %v352
  %v2382 = vunpack.c.l.b16 %v353
  %v2383 = vunpack.c.h.b16 %v353
  %v2384 = vunpack.c.l.b16 %v354
  %v2385 = vunpack.c.h.b16 %v354
  %v2386 = vunpack.c.l.b16 %v355
  %v2387 = vunpack.c.h.b16 %v355
  %v2388 = vunpack.c.l.b16 %v356
  %v2389 = vunpack.c.h.b16 %v356
  %v2390 = vunpack.c.l.b16 %v357
  %v2391 = vunpack.c.h.b16 %v357
  %v2392 = vunpack.c.l.b16 %v358
  %v2393 = vunpack.c.h.b16 %v358
  %v2394 = vunpack.c.l.b16 %v359
  %v2395 = vunpack.c.h.b16 %v359
  %v2396 = vunpack.c.l.b16 %v360
  %v2397 = vunpack.c.h.b16 %v360
  %v2398 = vunpack.c.l.b16 %v361
  %v2399 = vunpack.c.h.b16 %v361
  %v2400 = vunpack.c.l.b16 %v362
  %v2401 = vunpack.c.h.b16 %v362
  %v2402 = vunpack.c.l.b16 %v363
  %v2403 = vunpack.c.h.b16 %v363
  %v2404 = vunpack.c.l.b16 %v364
  %v2405 = vunpack.c.h.b16 %v364
  %v2406 = vunpack.c.l.b16 %v365
  %v2407 = vunpack.c.h.b16 %v365
  %v2408 = vunpack.c.l.b16 %v366
  %v2409 = vunpack.c.h.b16 %v366
  %v2410 = vunpack.c.l.b16 %v367
  %v2411 = vunpack.c.h.b16 %v367
  %v2412 = vunpack.c.l.b16 %v368
  %v2413 = vunpack.c.h.b16 %v368
  %v2414 = vunpack.c.l.b16 %v369
  %v2415 = vunpack.c.h.b16 %v369
  %v2416 = vunpack.c.l.b16 %v370
  %v2417 = vunpack.c.h.b16 %v370
  %v2418 = vunpack.c.l.b16 %v371
  %v2419 = vunpack.c.h.b16 %v371
  %v2420 = vunpack.c.l.b16 %v372
  %v2421 = vunpack.c.h.b16 %v372
  %v2422 = vunpack.c.l.b16 %v373
  %v2423 = vunpack.c.h.b16 %v373
  %v2424 = vunpack.c.l.b16 %v374
  %v2425 = vunpack.c.h.b16 %v374
  %v2426 = vunpack.c.l.b16 %v375
  %v2427 = vunpack.c.h.b16 %v375
  %v2428 = vunpack.c.l.b16 %v376
  %v2429 = vunpack.c.h.b16 %v376
  %v2430 = vunpack.c.l.b16 %v377
  %v2431 = vunpack.c.h.b16 %v377
  %v2432 = vunpack.c.l.b16 %v378
  %v2433 = vunpack.c.h.b16 %v378
  %v2434 = vunpack.c.l.b16 %v379
  %v2435 = vunpack.c.h.b16 %v379
  %v2436 = vunpack.c.l.b16 %v380
  %v2437 = vunpack.c.h.b16 %v380
  %v2438 = vunpack.c.l.b16 %v381
  %v2439 = vunpack.c.h.b16 %v381
  %v2440 = vunpack.c.l.b16 %v382
  %v2441 = vunpack.c.h.b16 %v382
  %v2442 = vunpack.c.l.b16 %v383
  %v2443 = vunpack.c.h.b16 %v383
  %v2444 = vunpack.c.l.b16 %v384
  %v2445 = vunpack.c.h.b16 %v384
  %v2446 = vunpack.c.l.b16 %v385
  %v2447 = vunpack.c.h.b16 %v385
  %v2448 = vunpack.c.l.b16 %v386
  %v2449 = vunpack.c.h.b16 %v386
  %v2450 = vunpack.c.l.b16 %v387
  %v2451 = vunpack.c.h.b16 %v387
  %v2452 = vunpack.c.l.b16 %v388
  %v2453 = vunpack.c.h.b16 %v388
  %v2454 = vunpack.c.l.b16 %v389
  %v2455 = vunpack.c.h.b16 %v389
  %v2456 = vunpack.c.l.b16 %v390
  %v2457 = vunpack.c.h.b16 %v390
  %v2458 = vunpack.c.l.b16 %v391
  %v2459 = vunpack.c.h.b16 %v391
  %v2460 = vunpack.c.l.b16 %v392
  %v2461 = vunpack.c.h.b16 %v392
  %v2462 = vunpack.c.l.b16 %v393
  %v2463 = vunpack.c.h.b16 %v393
  %v2464 = vunpack.c.l.b16 %v394
  %v2465 = vunpack.c.h.b16 %v394
  %v2466 = vunpack.c.l.b16 %v395
  %v2467 = vunpack.c.h.b16 %v395
  %v2468 = vunpack.c.l.b16 %v396
  %v2469 = vunpack.c.h.b16 %v396
  %v2470 = vunpack.c.l.b16 %v397
  %v2471 = vunpack.c.h.b16 %v397
  %v2472 = vunpack.c.l.b16 %v398
  %v2473 = vunpack.c.h.b16 %v398
  %v2474 = vunpack.c.l.b16 %v399
  %v2475 = vunpack.c.h.b16 %v399
  %v2476 = vunpack.c.l.b16 %v400
  %v2477 = vunpack.c.h.b16 %v400
  %v2478 = vunpack.c.l.b16 %v401
  %v2479 = vunpack.c.h.b16 %v401
  %v2480 = vunpack.c.l.b16 %v402
  %v2481 = vunpack.c.h.b16 %v402
  %v2482 = vunpack.c.l.b16 %v403
  %v2483 = vunpack.c.h.b16 %v403
  %v2484 = vunpack.c.l.b16 %v404
  %v2485 = vunpack.c.h.b16 %v404
  %v2486 = vunpack.c.l.b16 %v405
  %v2487 = vunpack.c.h.b16 %v405
  %v2488 = vunpack.c.l.b16 %v406
  %v2489 = vunpack.c.h.b16 %v406
  %v2490 = vunpack.c.l.b16 %v407
  %v2491 = vunpack.c.h.b16 %v407
  %v2492 = vunpack.c.l.b16 %v408
  %v2493 = vunpack.c.h.b16 %v408
  %v2494 = vunpack.c.l.b16 %v409
  %v2495 = vunpack.c.h.b16 %v409
  %v2496 = vunpack.c.l.b16 %v410
  %v2497 = vunpack.c.h.b16 %v410
  %v2498 = vunpack.c.l.b16 %v411
  %v2499 = vunpack.c.h.b16 %v411
  %v2500 = vunpack.c.l.b16 %v412
  %v2501 = vunpack.c.h.b16 %v412
  %v2502 = vunpack.c.l.b16 %v413
  %v2503 = vunpack.c.h.b16 %v413
  %v2504 = vunpack.c.l.b16 %v414
  %v2505 = vunpack.c.h.b16 %v414
  %v2506 = vunpack.c.l.b16 %v415
  %v2507 = vunpack.c.h.b16 %v415
  %v2508 = vunpack.c.l.b16 %v416
  %v2509 = vunpack.c.h.b16 %v416
  %v2510 = vunpack.c.l.b16 %v417
  %v2511 = vunpack.c.h.b16 %v417
  %v2512 = vunpack.c.l.b16 %v418
  %v2513 = vunpack.c.h.b16 %v418
  %v2514 = vunpack.c.l.b16 %v419
  %v2515 = vunpack.c.h.b16 %v419
  %v2516 = vunpack.c.l.b16 %v420
  %v2517 = vunpack.c.h.b16 %v420
  %v2518 = vunpack.c.l.b16 %v421
  %v2519 = vunpack.c.h.b16 %v421
  %v2520 = vunpack.c.l.b16 %v422
  %v2521 = vunpack.c.h.b16 %v422
  %v2522 = vunpack.c.l.b16 %v423
  %v2523 = vunpack.c.h.b16 %v423
  %v2524 = vunpack.c.l.b16 %v424
  %v2525 = vunpack.c.h.b16 %v424
  %v2526 = vunpack.c.l.b16 %v425
  %v2527 = vunpack.c.h.b16 %v425
  %v2528 = vunpack.c.l.b16 %v426
  %v2529 = vunpack.c.h.b16 %v426
  %v2530 = vunpack.c.l.b16 %v427
  %v2531 = vunpack.c.h.b16 %v427
  %v2532 = vunpack.c.l.b16 %v428
  %v2533 = vunpack.c.h.b16 %v428
  %v2534 = vunpack.c.l.b16 %v429
  %v2535 = vunpack.c.h.b16 %v429
  %v2536 = vunpack.c.l.b16 %v430
  %v2537 = vunpack.c.h.b16 %v430
  %v2538 = vunpack.c.l.b16 %v431
  %v2539 = vunpack.c.h.b16 %v431
  %v2540 = vunpack.c.l.b16 %v432
  %v2541 = vunpack.c.h.b16 %v432
  %v2542 = vunpack.c.l.b16 %v433
  %v2543 = vunpack.c.h.b16 %v433
  %v2544 = vunpack.c.l.b16 %v434
  %v2545 = vunpack.c.h.b16 %v434
  %v2546 = vunpack.c.l.b16 %v435
  %v2547 = vunpack.c.h.b16 %v435
  %v2548 = vunpack.c.l.b16 %v436
  %v2549 = vunpack.c.h.b16 %v436
  %v2550 = vunpack.c.l.b16 %v437
  %v2551 = vunpack.c.h.b16 %v437
  %v2552 = vunpack.c.l.b16 %v438
  %v2553 = vunpack.c.h.b16 %v438
  %v2554 = vunpack.c.l.b16 %v439
  %v2555 = vunpack.c.h.b16 %v439
  %v2556 = vunpack.c.l.b16 %v440
  %v2557 = vunpack.c.h.b16 %v440
  %v2558 = vunpack.c.l.b16 %v441
  %v2559 = vunpack.c.h.b16 %v441
  %v2560 = vunpack.c.l.b16 %v442
  %v2561 = vunpack.c.h.b16 %v442
  %v2562 = vunpack.c.l.b16 %v443
  %v2563 = vunpack.c.h.b16 %v443
  %v2564 = vunpack.c.l.b16 %v444
  %v2565 = vunpack.c.h.b16 %v444
  %v2566 = vunpack.c.l.b16 %v445
  %v2567 = vunpack.c.h.b16 %v445
  %v2568 = vunpack.c.l.b16 %v446
  %v2569 = vunpack.c.h.b16 %v446
  %v2570 = vunpack.c.l.b16 %v447
  %v2571 = vunpack.c.h.b16 %v447
  %v2572 = vunpack.c.l.b16 %v448
  %v2573 = vunpack.c.h.b16 %v448
  %v2574 = vunpack.c.l.b16 %v449
  %v2575 = vunpack.c.h.b16 %v449
  %v2576 = vunpack.c.l.b16 %v450
  %v2577 = vunpack.c.h.b16 %v450
  %v2578 = vunpack.c.l.b16 %v451
  %v2579 = vunpack.c.h.b16 %v451
  %v2580 = vunpack.c.l.b16 %v452
  %v2581 = vunpack.c.h.b16 %v452
  %v2582 = vunpack.c.l.b16 %v453
  %v2583 = vunpack.c.h.b16 %v453
  %v2584 = vunpack.c.l.b16 %v454
  %v2585 = vunpack.c.h.b16 %v454
  %v2586 = vunpack.c.l.b16 %v455
  %v2587 = vunpack.c.h.b16 %v455
  %v2588 = vunpack.c.l.b16 %v456
  %v2589 = vunpack.c.h.b16 %v456
  %v2590 = vunpack.c.l.b16 %v457
  %v2591 = vunpack.c.h.b16 %v457
  %v2592 = vunpack.c.l.b16 %v458
  %v2593 = vunpack.c.h.b16 %v458
  %v2594 = vunpack.c.l.b16 %v459
  %v2595 = vunpack.c.h.b16 %v459
  %v2596 = vunpack.c.l.b16 %v460
  %v2597 = vunpack.c.h.b16 %v460
  %v2598 = vunpack.c.l.b16 %v461
  %v2599 = vunpack.c.h.b16 %v461
  %v2600 = vunpack.c.l.b16 %v462
  %v2601 = vunpack.c.h.b16 %v462
  %v2602 = vunpack.c.l.b16 %v463
  %v2603 = vunpack.c.h.b16 %v463
  %v2604 = vunpack.c.l.b16 %v464
  %v2605 = vunpack.c.h.b16 %v464
  %v2606 = vunpack.c.l.b16 %v465
  %v2607 = vunpack.c.h.b16 %v465
  %v2608 = vunpack.c.l.b16 %v466
  %v2609 = vunpack.c.h.b16 %v466
  %v2610 = vunpack.c.l.b16 %v467
  %v2611 = vunpack.c.h.b16 %v467
  %v2612 = vunpack.c.l.b16 %v468
  %v2613 = vunpack.c.h.b16 %v468
  %v2614 = vunpack.c.l.b16 %v469
  %v2615 = vunpack.c.h.b16 %v469
  %v2616 = vunpack.c.l.b16 %v470
  %v2617 = vunpack.c.h.b16 %v470
  %v2618 = vunpack.c.l.b16 %v471
  %v2619 = vunpack.c.h.b16 %v471
  %v2620 = vunpack.c.l.b16 %v472
  %v2621 = vunpack.c.h.b16 %v472
  %v2622 = vunpack.c.l.b16 %v473
  %v2623 = vunpack.c.h.b16 %v473
  %v2624 = vunpack.c.l.b16 %v474
  %v2625 = vunpack.c.h.b16 %v474
  %v2626 = vunpack.c.l.b16 %v475
  %v2627 = vunpack.c.h.b16 %v475
  %v2628 = vunpack.c.l.b16 %v476
  %v2629 = vunpack.c.h.b16 %v476
  %v2630 = vunpack.c.l.b16 %v477
  %v2631 = vunpack.c.h.b16 %v477
  %v2632 = vunpack.c.l.b16 %v478
  %v2633 = vunpack.c.h.b16 %v478
  %v2634 = vunpack.c.l.b16 %v479
  %v2635 = vunpack.c.h.b16 %v479
  %v2636 = vunpack.c.l.b16 %v480
  %v2637 = vunpack.c.h.b16 %v480
  %v2638 = vunpack.c.l.b16 %v481
  %v2639 = vunpack.c.h.b16 %v481
  %v2640 = vunpack.c.l.b16 %v482
  %v2641 = vunpack.c.h.b16 %v482
  %v2642 = vunpack.c.l.b16 %v483
  %v2643 = vunpack.c.h.b16 %v483
  %v2644 = vunpack.c.l.b16 %v484
  %v2645 = vunpack.c.h.b16 %v484
  %v2646 = vunpack.c.l.b16 %v485
  %v2647 = vunpack.c.h.b16 %v485
  %v2648 = vunpack.c.l.b16 %v486
  %v2649 = vunpack.c.h.b16 %v486
  %v2650 = vunpack.c.l.b16 %v487
  %v2651 = vunpack.c.h.b16 %v487
  %v2652 = vunpack.c.l.b16 %v488
  %v2653 = vunpack.c.h.b16 %v488
  %v2654 = vunpack.c.l.b16 %v489
  %v2655 = vunpack.c.h.b16 %v489
  %v2656 = vunpack.c.l.b16 %v490
  %v2657 = vunpack.c.h.b16 %v490
  %v2658 = vunpack.c.l.b16 %v491
  %v2659 = vunpack.c.h.b16 %v491
  %v2660 = vunpack.c.l.b16 %v492
  %v2661 = vunpack.c.h.b16 %v492
  %v2662 = vunpack.c.l.b16 %v493
  %v2663 = vunpack.c.h.b16 %v493
  %v2664 = vunpack.c.l.b16 %v494
  %v2665 = vunpack.c.h.b16 %v494
  %v2666 = vunpack.c.l.b16 %v495
  %v2667 = vunpack.c.h.b16 %v495
  %v2668 = vunpack.c.l.b16 %v496
  %v2669 = vunpack.c.h.b16 %v496
  %v2670 = vunpack.c.l.b16 %v497
  %v2671 = vunpack.c.h.b16 %v497
  %v2672 = vunpack.c.l.b16 %v498
  %v2673 = vunpack.c.h.b16 %v498
  %v2674 = vunpack.c.l.b16 %v499
  %v2675 = vunpack.c.h.b16 %v499
  %v2676 = vunpack.c.l.b16 %v500
  %v2677 = vunpack.c.h.b16 %v500
  %v2678 = vunpack.c.l.b16 %v501
  %v2679 = vunpack.c.h.b16 %v501
  %v2680 = vunpack.c.l.b16 %v502
  %v2681 = vunpack.c.h.b16 %v502
  %v2682 = vunpack.c.l.b16 %v503
  %v2683 = vunpack.c.h.b16 %v503
  %v2684 = vunpack.c.l.b16 %v504
  %v2685 = vunpack.c.h.b16 %v504
  %v2686 = vunpack.c.l.b16 %v505
  %v2687 = vunpack.c.h.b16 %v505
  %v2688 = vunpack.c.l.b16 %v506
  %v2689 = vunpack.c.h.b16 %v506
  %v2690 = vunpack.c.l.b16 %v507
  %v2691 = vunpack.c.h.b16 %v507
  %v2692 = vunpack.c.l.b16 %v508
  %v2693 = vunpack.c.h.b16 %v508
  %v2694 = vunpack.c.l.b16 %v509
  %v2695 = vunpack.c.h.b16 %v509
  %v2696 = vunpack.c.l.b16 %v510
  %v2697 = vunpack.c.h.b16 %v510
  %v2698 = vunpack.c.l.b16 %v511
  %v2699 = vunpack.c.h.b16 %v511
  %v2700 = vunpack.c.l.b16 %v512
  %v2701 = vunpack.c.h.b16 %v512
  %v2702 = vunpack.c.l.b16 %v513
  %v2703 = vunpack.c.h.b16 %v513
  %v2704 = vunpack.c.l.b16 %v514
  %v2705 = vunpack.c.h.b16 %v514
  %v2706 = vunpack.c.l.b16 %v515
  %v2707 = vunpack.c.h.b16 %v515
  %v2708 = vunpack.c.l.b16 %v516
  %v2709 = vunpack.c.h.b16 %v516
  %v2710 = vunpack.c.l.b16 %v517
  %v2711 = vunpack.c.h.b16 %v517
  %v2712 = vunpack.c.l.b16 %v518
  %v2713 = vunpack.c.h.b16 %v518
  %v2714 = vunpack.c.l.b16 %v519
  %v2715 = vunpack.c.h.b16 %v519
  %v2716 = vunpack.c.l.b16 %v520
  %v2717 = vunpack.c.h.b16 %v520
  %v2718 = vunpack.c.l.b16 %v521
  %v2719 = vunpack.c.h.b16 %v521
  %v2720 = vunpack.c.l.b16 %v522
  %v2721 = vunpack.c.h.b16 %v522
  %v2722 = vunpack.c.l.b16 %v523
  %v2723 = vunpack.c.h.b16 %v523
  %v2724 = vunpack.c.l.b16 %v524
  %v2725 = vunpack.c.h.b16 %v524
  %v2726 = vunpack.c.l.b16 %v525
  %v2727 = vunpack.c.h.b16 %v525
  %v2728 = vunpack.c.l.b16 %v526
  %v2729 = vunpack.c.h.b16 %v526
  %v2730 = vunpack.c.l.b16 %v527
  %v2731 = vunpack.c.h.b16 %v527
  %v2732 = vunpack.c.l.b16 %v528
  %v2733 = vunpack.c.h.b16 %v528
  %v2734 = vunpack.c.l.b16 %v529
  %v2735 = vunpack.c.h.b16 %v529
  %v2736 = vunpack.c.l.b16 %v530
  %v2737 = vunpack.c.h.b16 %v530
  %v2738 = vunpack.c.l.b16 %v531
  %v2739 = vunpack.c.h.b16 %v531
  %v2740 = vunpack.c.l.b16 %v532
  %v2741 = vunpack.c.h.b16 %v532
  %v2742 = vunpack.c.l.b16 %v533
  %v2743 = vunpack.c.h.b16 %v533
  %v2744 = vunpack.c.l.b16 %v534
  %v2745 = vunpack.c.h.b16 %v534
  %v2746 = vunpack.c.l.b16 %v535
  %v2747 = vunpack.c.h.b16 %v535
  %v2748 = vunpack.c.l.b16 %v536
  %v2749 = vunpack.c.h.b16 %v536
  %v2750 = vunpack.c.l.b16 %v537
  %v2751 = vunpack.c.h.b16 %v537
  %v2752 = vunpack.c.l.b16 %v538
  %v2753 = vunpack.c.h.b16 %v538
  %v2754 = vunpack.c.l.b16 %v539
  %v2755 = vunpack.c.h.b16 %v539
  %v2756 = vunpack.c.l.b16 %v540
  %v2757 = vunpack.c.h.b16 %v540
  %v2758 = vunpack.c.l.b16 %v541
  %v2759 = vunpack.c.h.b16 %v541
  %v2760 = vunpack.c.l.b16 %v542
  %v2761 = vunpack.c.h.b16 %v542
  %v2762 = vunpack.c.l.b16 %v543
  %v2763 = vunpack.c.h.b16 %v543
  %v2764 = vunpack.c.l.b16 %v544
  %v2765 = vunpack.c.h.b16 %v544
  %v2766 = vunpack.c.l.b16 %v545
  %v2767 = vunpack.c.h.b16 %v545
  %v2768 = vunpack.c.l.b16 %v546
  %v2769 = vunpack.c.h.b16 %v546
  %v2770 = vunpack.c.l.b16 %v547
  %v2771 = vunpack.c.h.b16 %v547
  %v2772 = vunpack.c.l.b16 %v548
  %v2773 = vunpack.c.h.b16 %v548
  %v2774 = vunpack.c.l.b16 %v549
  %v2775 = vunpack.c.h.b16 %v549
  %v2776 = vunpack.c.l.b16 %v550
  %v2777 = vunpack.c.h.b16 %v550
  %v2778 = vunpack.c.l.b16 %v551
  %v2779 = vunpack.c.h.b16 %v551
  %v2780 = vunpack.c.l.b16 %v552
  %v2781 = vunpack.c.h.b16 %v552
  %v2782 = vunpack.c.l.b16 %v553
  %v2783 = vunpack.c.h.b16 %v553
  %v2784 = vunpack.c.l.b16 %v554
  %v2785 = vunpack.c.h.b16 %v554
  %v2786 = vunpack.c.l.b16 %v555
  %v2787 = vunpack.c.h.b16 %v555
  %v2788 = vunpack.c.l.b16 %v556
  %v2789 = vunpack.c.h.b16 %v556
  %v2790 = vunpack.c.l.b16 %v557
  %v2791 = vunpack.c.h.b16 %v557
  %v2792 = vunpack.c.l.b16 %v558
  %v2793 = vunpack.c.h.b16 %v558
  %v2794 = vunpack.c.l.b16 %v559
  %v2795 = vunpack.c.h.b16 %v559
  %v2796 = vunpack.c.l.b16 %v560
  %v2797 = vunpack.c.h.b16 %v560
  %v2798 = vunpack.c.l.b16 %v561
  %v2799 = vunpack.c.h.b16 %v561
  %v2800 = vunpack.c.l.b16 %v562
  %v2801 = vunpack.c.h.b16 %v562
  %v2802 = vunpack.c.l.b16 %v563
  %v2803 = vunpack.c.h.b16 %v563
  %v2804 = vunpack.c.l.b16 %v564
  %v2805 = vunpack.c.h.b16 %v564
  %v2806 = vunpack.c.l.b16 %v565
  %v2807 = vunpack.c.h.b16 %v565
  %v2808 = vunpack.c.l.b16 %v566
  %v2809 = vunpack.c.h.b16 %v566
  %v2810 = vunpack.c.l.b16 %v567
  %v2811 = vunpack.c.h.b16 %v567
  %v2812 = vunpack.c.l.b16 %v568
  %v2813 = vunpack.c.h.b16 %v568
  %v2814 = vunpack.c.l.b16 %v569
  %v2815 = vunpack.c.h.b16 %v569
  %v2816 = vunpack.c.l.b16 %v570
  %v2817 = vunpack.c.h.b16 %v570
  %v2818 = vunpack.c.l.b16 %v571
  %v2819 = vunpack.c.h.b16 %v571
  %v2820 = vunpack.c.l.b16 %v572
  %v2821 = vunpack.c.h.b16 %v572
  %v2822 = vunpack.c.l.b16 %v573
  %v2823 = vunpack.c.h.b16 %v573
  %v2824 = vunpack.c.l.b16 %v574
  %v2825 = vunpack.c.h.b16 %v574
  %v2826 = vunpack.c.l.b16 %v575
  %v2827 = vunpack.c.h.b16 %v575
  %v2828 = vunpack.c.l.b16 %v576
  %v2829 = vunpack.c.h.b16 %v576
  %v2830 = vunpack.c.l.b16 %v577
  %v2831 = vunpack.c.h.b16 %v577
  %v2832 = vunpack.c.l.b16 %v578
  %v2833 = vunpack.c.h.b16 %v578
  %v2834 = vunpack.c.l.b16 %v579
  %v2835 = vunpack.c.h.b16 %v579
  %v2836 = vunpack.c.l.b16 %v580
  %v2837 = vunpack.c.h.b16 %v580
  %v2838 = vunpack.c.l.b16 %v581
  %v2839 = vunpack.c.h.b16 %v581
  %v2840 = vunpack.c.l.b16 %v582
  %v2841 = vunpack.c.h.b16 %v582
  %v2842 = vunpack.c.l.b16 %v583
  %v2843 = vunpack.c.h.b16 %v583
  %v2844 = vunpack.c.l.b16 %v584
  %v2845 = vunpack.c.h.b16 %v584
  %v2846 = vunpack.c.l.b16 %v585
  %v2847 = vunpack.c.h.b16 %v585
  %v2848 = vunpack.c.l.b16 %v586
  %v2849 = vunpack.c.h.b16 %v586
  %v2850 = vunpack.c.l.b16 %v587
  %v2851 = vunpack.c.h.b16 %v587
  %v2852 = vunpack.c.l.b16 %v588
  %v2853 = vunpack.c.h.b16 %v588
  %v2854 = vunpack.c.l.b16 %v589
  %v2855 = vunpack.c.h.b16 %v589
  %v2856 = vunpack.c.l.b16 %v590
  %v2857 = vunpack.c.h.b16 %v590
  %v2858 = vunpack.c.l.b16 %v591
  %v2859 = vunpack.c.h.b16 %v591
  %v2860 = vunpack.c.l.b16 %v592
  %v2861 = vunpack.c.h.b16 %v592
  %v2862 = vunpack.c.l.b16 %v593
  %v2863 = vunpack.c.h.b16 %v593
  %v2864 = vunpack.c.l.b16 %v594
  %v2865 = vunpack.c.h.b16 %v594
  %v2866 = vunpack.c.l.b16 %v595
  %v2867 = vunpack.c.h.b16 %v595
  %v2868 = vunpack.c.l.b16 %v596
  %v2869 = vunpack.c.h.b16 %v596
  %v2870 = vunpack.c.l.b16 %v597
  %v2871 = vunpack.c.h.b16 %v597
  %v2872 = vunpack.c.l.b16 %v598
  %v2873 = vunpack.c.h.b16 %v598
  %v2874 = vunpack.c.l.b16 %v599
  %v2875 = vunpack.c.h.b16 %v599
  %v2876 = vunpack.c.l.b16 %v600
  %v2877 = vunpack.c.h.b16 %v600
  %v2878 = vunpack.c.l.b16 %v601
  %v2879 = vunpack.c.h.b16 %v601
  %v2880 = vunpack.c.l.b16 %v602
  %v2881 = vunpack.c.h.b16 %v602
  %v2882 = vunpack.c.l.b16 %v603
  %v2883 = vunpack.c.h.b16 %v603
  %v2884 = vunpack.c.l.b16 %v604
  %v2885 = vunpack.c.h.b16 %v604
  %v2886 = vunpack.c.l.b16 %v605
  %v2887 = vunpack.c.h.b16 %v605
  %v2888 = vunpack.c.l.b16 %v606
  %v2889 = vunpack.c.h.b16 %v606
  %v2890 = vunpack.c.l.b16 %v607
  %v2891 = vunpack.c.h.b16 %v607
  %v2892 = vunpack.c.l.b16 %v608
  %v2893 = vunpack.c.h.b16 %v608
  %v2894 = vunpack.c.l.b16 %v609
  %v2895 = vunpack.c.h.b16 %v609
  %v2896 = vunpack.c.l.b16 %v610
  %v2897 = vunpack.c.h.b16 %v610
  %v2898 = vunpack.c.l.b16 %v611
  %v2899 = vunpack.c.h.b16 %v611
  %v2900 = vunpack.c.l.b16 %v612
  %v2901 = vunpack.c.h.b16 %v612
  %v2902 = vunpack.c.l.b16 %v613
  %v2903 = vunpack.c.h.b16 %v613
  %v2904 = vunpack.c.l.b16 %v614
  %v2905 = vunpack.c.h.b16 %v614
  %v2906 = vunpack.c.l.b16 %v615
  %v2907 = vunpack.c.h.b16 %v615
  %v2908 = vunpack.c.l.b16 %v616
  %v2909 = vunpack.c.h.b16 %v616
  %v2910 = vunpack.c.l.b16 %v617
  %v2911 = vunpack.c.h.b16 %v617
  %v2912 = vunpack.c.l.b16 %v618
  %v2913 = vunpack.c.h.b16 %v618
  %v2914 = vunpack.c.l.b16 %v619
  %v2915 = vunpack.c.h.b16 %v619
  %v2916 = vunpack.c.l.b16 %v620
  %v2917 = vunpack.c.h.b16 %v620
  %v2918 = vunpack.c.l.b16 %v621
  %v2919 = vunpack.c.h.b16 %v621
  %v2920 = vunpack.c.l.b16 %v622
  %v2921 = vunpack.c.h.b16 %v622
  %v2922 = vunpack.c.l.b16 %v623
  %v2923 = vunpack.c.h.b16 %v623
  %v2924 = vunpack.c.l.b16 %v624
  %v2925 = vunpack.c.h.b16 %v624
  %v2926 = vunpack.c.l.b16 %v625
  %v2927 = vunpack.c.h.b16 %v625
  %v2928 = vunpack.c.l.b16 %v626
  %v2929 = vunpack.c.h.b16 %v626
  %v2930 = vunpack.c.l.b16 %v627
  %v2931 = vunpack.c.h.b16 %v627
  %v2932 = vunpack.c.l.b16 %v628
  %v2933 = vunpack.c.h.b16 %v628
  %v2934 = vunpack.c.l.b16 %v629
  %v2935 = vunpack.c.h.b16 %v629
  %v2936 = vunpack.c.l.b16 %v630
  %v2937 = vunpack.c.h.b16 %v630
  %v2938 = vunpack.c.l.b16 %v631
  %v2939 = vunpack.c.h.b16 %v631
  %v2940 = vunpack.c.l.b16 %v632
  %v2941 = vunpack.c.h.b16 %v632
  %v2942 = vunpack.c.l.b16 %v633
  %v2943 = vunpack.c.h.b16 %v633
  %v2944 = vunpack.c.l.b16 %v634
  %v2945 = vunpack.c.h.b16 %v634
  %v2946 = vunpack.c.l.b16 %v635
  %v2947 = vunpack.c.h.b16 %v635
  %v2948 = vunpack.c.l.b16 %v636
  %v2949 = vunpack.c.h.b16 %v636
  %v2950 = vunpack.c.l.b16 %v637
  %v2951 = vunpack.c.h.b16 %v637
  %v2952 = vunpack.c.l.b16 %v638
  %v2953 = vunpack.c.h.b16 %v638
  %v2954 = vunpack.c.l.b16 %v639
  %v2955 = vunpack.c.h.b16 %v639
  %v2956 = vunpack.c.l.b16 %v640
  %v2957 = vunpack.c.h.b16 %v640
  %v2958 = vunpack.c.l.b16 %v641
  %v2959 = vunpack.c.h.b16 %v641
  %v2960 = vunpack.c.l.b16 %v642
  %v2961 = vunpack.c.h.b16 %v642
  %v2962 = vunpack.c.l.b16 %v643
  %v2963 = vunpack.c.h.b16 %v643
  %v2964 = vunpack.c.l.b16 %v644
  %v2965 = vunpack.c.h.b16 %v644
  %v2966 = vunpack.c.l.b16 %v645
  %v2967 = vunpack.c.h.b16 %v645
  %v2968 = vunpack.c.l.b16 %v646
  %v2969 = vunpack.c.h.b16 %v646
  %v2970 = vunpack.c.l.b16 %v647
  %v2971 = vunpack.c.h.b16 %v647
  %v2972 = vunpack.c.l.b16 %v648
  %v2973 = vunpack.c.h.b16 %v648
  %v2974 = vunpack.c.l.b16 %v649
  %v2975 = vunpack.c.h.b16 %v649
  %v2976 = vunpack.c.l.b16 %v650
  %v2977 = vunpack.c.h.b16 %v650
  %v2978 = vunpack.c.l.b16 %v651
  %v2979 = vunpack.c.h.b16 %v651
  %v2980 = vunpack.c.l.b16 %v652
  %v2981 = vunpack.c.h.b16 %v652
  %v2982 = vunpack.c.l.b16 %v653
  %v2983 = vunpack.c.h.b16 %v653
  %v2984 = vunpack.c.l.b16 %v654
  %v2985 = vunpack.c.h.b16 %v654
  %v2986 = vunpack.c.l.b16 %v655
  %v2987 = vunpack.c.h.b16 %v655
  %v2988 = vunpack.c.l.b16 %v656
  %v2989 = vunpack.c.h.b16 %v656
  %v2990 = vunpack.c.l.b16 %v657
  %v2991 = vunpack.c.h.b16 %v657
  %v2992 = vunpack.c.l.b16 %v658
  %v2993 = vunpack.c.h.b16 %v658
  %v2994 = vunpack.c.l.b16 %v659
  %v2995 = vunpack.c.h.b16 %v659
  %v2996 = vunpack.c.l.b16 %v660
  %v2997 = vunpack.c.h.b16 %v660
  %v2998 = vunpack.c.l.b16 %v661
  %v2999 = vunpack.c.h.b16 %v661
  %v3000 = vunpack.c.l.b16 %v662
  %v3001 = vunpack.c.h.b16 %v662
  %v3002 = vunpack.c.l.b16 %v663
  %v3003 = vunpack.c.h.b16 %v663
  %v3004 = vunpack.c.l.b16 %v664
  %v3005 = vunpack.c.h.b16 %v664
  %v3006 = vunpack.c.l.b16 %v665
  %v3007 = vunpack.c.h.b16 %v665
  %v3008 = vunpack.c.l.b16 %v666
  %v3009 = vunpack.c.h.b16 %v666
  %v3010 = vunpack.c.l.b16 %v667
  %v3011 = vunpack.c.h.b16 %v667
  %v3012 = vunpack.c.l.b16 %v668
  %v3013 = vunpack.c.h.b16 %v668
  %v3014 = vunpack.c.l.b16 %v669
  %v3015 = vunpack.c.h.b16 %v669
  %v3016 = vunpack.c.l.b16 %v670
  %v3017 = vunpack.c.h.b16 %v670
  %v3018 = vunpack.c.l.b16 %v671
  %v3019 = vunpack.c.h.b16 %v671
  %v3020 = vunpack.c.l.b16 %v672
  %v3021 = vunpack.c.h.b16 %v672
  %v3022 = vunpack.c.l.b16 %v673
  %v3023 = vunpack.c.h.b16 %v673
  %v3024 = vunpack.c.l.b16 %v674
  %v3025 = vunpack.c.h.b16 %v674
  %v3026 = vunpack.c.l.b16 %v675
  %v3027 = vunpack.c.h.b16 %v675
  %v3028 = vunpack.c.l.b16 %v676
  %v3029 = vunpack.c.h.b16 %v676
  %v3030 = vunpack.c.l.b16 %v677
  %v3031 = vunpack.c.h.b16 %v677
  %v3032 = vunpack.c.l.b16 %v678
  %v3033 = vunpack.c.h.b16 %v678
  %v3034 = vunpack.c.l.b16 %v679
  %v3035 = vunpack.c.h.b16 %v679
  %v3036 = vunpack.c.l.b16 %v680
  %v3037 = vunpack.c.h.b16 %v680
  %v3038 = vunpack.c.l.b16 %v681
  %v3039 = vunpack.c.h.b16 %v681
  %v3040 = vunpack.c.l.b16 %v682
  %v3041 = vunpack.c.h.b16 %v682
  %v3042 = vunpack.c.l.b16 %v683
  %v3043 = vunpack.c.h.b16 %v683
  %v3044 = vunpack.c.l.b16 %v684
  %v3045 = vunpack.c.h.b16 %v684
  %v3046 = vunpack.c.l.b16 %v685
  %v3047 = vunpack.c.h.b16 %v685
  %v3048 = vunpack.c.l.b16 %v686
  %v3049 = vunpack.c.h.b16 %v686
  %v3050 = vunpack.c.l.b16 %v687
  %v3051 = vunpack.c.h.b16 %v687
  %v3052 = vunpack.c.l.b16 %v688
  %v3053 = vunpack.c.h.b16 %v688
  %v3054 = vunpack.c.l.b16 %v689
  %v3055 = vunpack.c.h.b16 %v689
  %v3056 = vunpack.c.l.b16 %v690
  %v3057 = vunpack.c.h.b16 %v690
  %v3058 = vunpack.c.l.b16 %v691
  %v3059 = vunpack.c.h.b16 %v691
  %v3060 = vunpack.c.l.b16 %v692
  %v3061 = vunpack.c.h.b16 %v692
  %v3062 = vunpack.c.l.b16 %v693
  %v3063 = vunpack.c.h.b16 %v693
  %v3064 = vunpack.c.l.b16 %v694
  %v3065 = vunpack.c.h.b16 %v694
  %v3066 = vunpack.c.l.b16 %v695
  %v3067 = vunpack.c.h.b16 %v695
  %v3068 = vunpack.c.l.b16 %v696
  %v3069 = vunpack.c.h.b16 %v696
  %v3070 = vunpack.c.l.b16 %v697
  %v3071 = vunpack.c.h.b16 %v697
  %v3072 = vunpack.c.l.b16 %v698
  %v3073 = vunpack.c.h.b16 %v698
  %v3074 = vunpack.c.l.b16 %v699
  %v3075 = vunpack.c.h.b16 %v699
  %v3076 = vunpack.c.l.b16 %v700
  %v3077 = vunpack.c.h.b16 %v700
  %v3078 = vunpack.c.l.b16 %v701
  %v3079 = vunpack.c.h.b16 %v701
  %v3080 = vunpack.c.l.b16 %v702
  %v3081 = vunpack.c.h.b16 %v702
  %v3082 = vunpack.c.l.b16 %v703
  %v3083 = vunpack.c.h.b16 %v703
  %v3084 = vunpack.c.l.b16 %v704
  %v3085 = vunpack.c.h.b16 %v704
  %v3086 = vunpack.c.l.b16 %v705
  %v3087 = vunpack.c.h.b16 %v705
  %v3088 = vunpack.c.l.b16 %v706
  %v3089 = vunpack.c.h.b16 %v706
  %v3090 = vunpack.c.l.b16 %v707
  %v3091 = vunpack.c.h.b16 %v707
  %v3092 = vunpack.c.l.b16 %v708
  %v3093 = vunpack.c.h.b16 %v708
  %v3094 = vunpack.c.l.b16 %v709
  %v3095 = vunpack.c.h.b16 %v709
  %v3096 = vunpack.c.l.b16 %v710
  %v3097 = vunpack.c.h.b16 %v710
  %v3098 = vunpack.c.l.b16 %v711
  %v3099 = vunpack.c.h.b16 %v711
  %v3100 = vunpack.c.l.b16 %v712
  %v3101 = vunpack.c.h.b16 %v712
  %v3102 = vunpack.c.l.b16 %v713
  %v3103 = vunpack.c.h.b16 %v713
  %v3104 = vunpack.c.l.b16 %v714
  %v3105 = vunpack.c.h.b16 %v714
  %v3106 = vunpack.c.l.b16 %v715
  %v3107 = vunpack.c.h.b16 %v715
  %v3108 = vunpack.c.l.b16 %v716
  %v3109 = vunpack.c.h.b16 %v716
  %v3110 = vunpack.c.l.b16 %v717
  %v3111 = vunpack.c.h.b16 %v717
  %v3112 = vunpack.c.l.b16 %v718
  %v3113 = vunpack.c.h.b16 %v718
  %v3114 = vunpack.c.l.b16 %v719
  %v3115 = vunpack.c.h.b16 %v719
  %v3116 = vunpack.c.l.b16 %v720
  %v3117 = vunpack.c.h.b16 %v720
  %v3118 = vunpack.c.l.b16 %v721
  %v3119 = vunpack.c.h.b16 %v721
  %v3120 = vunpack.c.l.b16 %v722
  %v3121 = vunpack.c.h.b16 %v722
  %v3122 = vunpack.c.l.b16 %v723
  %v3123 = vunpack.c.h.b16 %v723
  %v3124 = vunpack.c.l.b16 %v724
  %v3125 = vunpack.c.h.b16 %v724
  %v3126 = vunpack.c.l.b16 %v725
  %v3127 = vunpack.c.h.b16 %v725
  %v3128 = vunpack.c.l.b16 %v726
  %v3129 = vunpack.c.h.b16 %v726
  %v3130 = vunpack.c.l.b16 %v727
  %v3131 = vunpack.c.h.b16 %v727
  %v3132 = vunpack.c.l.b16 %v728
  %v3133 = vunpack.c.h.b16 %v728
  %v3134 = vunpack.c.l.b16 %v729
  %v3135 = vunpack.c.h.b16 %v729
  %v3136 = vunpack.c.l.b16 %v730
  %v3137 = vunpack.c.h.b16 %v730
  %v3138 = vunpack.c.l.b16 %v731
  %v3139 = vunpack.c.h.b16 %v731
  %v3140 = vunpack.c.l.b16 %v732
  %v3141 = vunpack.c.h.b16 %v732
  %v3142 = vunpack.c.l.b16 %v733
  %v3143 = vunpack.c.h.b16 %v733
  %v3144 = vunpack.c.l.b16 %v734
  %v3145 = vunpack.c.h.b16 %v734
  %v3146 = vunpack.c.l.b16 %v735
  %v3147 = vunpack.c.h.b16 %v735
  %v3148 = vunpack.c.l.b16 %v736
  %v3149 = vunpack.c.h.b16 %v736
  %v3150 = vunpack.c.l.b16 %v737
  %v3151 = vunpack.c.h.b16 %v737
  %v3152 = vunpack.c.l.b16 %v738
  %v3153 = vunpack.c.h.b16 %v738
  %v3154 = vunpack.c.l.b16 %v739
  %v3155 = vunpack.c.h.b16 %v739
  %v3156 = vunpack.c.l.b16 %v740
  %v3157 = vunpack.c.h.b16 %v740
  %v3158 = vunpack.c.l.b16 %v741
  %v3159 = vunpack.c.h.b16 %v741
  %v3160 = vunpack.c.l.b16 %v742
  %v3161 = vunpack.c.h.b16 %v742
  %v3162 = vunpack.c.l.b16 %v743
  %v3163 = vunpack.c.h.b16 %v743
  %v3164 = vunpack.c.l.b16 %v744
  %v3165 = vunpack.c.h.b16 %v744
  %v3166 = vunpack.c.l.b16 %v745
  %v3167 = vunpack.c.h.b16 %v745
  %v3168 = vunpack.c.l.b16 %v746
  %v3169 = vunpack.c.h.b16 %v746
  %v3170 = vunpack.c.l.b16 %v747
  %v3171 = vunpack.c.h.b16 %v747
  %v3172 = vunpack.c.l.b16 %v748
  %v3173 = vunpack.c.h.b16 %v748
  %v3174 = vunpack.c.l.b16 %v749
  %v3175 = vunpack.c.h.b16 %v749
  %v3176 = vunpack.c.l.b16 %v750
  %v3177 = vunpack.c.h.b16 %v750
  %v3178 = vunpack.c.l.b16 %v751
  %v3179 = vunpack.c.h.b16 %v751
  %v3180 = vunpack.c.l.b16 %v752
  %v3181 = vunpack.c.h.b16 %v752
  %v3182 = vunpack.c.l.b16 %v753
  %v3183 = vunpack.c.h.b16 %v753
  %v3184 = vunpack.c.l.b16 %v754
  %v3185 = vunpack.c.h.b16 %v754
  %v3186 = vunpack.c.l.b16 %v755
  %v3187 = vunpack.c.h.b16 %v755
  %v3188 = vunpack.c.l.b16 %v756
  %v3189 = vunpack.c.h.b16 %v756
  %v3190 = vunpack.c.l.b16 %v757
  %v3191 = vunpack.c.h.b16 %v757
  %v3192 = vunpack.c.l.b16 %v758
  %v3193 = vunpack.c.h.b16 %v758
  %v3194 = vunpack.c.l.b16 %v759
  %v3195 = vunpack.c.h.b16 %v759
  %v3196 = vunpack.c.l.b16 %v760
  %v3197 = vunpack.c.h.b16 %v760
  %v3198 = vunpack.c.l.b16 %v761
  %v3199 = vunpack.c.h.b16 %v761
  %v3200 = vunpack.c.l.b16 %v762
  %v3201 = vunpack.c.h.b16 %v762
  %v3202 = vunpack.c.l.b16 %v763
  %v3203 = vunpack.c.h.b16 %v763
  %v3204 = vunpack.c.l.b16 %v764
  %v3205 = vunpack.c.h.b16 %v764
  %v3206 = vunpack.c.l.b16 %v765
  %v3207 = vunpack.c.h.b16 %v765
  %v3208 = vunpack.c.l.b16 %v766
  %v3209 = vunpack.c.h.b16 %v766
  %v3210 = vunpack.c.l.b16 %v767
  %v3211 = vunpack.c.h.b16 %v767
  %v3212 = vunpack.c.l.b16 %v768
  %v3213 = vunpack.c.h.b16 %v768
  %v3214 = vunpack.c.l.b16 %v769
  %v3215 = vunpack.c.h.b16 %v769
  %v3216 = vunpack.c.l.b16 %v770
  %v3217 = vunpack.c.h.b16 %v770
  %v3218 = vunpack.c.l.b16 %v771
  %v3219 = vunpack.c.h.b16 %v771
  %v3220 = vunpack.c.l.b16 %v772
  %v3221 = vunpack.c.h.b16 %v772
  %v3222 = vunpack.c.l.b16 %v773
  %v3223 = vunpack.c.h.b16 %v773
  %v3224 = vunpack.c.l.b16 %v774
  %v3225 = vunpack.c.h.b16 %v774
  %v3226 = vunpack.c.l.b16 %v775
  %v3227 = vunpack.c.h.b16 %v775
  %v3228 = vunpack.c.l.b16 %v776
  %v3229 = vunpack.c.h.b16 %v776
  %v3230 = vunpack.c.l.b16 %v777
  %v3231 = vunpack.c.h.b16 %v777
  %v3232 = vunpack.c.l.b16 %v778
  %v3233 = vunpack.c.h.b16 %v778
  %v3234 = vunpack.c.l.b16 %v779
  %v3235 = vunpack.c.h.b16 %v779
  %v3236 = vunpack.c.l.b16 %v780
  %v3237 = vunpack.c.h.b16 %v780
  %v3238 = vunpack.c.l.b16 %v781
  %v3239 = vunpack.c.h.b16 %v781
  %v3240 = vunpack.c.l.b16 %v782
  %v3241 = vunpack.c.h.b16 %v782
  %v3242 = vunpack.c.l.b16 %v783
  %v3243 = vunpack.c.h.b16 %v783
  %v3244 = vunpack.c.l.b16 %v784
  %v3245 = vunpack.c.h.b16 %v784
  %v3246 = vunpack.c.l.b16 %v785
  %v3247 = vunpack.c.h.b16 %v785
  %v3248 = vunpack.c.l.b16 %v786
  %v3249 = vunpack.c.h.b16 %v786
  %v3250 = vunpack.c.l.b16 %v787
  %v3251 = vunpack.c.h.b16 %v787
  %v3252 = vunpack.c.l.b16 %v788
  %v3253 = vunpack.c.h.b16 %v788
  %v3254 = vunpack.c.l.b16 %v789
  %v3255 = vunpack.c.h.b16 %v789
  %v3256 = vunpack.c.l.b16 %v790
  %v3257 = vunpack.c.h.b16 %v790
  %v3258 = vunpack.c.l.b16 %v791
  %v3259 = vunpack.c.h.b16 %v791
  %v3260 = vunpack.c.l.b16 %v792
  %v3261 = vunpack.c.h.b16 %v792
  %v3262 = vunpack.c.l.b16 %v793
  %v3263 = vunpack.c.h.b16 %v793
  %v3264 = vunpack.c.l.b16 %v794
  %v3265 = vunpack.c.h.b16 %v794
  %v3266 = vunpack.c.l.b16 %v795
  %v3267 = vunpack.c.h.b16 %v795
  %v3268 = vunpack.c.l.b16 %v796
  %v3269 = vunpack.c.h.b16 %v796
  %v3270 = vunpack.c.l.b16 %v797
  %v3271 = vunpack.c.h.b16 %v797
  %v3272 = vunpack.c.l.b16 %v798
  %v3273 = vunpack.c.h.b16 %v798
  %v3274 = vunpack.c.l.b16 %v799
  %v3275 = vunpack.c.h.b16 %v799
  %v3276 = vunpack.c.l.b16 %v800
  %v3277 = vunpack.c.h.b16 %v800
  %v3278 = vunpack.c.l.b16 %v801
  %v3279 = vunpack.c.h.b16 %v801
  %v3280 = vunpack.c.l.b16 %v802
  %v3281 = vunpack.c.h.b16 %v802
  %v3282 = vunpack.c.l.b16 %v803
  %v3283 = vunpack.c.h.b16 %v803
  %v3284 = vunpack.c.l.b16 %v804
  %v3285 = vunpack.c.h.b16 %v804
  %v3286 = vunpack.c.l.b16 %v805
  %v3287 = vunpack.c.h.b16 %v805
  %v3288 = vunpack.c.l.b16 %v806
  %v3289 = vunpack.c.h.b16 %v806
  %v3290 = vunpack.c.l.b16 %v807
  %v3291 = vunpack.c.h.b16 %v807
  %v3292 = vunpack.c.l.b16 %v808
  %v3293 = vunpack.c.h.b16 %v808
  %v3294 = vunpack.c.l.b16 %v809
  %v3295 = vunpack.c.h.b16 %v809
  %v3296 = vunpack.c.l.b16 %v810
  %v3297 = vunpack.c.h.b16 %v810
  %v3298 = vunpack.c.l.b16 %v811
  %v3299 = vunpack.c.h.b16 %v811
  %v3300 = vunpack.c.l.b16 %v812
  %v3301 = vunpack.c.h.b16 %v812
  %v3302 = vunpack.c.l.b16 %v813
  %v3303 = vunpack.c.h.b16 %v813
  %v3304 = vunpack.c.l.b16 %v814
  %v3305 = vunpack.c.h.b16 %v814
  %v3306 = vunpack.c.l.b16 %v815
  %v3307 = vunpack.c.h.b16 %v815
  %v3308 = vunpack.c.l.b16 %v816
  %v3309 = vunpack.c.h.b16 %v816
  %v3310 = vunpack.c.l.b16 %v817
  %v3311 = vunpack.c.h.b16 %v817
  %v3312 = vunpack.c.l.b16 %v818
  %v3313 = vunpack.c.h.b16 %v818
  %v3314 = vunpack.c.l.b16 %v819
  %v3315 = vunpack.c.h.b16 %v819
  %v3316 = vunpack.c.l.b16 %v820
  %v3317 = vunpack.c.h.b16 %v820
  %v3318 = vunpack.c.l.b16 %v821
  %v3319 = vunpack.c.h.b16 %v821
  %v3320 = vunpack.c.l.b16 %v822
  %v3321 = vunpack.c.h.b16 %v822
  %v3322 = vunpack.c.l.b16 %v823
  %v3323 = vunpack.c.h.b16 %v823
  %v3324 = vunpack.c.l.b16 %v824
  %v3325 = vunpack.c.h.b16 %v824
  %v3326 = vunpack.c.l.b16 %v825
  %v3327 = vunpack.c.h.b16 %v825
  %v3328 = vunpack.c.l.b16 %v826
  %v3329 = vunpack.c.h.b16 %v826
  %v3330 = vunpack.c.l.b16 %v827
  %v3331 = vunpack.c.h.b16 %v827
  %v3332 = vunpack.c.l.b16 %v828
  %v3333 = vunpack.c.h.b16 %v828
  %v3334 = vunpack.c.l.b16 %v829
  %v3335 = vunpack.c.h.b16 %v829
  %v3336 = vunpack.c.l.b16 %v830
  %v3337 = vunpack.c.h.b16 %v830
  %v3338 = vunpack.c.l.b16 %v831
  %v3339 = vunpack.c.h.b16 %v831
  %v3340 = vunpack.c.l.b16 %v832
  %v3341 = vunpack.c.h.b16 %v832
  %v3342 = vunpack.c.l.b16 %v833
  %v3343 = vunpack.c.h.b16 %v833
  %v3344 = vpack.c.b16 %v1748, %v1744
  %v3345 = vpack.c.b16 %v1749, %v1745
  %v3346 = vpack.c.b16 %v1750, %v1746
  %v3347 = vpack.c.b16 %v1751, %v1747
  %v3348 = vpack.c.b16 %v1756, %v1752
  %v3349 = vpack.c.b16 %v1757, %v1753
  %v3350 = vpack.c.b16 %v1758, %v1754
  %v3351 = vpack.c.b16 %v1759, %v1755
  %v3352 = vpack.c.b16 %v1764, %v1760
  %v3353 = vpack.c.b16 %v1765, %v1761
  %v3354 = vpack.c.b16 %v1766, %v1762
  %v3355 = vpack.c.b16 %v1767, %v1763
  %v3356 = vpack.c.b16 %v1772, %v1768
  %v3357 = vpack.c.b16 %v1773, %v1769
  %v3358 = vpack.c.b16 %v1774, %v1770
  %v3359 = vpack.c.b16 %v1775, %v1771
  %v3360 = vpack.c.b16 %v1780, %v1776
  %v3361 = vpack.c.b16 %v1781, %v1777
  %v3362 = vpack.c.b16 %v1782, %v1778
  %v3363 = vpack.c.b16 %v1783, %v1779
  %v3364 = vpack.c.b16 %v1788, %v1784
  %v3365 = vpack.c.b16 %v1789, %v1785
  %v3366 = vpack.c.b16 %v1790, %v1786
  %v3367 = vpack.c.b16 %v1791, %v1787
  %v3368 = vpack.c.b16 %v1796, %v1792
  %v3369 = vpack.c.b16 %v1797, %v1793
  %v3370 = vpack.c.b16 %v1798, %v1794
  %v3371 = vpack.c.b16 %v1799, %v1795
  %v3372 = vpack.c.b16 %v1804, %v1800
  %v3373 = vpack.c.b16 %v1805, %v1801
  %v3374 = vpack.c.b16 %v1806, %v1802
  %v3375 = vpack.c.b16 %v1807, %v1803
  %v3376 = vpack.c.b16 %v1812, %v1808
  %v3377 = vpack.c.b16 %v1813, %v1809
  %v3378 = vpack.c.b16 %v1814, %v1810
  %v3379 = vpack.c.b16 %v1815, %v1811
  %v3380 = vpack.c.b16 %v1820, %v1816
  %v3381 = vpack.c.b16 %v1821, %v1817
  %v3382 = vpack.c.b16 %v1822, %v1818
  %v3383 = vpack.c.b16 %v1823, %v1819
  %v3384 = vpack.c.b16 %v1828, %v1824
  %v3385 = vpack.c.b16 %v1829, %v1825
  %v3386 = vpack.c.b16 %v1830, %v1826
  %v3387 = vpack.c.b16 %v1831, %v1827
  %v3388 = vpack.c.b16 %v1836, %v1832
  %v3389 = vpack.c.b16 %v1837, %v1833
  %v3390 = vpack.c.b16 %v1838, %v1834
  %v3391 = vpack.c.b16 %v1839, %v1835
  %v3392 = vpack.c.b16 %v1844, %v1840
  %v3393 = vpack.c.b16 %v1845, %v1841
  %v3394 = vpack.c.b16 %v1846, %v1842
  %v3395 = vpack.c.b16 %v1847, %v1843
  %v3396 = vpack.c.b16 %v1852, %v1848
  %v3397 = vpack.c.b16 %v1853, %v1849
  %v3398 = vpack.c.b16 %v1854, %v1850
  %v3399 = vpack.c.b16 %v1855, %v1851
  %v3400 = vpack.c.b16 %v1860, %v1856
  %v3401 = vpack.c.b16 %v1861, %v1857
  %v3402 = vpack.c.b16 %v1862, %v1858
  %v3403 = vpack.c.b16 %v1863, %v1859
  %v3404 = vpack.c.b16 %v1868, %v1864
  %v3405 = vpack.c.b16 %v1869, %v1865
  %v3406 = vpack.c.b16 %v1870, %v1866
  %v3407 = vpack.c.b16 %v1871, %v1867
  %v3408 = vpack.c.b16 %v1876, %v1872
  %v3409 = vpack.c.b16 %v1877, %v1873
  %v3410 = vpack.c.b16 %v1878, %v1874
  %v3411 = vpack.c.b16 %v1879, %v1875
  %v3412 = vpack.c.b16 %v1884, %v1880
  %v3413 = vpack.c.b16 %v1885, %v1881
  %v3414 = vpack.c.b16 %v1886, %v1882
  %v3415 = vpack.c.b16 %v1887, %v1883
  %v3416 = vpack.c.b16 %v1892, %v1888
  %v3417 = vpack.c.b16 %v1893, %v1889
  %v3418 = vpack.c.b16 %v1894, %v1890
  %v3419 = vpack.c.b16 %v1895, %v1891
  %v3420 = vpack.c.b16 %v1900, %v1896
  %v3421 = vpack.c.b16 %v1901, %v1897
  %v3422 = vpack.c.b16 %v1902, %v1898
  %v3423 = vpack.c.b16 %v1903, %v1899
  %v3424 = vpack.c.b16 %v1908, %v1904
  %v3425 = vpack.c.b16 %v1909, %v1905
  %v3426 = vpack.c.b16 %v1910, %v1906
  %v3427 = vpack.c.b16 %v1911, %v1907
  %v3428 = vpack.c.b16 %v1916, %v1912
  %v3429 = vpack.c.b16 %v1917, %v1913
  %v3430 = vpack.c.b16 %v1918, %v1914
  %v3431 = vpack.c.b16 %v1919, %v1915
  %v3432 = vpack.c.b16 %v1924, %v1920
  %v3433 = vpack.c.b16 %v1925, %v1921
  %v3434 = vpack.c.b16 %v1926, %v1922
  %v3435 = vpack.c.b16 %v1927, %v1923
  %v3436 = vpack.c.b16 %v1932, %v1928
  %v3437 = vpack.c.b16 %v1933, %v1929
  %v3438 = vpack.c.b16 %v1934, %v1930
  %v3439 = vpack.c.b16 %v1935, %v1931
  %v3440 = vpack.c.b16 %v1940, %v1936
  %v3441 = vpack.c.b16 %v1941, %v1937
  %v3442 = vpack.c.b16 %v1942, %v1938
  %v3443 = vpack.c.b16 %v1943, %v1939
  %v3444 = vpack.c.b16 %v1948, %v1944
  %v3445 = vpack.c.b16 %v1949, %v1945
  %v3446 = vpack.c.b16 %v1950, %v1946
  %v3447 = vpack.c.b16 %v1951, %v1947
  %v3448 = vpack.c.b16 %v1956, %v1952
  %v3449 = vpack.c.b16 %v1957, %v1953
  %v3450 = vpack.c.b16 %v1958, %v1954
  %v3451 = vpack.c.b16 %v1959, %v1955
  %v3452 = vpack.c.b16 %v1964, %v1960
  %v3453 = vpack.c.b16 %v1965, %v1961
  %v3454 = vpack.c.b16 %v1966, %v1962
  %v3455 = vpack.c.b16 %v1967, %v1963
  %v3456 = vpack.c.b16 %v1972, %v1968
  %v3457 = vpack.c.b16 %v1973, %v1969
  %v3458 = vpack.c.b16 %v1974, %v1970
  %v3459 = vpack.c.b16 %v1975, %v1971
  %v3460 = vpack.c.b16 %v1980, %v1976
  %v3461 = vpack.c.b16 %v1981, %v1977
  %v3462 = vpack.c.b16 %v1982, %v1978
  %v3463 = vpack.c.b16 %v1983, %v1979
  %v3464 = vpack.c.b16 %v1988, %v1984
  %v3465 = vpack.c.b16 %v1989, %v1985
  %v3466 = vpack.c.b16 %v1990, %v1986
  %v3467 = vpack.c.b16 %v1991, %v1987
  %v3468 = vpack.c.b16 %v1996, %v1992
  %v3469 = vpack.c.b16 %v1997, %v1993
  %v3470 = vpack.c.b16 %v1998, %v1994
  %v3471 = vpack.c.b16 %v1999, %v1995
  %v3472 = vpack.c.b16 %v2004, %v2000
  %v3473 = vpack.c.b16 %v2005, %v2001
  %v3474 = vpack.c.b16 %v2006, %v2002
  %v3475 = vpack.c.b16 %v2007, %v2003
  %v3476 = vpack.c.b16 %v2012, %v2008
  %v3477 = vpack.c.b16 %v2013, %v2009
  %v3478 = vpack.c.b16 %v2014, %v2010
  %v3479 = vpack.c.b16 %v2015, %v2011
  %v3480 = vpack.c.b16 %v2020, %v2016
  %v3481 = vpack.c.b16 %v2021, %v2017
  %v3482 = vpack.c.b16 %v2022, %v2018
  %v3483 = vpack.c.b16 %v2023, %v2019
  %v3484 = vpack.c.b16 %v2028, %v2024
  %v3485 = vpack.c.b16 %v2029, %v2025
  %v3486 = vpack.c.b16 %v2030, %v2026
  %v3487 = vpack.c.b16 %v2031, %v2027
  %v3488 = vpack.c.b16 %v2036, %v2032
  %v3489 = vpack.c.b16 %v2037, %v2033
  %v3490 = vpack.c.b16 %v2038, %v2034
  %v3491 = vpack.c.b16 %v2039, %v2035
  %v3492 = vpack.c.b16 %v2044, %v2040
  %v3493 = vpack.c.b16 %v2045, %v2041
  %v3494 = vpack.c.b16 %v2046, %v2042
  %v3495 = vpack.c.b16 %v2047, %v2043
  %v3496 = vpack.c.b16 %v2052, %v2048
  %v3497 = vpack.c.b16 %v2053, %v2049
  %v3498 = vpack.c.b16 %v2054, %v2050
  %v3499 = vpack.c.b16 %v2055, %v2051
  %v3500 = vpack.c.b16 %v2060, %v2056
  %v3501 = vpack.c.b16 %v2061, %v2057
  %v3502 = vpack.c.b16 %v2062, %v2058
  %v3503 = vpack.c.b16 %v2063, %v2059
  %v3504 = vpack.c.b16 %v2068, %v2064
  %v3505 = vpack.c.b16 %v2069, %v2065
  %v3506 = vpack.c.b16 %v2070, %v2066
  %v3507 = vpack.c.b16 %v2071, %v2067
  %v3508 = vpack.c.b16 %v2076, %v2072
  %v3509 = vpack.c.b16 %v2077, %v2073
  %v3510 = vpack.c.b16 %v2078, %v2074
  %v3511 = vpack.c.b16 %v2079, %v2075
  %v3512 = vpack.c.b16 %v2084, %v2080
  %v3513 = vpack.c.b16 %v2085, %v2081
  %v3514 = vpack.c.b16 %v2086, %v2082
  %v3515 = vpack.c.b16 %v2087, %v2083
  %v3516 = vpack.c.b16 %v2092, %v2088
  %v3517 = vpack.c.b16 %v2093, %v2089
  %v3518 = vpack.c.b16 %v2094, %v2090
  %v3519 = vpack.c.b16 %v2095, %v2091
  %v3520 = vpack.c.b16 %v2100, %v2096
  %v3521 = vpack.c.b16 %v2101, %v2097
  %v3522 = vpack.c.b16 %v2102, %v2098
  %v3523 = vpack.c.b16 %v2103, %v2099
  %v3524 = vpack.c.b16 %v2108, %v2104
  %v3525 = vpack.c.b16 %v2109, %v2105
  %v3526 = vpack.c.b16 %v2110, %v2106
  %v3527 = vpack.c.b16 %v2111, %v2107
  %v3528 = vpack.c.b16 %v2116, %v2112
  %v3529 = vpack.c.b16 %v2117, %v2113
  %v3530 = vpack.c.b16 %v2118, %v2114
  %v3531 = vpack.c.b16 %v2119, %v2115
  %v3532 = vpack.c.b16 %v2124, %v2120
  %v3533 = vpack.c.b16 %v2125, %v2121
  %v3534 = vpack.c.b16 %v2126, %v2122
  %v3535 = vpack.c.b16 %v2127, %v2123
  %v3536 = vpack.c.b16 %v2132, %v2128
  %v3537 = vpack.c.b16 %v2133, %v2129
  %v3538 = vpack.c.b16 %v2134, %v2130
  %v3539 = vpack.c.b16 %v2135, %v2131
  %v3540 = vpack.c.b16 %v2140, %v2136
  %v3541 = vpack.c.b16 %v2141, %v2137
  %v3542 = vpack.c.b16 %v2142, %v2138
  %v3543 = vpack.c.b16 %v2143, %v2139
  %v3544 = vpack.c.b16 %v2148, %v2144
  %v3545 = vpack.c.b16 %v2149, %v2145
  %v3546 = vpack.c.b16 %v2150, %v2146
  %v3547 = vpack.c.b16 %v2151, %v2147
  %v3548 = vpack.c.b16 %v2156, %v2152
  %v3549 = vpack.c.b16 %v2157, %v2153
  %v3550 = vpack.c.b16 %v2158, %v2154
  %v3551 = vpack.c.b16 %v2159, %v2155
  %v3552 = vpack.c.b16 %v2164, %v2160
  %v3553 = vpack.c.b16 %v2165, %v2161
  %v3554 = vpack.c.b16 %v2166, %v2162
  %v3555 = vpack.c.b16 %v2167, %v2163
  %v3556 = vpack.c.b16 %v2172, %v2168
  %v3557 = vpack.c.b16 %v2173, %v2169
  %v3558 = vpack.c.b16 %v2174, %v2170
  %v3559 = vpack.c.b16 %v2175, %v2171
  %v3560 = vpack.c.b16 %v2180, %v2176
  %v3561 = vpack.c.b16 %v2181, %v2177
  %v3562 = vpack.c.b16 %v2182, %v2178
  %v3563 = vpack.c.b16 %v2183, %v2179
  %v3564 = vpack.c.b16 %v2188, %v2184
  %v3565 = vpack.c.b16 %v2189, %v2185
  %v3566 = vpack.c.b16 %v2190, %v2186
  %v3567 = vpack.c.b16 %v2191, %v2187
  %v3568 = vpack.c.b16 %v2196, %v2192
  %v3569 = vpack.c.b16 %v2197, %v2193
  %v3570 = vpack.c.b16 %v2198, %v2194
  %v3571 = vpack.c.b16 %v2199, %v2195
  %v3572 = vpack.c.b16 %v2204, %v2200
  %v3573 = vpack.c.b16 %v2205, %v2201
  %v3574 = vpack.c.b16 %v2206, %v2202
  %v3575 = vpack.c.b16 %v2207, %v2203
  %v3576 = vpack.c.b16 %v2212, %v2208
  %v3577 = vpack.c.b16 %v2213, %v2209
  %v3578 = vpack.c.b16 %v2214, %v2210
  %v3579 = vpack.c.b16 %v2215, %v2211
  %v3580 = vpack.c.b16 %v2220, %v2216
  %v3581 = vpack.c.b16 %v2221, %v2217
  %v3582 = vpack.c.b16 %v2222, %v2218
  %v3583 = vpack.c.b16 %v2223, %v2219
  %v3584 = vpack.c.b16 %v2228, %v2224
  %v3585 = vpack.c.b16 %v2229, %v2225
  %v3586 = vpack.c.b16 %v2230, %v2226
  %v3587 = vpack.c.b16 %v2231, %v2227
  %v3588 = vpack.c.b16 %v2236, %v2232
  %v3589 = vpack.c.b16 %v2237, %v2233
  %v3590 = vpack.c.b16 %v2238, %v2234
  %v3591 = vpack.c.b16 %v2239, %v2235
  %v3592 = vpack.c.b16 %v2244, %v2240
  %v3593 = vpack.c.b16 %v2245, %v2241
  %v3594 = vpack.c.b16 %v2246, %v2242
  %v3595 = vpack.c.b16 %v2247, %v2243
  %v3596 = vpack.c.b16 %v2252, %v2248
  %v3597 = vpack.c.b16 %v2253, %v2249
  %v3598 = vpack.c.b16 %v2254, %v2250
  %v3599 = vpack.c.b16 %v2255, %v2251
  %v3600 = vpack.c.b16 %v2260, %v2256
  %v3601 = vpack.c.b16 %v2261, %v2257
  %v3602 = vpack.c.b16 %v2262, %v2258
  %v3603 = vpack.c.b16 %v2263, %v2259
  %v3604 = vpack.c.b16 %v2268, %v2264
  %v3605 = vpack.c.b16 %v2269, %v2265
  %v3606 = vpack.c.b16 %v2270, %v2266
  %v3607 = vpack.c.b16 %v2271, %v2267
  %v3608 = vpack.c.b16 %v2276, %v2272
  %v3609 = vpack.c.b16 %v2277, %v2273
  %v3610 = vpack.c.b16 %v2278, %v2274
  %v3611 = vpack.c.b16 %v2279, %v2275
  %v3612 = vpack.c.b16 %v2284, %v2280
  %v3613 = vpack.c.b16 %v2285, %v2281
  %v3614 = vpack.c.b16 %v2286, %v2282
  %v3615 = vpack.c.b16 %v2287, %v2283
  %v3616 = vpack.c.b16 %v2292, %v2288
  %v3617 = vpack.c.b16 %v2293, %v2289
  %v3618 = vpack.c.b16 %v2294, %v2290
  %v3619 = vpack.c.b16 %v2295, %v2291
  %v3620 = vpack.c.b16 %v2300, %v2296
  %v3621 = vpack.c.b16 %v2301, %v2297
  %v3622 = vpack.c.b16 %v2302, %v2298
  %v3623 = vpack.c.b16 %v2303, %v2299
  %v3624 = vpack.c.b16 %v2308, %v2304
  %v3625 = vpack.c.b16 %v2309, %v2305
  %v3626 = vpack.c.b16 %v2310, %v2306
  %v3627 = vpack.c.b16 %v2311, %v2307
  %v3628 = vpack.c.b16 %v2316, %v2312
  %v3629 = vpack.c.b16 %v2317, %v2313
  %v3630 = vpack.c.b16 %v2318, %v2314
  %v3631 = vpack.c.b16 %v2319, %v2315
  %v3632 = vpack.c.b16 %v2324, %v2320
  %v3633 = vpack.c.b16 %v2325, %v2321
  %v3634 = vpack.c.b16 %v2326, %v2322
  %v3635 = vpack.c.b16 %v2327, %v2323
  %v3636 = vpack.c.b16 %v2332, %v2328
  %v3637 = vpack.c.b16 %v2333, %v2329
  %v3638 = vpack.c.b16 %v2334, %v2330
  %v3639 = vpack.c.b16 %v2335, %v2331
  %v3640 = vpack.c.b16 %v2340, %v2336
  %v3641 = vpack.c.b16 %v2341, %v2337
  %v3642 = vpack.c.b16 %v2342, %v2338
  %v3643 = vpack.c.b16 %v2343, %v2339
  %v3644 = vpack.c.b16 %v2348, %v2344
  %v3645 = vpack.c.b16 %v2349, %v2345
  %v3646 = vpack.c.b16 %v2350, %v2346
  %v3647 = vpack.c.b16 %v2351, %v2347
  %v3648 = vpack.c.b16 %v2356, %v2352
  %v3649 = vpack.c.b16 %v2357, %v2353
  %v3650 = vpack.c.b16 %v2358, %v2354
  %v3651 = vpack.c.b16 %v2359, %v2355
  %v3652 = vpack.c.b16 %v2364, %v2360
  %v3653 = vpack.c.b16 %v2365, %v2361
  %v3654 = vpack.c.b16 %v2366, %v2362
  %v3655 = vpack.c.b16 %v2367, %v2363
  %v3656 = vpack.c.b16 %v2372, %v2368
  %v3657 = vpack.c.b16 %v2373, %v2369
  %v3658 = vpack.c.b16 %v2374, %v2370
  %v3659 = vpack.c.b16 %v2375, %v2371
  %v3660 = vpack.c.b16 %v2380, %v2376
  %v3661 = vpack.c.b16 %v2381, %v2377
  %v3662 = vpack.c.b16 %v2382, %v2378
  %v3663 = vpack.c.b16 %v2383, %v2379
  %v3664 = vpack.c.b16 %v2388, %v2384
  %v3665 = vpack.c.b16 %v2389, %v2385
  %v3666 = vpack.c.b16 %v2390, %v2386
  %v3667 = vpack.c.b16 %v2391, %v2387
  %v3668 = vpack.c.b16 %v2396, %v2392
  %v3669 = vpack.c.b16 %v2397, %v2393
  %v3670 = vpack.c.b16 %v2398, %v2394
  %v3671 = vpack.c.b16 %v2399, %v2395
  %v3672 = vpack.c.b16 %v2404, %v2400
  %v3673 = vpack.c.b16 %v2405, %v2401
  %v3674 = vpack.c.b16 %v2406, %v2402
  %v3675 = vpack.c.b16 %v2407, %v2403
  %v3676 = vpack.c.b16 %v2412, %v2408
  %v3677 = vpack.c.b16 %v2413, %v2409
  %v3678 = vpack.c.b16 %v2414, %v2410
  %v3679 = vpack.c.b16 %v2415, %v2411
  %v3680 = vpack.c.b16 %v2420, %v2416
  %v3681 = vpack.c.b16 %v2421, %v2417
  %v3682 = vpack.c.b16 %v2422, %v2418
  %v3683 = vpack.c.b16 %v2423, %v2419
  %v3684 = vpack.c.b16 %v2428, %v2424
  %v3685 = vpack.c.b16 %v2429, %v2425
  %v3686 = vpack.c.b16 %v2430, %v2426
  %v3687 = vpack.c.b16 %v2431, %v2427
  %v3688 = vpack.c.b16 %v2436, %v2432
  %v3689 = vpack.c.b16 %v2437, %v2433
  %v3690 = vpack.c.b16 %v2438, %v2434
  %v3691 = vpack.c.b16 %v2439, %v2435
  %v3692 = vpack.c.b16 %v2444, %v2440
  %v3693 = vpack.c.b16 %v2445, %v2441
  %v3694 = vpack.c.b16 %v2446, %v2442
  %v3695 = vpack.c.b16 %v2447, %v2443
  %v3696 = vpack.c.b16 %v2452, %v2448
  %v3697 = vpack.c.b16 %v2453, %v2449
  %v3698 = vpack.c.b16 %v2454, %v2450
  %v3699 = vpack.c.b16 %v2455, %v2451
  %v3700 = vpack.c.b16 %v2460, %v2456
  %v3701 = vpack.c.b16 %v2461, %v2457
  %v3702 = vpack.c.b16 %v2462, %v2458
  %v3703 = vpack.c.b16 %v2463, %v2459
  %v3704 = vpack.c.b16 %v2468, %v2464
  %v3705 = vpack.c.b16 %v2469, %v2465
  %v3706 = vpack.c.b16 %v2470, %v2466
  %v3707 = vpack.c.b16 %v2471, %v2467
  %v3708 = vpack.c.b16 %v2476, %v2472
  %v3709 = vpack.c.b16 %v2477, %v2473
  %v3710 = vpack.c.b16 %v2478, %v2474
  %v3711 = vpack.c.b16 %v2479, %v2475
  %v3712 = vpack.c.b16 %v2484, %v2480
  %v3713 = vpack.c.b16 %v2485, %v2481
  %v3714 = vpack.c.b16 %v2486, %v2482
  %v3715 = vpack.c.b16 %v2487, %v2483
  %v3716 = vpack.c.b16 %v2492, %v2488
  %v3717 = vpack.c.b16 %v2493, %v2489
  %v3718 = vpack.c.b16 %v2494, %v2490
  %v3719 = vpack.c.b16 %v2495, %v2491
  %v3720 = vpack.c.b16 %v2500, %v2496
  %v3721 = vpack.c.b16 %v2501, %v2497
  %v3722 = vpack.c.b16 %v2502, %v2498
  %v3723 = vpack.c.b16 %v2503, %v2499
  %v3724 = vpack.c.b16 %v2508, %v2504
  %v3725 = vpack.c.b16 %v2509, %v2505
  %v3726 = vpack.c.b16 %v2510, %v2506
  %v3727 = vpack.c.b16 %v2511, %v2507
  %v3728 = vpack.c.b16 %v2516, %v2512
  %v3729 = vpack.c.b16 %v2517, %v2513
  %v3730 = vpack.c.b16 %v2518, %v2514
  %v3731 = vpack.c.b16 %v2519, %v2515
  %v3732 = vpack.c.b16 %v2524, %v2520
  %v3733 = vpack.c.b16 %v2525, %v2521
  %v3734 = vpack.c.b16 %v2526, %v2522
  %v3735 = vpack.c.b16 %v2527, %v2523
  %v3736 = vpack.c.b16 %v2532, %v2528
  %v3737 = vpack.c.b16 %v2533, %v2529
  %v3738 = vpack.c.b16 %v2534, %v2530
  %v3739 = vpack.c.b16 %v2535, %v2531
  %v3740 = vpack.c.b16 %v2540, %v2536
  %v3741 = vpack.c.b16 %v2541, %v2537
  %v3742 = vpack.c.b16 %v2542, %v2538
  %v3743 = vpack.c.b16 %v2543, %v2539
  %v3744 = vpack.c.b16 %v2548, %v2544
  %v3745 = vpack.c.b16 %v2549, %v2545
  %v3746 = vpack.c.b16 %v2550, %v2546
  %v3747 = vpack.c.b16 %v2551, %v2547
  %v3748 = vpack.c.b16 %v2556, %v2552
  %v3749 = vpack.c.b16 %v2557, %v2553
  %v3750 = vpack.c.b16 %v2558, %v2554
  %v3751 = vpack.c.b16 %v2559, %v2555
  %v3752 = vpack.c.b16 %v2564, %v2560
  %v3753 = vpack.c.b16 %v2565, %v2561
  %v3754 = vpack.c.b16 %v2566, %v2562
  %v3755 = vpack.c.b16 %v2567, %v2563
  %v3756 = vpack.c.b16 %v2572, %v2568
  %v3757 = vpack.c.b16 %v2573, %v2569
  %v3758 = vpack.c.b16 %v2574, %v2570
  %v3759 = vpack.c.b16 %v2575, %v2571
  %v3760 = vpack.c.b16 %v2580, %v2576
  %v3761 = vpack.c.b16 %v2581, %v2577
  %v3762 = vpack.c.b16 %v2582, %v2578
  %v3763 = vpack.c.b16 %v2583, %v2579
  %v3764 = vpack.c.b16 %v2588, %v2584
  %v3765 = vpack.c.b16 %v2589, %v2585
  %v3766 = vpack.c.b16 %v2590, %v2586
  %v3767 = vpack.c.b16 %v2591, %v2587
  %v3768 = vpack.c.b16 %v2596, %v2592
  %v3769 = vpack.c.b16 %v2597, %v2593
  %v3770 = vpack.c.b16 %v2598, %v2594
  %v3771 = vpack.c.b16 %v2599, %v2595
  %v3772 = vpack.c.b16 %v2604, %v2600
  %v3773 = vpack.c.b16 %v2605, %v2601
  %v3774 = vpack.c.b16 %v2606, %v2602
  %v3775 = vpack.c.b16 %v2607, %v2603
  %v3776 = vpack.c.b16 %v2612, %v2608
  %v3777 = vpack.c.b16 %v2613, %v2609
  %v3778 = vpack.c.b16 %v2614, %v2610
  %v3779 = vpack.c.b16 %v2615, %v2611
  %v3780 = vpack.c.b16 %v2620, %v2616
  %v3781 = vpack.c.b16 %v2621, %v2617
  %v3782 = vpack.c.b16 %v2622, %v2618
  %v3783 = vpack.c.b16 %v2623, %v2619
  %v3784 = vpack.c.b16 %v2628, %v2624
  %v3785 = vpack.c.b16 %v2629, %v2625
  %v3786 = vpack.c.b16 %v2630, %v2626
  %v3787 = vpack.c.b16 %v2631, %v2627
  %v3788 = vpack.c.b16 %v2636, %v2632
  %v3789 = vpack.c.b16 %v2637, %v2633
  %v3790 = vpack.c.b16 %v2638, %v2634
  %v3791 = vpack.c.b16 %v2639, %v2635
  %v3792 = vpack.c.b16 %v2644, %v2640
  %v3793 = vpack.c.b16 %v2645, %v2641
  %v3794 = vpack.c.b16 %v2646, %v2642
  %v3795 = vpack.c.b16 %v2647, %v2643
  %v3796 = vpack.c.b16 %v2652, %v2648
  %v3797 = vpack.c.b16 %v2653, %v2649
  %v3798 = vpack.c.b16 %v2654, %v2650
  %v3799 = vpack.c.b16 %v2655, %v2651
  %v3800 = vpack.c.b16 %v2660, %v2656
  %v3801 = vpack.c.b16 %v2661, %v2657
  %v3802 = vpack.c.b16 %v2662, %v2658
  %v3803 = vpack.c.b16 %v2663, %v2659
  %v3804 = vpack.c.b16 %v2668, %v2664
  %v3805 = vpack.c.b16 %v2669, %v2665
  %v3806 = vpack.c.b16 %v2670, %v2666
  %v3807 = vpack.c.b16 %v2671, %v2667
  %v3808 = vpack.c.b16 %v2676, %v2672
  %v3809 = vpack.c.b16 %v2677, %v2673
  %v3810 = vpack.c.b16 %v2678, %v2674
  %v3811 = vpack.c.b16 %v2679, %v2675
  %v3812 = vpack.c.b16 %v2684, %v2680
  %v3813 = vpack.c.b16 %v2685, %v2681
  %v3814 = vpack.c.b16 %v2686, %v2682
  %v3815 = vpack.c.b16 %v2687, %v2683
  %v3816 = vpack.c.b16 %v2692, %v2688
  %v3817 = vpack.c.b16 %v2693, %v2689
  %v3818 = vpack.c.b16 %v2694, %v2690
  %v3819 = vpack.c.b16 %v2695, %v2691
  %v3820 = vpack.c.b16 %v2700, %v2696
  %v3821 = vpack.c.b16 %v2701, %v2697
  %v3822 = vpack.c.b16 %v2702, %v2698
  %v3823 = vpack.c.b16 %v2703, %v2699
  %v3824 = vpack.c.b16 %v2708, %v2704
  %v3825 = vpack.c.b16 %v2709, %v2705
  %v3826 = vpack.c.b16 %v2710, %v2706
  %v3827 = vpack.c.b16 %v2711, %v2707
  %v3828 = vpack.c.b16 %v2716, %v2712
  %v3829 = vpack.c.b16 %v2717, %v2713
  %v3830 = vpack.c.b16 %v2718, %v2714
  %v3831 = vpack.c.b16 %v2719, %v2715
  %v3832 = vpack.c.b16 %v2724, %v2720
  %v3833 = vpack.c.b16 %v2725, %v2721
  %v3834 = vpack.c.b16 %v2726, %v2722
  %v3835 = vpack.c.b16 %v2727, %v2723
  %v3836 = vpack.c.b16 %v2732, %v2728
  %v3837 = vpack.c.b16 %v2733, %v2729
  %v3838 = vpack.c.b16 %v2734, %v2730
  %v3839 = vpack.c.b16 %v2735, %v2731
  %v3840 = vpack.c.b16 %v2740, %v2736
  %v3841 = vpack.c.b16 %v2741, %v2737
  %v3842 = vpack.c.b16 %v2742, %v2738
  %v3843 = vpack.c.b16 %v2743, %v2739
  %v3844 = vpack.c.b16 %v2748, %v2744
  %v3845 = vpack.c.b16 %v2749, %v2745
  %v3846 = vpack.c.b16 %v2750, %v2746
  %v3847 = vpack.c.b16 %v2751, %v2747
  %v3848 = vpack.c.b16 %v2756, %v2752
  %v3849 = vpack.c.b16 %v2757, %v2753
  %v3850 = vpack.c.b16 %v2758, %v2754
  %v3851 = vpack.c.b16 %v2759, %v2755
  %v3852 = vpack.c.b16 %v2764, %v2760
  %v3853 = vpack.c.b16 %v2765, %v2761
  %v3854 = vpack.c.b16 %v2766, %v2762
  %v3855 = vpack.c.b16 %v2767, %v2763
  %v3856 = vpack.c.b16 %v2772, %v2768
  %v3857 = vpack.c.b16 %v2773, %v2769
  %v3858 = vpack.c.b16 %v2774, %v2770
  %v3859 = vpack.c.b16 %v2775, %v2771
  %v3860 = vpack.c.b16 %v2780, %v2776
  %v3861 = vpack.c.b16 %v2781, %v2777
  %v3862 = vpack.c.b16 %v2782, %v2778
  %v3863 = vpack.c.b16 %v2783, %v2779
  %v3864 = vpack.c.b16 %v2788, %v2784
  %v3865 = vpack.c.b16 %v2789, %v2785
  %v3866 = vpack.c.b16 %v2790, %v2786
  %v3867 = vpack.c.b16 %v2791, %v2787
  %v3868 = vpack.c.b16 %v2796, %v2792
  %v3869 = vpack.c.b16 %v2797, %v2793
  %v3870 = vpack.c.b16 %v2798, %v2794
  %v3871 = vpack.c.b16 %v2799, %v2795
  %v3872 = vpack.c.b16 %v2804, %v2800
  %v3873 = vpack.c.b16 %v2805, %v2801
  %v3874 = vpack.c.b16 %v2806, %v2802
  %v3875 = vpack.c.b16 %v2807, %v2803
  %v3876 = vpack.c.b16 %v2812, %v2808
  %v3877 = vpack.c.b16 %v2813, %v2809
  %v3878 = vpack.c.b16 %v2814, %v2810
  %v3879 = vpack.c.b16 %v2815, %v2811
  %v3880 = vpack.c.b16 %v2820, %v2816
  %v3881 = vpack.c.b16 %v2821, %v2817
  %v3882 = vpack.c.b16 %v2822, %v2818
  %v3883 = vpack.c.b16 %v2823, %v2819
  %v3884 = vpack.c.b16 %v2828, %v2824
  %v3885 = vpack.c.b16 %v2829, %v2825
  %v3886 = vpack.c.b16 %v2830, %v2826
  %v3887 = vpack.c.b16 %v2831, %v2827
  %v3888 = vpack.c.b16 %v2836, %v2832
  %v3889 = vpack.c.b16 %v2837, %v2833
  %v3890 = vpack.c.b16 %v2838, %v2834
  %v3891 = vpack.c.b16 %v2839, %v2835
  %v3892 = vpack.c.b16 %v2844, %v2840
  %v3893 = vpack.c.b16 %v2845, %v2841
  %v3894 = vpack.c.b16 %v2846, %v2842
  %v3895 = vpack.c.b16 %v2847, %v2843
  %v3896 = vpack.c.b16 %v2852, %v2848
  %v3897 = vpack.c.b16 %v2853, %v2849
  %v3898 = vpack.c.b16 %v2854, %v2850
  %v3899 = vpack.c.b16 %v2855, %v2851
  %v3900 = vpack.c.b16 %v2860, %v2856
  %v3901 = vpack.c.b16 %v2861, %v2857
  %v3902 = vpack.c.b16 %v2862, %v2858
  %v3903 = vpack.c.b16 %v2863, %v2859
  %v3904 = vpack.c.b16 %v2868, %v2864
  %v3905 = vpack.c.b16 %v2869, %v2865
  %v3906 = vpack.c.b16 %v2870, %v2866
  %v3907 = vpack.c.b16 %v2871, %v2867
  %v3908 = vpack.c.b16 %v2876, %v2872
  %v3909 = vpack.c.b16 %v2877, %v2873
  %v3910 = vpack.c.b16 %v2878, %v2874
  %v3911 = vpack.c.b16 %v2879, %v2875
  %v3912 = vpack.c.b16 %v2884, %v2880
  %v3913 = vpack.c.b16 %v2885, %v2881
  %v3914 = vpack.c.b16 %v2886, %v2882
  %v3915 = vpack.c.b16 %v2887, %v2883
  %v3916 = vpack.c.b16 %v2892, %v2888
  %v3917 = vpack.c.b16 %v2893, %v2889
  %v3918 = vpack.c.b16 %v2894, %v2890
  %v3919 = vpack.c.b16 %v2895, %v2891
  %v3920 = vpack.c.b16 %v2900, %v2896
  %v3921 = vpack.c.b16 %v2901, %v2897
  %v3922 = vpack.c.b16 %v2902, %v2898
  %v3923 = vpack.c.b16 %v2903, %v2899
  %v3924 = vpack.c.b16 %v2908, %v2904
  %v3925 = vpack.c.b16 %v2909, %v2905
  %v3926 = vpack.c.b16 %v2910, %v2906
  %v3927 = vpack.c.b16 %v2911, %v2907
  %v3928 = vpack.c.b16 %v2916, %v2912
  %v3929 = vpack.c.b16 %v2917, %v2913
  %v3930 = vpack.c.b16 %v2918, %v2914
  %v3931 = vpack.c.b16 %v2919, %v2915
  %v3932 = vpack.c.b16 %v2924, %v2920
  %v3933 = vpack.c.b16 %v2925, %v2921
  %v3934 = vpack.c.b16 %v2926, %v2922
  %v3935 = vpack.c.b16 %v2927, %v2923
  %v3936 = vpack.c.b16 %v2932, %v2928
  %v3937 = vpack.c.b16 %v2933, %v2929
  %v3938 = vpack.c.b16 %v2934, %v2930
  %v3939 = vpack.c.b16 %v2935, %v2931
  %v3940 = vpack.c.b16 %v2940, %v2936
  %v3941 = vpack.c.b16 %v2941, %v2937
  %v3942 = vpack.c.b16 %v2942, %v2938
  %v3943 = vpack.c.b16 %v2943, %v2939
  %v3944 = vpack.c.b16 %v2948, %v2944
  %v3945 = vpack.c.b16 %v2949, %v2945
  %v3946 = vpack.c.b16 %v2950, %v2946
  %v3947 = vpack.c.b16 %v2951, %v2947
  %v3948 = vpack.c.b16 %v2956, %v2952
  %v3949 = vpack.c.b16 %v2957, %v2953
  %v3950 = vpack.c.b16 %v2958, %v2954
  %v3951 = vpack.c.b16 %v2959, %v2955
  %v3952 = vpack.c.b16 %v2964, %v2960
  %v3953 = vpack.c.b16 %v2965, %v2961
  %v3954 = vpack.c.b16 %v2966, %v2962
  %v3955 = vpack.c.b16 %v2967, %v2963
  %v3956 = vpack.c.b16 %v2972, %v2968
  %v3957 = vpack.c.b16 %v2973, %v2969
  %v3958 = vpack.c.b16 %v2974, %v2970
  %v3959 = vpack.c.b16 %v2975, %v2971
  %v3960 = vpack.c.b16 %v2980, %v2976
  %v3961 = vpack.c.b16 %v2981, %v2977
  %v3962 = vpack.c.b16 %v2982, %v2978
  %v3963 = vpack.c.b16 %v2983, %v2979
  %v3964 = vpack.c.b16 %v2988, %v2984
  %v3965 = vpack.c.b16 %v2989, %v2985
  %v3966 = vpack.c.b16 %v2990, %v2986
  %v3967 = vpack.c.b16 %v2991, %v2987
  %v3968 = vpack.c.b16 %v2996, %v2992
  %v3969 = vpack.c.b16 %v2997, %v2993
  %v3970 = vpack.c.b16 %v2998, %v2994
  %v3971 = vpack.c.b16 %v2999, %v2995
  %v3972 = vpack.c.b16 %v3004, %v3000
  %v3973 = vpack.c.b16 %v3005, %v3001
  %v3974 = vpack.c.b16 %v3006, %v3002
  %v3975 = vpack.c.b16 %v3007, %v3003
  %v3976 = vpack.c.b16 %v3012, %v3008
  %v3977 = vpack.c.b16 %v3013, %v3009
  %v3978 = vpack.c.b16 %v3014, %v3010
  %v3979 = vpack.c.b16 %v3015, %v3011
  %v3980 = vpack.c.b16 %v3020, %v3016
  %v3981 = vpack.c.b16 %v3021, %v3017
  %v3982 = vpack.c.b16 %v3022, %v3018
  %v3983 = vpack.c.b16 %v3023, %v3019
  %v3984 = vpack.c.b16 %v3028, %v3024
  %v3985 = vpack.c.b16 %v3029, %v3025
  %v3986 = vpack.c.b16 %v3030, %v3026
  %v3987 = vpack.c.b16 %v3031, %v3027
  %v3988 = vpack.c.b16 %v3036, %v3032
  %v3989 = vpack.c.b16 %v3037, %v3033
  %v3990 = vpack.c.b16 %v3038, %v3034
  %v3991 = vpack.c.b16 %v3039, %v3035
  %v3992 = vpack.c.b16 %v3044, %v3040
  %v3993 = vpack.c.b16 %v3045, %v3041
  %v3994 = vpack.c.b16 %v3046, %v3042
  %v3995 = vpack.c.b16 %v3047, %v3043
  %v3996 = vpack.c.b16 %v3052, %v3048
  %v3997 = vpack.c.b16 %v3053, %v3049
  %v3998 = vpack.c.b16 %v3054, %v3050
  %v3999 = vpack.c.b16 %v3055, %v3051
  %v4000 = vpack.c.b16 %v3060, %v3056
  %v4001 = vpack.c.b16 %v3061, %v3057
  %v4002 = vpack.c.b16 %v3062, %v3058
  %v4003 = vpack.c.b16 %v3063, %v3059
  %v4004 = vpack.c.b16 %v3068, %v3064
  %v4005 = vpack.c.b16 %v3069, %v3065
  %v4006 = vpack.c.b16 %v3070, %v3066
  %v4007 = vpack.c.b16 %v3071, %v3067
  %v4008 = vpack.c.b16 %v3076, %v3072
  %v4009 = vpack.c.b16 %v3077, %v3073
  %v4010 = vpack.c.b16 %v3078, %v3074
  %v4011 = vpack.c.b16 %v3079, %v3075
  %v4012 = vpack.c.b16 %v3084, %v3080
  %v4013 = vpack.c.b16 %v3085, %v3081
  %v4014 = vpack.c.b16 %v3086, %v3082
  %v4015 = vpack.c.b16 %v3087, %v3083
  %v4016 = vpack.c.b16 %v3092, %v3088
  %v4017 = vpack.c.b16 %v3093, %v3089
  %v4018 = vpack.c.b16 %v3094, %v3090
  %v4019 = vpack.c.b16 %v3095, %v3091
  %v4020 = vpack.c.b16 %v3100, %v3096
  %v4021 = vpack.c.b16 %v3101, %v3097
  %v4022 = vpack.c.b16 %v3102, %v3098
  %v4023 = vpack.c.b16 %v3103, %v3099
  %v4024 = vpack.c.b16 %v3108, %v3104
  %v4025 = vpack.c.b16 %v3109, %v3105
  %v4026 = vpack.c.b16 %v3110, %v3106
  %v4027 = vpack.c.b16 %v3111, %v3107
  %v4028 = vpack.c.b16 %v3116, %v3112
  %v4029 = vpack.c.b16 %v3117, %v3113
  %v4030 = vpack.c.b16 %v3118, %v3114
  %v4031 = vpack.c.b16 %v3119, %v3115
  %v4032 = vpack.c.b16 %v3124, %v3120
  %v4033 = vpack.c.b16 %v3125, %v3121
  %v4034 = vpack.c.b16 %v3126, %v3122
  %v4035 = vpack.c.b16 %v3127, %v3123
  %v4036 = vpack.c.b16 %v3132, %v3128
  %v4037 = vpack.c.b16 %v3133, %v3129
  %v4038 = vpack.c.b16 %v3134, %v3130
  %v4039 = vpack.c.b16 %v3135, %v3131
  %v4040 = vpack.c.b16 %v3140, %v3136
  %v4041 = vpack.c.b16 %v3141, %v3137
  %v4042 = vpack.c.b16 %v3142, %v3138
  %v4043 = vpack.c.b16 %v3143, %v3139
  %v4044 = vpack.c.b16 %v3148, %v3144
  %v4045 = vpack.c.b16 %v3149, %v3145
  %v4046 = vpack.c.b16 %v3150, %v3146
  %v4047 = vpack.c.b16 %v3151, %v3147
  %v4048 = vpack.c.b16 %v3156, %v3152
  %v4049 = vpack.c.b16 %v3157, %v3153
  %v4050 = vpack.c.b16 %v3158, %v3154
  %v4051 = vpack.c.b16 %v3159, %v3155
  %v4052 = vpack.c.b16 %v3164, %v3160
  %v4053 = vpack.c.b16 %v3165, %v3161
  %v4054 = vpack.c.b16 %v3166, %v3162
  %v4055 = vpack.c.b16 %v3167, %v3163
  %v4056 = vpack.c.b16 %v3172, %v3168
  %v4057 = vpack.c.b16 %v3173, %v3169
  %v4058 = vpack.c.b16 %v3174, %v3170
  %v4059 = vpack.c.b16 %v3175, %v3171
  %v4060 = vpack.c.b16 %v3180, %v3176
  %v4061 = vpack.c.b16 %v3181, %v3177
  %v4062 = vpack.c.b16 %v3182, %v3178
  %v4063 = vpack.c.b16 %v3183, %v3179
  %v4064 = vpack.c.b16 %v3188, %v3184
  %v4065 = vpack.c.b16 %v3189, %v3185
  %v4066 = vpack.c.b16 %v3190, %v3186
  %v4067 = vpack.c.b16 %v3191, %v3187
  %v4068 = vpack.c.b16 %v3196, %v3192
  %v4069 = vpack.c.b16 %v3197, %v3193
  %v4070 = vpack.c.b16 %v3198, %v3194
  %v4071 = vpack.c.b16 %v3199, %v3195
  %v4072 = vpack.c.b16 %v3204, %v3200
  %v4073 = vpack.c.b16 %v3205, %v3201
  %v4074 = vpack.c.b16 %v3206, %v3202
  %v4075 = vpack.c.b16 %v3207, %v3203
  %v4076 = vpack.c.b16 %v3212, %v3208
  %v4077 = vpack.c.b16 %v3213, %v3209
  %v4078 = vpack.c.b16 %v3214, %v3210
  %v4079 = vpack.c.b16 %v3215, %v3211
  %v4080 = vpack.c.b16 %v3220, %v3216
  %v4081 = vpack.c.b16 %v3221, %v3217
  %v4082 = vpack.c.b16 %v3222, %v3218
  %v4083 = vpack.c.b16 %v3223, %v3219
  %v4084 = vpack.c.b16 %v3228, %v3224
  %v4085 = vpack.c.b16 %v3229, %v3225
  %v4086 = vpack.c.b16 %v3230, %v3226
  %v4087 = vpack.c.b16 %v3231, %v3227
  %v4088 = vpack.c.b16 %v3236, %v3232
  %v4089 = vpack.c.b16 %v3237, %v3233
  %v4090 = vpack.c.b16 %v3238, %v3234
  %v4091 = vpack.c.b16 %v3239, %v3235
  %v4092 = vpack.c.b16 %v3244, %v3240
  %v4093 = vpack.c.b16 %v3245, %v3241
  %v4094 = vpack.c.b16 %v3246, %v3242
  %v4095 = vpack.c.b16 %v3247, %v3243
  %v4096 = vpack.c.b16 %v3252, %v3248
  %v4097 = vpack.c.b16 %v3253, %v3249
  %v4098 = vpack.c.b16 %v3254, %v3250
  %v4099 = vpack.c.b16 %v3255, %v3251
  %v4100 = vpack.c.b16 %v3260, %v3256
  %v4101 = vpack.c.b16 %v3261, %v3257
  %v4102 = vpack.c.b16 %v3262, %v3258
  %v4103 = vpack.c.b16 %v3263, %v3259
  %v4104 = vpack.c.b16 %v3268, %v3264
  %v4105 = vpack.c.b16 %v3269, %v3265
  %v4106 = vpack.c.b16 %v3270, %v3266
  %v4107 = vpack.c.b16 %v3271, %v3267
  %v4108 = vpack.c.b16 %v3276, %v3272
  %v4109 = vpack.c.b16 %v3277, %v3273
  %v4110 = vpack.c.b16 %v3278, %v3274
  %v4111 = vpack.c.b16 %v3279, %v3275
  %v4112 = vpack.c.b16 %v3284, %v3280
  %v4113 = vpack.c.b16 %v3285, %v3281
  %v4114 = vpack.c.b16 %v3286, %v3282
  %v4115 = vpack.c.b16 %v3287, %v3283
  %v4116 = vpack.c.b16 %v3292, %v3288
  %v4117 = vpack.c.b16 %v3293, %v3289
  %v4118 = vpack.c.b16 %v3294, %v3290
  %v4119 = vpack.c.b16 %v3295, %v3291
  %v4120 = vpack.c.b16 %v3300, %v3296
  %v4121 = vpack.c.b16 %v3301, %v3297
  %v4122 = vpack.c.b16 %v3302, %v3298
  %v4123 = vpack.c.b16 %v3303, %v3299
  %v4124 = vpack.c.b16 %v3308, %v3304
  %v4125 = vpack.c.b16 %v3309, %v3305
  %v4126 = vpack.c.b16 %v3310, %v3306
  %v4127 = vpack.c.b16 %v3311, %v3307
  %v4128 = vpack.c.b16 %v3316, %v3312
  %v4129 = vpack.c.b16 %v3317, %v3313
  %v4130 = vpack.c.b16 %v3318, %v3314
  %v4131 = vpack.c.b16 %v3319, %v3315
  %v4132 = vpack.c.b16 %v3324, %v3320
  %v4133 = vpack.c.b16 %v3325, %v3321
  %v4134 = vpack.c.b16 %v3326, %v3322
  %v4135 = vpack.c.b16 %v3327, %v3323
  %v4136 = vpack.c.b16 %v3332, %v3328
  %v4137 = vpack.c.b16 %v3333, %v3329
  %v4138 = vpack.c.b16 %v3334, %v3330
  %v4139 = vpack.c.b16 %v3335, %v3331
  %v4140 = vpack.c.b16 %v3340, %v3336
  %v4141 = vpack.c.b16 %v3341, %v3337
  %v4142 = vpack.c.b16 %v3342, %v3338
  %v4143 = vpack.c.b16 %v3343, %v3339
  %4944 = vmatprep.subr.bf16.mxu0 %v3345
  %4945 = vmatpush1.bf16.msra.mxu0 %v3344
  %4946 = vmatprep.subr.bf16.mxu0 %v3349
  %4947 = vmatpush1.bf16.msra.mxu0 %v3348
  %4948 = vmatprep.subr.bf16.mxu0 %v3353
  %4949 = vmatpush1.bf16.msra.mxu0 %v3352
  %4950 = vmatprep.subr.bf16.mxu0 %v3357
  %4951 = vmatpush1.bf16.msra.mxu0 %v3356
  %4952 = vmatprep.subr.bf16.mxu0 %v3361
  %4953 = vmatpush1.bf16.msra.mxu0 %v3360
  %4954 = vmatprep.subr.bf16.mxu0 %v3365
  %4955 = vmatpush1.bf16.msra.mxu0 %v3364
  %4956 = vmatprep.subr.bf16.mxu0 %v3369
  %4957 = vmatpush1.bf16.msra.mxu0 %v3368
  %4958 = vmatprep.subr.bf16.mxu0 %v3373
  %4959 = vmatpush1.bf16.msra.mxu0 %v3372
  %4960 = vmatprep.subr.bf16.mxu0 %v3377
  %4961 = vmatpush1.bf16.msra.mxu0 %v3376
  %4962 = vmatprep.subr.bf16.mxu0 %v3381
  %4963 = vmatpush1.bf16.msra.mxu0 %v3380
  %4964 = vmatprep.subr.bf16.mxu0 %v3385
  %4965 = vmatpush1.bf16.msra.mxu0 %v3384
  %4966 = vmatprep.subr.bf16.mxu0 %v3389
  %4967 = vmatpush1.bf16.msra.mxu0 %v3388
  %4968 = vmatprep.subr.bf16.mxu0 %v3393
  %4969 = vmatpush1.bf16.msra.mxu0 %v3392
  %4970 = vmatprep.subr.bf16.mxu0 %v3397
  %4971 = vmatpush1.bf16.msra.mxu0 %v3396
  %4972 = vmatprep.subr.bf16.mxu0 %v3401
  %4973 = vmatpush1.bf16.msra.mxu0 %v3400
  %4974 = vmatprep.subr.bf16.mxu0 %v3405
  %4975 = vmatpush1.bf16.msra.mxu0 %v3404
  %4976 = vmatprep.mubr.bf16.mxu0 %v895
  %4977 = vmatmul.mubr.bf16.gmra.mrb[0].mxu0 %v894
  %v4978 = vpop.f32.mrb[0].mxu0
  %v4979 = vadd.f32 %v839, %v4978
  %v4980 = vpop.f32.mrb[0].mxu0
  %v4981 = vadd.f32 %v843, %v4980
  %v4982 = vpop.f32.mrb[0].mxu0
  %v4983 = vpop.f32.mrb[0].mxu0
  %4984 = vdwg.mxu0
  %4985 = vmatprep.subr.bf16.mxu0 %v3409
  %4986 = vmatpush1.bf16.msra.mxu0 %v3408
  %4987 = vmatprep.subr.bf16.mxu0 %v3413
  %4988 = vmatpush1.bf16.msra.mxu0 %v3412
  %4989 = vmatprep.subr.bf16.mxu0 %v3417
  %4990 = vmatpush1.bf16.msra.mxu0 %v3416
  %4991 = vmatprep.subr.bf16.mxu0 %v3421
  %4992 = vmatpush1.bf16.msra.mxu0 %v3420
  %4993 = vmatprep.subr.bf16.mxu0 %v3425
  %4994 = vmatpush1.bf16.msra.mxu0 %v3424
  %4995 = vmatprep.subr.bf16.mxu0 %v3429
  %4996 = vmatpush1.bf16.msra.mxu0 %v3428
  %4997 = vmatprep.subr.bf16.mxu0 %v3433
  %4998 = vmatpush1.bf16.msra.mxu0 %v3432
  %4999 = vmatprep.subr.bf16.mxu0 %v3437
  %5000 = vmatpush1.bf16.msra.mxu0 %v3436
  %5001 = vmatprep.subr.bf16.mxu0 %v3441
  %5002 = vmatpush1.bf16.msra.mxu0 %v3440
  %5003 = vmatprep.subr.bf16.mxu0 %v3445
  %5004 = vmatpush1.bf16.msra.mxu0 %v3444
  %5005 = vmatprep.subr.bf16.mxu0 %v3449
  %5006 = vmatpush1.bf16.msra.mxu0 %v3448
  %5007 = vmatprep.subr.bf16.mxu0 %v3453
  %5008 = vmatpush1.bf16.msra.mxu0 %v3452
  %5009 = vmatprep.subr.bf16.mxu0 %v3457
  %5010 = vmatpush1.bf16.msra.mxu0 %v3456
  %5011 = vmatprep.subr.bf16.mxu0 %v3461
  %5012 = vmatpush1.bf16.msra.mxu0 %v3460
  %5013 = vmatprep.subr.bf16.mxu0 %v3465
  %5014 = vmatpush1.bf16.msra.mxu0 %v3464
  %5015 = vmatprep.subr.bf16.mxu0 %v3469
  %5016 = vmatpush1.bf16.msra.mxu0 %v3468
  %5017 = vmatprep.mubr.bf16.mxu0 %v897
  %5018 = vmatmul.mubr.bf16.gmra.mrb[0].mxu0 %v896
  %v5019 = vpop.f32.mrb[0].mxu0
  %v5020 = vadd.f32 %v4979, %v5019
  %v5021 = vpop.f32.mrb[0].mxu0
  %v5022 = vadd.f32 %v4981, %v5021
  %v5023 = vpop.f32.mrb[0].mxu0
  %v5024 = vpop.f32.mrb[0].mxu0
  %5025 = vdwg.mxu0
  %5026 = vmatprep.subr.bf16.mxu0 %v3473
  %5027 = vmatpush1.bf16.msra.mxu0 %v3472
  %5028 = vmatprep.subr.bf16.mxu0 %v3477
  %5029 = vmatpush1.bf16.msra.mxu0 %v3476
  %5030 = vmatprep.subr.bf16.mxu0 %v3481
  %5031 = vmatpush1.bf16.msra.mxu0 %v3480
  %5032 = vmatprep.subr.bf16.mxu0 %v3485
  %5033 = vmatpush1.bf16.msra.mxu0 %v3484
  %5034 = vmatprep.subr.bf16.mxu0 %v3489
  %5035 = vmatpush1.bf16.msra.mxu0 %v3488
  %5036 = vmatprep.subr.bf16.mxu0 %v3493
  %5037 = vmatpush1.bf16.msra.mxu0 %v3492
  %5038 = vmatprep.subr.bf16.mxu0 %v3497
  %5039 = vmatpush1.bf16.msra.mxu0 %v3496
  %5040 = vmatprep.subr.bf16.mxu0 %v3501
  %5041 = vmatpush1.bf16.msra.mxu0 %v3500
  %5042 = vmatprep.subr.bf16.mxu0 %v3505
  %5043 = vmatpush1.bf16.msra.mxu0 %v3504
  %5044 = vmatprep.subr.bf16.mxu0 %v3509
  %5045 = vmatpush1.bf16.msra.mxu0 %v3508
  %5046 = vmatprep.subr.bf16.mxu0 %v3513
  %5047 = vmatpush1.bf16.msra.mxu0 %v3512
  %5048 = vmatprep.subr.bf16.mxu0 %v3517
  %5049 = vmatpush1.bf16.msra.mxu0 %v3516
  %5050 = vmatprep.subr.bf16.mxu0 %v3521
  %5051 = vmatpush1.bf16.msra.mxu0 %v3520
  %5052 = vmatprep.subr.bf16.mxu0 %v3525
  %5053 = vmatpush1.bf16.msra.mxu0 %v3524
  %5054 = vmatprep.subr.bf16.mxu0 %v3529
  %5055 = vmatpush1.bf16.msra.mxu0 %v3528
  %5056 = vmatprep.subr.bf16.mxu0 %v3533
  %5057 = vmatpush1.bf16.msra.mxu0 %v3532
  %5058 = vmatprep.mubr.bf16.mxu0 %v899
  %5059 = vmatmul.mubr.bf16.gmra.mrb[0].mxu0 %v898
  %v5060 = vpop.f32.mrb[0].mxu0
  %v5061 = vadd.f32 %v5020, %v5060
  %v5062 = vpop.f32.mrb[0].mxu0
  %v5063 = vadd.f32 %v5022, %v5062
  %v5064 = vpop.f32.mrb[0].mxu0
  %v5065 = vpop.f32.mrb[0].mxu0
  %5066 = vdwg.mxu0
  %5067 = vmatprep.subr.bf16.mxu0 %v3537
  %5068 = vmatpush1.bf16.msra.mxu0 %v3536
  %5069 = vmatprep.subr.bf16.mxu0 %v3541
  %5070 = vmatpush1.bf16.msra.mxu0 %v3540
  %5071 = vmatprep.subr.bf16.mxu0 %v3545
  %5072 = vmatpush1.bf16.msra.mxu0 %v3544
  %5073 = vmatprep.subr.bf16.mxu0 %v3549
  %5074 = vmatpush1.bf16.msra.mxu0 %v3548
  %5075 = vmatprep.subr.bf16.mxu0 %v3553
  %5076 = vmatpush1.bf16.msra.mxu0 %v3552
  %5077 = vmatprep.subr.bf16.mxu0 %v3557
  %5078 = vmatpush1.bf16.msra.mxu0 %v3556
  %5079 = vmatprep.subr.bf16.mxu0 %v3561
  %5080 = vmatpush1.bf16.msra.mxu0 %v3560
  %5081 = vmatprep.subr.bf16.mxu0 %v3565
  %5082 = vmatpush1.bf16.msra.mxu0 %v3564
  %5083 = vmatprep.subr.bf16.mxu0 %v3569
  %5084 = vmatpush1.bf16.msra.mxu0 %v3568
  %5085 = vmatprep.subr.bf16.mxu0 %v3573
  %5086 = vmatpush1.bf16.msra.mxu0 %v3572
  %5087 = vmatprep.subr.bf16.mxu0 %v3577
  %5088 = vmatpush1.bf16.msra.mxu0 %v3576
  %5089 = vmatprep.subr.bf16.mxu0 %v3581
  %5090 = vmatpush1.bf16.msra.mxu0 %v3580
  %5091 = vmatprep.subr.bf16.mxu0 %v3585
  %5092 = vmatpush1.bf16.msra.mxu0 %v3584
  %5093 = vmatprep.subr.bf16.mxu0 %v3589
  %5094 = vmatpush1.bf16.msra.mxu0 %v3588
  %5095 = vmatprep.subr.bf16.mxu0 %v3593
  %5096 = vmatpush1.bf16.msra.mxu0 %v3592
  %5097 = vmatprep.subr.bf16.mxu0 %v3597
  %5098 = vmatpush1.bf16.msra.mxu0 %v3596
  %5099 = vmatprep.mubr.bf16.mxu0 %v901
  %5100 = vmatmul.mubr.bf16.gmra.mrb[0].mxu0 %v900
  %v5101 = vpop.f32.mrb[0].mxu0
  %v5102 = vadd.f32 %v5061, %v5101
  %v5103 = vpop.f32.mrb[0].mxu0
  %v5104 = vadd.f32 %v5063, %v5103
  %v5105 = vpop.f32.mrb[0].mxu0
  %v5106 = vpop.f32.mrb[0].mxu0
  %5107 = vdwg.mxu0
  %5108 = vmatprep.subr.bf16.mxu0 %v3601
  %5109 = vmatpush1.bf16.msra.mxu0 %v3600
  %5110 = vmatprep.subr.bf16.mxu0 %v3605
  %5111 = vmatpush1.bf16.msra.mxu0 %v3604
  %5112 = vmatprep.subr.bf16.mxu0 %v3609
  %5113 = vmatpush1.bf16.msra.mxu0 %v3608
  %5114 = vmatprep.subr.bf16.mxu0 %v3613
  %5115 = vmatpush1.bf16.msra.mxu0 %v3612
  %5116 = vmatprep.subr.bf16.mxu0 %v3617
  %5117 = vmatpush1.bf16.msra.mxu0 %v3616
  %5118 = vmatprep.subr.bf16.mxu0 %v3621
  %5119 = vmatpush1.bf16.msra.mxu0 %v3620
  %5120 = vmatprep.subr.bf16.mxu0 %v3625
  %5121 = vmatpush1.bf16.msra.mxu0 %v3624
  %5122 = vmatprep.subr.bf16.mxu0 %v3629
  %5123 = vmatpush1.bf16.msra.mxu0 %v3628
  %5124 = vmatprep.subr.bf16.mxu0 %v3633
  %5125 = vmatpush1.bf16.msra.mxu0 %v3632
  %5126 = vmatprep.subr.bf16.mxu0 %v3637
  %5127 = vmatpush1.bf16.msra.mxu0 %v3636
  %5128 = vmatprep.subr.bf16.mxu0 %v3641
  %5129 = vmatpush1.bf16.msra.mxu0 %v3640
  %5130 = vmatprep.subr.bf16.mxu0 %v3645
  %5131 = vmatpush1.bf16.msra.mxu0 %v3644
  %5132 = vmatprep.subr.bf16.mxu0 %v3649
  %5133 = vmatpush1.bf16.msra.mxu0 %v3648
  %5134 = vmatprep.subr.bf16.mxu0 %v3653
  %5135 = vmatpush1.bf16.msra.mxu0 %v3652
  %5136 = vmatprep.subr.bf16.mxu0 %v3657
  %5137 = vmatpush1.bf16.msra.mxu0 %v3656
  %5138 = vmatprep.subr.bf16.mxu0 %v3661
  %5139 = vmatpush1.bf16.msra.mxu0 %v3660
  %5140 = vmatprep.mubr.bf16.mxu0 %v903
  %5141 = vmatmul.mubr.bf16.gmra.mrb[0].mxu0 %v902
  %v5142 = vpop.f32.mrb[0].mxu0
  %v5143 = vadd.f32 %v5102, %v5142
  %v5144 = vpop.f32.mrb[0].mxu0
  %v5145 = vadd.f32 %v5104, %v5144
  %v5146 = vpop.f32.mrb[0].mxu0
  %v5147 = vpop.f32.mrb[0].mxu0
  %5148 = vdwg.mxu0
  %5149 = vmatprep.subr.bf16.mxu0 %v3665
  %5150 = vmatpush1.bf16.msra.mxu0 %v3664
  %5151 = vmatprep.subr.bf16.mxu0 %v3669
  %5152 = vmatpush1.bf16.msra.mxu0 %v3668
  %5153 = vmatprep.subr.bf16.mxu0 %v3673
  %5154 = vmatpush1.bf16.msra.mxu0 %v3672
  %5155 = vmatprep.subr.bf16.mxu0 %v3677
  %5156 = vmatpush1.bf16.msra.mxu0 %v3676
  %5157 = vmatprep.subr.bf16.mxu0 %v3681
  %5158 = vmatpush1.bf16.msra.mxu0 %v3680
  %5159 = vmatprep.subr.bf16.mxu0 %v3685
  %5160 = vmatpush1.bf16.msra.mxu0 %v3684
  %5161 = vmatprep.subr.bf16.mxu0 %v3689
  %5162 = vmatpush1.bf16.msra.mxu0 %v3688
  %5163 = vmatprep.subr.bf16.mxu0 %v3693
  %5164 = vmatpush1.bf16.msra.mxu0 %v3692
  %5165 = vmatprep.subr.bf16.mxu0 %v3697
  %5166 = vmatpush1.bf16.msra.mxu0 %v3696
  %5167 = vmatprep.subr.bf16.mxu0 %v3701
  %5168 = vmatpush1.bf16.msra.mxu0 %v3700
  %5169 = vmatprep.subr.bf16.mxu0 %v3705
  %5170 = vmatpush1.bf16.msra.mxu0 %v3704
  %5171 = vmatprep.subr.bf16.mxu0 %v3709
  %5172 = vmatpush1.bf16.msra.mxu0 %v3708
  %5173 = vmatprep.subr.bf16.mxu0 %v3713
  %5174 = vmatpush1.bf16.msra.mxu0 %v3712
  %5175 = vmatprep.subr.bf16.mxu0 %v3717
  %5176 = vmatpush1.bf16.msra.mxu0 %v3716
  %5177 = vmatprep.subr.bf16.mxu0 %v3721
  %5178 = vmatpush1.bf16.msra.mxu0 %v3720
  %5179 = vmatprep.subr.bf16.mxu0 %v3725
  %5180 = vmatpush1.bf16.msra.mxu0 %v3724
  %5181 = vmatprep.mubr.bf16.mxu0 %v905
  %5182 = vmatmul.mubr.bf16.gmra.mrb[0].mxu0 %v904
  %v5183 = vpop.f32.mrb[0].mxu0
  %v5184 = vadd.f32 %v5143, %v5183
  %v5185 = vpop.f32.mrb[0].mxu0
  %v5186 = vadd.f32 %v5145, %v5185
  %v5187 = vpop.f32.mrb[0].mxu0
  %v5188 = vpop.f32.mrb[0].mxu0
  %5189 = vdwg.mxu0
  %5190 = vmatprep.subr.bf16.mxu0 %v3729
  %5191 = vmatpush1.bf16.msra.mxu0 %v3728
  %5192 = vmatprep.subr.bf16.mxu0 %v3733
  %5193 = vmatpush1.bf16.msra.mxu0 %v3732
  %5194 = vmatprep.subr.bf16.mxu0 %v3737
  %5195 = vmatpush1.bf16.msra.mxu0 %v3736
  %5196 = vmatprep.subr.bf16.mxu0 %v3741
  %5197 = vmatpush1.bf16.msra.mxu0 %v3740
  %5198 = vmatprep.subr.bf16.mxu0 %v3745
  %5199 = vmatpush1.bf16.msra.mxu0 %v3744
  %5200 = vmatprep.subr.bf16.mxu0 %v3749
  %5201 = vmatpush1.bf16.msra.mxu0 %v3748
  %5202 = vmatprep.subr.bf16.mxu0 %v3753
  %5203 = vmatpush1.bf16.msra.mxu0 %v3752
  %5204 = vmatprep.subr.bf16.mxu0 %v3757
  %5205 = vmatpush1.bf16.msra.mxu0 %v3756
  %5206 = vmatprep.subr.bf16.mxu0 %v3761
  %5207 = vmatpush1.bf16.msra.mxu0 %v3760
  %5208 = vmatprep.subr.bf16.mxu0 %v3765
  %5209 = vmatpush1.bf16.msra.mxu0 %v3764
  %5210 = vmatprep.subr.bf16.mxu0 %v3769
  %5211 = vmatpush1.bf16.msra.mxu0 %v3768
  %5212 = vmatprep.subr.bf16.mxu0 %v3773
  %5213 = vmatpush1.bf16.msra.mxu0 %v3772
  %5214 = vmatprep.subr.bf16.mxu0 %v3777
  %5215 = vmatpush1.bf16.msra.mxu0 %v3776
  %5216 = vmatprep.subr.bf16.mxu0 %v3781
  %5217 = vmatpush1.bf16.msra.mxu0 %v3780
  %5218 = vmatprep.subr.bf16.mxu0 %v3785
  %5219 = vmatpush1.bf16.msra.mxu0 %v3784
  %5220 = vmatprep.subr.bf16.mxu0 %v3789
  %5221 = vmatpush1.bf16.msra.mxu0 %v3788
  %5222 = vmatprep.mubr.bf16.mxu0 %v907
  %5223 = vmatmul.mubr.bf16.gmra.mrb[0].mxu0 %v906
  %v5224 = vpop.f32.mrb[0].mxu0
  %v5225 = vadd.f32 %v5184, %v5224
  %v5226 = vpop.f32.mrb[0].mxu0
  %v5227 = vadd.f32 %v5186, %v5226
  %v5228 = vpop.f32.mrb[0].mxu0
  %v5229 = vpop.f32.mrb[0].mxu0
  %5230 = vdwg.mxu0
  %5231 = vmatprep.subr.bf16.mxu0 %v3793
  %5232 = vmatpush1.bf16.msra.mxu0 %v3792
  %5233 = vmatprep.subr.bf16.mxu0 %v3797
  %5234 = vmatpush1.bf16.msra.mxu0 %v3796
  %5235 = vmatprep.subr.bf16.mxu0 %v3801
  %5236 = vmatpush1.bf16.msra.mxu0 %v3800
  %5237 = vmatprep.subr.bf16.mxu0 %v3805
  %5238 = vmatpush1.bf16.msra.mxu0 %v3804
  %5239 = vmatprep.subr.bf16.mxu0 %v3809
  %5240 = vmatpush1.bf16.msra.mxu0 %v3808
  %5241 = vmatprep.subr.bf16.mxu0 %v3813
  %5242 = vmatpush1.bf16.msra.mxu0 %v3812
  %5243 = vmatprep.subr.bf16.mxu0 %v3817
  %5244 = vmatpush1.bf16.msra.mxu0 %v3816
  %5245 = vmatprep.subr.bf16.mxu0 %v3821
  %5246 = vmatpush1.bf16.msra.mxu0 %v3820
  %5247 = vmatprep.subr.bf16.mxu0 %v3825
  %5248 = vmatpush1.bf16.msra.mxu0 %v3824
  %5249 = vmatprep.subr.bf16.mxu0 %v3829
  %5250 = vmatpush1.bf16.msra.mxu0 %v3828
  %5251 = vmatprep.subr.bf16.mxu0 %v3833
  %5252 = vmatpush1.bf16.msra.mxu0 %v3832
  %5253 = vmatprep.subr.bf16.mxu0 %v3837
  %5254 = vmatpush1.bf16.msra.mxu0 %v3836
  %5255 = vmatprep.subr.bf16.mxu0 %v3841
  %5256 = vmatpush1.bf16.msra.mxu0 %v3840
  %5257 = vmatprep.subr.bf16.mxu0 %v3845
  %5258 = vmatpush1.bf16.msra.mxu0 %v3844
  %5259 = vmatprep.subr.bf16.mxu0 %v3849
  %5260 = vmatpush1.bf16.msra.mxu0 %v3848
  %5261 = vmatprep.subr.bf16.mxu0 %v3853
  %5262 = vmatpush1.bf16.msra.mxu0 %v3852
  %5263 = vmatprep.mubr.bf16.mxu0 %v909
  %5264 = vmatmul.mubr.bf16.gmra.mrb[0].mxu0 %v908
  %v5265 = vpop.f32.mrb[0].mxu0
  %v5266 = vadd.f32 %v5225, %v5265
  %v5267 = vpop.f32.mrb[0].mxu0
  %v5268 = vadd.f32 %v5227, %v5267
  %v5269 = vpop.f32.mrb[0].mxu0
  %v5270 = vpop.f32.mrb[0].mxu0
  %5271 = vdwg.mxu0
  %5272 = vmatprep.subr.bf16.mxu0 %v3857
  %5273 = vmatpush1.bf16.msra.mxu0 %v3856
  %5274 = vmatprep.subr.bf16.mxu0 %v3861
  %5275 = vmatpush1.bf16.msra.mxu0 %v3860
  %5276 = vmatprep.subr.bf16.mxu0 %v3865
  %5277 = vmatpush1.bf16.msra.mxu0 %v3864
  %5278 = vmatprep.subr.bf16.mxu0 %v3869
  %5279 = vmatpush1.bf16.msra.mxu0 %v3868
  %5280 = vmatprep.subr.bf16.mxu0 %v3873
  %5281 = vmatpush1.bf16.msra.mxu0 %v3872
  %5282 = vmatprep.subr.bf16.mxu0 %v3877
  %5283 = vmatpush1.bf16.msra.mxu0 %v3876
  %5284 = vmatprep.subr.bf16.mxu0 %v3881
  %5285 = vmatpush1.bf16.msra.mxu0 %v3880
  %5286 = vmatprep.subr.bf16.mxu0 %v3885
  %5287 = vmatpush1.bf16.msra.mxu0 %v3884
  %5288 = vmatprep.subr.bf16.mxu0 %v3889
  %5289 = vmatpush1.bf16.msra.mxu0 %v3888
  %5290 = vmatprep.subr.bf16.mxu0 %v3893
  %5291 = vmatpush1.bf16.msra.mxu0 %v3892
  %5292 = vmatprep.subr.bf16.mxu0 %v3897
  %5293 = vmatpush1.bf16.msra.mxu0 %v3896
  %5294 = vmatprep.subr.bf16.mxu0 %v3901
  %5295 = vmatpush1.bf16.msra.mxu0 %v3900
  %5296 = vmatprep.subr.bf16.mxu0 %v3905
  %5297 = vmatpush1.bf16.msra.mxu0 %v3904
  %5298 = vmatprep.subr.bf16.mxu0 %v3909
  %5299 = vmatpush1.bf16.msra.mxu0 %v3908
  %5300 = vmatprep.subr.bf16.mxu0 %v3913
  %5301 = vmatpush1.bf16.msra.mxu0 %v3912
  %5302 = vmatprep.subr.bf16.mxu0 %v3917
  %5303 = vmatpush1.bf16.msra.mxu0 %v3916
  %5304 = vmatprep.mubr.bf16.mxu0 %v911
  %5305 = vmatmul.mubr.bf16.gmra.mrb[0].mxu0 %v910
  %v5306 = vpop.f32.mrb[0].mxu0
  %v5307 = vadd.f32 %v5266, %v5306
  %v5308 = vpop.f32.mrb[0].mxu0
  %v5309 = vadd.f32 %v5268, %v5308
  %v5310 = vpop.f32.mrb[0].mxu0
  %v5311 = vpop.f32.mrb[0].mxu0
  %5312 = vdwg.mxu0
  %5313 = vmatprep.subr.bf16.mxu0 %v3921
  %5314 = vmatpush1.bf16.msra.mxu0 %v3920
  %5315 = vmatprep.subr.bf16.mxu0 %v3925
  %5316 = vmatpush1.bf16.msra.mxu0 %v3924
  %5317 = vmatprep.subr.bf16.mxu0 %v3929
  %5318 = vmatpush1.bf16.msra.mxu0 %v3928
  %5319 = vmatprep.subr.bf16.mxu0 %v3933
  %5320 = vmatpush1.bf16.msra.mxu0 %v3932
  %5321 = vmatprep.subr.bf16.mxu0 %v3937
  %5322 = vmatpush1.bf16.msra.mxu0 %v3936
  %5323 = vmatprep.subr.bf16.mxu0 %v3941
  %5324 = vmatpush1.bf16.msra.mxu0 %v3940
  %5325 = vmatprep.subr.bf16.mxu0 %v3945
  %5326 = vmatpush1.bf16.msra.mxu0 %v3944
  %5327 = vmatprep.subr.bf16.mxu0 %v3949
  %5328 = vmatpush1.bf16.msra.mxu0 %v3948
  %5329 = vmatprep.subr.bf16.mxu0 %v3953
  %5330 = vmatpush1.bf16.msra.mxu0 %v3952
  %5331 = vmatprep.subr.bf16.mxu0 %v3957
  %5332 = vmatpush1.bf16.msra.mxu0 %v3956
  %5333 = vmatprep.subr.bf16.mxu0 %v3961
  %5334 = vmatpush1.bf16.msra.mxu0 %v3960
  %5335 = vmatprep.subr.bf16.mxu0 %v3965
  %5336 = vmatpush1.bf16.msra.mxu0 %v3964
  %5337 = vmatprep.subr.bf16.mxu0 %v3969
  %5338 = vmatpush1.bf16.msra.mxu0 %v3968
  %5339 = vmatprep.subr.bf16.mxu0 %v3973
  %5340 = vmatpush1.bf16.msra.mxu0 %v3972
  %5341 = vmatprep.subr.bf16.mxu0 %v3977
  %5342 = vmatpush1.bf16.msra.mxu0 %v3976
  %5343 = vmatprep.subr.bf16.mxu0 %v3981
  %5344 = vmatpush1.bf16.msra.mxu0 %v3980
  %5345 = vmatprep.mubr.bf16.mxu0 %v913
  %5346 = vmatmul.mubr.bf16.gmra.mrb[0].mxu0 %v912
  %v5347 = vpop.f32.mrb[0].mxu0
  %v5348 = vadd.f32 %v5307, %v5347
  %v5349 = vpop.f32.mrb[0].mxu0
  %v5350 = vadd.f32 %v5309, %v5349
  %v5351 = vpop.f32.mrb[0].mxu0
  %v5352 = vpop.f32.mrb[0].mxu0
  %5353 = vdwg.mxu0
  %5354 = vmatprep.subr.bf16.mxu0 %v3985
  %5355 = vmatpush1.bf16.msra.mxu0 %v3984
  %5356 = vmatprep.subr.bf16.mxu0 %v3989
  %5357 = vmatpush1.bf16.msra.mxu0 %v3988
  %5358 = vmatprep.subr.bf16.mxu0 %v3993
  %5359 = vmatpush1.bf16.msra.mxu0 %v3992
  %5360 = vmatprep.subr.bf16.mxu0 %v3997
  %5361 = vmatpush1.bf16.msra.mxu0 %v3996
  %5362 = vmatprep.subr.bf16.mxu0 %v4001
  %5363 = vmatpush1.bf16.msra.mxu0 %v4000
  %5364 = vmatprep.subr.bf16.mxu0 %v4005
  %5365 = vmatpush1.bf16.msra.mxu0 %v4004
  %5366 = vmatprep.subr.bf16.mxu0 %v4009
  %5367 = vmatpush1.bf16.msra.mxu0 %v4008
  %5368 = vmatprep.subr.bf16.mxu0 %v4013
  %5369 = vmatpush1.bf16.msra.mxu0 %v4012
  %5370 = vmatprep.subr.bf16.mxu0 %v4017
  %5371 = vmatpush1.bf16.msra.mxu0 %v4016
  %5372 = vmatprep.subr.bf16.mxu0 %v4021
  %5373 = vmatpush1.bf16.msra.mxu0 %v4020
  %5374 = vmatprep.subr.bf16.mxu0 %v4025
  %5375 = vmatpush1.bf16.msra.mxu0 %v4024
  %5376 = vmatprep.subr.bf16.mxu0 %v4029
  %5377 = vmatpush1.bf16.msra.mxu0 %v4028
  %5378 = vmatprep.subr.bf16.mxu0 %v4033
  %5379 = vmatpush1.bf16.msra.mxu0 %v4032
  %5380 = vmatprep.subr.bf16.mxu0 %v4037
  %5381 = vmatpush1.bf16.msra.mxu0 %v4036
  %5382 = vmatprep.subr.bf16.mxu0 %v4041
  %5383 = vmatpush1.bf16.msra.mxu0 %v4040
  %5384 = vmatprep.subr.bf16.mxu0 %v4045
  %5385 = vmatpush1.bf16.msra.mxu0 %v4044
  %5386 = vmatprep.mubr.bf16.mxu0 %v915
  %5387 = vmatmul.mubr.bf16.gmra.mrb[0].mxu0 %v914
  %v5388 = vpop.f32.mrb[0].mxu0
  %v5389 = vadd.f32 %v5348, %v5388
  %v5390 = vpop.f32.mrb[0].mxu0
  %v5391 = vadd.f32 %v5350, %v5390
  %v5392 = vpop.f32.mrb[0].mxu0
  %v5393 = vpop.f32.mrb[0].mxu0
  %5394 = vdwg.mxu0
  %5395 = vmatprep.subr.bf16.mxu0 %v4049
  %5396 = vmatpush1.bf16.msra.mxu0 %v4048
  %5397 = vmatprep.subr.bf16.mxu0 %v4053
  %5398 = vmatpush1.bf16.msra.mxu0 %v4052
  %5399 = vmatprep.subr.bf16.mxu0 %v4057
  %5400 = vmatpush1.bf16.msra.mxu0 %v4056
  %5401 = vmatprep.subr.bf16.mxu0 %v4061
  %5402 = vmatpush1.bf16.msra.mxu0 %v4060
  %5403 = vmatprep.subr.bf16.mxu0 %v4065
  %5404 = vmatpush1.bf16.msra.mxu0 %v4064
  %5405 = vmatprep.subr.bf16.mxu0 %v4069
  %5406 = vmatpush1.bf16.msra.mxu0 %v4068
  %5407 = vmatprep.subr.bf16.mxu0 %v4073
  %5408 = vmatpush1.bf16.msra.mxu0 %v4072
  %5409 = vmatprep.subr.bf16.mxu0 %v4077
  %5410 = vmatpush1.bf16.msra.mxu0 %v4076
  %5411 = vmatprep.subr.bf16.mxu0 %v4081
  %5412 = vmatpush1.bf16.msra.mxu0 %v4080
  %5413 = vmatprep.subr.bf16.mxu0 %v4085
  %5414 = vmatpush1.bf16.msra.mxu0 %v4084
  %5415 = vmatprep.subr.bf16.mxu0 %v4089
  %5416 = vmatpush1.bf16.msra.mxu0 %v4088
  %5417 = vmatprep.subr.bf16.mxu0 %v4093
  %5418 = vmatpush1.bf16.msra.mxu0 %v4092
  %5419 = vmatprep.subr.bf16.mxu0 %v4097
  %5420 = vmatpush1.bf16.msra.mxu0 %v4096
  %5421 = vmatprep.subr.bf16.mxu0 %v4101
  %5422 = vmatpush1.bf16.msra.mxu0 %v4100
  %5423 = vmatprep.subr.bf16.mxu0 %v4105
  %5424 = vmatpush1.bf16.msra.mxu0 %v4104
  %5425 = vmatprep.subr.bf16.mxu0 %v4109
  %5426 = vmatpush1.bf16.msra.mxu0 %v4108
  %5427 = vmatprep.mubr.bf16.mxu0 %v917
  %5428 = vmatmul.mubr.bf16.gmra.mrb[0].mxu0 %v916
  %v5429 = vpop.f32.mrb[0].mxu0
  %v5430 = vadd.f32 %v5389, %v5429
  %v5431 = vpop.f32.mrb[0].mxu0
  %v5432 = vadd.f32 %v5391, %v5431
  %v5433 = vpop.f32.mrb[0].mxu0
  %v5434 = vpop.f32.mrb[0].mxu0
  %5435 = vdwg.mxu0
  %5436 = vmatprep.subr.bf16.mxu0 %v4113
  %5437 = vmatpush1.bf16.msra.mxu0 %v4112
  %5438 = vmatprep.subr.bf16.mxu0 %v4117
  %5439 = vmatpush1.bf16.msra.mxu0 %v4116
  %5440 = vmatprep.subr.bf16.mxu0 %v4121
  %5441 = vmatpush1.bf16.msra.mxu0 %v4120
  %5442 = vmatprep.subr.bf16.mxu0 %v4125
  %5443 = vmatpush1.bf16.msra.mxu0 %v4124
  %5444 = vmatprep.subr.bf16.mxu0 %v4129
  %5445 = vmatpush1.bf16.msra.mxu0 %v4128
  %5446 = vmatprep.subr.bf16.mxu0 %v4133
  %5447 = vmatpush1.bf16.msra.mxu0 %v4132
  %5448 = vmatprep.subr.bf16.mxu0 %v4137
  %5449 = vmatpush1.bf16.msra.mxu0 %v4136
  %5450 = vmatprep.subr.bf16.mxu0 %v4141
  %5451 = vmatpush1.bf16.msra.mxu0 %v4140
  %5452 = vmatprep.subr.bf16.mxu0 0
  %5453 = vmatpush1.bf16.msra.mxu0 0
  %5454 = vmatprep.subr.bf16.mxu0 0
  %5455 = vmatpush1.bf16.msra.mxu0 0
  %5456 = vmatprep.subr.bf16.mxu0 0
  %5457 = vmatpush1.bf16.msra.mxu0 0
  %5458 = vmatprep.subr.bf16.mxu0 0
  %5459 = vmatpush1.bf16.msra.mxu0 0
  %5460 = vmatprep.subr.bf16.mxu0 0
  %5461 = vmatpush1.bf16.msra.mxu0 0
  %5462 = vmatprep.subr.bf16.mxu0 0
  %5463 = vmatpush1.bf16.msra.mxu0 0
  %5464 = vmatprep.subr.bf16.mxu0 0
  %5465 = vmatpush1.bf16.msra.mxu0 0
  %5466 = vmatprep.subr.bf16.mxu0 0
  %5467 = vmatpush1.bf16.msra.mxu0 0
  %5468 = vmatprep.mubr.bf16.mxu0 0
  %5469 = vmatmul.mubr.bf16.gmra.mrb[0].mxu0 %v918
  %v5470 = vpop.f32.mrb[0].mxu0
  %v5471 = vadd.f32 %v5430, %v5470
  %v5472 = vpop.f32.mrb[0].mxu0
  %v5473 = vadd.f32 %v5432, %v5472
  %v5474 = vpop.f32.mrb[0].mxu0
  %v5475 = vpop.f32.mrb[0].mxu0
  %5476 = vdwg.mxu0
  %5477 = vmatprep.subr.bf16.mxu0 %v3347
  %5478 = vmatpush1.bf16.msra.mxu0 %v3346
  %5479 = vmatprep.subr.bf16.mxu0 %v3351
  %5480 = vmatpush1.bf16.msra.mxu0 %v3350
  %5481 = vmatprep.subr.bf16.mxu0 %v3355
  %5482 = vmatpush1.bf16.msra.mxu0 %v3354
  %5483 = vmatprep.subr.bf16.mxu0 %v3359
  %5484 = vmatpush1.bf16.msra.mxu0 %v3358
  %5485 = vmatprep.subr.bf16.mxu0 %v3363
  %5486 = vmatpush1.bf16.msra.mxu0 %v3362
  %5487 = vmatprep.subr.bf16.mxu0 %v3367
  %5488 = vmatpush1.bf16.msra.mxu0 %v3366
  %5489 = vmatprep.subr.bf16.mxu0 %v3371
  %5490 = vmatpush1.bf16.msra.mxu0 %v3370
  %5491 = vmatprep.subr.bf16.mxu0 %v3375
  %5492 = vmatpush1.bf16.msra.mxu0 %v3374
  %5493 = vmatprep.subr.bf16.mxu0 %v3379
  %5494 = vmatpush1.bf16.msra.mxu0 %v3378
  %5495 = vmatprep.subr.bf16.mxu0 %v3383
  %5496 = vmatpush1.bf16.msra.mxu0 %v3382
  %5497 = vmatprep.subr.bf16.mxu0 %v3387
  %5498 = vmatpush1.bf16.msra.mxu0 %v3386
  %5499 = vmatprep.subr.bf16.mxu0 %v3391
  %5500 = vmatpush1.bf16.msra.mxu0 %v3390
  %5501 = vmatprep.subr.bf16.mxu0 %v3395
  %5502 = vmatpush1.bf16.msra.mxu0 %v3394
  %5503 = vmatprep.subr.bf16.mxu0 %v3399
  %5504 = vmatpush1.bf16.msra.mxu0 %v3398
  %5505 = vmatprep.subr.bf16.mxu0 %v3403
  %5506 = vmatpush1.bf16.msra.mxu0 %v3402
  %5507 = vmatprep.subr.bf16.mxu0 %v3407
  %5508 = vmatpush1.bf16.msra.mxu0 %v3406
  %5509 = vmatprep.mubr.bf16.mxu0 %v895
  %5510 = vmatmul.mubr.bf16.gmra.mrb[0].mxu0 %v894
  %v5511 = vpop.f32.mrb[0].mxu0
  %v5512 = vadd.f32 %v847, %v5511
  %v5513 = vpop.f32.mrb[0].mxu0
  %v5514 = vadd.f32 %v851, %v5513
  %v5515 = vpop.f32.mrb[0].mxu0
  %v5516 = vpop.f32.mrb[0].mxu0
  %5517 = vdwg.mxu0
  %5518 = vmatprep.subr.bf16.mxu0 %v3411
  %5519 = vmatpush1.bf16.msra.mxu0 %v3410
  %5520 = vmatprep.subr.bf16.mxu0 %v3415
  %5521 = vmatpush1.bf16.msra.mxu0 %v3414
  %5522 = vmatprep.subr.bf16.mxu0 %v3419
  %5523 = vmatpush1.bf16.msra.mxu0 %v3418
  %5524 = vmatprep.subr.bf16.mxu0 %v3423
  %5525 = vmatpush1.bf16.msra.mxu0 %v3422
  %5526 = vmatprep.subr.bf16.mxu0 %v3427
  %5527 = vmatpush1.bf16.msra.mxu0 %v3426
  %5528 = vmatprep.subr.bf16.mxu0 %v3431
  %5529 = vmatpush1.bf16.msra.mxu0 %v3430
  %5530 = vmatprep.subr.bf16.mxu0 %v3435
  %5531 = vmatpush1.bf16.msra.mxu0 %v3434
  %5532 = vmatprep.subr.bf16.mxu0 %v3439
  %5533 = vmatpush1.bf16.msra.mxu0 %v3438
  %5534 = vmatprep.subr.bf16.mxu0 %v3443
  %5535 = vmatpush1.bf16.msra.mxu0 %v3442
  %5536 = vmatprep.subr.bf16.mxu0 %v3447
  %5537 = vmatpush1.bf16.msra.mxu0 %v3446
  %5538 = vmatprep.subr.bf16.mxu0 %v3451
  %5539 = vmatpush1.bf16.msra.mxu0 %v3450
  %5540 = vmatprep.subr.bf16.mxu0 %v3455
  %5541 = vmatpush1.bf16.msra.mxu0 %v3454
  %5542 = vmatprep.subr.bf16.mxu0 %v3459
  %5543 = vmatpush1.bf16.msra.mxu0 %v3458
  %5544 = vmatprep.subr.bf16.mxu0 %v3463
  %5545 = vmatpush1.bf16.msra.mxu0 %v3462
  %5546 = vmatprep.subr.bf16.mxu0 %v3467
  %5547 = vmatpush1.bf16.msra.mxu0 %v3466
  %5548 = vmatprep.subr.bf16.mxu0 %v3471
  %5549 = vmatpush1.bf16.msra.mxu0 %v3470
  %5550 = vmatprep.mubr.bf16.mxu0 %v897
  %5551 = vmatmul.mubr.bf16.gmra.mrb[0].mxu0 %v896
  %v5552 = vpop.f32.mrb[0].mxu0
  %v5553 = vadd.f32 %v5512, %v5552
  %v5554 = vpop.f32.mrb[0].mxu0
  %v5555 = vadd.f32 %v5514, %v5554
  %v5556 = vpop.f32.mrb[0].mxu0
  %v5557 = vpop.f32.mrb[0].mxu0
  %5558 = vdwg.mxu0
  %5559 = vmatprep.subr.bf16.mxu0 %v3475
  %5560 = vmatpush1.bf16.msra.mxu0 %v3474
  %5561 = vmatprep.subr.bf16.mxu0 %v3479
  %5562 = vmatpush1.bf16.msra.mxu0 %v3478
  %5563 = vmatprep.subr.bf16.mxu0 %v3483
  %5564 = vmatpush1.bf16.msra.mxu0 %v3482
  %5565 = vmatprep.subr.bf16.mxu0 %v3487
  %5566 = vmatpush1.bf16.msra.mxu0 %v3486
  %5567 = vmatprep.subr.bf16.mxu0 %v3491
  %5568 = vmatpush1.bf16.msra.mxu0 %v3490
  %5569 = vmatprep.subr.bf16.mxu0 %v3495
  %5570 = vmatpush1.bf16.msra.mxu0 %v3494
  %5571 = vmatprep.subr.bf16.mxu0 %v3499
  %5572 = vmatpush1.bf16.msra.mxu0 %v3498
  %5573 = vmatprep.subr.bf16.mxu0 %v3503
  %5574 = vmatpush1.bf16.msra.mxu0 %v3502
  %5575 = vmatprep.subr.bf16.mxu0 %v3507
  %5576 = vmatpush1.bf16.msra.mxu0 %v3506
  %5577 = vmatprep.subr.bf16.mxu0 %v3511
  %5578 = vmatpush1.bf16.msra.mxu0 %v3510
  %5579 = vmatprep.subr.bf16.mxu0 %v3515
  %5580 = vmatpush1.bf16.msra.mxu0 %v3514
  %5581 = vmatprep.subr.bf16.mxu0 %v3519
  %5582 = vmatpush1.bf16.msra.mxu0 %v3518
  %5583 = vmatprep.subr.bf16.mxu0 %v3523
  %5584 = vmatpush1.bf16.msra.mxu0 %v3522
  %5585 = vmatprep.subr.bf16.mxu0 %v3527
  %5586 = vmatpush1.bf16.msra.mxu0 %v3526
  %5587 = vmatprep.subr.bf16.mxu0 %v3531
  %5588 = vmatpush1.bf16.msra.mxu0 %v3530
  %5589 = vmatprep.subr.bf16.mxu0 %v3535
  %5590 = vmatpush1.bf16.msra.mxu0 %v3534
  %5591 = vmatprep.mubr.bf16.mxu0 %v899
  %5592 = vmatmul.mubr.bf16.gmra.mrb[0].mxu0 %v898
  %v5593 = vpop.f32.mrb[0].mxu0
  %v5594 = vadd.f32 %v5553, %v5593
  %v5595 = vpop.f32.mrb[0].mxu0
  %v5596 = vadd.f32 %v5555, %v5595
  %v5597 = vpop.f32.mrb[0].mxu0
  %v5598 = vpop.f32.mrb[0].mxu0
  %5599 = vdwg.mxu0
  %5600 = vmatprep.subr.bf16.mxu0 %v3539
  %5601 = vmatpush1.bf16.msra.mxu0 %v3538
  %5602 = vmatprep.subr.bf16.mxu0 %v3543
  %5603 = vmatpush1.bf16.msra.mxu0 %v3542
  %5604 = vmatprep.subr.bf16.mxu0 %v3547
  %5605 = vmatpush1.bf16.msra.mxu0 %v3546
  %5606 = vmatprep.subr.bf16.mxu0 %v3551
  %5607 = vmatpush1.bf16.msra.mxu0 %v3550
  %5608 = vmatprep.subr.bf16.mxu0 %v3555
  %5609 = vmatpush1.bf16.msra.mxu0 %v3554
  %5610 = vmatprep.subr.bf16.mxu0 %v3559
  %5611 = vmatpush1.bf16.msra.mxu0 %v3558
  %5612 = vmatprep.subr.bf16.mxu0 %v3563
  %5613 = vmatpush1.bf16.msra.mxu0 %v3562
  %5614 = vmatprep.subr.bf16.mxu0 %v3567
  %5615 = vmatpush1.bf16.msra.mxu0 %v3566
  %5616 = vmatprep.subr.bf16.mxu0 %v3571
  %5617 = vmatpush1.bf16.msra.mxu0 %v3570
  %5618 = vmatprep.subr.bf16.mxu0 %v3575
  %5619 = vmatpush1.bf16.msra.mxu0 %v3574
  %5620 = vmatprep.subr.bf16.mxu0 %v3579
  %5621 = vmatpush1.bf16.msra.mxu0 %v3578
  %5622 = vmatprep.subr.bf16.mxu0 %v3583
  %5623 = vmatpush1.bf16.msra.mxu0 %v3582
  %5624 = vmatprep.subr.bf16.mxu0 %v3587
  %5625 = vmatpush1.bf16.msra.mxu0 %v3586
  %5626 = vmatprep.subr.bf16.mxu0 %v3591
  %5627 = vmatpush1.bf16.msra.mxu0 %v3590
  %5628 = vmatprep.subr.bf16.mxu0 %v3595
  %5629 = vmatpush1.bf16.msra.mxu0 %v3594
  %5630 = vmatprep.subr.bf16.mxu0 %v3599
  %5631 = vmatpush1.bf16.msra.mxu0 %v3598
  %5632 = vmatprep.mubr.bf16.mxu0 %v901
  %5633 = vmatmul.mubr.bf16.gmra.mrb[0].mxu0 %v900
  %v5634 = vpop.f32.mrb[0].mxu0
  %v5635 = vadd.f32 %v5594, %v5634
  %v5636 = vpop.f32.mrb[0].mxu0
  %v5637 = vadd.f32 %v5596, %v5636
  %v5638 = vpop.f32.mrb[0].mxu0
  %v5639 = vpop.f32.mrb[0].mxu0
  %5640 = vdwg.mxu0
  %5641 = vmatprep.subr.bf16.mxu0 %v3603
  %5642 = vmatpush1.bf16.msra.mxu0 %v3602
  %5643 = vmatprep.subr.bf16.mxu0 %v3607
  %5644 = vmatpush1.bf16.msra.mxu0 %v3606
  %5645 = vmatprep.subr.bf16.mxu0 %v3611
  %5646 = vmatpush1.bf16.msra.mxu0 %v3610
  %5647 = vmatprep.subr.bf16.mxu0 %v3615
  %5648 = vmatpush1.bf16.msra.mxu0 %v3614
  %5649 = vmatprep.subr.bf16.mxu0 %v3619
  %5650 = vmatpush1.bf16.msra.mxu0 %v3618
  %5651 = vmatprep.subr.bf16.mxu0 %v3623
  %5652 = vmatpush1.bf16.msra.mxu0 %v3622
  %5653 = vmatprep.subr.bf16.mxu0 %v3627
  %5654 = vmatpush1.bf16.msra.mxu0 %v3626
  %5655 = vmatprep.subr.bf16.mxu0 %v3631
  %5656 = vmatpush1.bf16.msra.mxu0 %v3630
  %5657 = vmatprep.subr.bf16.mxu0 %v3635
  %5658 = vmatpush1.bf16.msra.mxu0 %v3634
  %5659 = vmatprep.subr.bf16.mxu0 %v3639
  %5660 = vmatpush1.bf16.msra.mxu0 %v3638
  %5661 = vmatprep.subr.bf16.mxu0 %v3643
  %5662 = vmatpush1.bf16.msra.mxu0 %v3642
  %5663 = vmatprep.subr.bf16.mxu0 %v3647
  %5664 = vmatpush1.bf16.msra.mxu0 %v3646
  %5665 = vmatprep.subr.bf16.mxu0 %v3651
  %5666 = vmatpush1.bf16.msra.mxu0 %v3650
  %5667 = vmatprep.subr.bf16.mxu0 %v3655
  %5668 = vmatpush1.bf16.msra.mxu0 %v3654
  %5669 = vmatprep.subr.bf16.mxu0 %v3659
  %5670 = vmatpush1.bf16.msra.mxu0 %v3658
  %5671 = vmatprep.subr.bf16.mxu0 %v3663
  %5672 = vmatpush1.bf16.msra.mxu0 %v3662
  %5673 = vmatprep.mubr.bf16.mxu0 %v903
  %5674 = vmatmul.mubr.bf16.gmra.mrb[0].mxu0 %v902
  %v5675 = vpop.f32.mrb[0].mxu0
  %v5676 = vadd.f32 %v5635, %v5675
  %v5677 = vpop.f32.mrb[0].mxu0
  %v5678 = vadd.f32 %v5637, %v5677
  %v5679 = vpop.f32.mrb[0].mxu0
  %v5680 = vpop.f32.mrb[0].mxu0
  %5681 = vdwg.mxu0
  %5682 = vmatprep.subr.bf16.mxu0 %v3667
  %5683 = vmatpush1.bf16.msra.mxu0 %v3666
  %5684 = vmatprep.subr.bf16.mxu0 %v3671
  %5685 = vmatpush1.bf16.msra.mxu0 %v3670
  %5686 = vmatprep.subr.bf16.mxu0 %v3675
  %5687 = vmatpush1.bf16.msra.mxu0 %v3674
  %5688 = vmatprep.subr.bf16.mxu0 %v3679
  %5689 = vmatpush1.bf16.msra.mxu0 %v3678
  %5690 = vmatprep.subr.bf16.mxu0 %v3683
  %5691 = vmatpush1.bf16.msra.mxu0 %v3682
  %5692 = vmatprep.subr.bf16.mxu0 %v3687
  %5693 = vmatpush1.bf16.msra.mxu0 %v3686
  %5694 = vmatprep.subr.bf16.mxu0 %v3691
  %5695 = vmatpush1.bf16.msra.mxu0 %v3690
  %5696 = vmatprep.subr.bf16.mxu0 %v3695
  %5697 = vmatpush1.bf16.msra.mxu0 %v3694
  %5698 = vmatprep.subr.bf16.mxu0 %v3699
  %5699 = vmatpush1.bf16.msra.mxu0 %v3698
  %5700 = vmatprep.subr.bf16.mxu0 %v3703
  %5701 = vmatpush1.bf16.msra.mxu0 %v3702
  %5702 = vmatprep.subr.bf16.mxu0 %v3707
  %5703 = vmatpush1.bf16.msra.mxu0 %v3706
  %5704 = vmatprep.subr.bf16.mxu0 %v3711
  %5705 = vmatpush1.bf16.msra.mxu0 %v3710
  %5706 = vmatprep.subr.bf16.mxu0 %v3715
  %5707 = vmatpush1.bf16.msra.mxu0 %v3714
  %5708 = vmatprep.subr.bf16.mxu0 %v3719
  %5709 = vmatpush1.bf16.msra.mxu0 %v3718
  %5710 = vmatprep.subr.bf16.mxu0 %v3723
  %5711 = vmatpush1.bf16.msra.mxu0 %v3722
  %5712 = vmatprep.subr.bf16.mxu0 %v3727
  %5713 = vmatpush1.bf16.msra.mxu0 %v3726
  %5714 = vmatprep.mubr.bf16.mxu0 %v905
  %5715 = vmatmul.mubr.bf16.gmra.mrb[0].mxu0 %v904
  %v5716 = vpop.f32.mrb[0].mxu0
  %v5717 = vadd.f32 %v5676, %v5716
  %v5718 = vpop.f32.mrb[0].mxu0
  %v5719 = vadd.f32 %v5678, %v5718
  %v5720 = vpop.f32.mrb[0].mxu0
  %v5721 = vpop.f32.mrb[0].mxu0
  %5722 = vdwg.mxu0
  %5723 = vmatprep.subr.bf16.mxu0 %v3731
  %5724 = vmatpush1.bf16.msra.mxu0 %v3730
  %5725 = vmatprep.subr.bf16.mxu0 %v3735
  %5726 = vmatpush1.bf16.msra.mxu0 %v3734
  %5727 = vmatprep.subr.bf16.mxu0 %v3739
  %5728 = vmatpush1.bf16.msra.mxu0 %v3738
  %5729 = vmatprep.subr.bf16.mxu0 %v3743
  %5730 = vmatpush1.bf16.msra.mxu0 %v3742
  %5731 = vmatprep.subr.bf16.mxu0 %v3747
  %5732 = vmatpush1.bf16.msra.mxu0 %v3746
  %5733 = vmatprep.subr.bf16.mxu0 %v3751
  %5734 = vmatpush1.bf16.msra.mxu0 %v3750
  %5735 = vmatprep.subr.bf16.mxu0 %v3755
  %5736 = vmatpush1.bf16.msra.mxu0 %v3754
  %5737 = vmatprep.subr.bf16.mxu0 %v3759
  %5738 = vmatpush1.bf16.msra.mxu0 %v3758
  %5739 = vmatprep.subr.bf16.mxu0 %v3763
  %5740 = vmatpush1.bf16.msra.mxu0 %v3762
  %5741 = vmatprep.subr.bf16.mxu0 %v3767
  %5742 = vmatpush1.bf16.msra.mxu0 %v3766
  %5743 = vmatprep.subr.bf16.mxu0 %v3771
  %5744 = vmatpush1.bf16.msra.mxu0 %v3770
  %5745 = vmatprep.subr.bf16.mxu0 %v3775
  %5746 = vmatpush1.bf16.msra.mxu0 %v3774
  %5747 = vmatprep.subr.bf16.mxu0 %v3779
  %5748 = vmatpush1.bf16.msra.mxu0 %v3778
  %5749 = vmatprep.subr.bf16.mxu0 %v3783
  %5750 = vmatpush1.bf16.msra.mxu0 %v3782
  %5751 = vmatprep.subr.bf16.mxu0 %v3787
  %5752 = vmatpush1.bf16.msra.mxu0 %v3786
  %5753 = vmatprep.subr.bf16.mxu0 %v3791
  %5754 = vmatpush1.bf16.msra.mxu0 %v3790
  %5755 = vmatprep.mubr.bf16.mxu0 %v907
  %5756 = vmatmul.mubr.bf16.gmra.mrb[0].mxu0 %v906
  %v5757 = vpop.f32.mrb[0].mxu0
  %v5758 = vadd.f32 %v5717, %v5757
  %v5759 = vpop.f32.mrb[0].mxu0
  %v5760 = vadd.f32 %v5719, %v5759
  %v5761 = vpop.f32.mrb[0].mxu0
  %v5762 = vpop.f32.mrb[0].mxu0
  %5763 = vdwg.mxu0
  %5764 = vmatprep.subr.bf16.mxu0 %v3795
  %5765 = vmatpush1.bf16.msra.mxu0 %v3794
  %5766 = vmatprep.subr.bf16.mxu0 %v3799
  %5767 = vmatpush1.bf16.msra.mxu0 %v3798
  %5768 = vmatprep.subr.bf16.mxu0 %v3803
  %5769 = vmatpush1.bf16.msra.mxu0 %v3802
  %5770 = vmatprep.subr.bf16.mxu0 %v3807
  %5771 = vmatpush1.bf16.msra.mxu0 %v3806
  %5772 = vmatprep.subr.bf16.mxu0 %v3811
  %5773 = vmatpush1.bf16.msra.mxu0 %v3810
  %5774 = vmatprep.subr.bf16.mxu0 %v3815
  %5775 = vmatpush1.bf16.msra.mxu0 %v3814
  %5776 = vmatprep.subr.bf16.mxu0 %v3819
  %5777 = vmatpush1.bf16.msra.mxu0 %v3818
  %5778 = vmatprep.subr.bf16.mxu0 %v3823
  %5779 = vmatpush1.bf16.msra.mxu0 %v3822
  %5780 = vmatprep.subr.bf16.mxu0 %v3827
  %5781 = vmatpush1.bf16.msra.mxu0 %v3826
  %5782 = vmatprep.subr.bf16.mxu0 %v3831
  %5783 = vmatpush1.bf16.msra.mxu0 %v3830
  %5784 = vmatprep.subr.bf16.mxu0 %v3835
  %5785 = vmatpush1.bf16.msra.mxu0 %v3834
  %5786 = vmatprep.subr.bf16.mxu0 %v3839
  %5787 = vmatpush1.bf16.msra.mxu0 %v3838
  %5788 = vmatprep.subr.bf16.mxu0 %v3843
  %5789 = vmatpush1.bf16.msra.mxu0 %v3842
  %5790 = vmatprep.subr.bf16.mxu0 %v3847
  %5791 = vmatpush1.bf16.msra.mxu0 %v3846
  %5792 = vmatprep.subr.bf16.mxu0 %v3851
  %5793 = vmatpush1.bf16.msra.mxu0 %v3850
  %5794 = vmatprep.subr.bf16.mxu0 %v3855
  %5795 = vmatpush1.bf16.msra.mxu0 %v3854
  %5796 = vmatprep.mubr.bf16.mxu0 %v909
  %5797 = vmatmul.mubr.bf16.gmra.mrb[0].mxu0 %v908
  %v5798 = vpop.f32.mrb[0].mxu0
  %v5799 = vadd.f32 %v5758, %v5798
  %v5800 = vpop.f32.mrb[0].mxu0
  %v5801 = vadd.f32 %v5760, %v5800
  %v5802 = vpop.f32.mrb[0].mxu0
  %v5803 = vpop.f32.mrb[0].mxu0
  %5804 = vdwg.mxu0
  %5805 = vmatprep.subr.bf16.mxu0 %v3859
  %5806 = vmatpush1.bf16.msra.mxu0 %v3858
  %5807 = vmatprep.subr.bf16.mxu0 %v3863
  %5808 = vmatpush1.bf16.msra.mxu0 %v3862
  %5809 = vmatprep.subr.bf16.mxu0 %v3867
  %5810 = vmatpush1.bf16.msra.mxu0 %v3866
  %5811 = vmatprep.subr.bf16.mxu0 %v3871
  %5812 = vmatpush1.bf16.msra.mxu0 %v3870
  %5813 = vmatprep.subr.bf16.mxu0 %v3875
  %5814 = vmatpush1.bf16.msra.mxu0 %v3874
  %5815 = vmatprep.subr.bf16.mxu0 %v3879
  %5816 = vmatpush1.bf16.msra.mxu0 %v3878
  %5817 = vmatprep.subr.bf16.mxu0 %v3883
  %5818 = vmatpush1.bf16.msra.mxu0 %v3882
  %5819 = vmatprep.subr.bf16.mxu0 %v3887
  %5820 = vmatpush1.bf16.msra.mxu0 %v3886
  %5821 = vmatprep.subr.bf16.mxu0 %v3891
  %5822 = vmatpush1.bf16.msra.mxu0 %v3890
  %5823 = vmatprep.subr.bf16.mxu0 %v3895
  %5824 = vmatpush1.bf16.msra.mxu0 %v3894
  %5825 = vmatprep.subr.bf16.mxu0 %v3899
  %5826 = vmatpush1.bf16.msra.mxu0 %v3898
  %5827 = vmatprep.subr.bf16.mxu0 %v3903
  %5828 = vmatpush1.bf16.msra.mxu0 %v3902
  %5829 = vmatprep.subr.bf16.mxu0 %v3907
  %5830 = vmatpush1.bf16.msra.mxu0 %v3906
  %5831 = vmatprep.subr.bf16.mxu0 %v3911
  %5832 = vmatpush1.bf16.msra.mxu0 %v3910
  %5833 = vmatprep.subr.bf16.mxu0 %v3915
  %5834 = vmatpush1.bf16.msra.mxu0 %v3914
  %5835 = vmatprep.subr.bf16.mxu0 %v3919
  %5836 = vmatpush1.bf16.msra.mxu0 %v3918
  %5837 = vmatprep.mubr.bf16.mxu0 %v911
  %5838 = vmatmul.mubr.bf16.gmra.mrb[0].mxu0 %v910
  %v5839 = vpop.f32.mrb[0].mxu0
  %v5840 = vadd.f32 %v5799, %v5839
  %v5841 = vpop.f32.mrb[0].mxu0
  %v5842 = vadd.f32 %v5801, %v5841
  %v5843 = vpop.f32.mrb[0].mxu0
  %v5844 = vpop.f32.mrb[0].mxu0
  %5845 = vdwg.mxu0
  %5846 = vmatprep.subr.bf16.mxu0 %v3923
  %5847 = vmatpush1.bf16.msra.mxu0 %v3922
  %5848 = vmatprep.subr.bf16.mxu0 %v3927
  %5849 = vmatpush1.bf16.msra.mxu0 %v3926
  %5850 = vmatprep.subr.bf16.mxu0 %v3931
  %5851 = vmatpush1.bf16.msra.mxu0 %v3930
  %5852 = vmatprep.subr.bf16.mxu0 %v3935
  %5853 = vmatpush1.bf16.msra.mxu0 %v3934
  %5854 = vmatprep.subr.bf16.mxu0 %v3939
  %5855 = vmatpush1.bf16.msra.mxu0 %v3938
  %5856 = vmatprep.subr.bf16.mxu0 %v3943
  %5857 = vmatpush1.bf16.msra.mxu0 %v3942
  %5858 = vmatprep.subr.bf16.mxu0 %v3947
  %5859 = vmatpush1.bf16.msra.mxu0 %v3946
  %5860 = vmatprep.subr.bf16.mxu0 %v3951
  %5861 = vmatpush1.bf16.msra.mxu0 %v3950
  %5862 = vmatprep.subr.bf16.mxu0 %v3955
  %5863 = vmatpush1.bf16.msra.mxu0 %v3954
  %5864 = vmatprep.subr.bf16.mxu0 %v3959
  %5865 = vmatpush1.bf16.msra.mxu0 %v3958
  %5866 = vmatprep.subr.bf16.mxu0 %v3963
  %5867 = vmatpush1.bf16.msra.mxu0 %v3962
  %5868 = vmatprep.subr.bf16.mxu0 %v3967
  %5869 = vmatpush1.bf16.msra.mxu0 %v3966
  %5870 = vmatprep.subr.bf16.mxu0 %v3971
  %5871 = vmatpush1.bf16.msra.mxu0 %v3970
  %5872 = vmatprep.subr.bf16.mxu0 %v3975
  %5873 = vmatpush1.bf16.msra.mxu0 %v3974
  %5874 = vmatprep.subr.bf16.mxu0 %v3979
  %5875 = vmatpush1.bf16.msra.mxu0 %v3978
  %5876 = vmatprep.subr.bf16.mxu0 %v3983
  %5877 = vmatpush1.bf16.msra.mxu0 %v3982
  %5878 = vmatprep.mubr.bf16.mxu0 %v913
  %5879 = vmatmul.mubr.bf16.gmra.mrb[0].mxu0 %v912
  %v5880 = vpop.f32.mrb[0].mxu0
  %v5881 = vadd.f32 %v5840, %v5880
  %v5882 = vpop.f32.mrb[0].mxu0
  %v5883 = vadd.f32 %v5842, %v5882
  %v5884 = vpop.f32.mrb[0].mxu0
  %v5885 = vpop.f32.mrb[0].mxu0
  %5886 = vdwg.mxu0
  %5887 = vmatprep.subr.bf16.mxu0 %v3987
  %5888 = vmatpush1.bf16.msra.mxu0 %v3986
  %5889 = vmatprep.subr.bf16.mxu0 %v3991
  %5890 = vmatpush1.bf16.msra.mxu0 %v3990
  %5891 = vmatprep.subr.bf16.mxu0 %v3995
  %5892 = vmatpush1.bf16.msra.mxu0 %v3994
  %5893 = vmatprep.subr.bf16.mxu0 %v3999
  %5894 = vmatpush1.bf16.msra.mxu0 %v3998
  %5895 = vmatprep.subr.bf16.mxu0 %v4003
  %5896 = vmatpush1.bf16.msra.mxu0 %v4002
  %5897 = vmatprep.subr.bf16.mxu0 %v4007
  %5898 = vmatpush1.bf16.msra.mxu0 %v4006
  %5899 = vmatprep.subr.bf16.mxu0 %v4011
  %5900 = vmatpush1.bf16.msra.mxu0 %v4010
  %5901 = vmatprep.subr.bf16.mxu0 %v4015
  %5902 = vmatpush1.bf16.msra.mxu0 %v4014
  %5903 = vmatprep.subr.bf16.mxu0 %v4019
  %5904 = vmatpush1.bf16.msra.mxu0 %v4018
  %5905 = vmatprep.subr.bf16.mxu0 %v4023
  %5906 = vmatpush1.bf16.msra.mxu0 %v4022
  %5907 = vmatprep.subr.bf16.mxu0 %v4027
  %5908 = vmatpush1.bf16.msra.mxu0 %v4026
  %5909 = vmatprep.subr.bf16.mxu0 %v4031
  %5910 = vmatpush1.bf16.msra.mxu0 %v4030
  %5911 = vmatprep.subr.bf16.mxu0 %v4035
  %5912 = vmatpush1.bf16.msra.mxu0 %v4034
  %5913 = vmatprep.subr.bf16.mxu0 %v4039
  %5914 = vmatpush1.bf16.msra.mxu0 %v4038
  %5915 = vmatprep.subr.bf16.mxu0 %v4043
  %5916 = vmatpush1.bf16.msra.mxu0 %v4042
  %5917 = vmatprep.subr.bf16.mxu0 %v4047
  %5918 = vmatpush1.bf16.msra.mxu0 %v4046
  %5919 = vmatprep.mubr.bf16.mxu0 %v915
  %5920 = vmatmul.mubr.bf16.gmra.mrb[0].mxu0 %v914
  %v5921 = vpop.f32.mrb[0].mxu0
  %v5922 = vadd.f32 %v5881, %v5921
  %v5923 = vpop.f32.mrb[0].mxu0
  %v5924 = vadd.f32 %v5883, %v5923
  %v5925 = vpop.f32.mrb[0].mxu0
  %v5926 = vpop.f32.mrb[0].mxu0
  %5927 = vdwg.mxu0
  %5928 = vmatprep.subr.bf16.mxu0 %v4051
  %5929 = vmatpush1.bf16.msra.mxu0 %v4050
  %5930 = vmatprep.subr.bf16.mxu0 %v4055
  %5931 = vmatpush1.bf16.msra.mxu0 %v4054
  %5932 = vmatprep.subr.bf16.mxu0 %v4059
  %5933 = vmatpush1.bf16.msra.mxu0 %v4058
  %5934 = vmatprep.subr.bf16.mxu0 %v4063
  %5935 = vmatpush1.bf16.msra.mxu0 %v4062
  %5936 = vmatprep.subr.bf16.mxu0 %v4067
  %5937 = vmatpush1.bf16.msra.mxu0 %v4066
  %5938 = vmatprep.subr.bf16.mxu0 %v4071
  %5939 = vmatpush1.bf16.msra.mxu0 %v4070
  %5940 = vmatprep.subr.bf16.mxu0 %v4075
  %5941 = vmatpush1.bf16.msra.mxu0 %v4074
  %5942 = vmatprep.subr.bf16.mxu0 %v4079
  %5943 = vmatpush1.bf16.msra.mxu0 %v4078
  %5944 = vmatprep.subr.bf16.mxu0 %v4083
  %5945 = vmatpush1.bf16.msra.mxu0 %v4082
  %5946 = vmatprep.subr.bf16.mxu0 %v4087
  %5947 = vmatpush1.bf16.msra.mxu0 %v4086
  %5948 = vmatprep.subr.bf16.mxu0 %v4091
  %5949 = vmatpush1.bf16.msra.mxu0 %v4090
  %5950 = vmatprep.subr.bf16.mxu0 %v4095
  %5951 = vmatpush1.bf16.msra.mxu0 %v4094
  %5952 = vmatprep.subr.bf16.mxu0 %v4099
  %5953 = vmatpush1.bf16.msra.mxu0 %v4098
  %5954 = vmatprep.subr.bf16.mxu0 %v4103
  %5955 = vmatpush1.bf16.msra.mxu0 %v4102
  %5956 = vmatprep.subr.bf16.mxu0 %v4107
  %5957 = vmatpush1.bf16.msra.mxu0 %v4106
  %5958 = vmatprep.subr.bf16.mxu0 %v4111
  %5959 = vmatpush1.bf16.msra.mxu0 %v4110
  %5960 = vmatprep.mubr.bf16.mxu0 %v917
  %5961 = vmatmul.mubr.bf16.gmra.mrb[0].mxu0 %v916
  %v5962 = vpop.f32.mrb[0].mxu0
  %v5963 = vadd.f32 %v5922, %v5962
  %v5964 = vpop.f32.mrb[0].mxu0
  %v5965 = vadd.f32 %v5924, %v5964
  %v5966 = vpop.f32.mrb[0].mxu0
  %v5967 = vpop.f32.mrb[0].mxu0
  %5968 = vdwg.mxu0
  %5969 = vmatprep.subr.bf16.mxu0 %v4115
  %5970 = vmatpush1.bf16.msra.mxu0 %v4114
  %5971 = vmatprep.subr.bf16.mxu0 %v4119
  %5972 = vmatpush1.bf16.msra.mxu0 %v4118
  %5973 = vmatprep.subr.bf16.mxu0 %v4123
  %5974 = vmatpush1.bf16.msra.mxu0 %v4122
  %5975 = vmatprep.subr.bf16.mxu0 %v4127
  %5976 = vmatpush1.bf16.msra.mxu0 %v4126
  %5977 = vmatprep.subr.bf16.mxu0 %v4131
  %5978 = vmatpush1.bf16.msra.mxu0 %v4130
  %5979 = vmatprep.subr.bf16.mxu0 %v4135
  %5980 = vmatpush1.bf16.msra.mxu0 %v4134
  %5981 = vmatprep.subr.bf16.mxu0 %v4139
  %5982 = vmatpush1.bf16.msra.mxu0 %v4138
  %5983 = vmatprep.subr.bf16.mxu0 %v4143
  %5984 = vmatpush1.bf16.msra.mxu0 %v4142
  %5985 = vmatprep.subr.bf16.mxu0 0
  %5986 = vmatpush1.bf16.msra.mxu0 0
  %5987 = vmatprep.subr.bf16.mxu0 0
  %5988 = vmatpush1.bf16.msra.mxu0 0
  %5989 = vmatprep.subr.bf16.mxu0 0
  %5990 = vmatpush1.bf16.msra.mxu0 0
  %5991 = vmatprep.subr.bf16.mxu0 0
  %5992 = vmatpush1.bf16.msra.mxu0 0
  %5993 = vmatprep.subr.bf16.mxu0 0
  %5994 = vmatpush1.bf16.msra.mxu0 0
  %5995 = vmatprep.subr.bf16.mxu0 0
  %5996 = vmatpush1.bf16.msra.mxu0 0
  %5997 = vmatprep.subr.bf16.mxu0 0
  %5998 = vmatpush1.bf16.msra.mxu0 0
  %5999 = vmatprep.subr.bf16.mxu0 0
  %6000 = vmatpush1.bf16.msra.mxu0 0
  %6001 = vmatprep.mubr.bf16.mxu0 0
  %6002 = vmatmul.mubr.bf16.gmra.mrb[0].mxu0 %v918
  %v6003 = vpop.f32.mrb[0].mxu0
  %v6004 = vadd.f32 %v5963, %v6003
  %v6005 = vpop.f32.mrb[0].mxu0
  %v6006 = vadd.f32 %v5965, %v6005
  %v6007 = vpop.f32.mrb[0].mxu0
  %v6008 = vpop.f32.mrb[0].mxu0
  %6009 = vdwg.mxu0
  %v6010 = vmax.f32 %v5471, 0.0
  %v6011 = vmax.f32 %v5473, 0.0
  %v6012 = vmax.f32 %v6004, 0.0
  %v6013 = vmax.f32 %v6006, 0.0
  %v6014 = vpack.c.bf16 %v6010, %v6010
  %v6015 = vpack.c.bf16 %v6011, %v6011
  %v6016 = vpack.c.bf16 %v6012, %v6012
  %v6017 = vpack.c.bf16 %v6013, %v6013
  %v6018 = vld [vmem:[%s3] sm:$0xf]
  %v6019 = vld [vmem:[%s3 + $0x4] sm:$0xf]
  %v6020 = vld [vmem:[%s3 + $0x8] sm:$0xf]
  %v6021 = vld [vmem:[%s3 + $0xc] sm:$0xf]
  %v6022 = vld [vmem:[%s3 + $0x10] sm:$0xf]
  %v6023 = vld [vmem:[%s3 + $0x14] sm:$0xf]
  %v6024 = vld [vmem:[%s3 + $0x18] sm:$0xf]
  %v6025 = vld [vmem:[%s3 + $0x1c] sm:$0xf]
  %v6026 = vld [vmem:[%s3 + $0x20] sm:$0xf]
  %v6027 = vld [vmem:[%s3 + $0x24] sm:$0xf]
  %v6028 = vld [vmem:[%s3 + $0x28] sm:$0xf]
  %v6029 = vld [vmem:[%s3 + $0x2c] sm:$0xf]
  %v6030 = vld [vmem:[%s3 + $0x30] sm:$0xf]
  %v6031 = vld [vmem:[%s3 + $0x34] sm:$0xf]
  %v6032 = vld [vmem:[%s3 + $0x38] sm:$0xf]
  %v6033 = vld [vmem:[%s3 + $0x3c] sm:$0xf]
  %v6034 = vld [vmem:[%s3 + $0x40] sm:$0xf]
  %v6035 = vld [vmem:[%s3 + $0x44] sm:$0xf]
  %v6036 = vld [vmem:[%s3 + $0x48] sm:$0xf]
  %v6037 = vld [vmem:[%s3 + $0x4c] sm:$0xf]
  %v6038 = vld [vmem:[%s3 + $0x50] sm:$0xf]
  %v6039 = vld [vmem:[%s3 + $0x54] sm:$0xf]
  %v6040 = vld [vmem:[%s3 + $0x58] sm:$0xf]
  %v6041 = vld [vmem:[%s3 + $0x5c] sm:$0xf]
  %v6042 = vld [vmem:[%s3 + $0x60] sm:$0xf]
  %v6043 = vld [vmem:[%s3 + $0x64] sm:$0xf]
  %v6044 = vld [vmem:[%s3 + $0x68] sm:$0xf]
  %v6045 = vld [vmem:[%s3 + $0x6c] sm:$0xf]
  %v6046 = vld [vmem:[%s3 + $0x70] sm:$0xf]
  %v6047 = vld [vmem:[%s3 + $0x74] sm:$0xf]
  %v6048 = vld [vmem:[%s3 + $0x78] sm:$0xf]
  %v6049 = vld [vmem:[%s3 + $0x7c] sm:$0xf]
  %v6050 = vld [vmem:[%s3 + $0x80] sm:$0xf]
  %v6051 = vld [vmem:[%s3 + $0x84] sm:$0xf]
  %v6052 = vld [vmem:[%s3 + $0x88] sm:$0xf]
  %v6053 = vld [vmem:[%s3 + $0x8c] sm:$0xf]
  %v6054 = vld [vmem:[%s3 + $0x90] sm:$0xf]
  %v6055 = vld [vmem:[%s3 + $0x94] sm:$0xf]
  %v6056 = vld [vmem:[%s3 + $0x98] sm:$0xf]
  %v6057 = vld [vmem:[%s3 + $0x9c] sm:$0xf]
  %v6058 = vld [vmem:[%s3 + $0xa0] sm:$0xf]
  %v6059 = vld [vmem:[%s3 + $0xa4] sm:$0xf]
  %v6060 = vld [vmem:[%s3 + $0xa8] sm:$0xf]
  %v6061 = vld [vmem:[%s3 + $0xac] sm:$0xf]
  %v6062 = vld [vmem:[%s3 + $0xb0] sm:$0xf]
  %v6063 = vld [vmem:[%s3 + $0xb4] sm:$0xf]
  %v6064 = vld [vmem:[%s3 + $0xb8] sm:$0xf]
  %v6065 = vld [vmem:[%s3 + $0xbc] sm:$0xf]
  %v6066 = vld [vmem:[%s3 + $0xc0] sm:$0xf]
  %v6067 = vld [vmem:[%s3 + $0xc4] sm:$0xf]
  %v6068 = vld [vmem:[%s3 + $0xc8] sm:$0xf]
  %v6069 = vld [vmem:[%s3 + $0xcc] sm:$0xf]
  %v6070 = vld [vmem:[%s3 + $0xd0] sm:$0xf]
  %v6071 = vld [vmem:[%s3 + $0xd4] sm:$0xf]
  %v6072 = vld [vmem:[%s3 + $0xd8] sm:$0xf]
  %v6073 = vld [vmem:[%s3 + $0xdc] sm:$0xf]
  %v6074 = vld [vmem:[%s3 + $0xe0] sm:$0xf]
  %v6075 = vld [vmem:[%s3 + $0xe4] sm:$0xf]
  %v6076 = vld [vmem:[%s3 + $0xe8] sm:$0xf]
  %v6077 = vld [vmem:[%s3 + $0xec] sm:$0xf]
  %v6078 = vld [vmem:[%s3 + $0xf0] sm:$0xf]
  %v6079 = vld [vmem:[%s3 + $0xf4] sm:$0xf]
  %v6080 = vld [vmem:[%s3 + $0xf8] sm:$0xf]
  %v6081 = vld [vmem:[%s3 + $0xfc] sm:$0xf]
  %v6082 = vld [vmem:[%s4] sm:$0x1]
  %v6084 = vlaneseq
  %v6085 = vshrl.u32 %v6084, 7
  %v6086 = vsub.s32 0, %v6085
  %v6087 = vrot.slane %v6082, %v6086
  %v6153 = vunpack.c.l.b16 %v6018
  %v6154 = vunpack.c.l.b16 %v6019
  %v6155 = vunpack.c.l.b16 %v6020
  %v6156 = vunpack.c.l.b16 %v6021
  %v6157 = vunpack.c.l.b16 %v6022
  %v6158 = vunpack.c.l.b16 %v6023
  %v6159 = vunpack.c.l.b16 %v6024
  %v6160 = vunpack.c.l.b16 %v6025
  %v6161 = vunpack.c.l.b16 %v6026
  %v6162 = vunpack.c.l.b16 %v6027
  %v6163 = vunpack.c.l.b16 %v6028
  %v6164 = vunpack.c.l.b16 %v6029
  %v6165 = vunpack.c.l.b16 %v6030
  %v6166 = vunpack.c.l.b16 %v6031
  %v6167 = vunpack.c.l.b16 %v6032
  %v6168 = vunpack.c.l.b16 %v6033
  %v6169 = vunpack.c.l.b16 %v6034
  %v6170 = vunpack.c.l.b16 %v6035
  %v6171 = vunpack.c.l.b16 %v6036
  %v6172 = vunpack.c.l.b16 %v6037
  %v6173 = vunpack.c.l.b16 %v6038
  %v6174 = vunpack.c.l.b16 %v6039
  %v6175 = vunpack.c.l.b16 %v6040
  %v6176 = vunpack.c.l.b16 %v6041
  %v6177 = vunpack.c.l.b16 %v6042
  %v6178 = vunpack.c.l.b16 %v6043
  %v6179 = vunpack.c.l.b16 %v6044
  %v6180 = vunpack.c.l.b16 %v6045
  %v6181 = vunpack.c.l.b16 %v6046
  %v6182 = vunpack.c.l.b16 %v6047
  %v6183 = vunpack.c.l.b16 %v6048
  %v6184 = vunpack.c.l.b16 %v6049
  %v6185 = vunpack.c.l.b16 %v6050
  %v6186 = vunpack.c.l.b16 %v6051
  %v6187 = vunpack.c.l.b16 %v6052
  %v6188 = vunpack.c.l.b16 %v6053
  %v6189 = vunpack.c.l.b16 %v6054
  %v6190 = vunpack.c.l.b16 %v6055
  %v6191 = vunpack.c.l.b16 %v6056
  %v6192 = vunpack.c.l.b16 %v6057
  %v6193 = vunpack.c.l.b16 %v6058
  %v6194 = vunpack.c.l.b16 %v6059
  %v6195 = vunpack.c.l.b16 %v6060
  %v6196 = vunpack.c.l.b16 %v6061
  %v6197 = vunpack.c.l.b16 %v6062
  %v6198 = vunpack.c.l.b16 %v6063
  %v6199 = vunpack.c.l.b16 %v6064
  %v6200 = vunpack.c.l.b16 %v6065
  %v6201 = vunpack.c.l.b16 %v6066
  %v6202 = vunpack.c.l.b16 %v6067
  %v6203 = vunpack.c.l.b16 %v6068
  %v6204 = vunpack.c.l.b16 %v6069
  %v6205 = vunpack.c.l.b16 %v6070
  %v6206 = vunpack.c.l.b16 %v6071
  %v6207 = vunpack.c.l.b16 %v6072
  %v6208 = vunpack.c.l.b16 %v6073
  %v6209 = vunpack.c.l.b16 %v6074
  %v6210 = vunpack.c.l.b16 %v6075
  %v6211 = vunpack.c.l.b16 %v6076
  %v6212 = vunpack.c.l.b16 %v6077
  %v6213 = vunpack.c.l.b16 %v6078
  %v6214 = vunpack.c.l.b16 %v6079
  %v6215 = vunpack.c.l.b16 %v6080
  %v6216 = vunpack.c.l.b16 %v6081
  %v6217 = vpack.c.b16 %v6154, %v6153
  %v6218 = vpack.c.b16 %v6156, %v6155
  %v6219 = vpack.c.b16 %v6158, %v6157
  %v6220 = vpack.c.b16 %v6160, %v6159
  %v6221 = vpack.c.b16 %v6162, %v6161
  %v6222 = vpack.c.b16 %v6164, %v6163
  %v6223 = vpack.c.b16 %v6166, %v6165
  %v6224 = vpack.c.b16 %v6168, %v6167
  %v6225 = vpack.c.b16 %v6170, %v6169
  %v6226 = vpack.c.b16 %v6172, %v6171
  %v6227 = vpack.c.b16 %v6174, %v6173
  %v6228 = vpack.c.b16 %v6176, %v6175
  %v6229 = vpack.c.b16 %v6178, %v6177
  %v6230 = vpack.c.b16 %v6180, %v6179
  %v6231 = vpack.c.b16 %v6182, %v6181
  %v6232 = vpack.c.b16 %v6184, %v6183
  %v6233 = vpack.c.b16 %v6186, %v6185
  %v6234 = vpack.c.b16 %v6188, %v6187
  %v6235 = vpack.c.b16 %v6190, %v6189
  %v6236 = vpack.c.b16 %v6192, %v6191
  %v6237 = vpack.c.b16 %v6194, %v6193
  %v6238 = vpack.c.b16 %v6196, %v6195
  %v6239 = vpack.c.b16 %v6198, %v6197
  %v6240 = vpack.c.b16 %v6200, %v6199
  %v6241 = vpack.c.b16 %v6202, %v6201
  %v6242 = vpack.c.b16 %v6204, %v6203
  %v6243 = vpack.c.b16 %v6206, %v6205
  %v6244 = vpack.c.b16 %v6208, %v6207
  %v6245 = vpack.c.b16 %v6210, %v6209
  %v6246 = vpack.c.b16 %v6212, %v6211
  %v6247 = vpack.c.b16 %v6214, %v6213
  %v6248 = vpack.c.b16 %v6216, %v6215
  %6281 = vmatprep.subr.bf16.mxu0 0
  %6282 = vmatpush1.bf16.msra.mxu0 %v6217
  %6283 = vmatprep.subr.bf16.mxu0 0
  %6284 = vmatpush1.bf16.msra.mxu0 %v6218
  %6285 = vmatprep.subr.bf16.mxu0 0
  %6286 = vmatpush1.bf16.msra.mxu0 %v6219
  %6287 = vmatprep.subr.bf16.mxu0 0
  %6288 = vmatpush1.bf16.msra.mxu0 %v6220
  %6289 = vmatprep.subr.bf16.mxu0 0
  %6290 = vmatpush1.bf16.msra.mxu0 %v6221
  %6291 = vmatprep.subr.bf16.mxu0 0
  %6292 = vmatpush1.bf16.msra.mxu0 %v6222
  %6293 = vmatprep.subr.bf16.mxu0 0
  %6294 = vmatpush1.bf16.msra.mxu0 %v6223
  %6295 = vmatprep.subr.bf16.mxu0 0
  %6296 = vmatpush1.bf16.msra.mxu0 %v6224
  %6297 = vmatprep.subr.bf16.mxu0 0
  %6298 = vmatpush1.bf16.msra.mxu0 %v6225
  %6299 = vmatprep.subr.bf16.mxu0 0
  %6300 = vmatpush1.bf16.msra.mxu0 %v6226
  %6301 = vmatprep.subr.bf16.mxu0 0
  %6302 = vmatpush1.bf16.msra.mxu0 %v6227
  %6303 = vmatprep.subr.bf16.mxu0 0
  %6304 = vmatpush1.bf16.msra.mxu0 %v6228
  %6305 = vmatprep.subr.bf16.mxu0 0
  %6306 = vmatpush1.bf16.msra.mxu0 %v6229
  %6307 = vmatprep.subr.bf16.mxu0 0
  %6308 = vmatpush1.bf16.msra.mxu0 %v6230
  %6309 = vmatprep.subr.bf16.mxu0 0
  %6310 = vmatpush1.bf16.msra.mxu0 %v6231
  %6311 = vmatprep.subr.bf16.mxu0 0
  %6312 = vmatpush1.bf16.msra.mxu0 %v6232
  %6313 = vmatprep.mubr.bf16.mxu0 %v6015
  %6314 = vmatmul.mubr.bf16.gmra.mrb[0].mxu0 %v6014
  %v6315 = vpop.f32.mrb[0].mxu0
  %v6316 = vadd.f32 %v6087, %v6315
  %v6317 = vpop.f32.mrb[0].mxu0
  %v6318 = vpop.f32.mrb[0].mxu0
  %v6319 = vpop.f32.mrb[0].mxu0
  %6320 = vdwg.mxu0
  %6321 = vmatprep.subr.bf16.mxu0 0
  %6322 = vmatpush1.bf16.msra.mxu0 %v6233
  %6323 = vmatprep.subr.bf16.mxu0 0
  %6324 = vmatpush1.bf16.msra.mxu0 %v6234
  %6325 = vmatprep.subr.bf16.mxu0 0
  %6326 = vmatpush1.bf16.msra.mxu0 %v6235
  %6327 = vmatprep.subr.bf16.mxu0 0
  %6328 = vmatpush1.bf16.msra.mxu0 %v6236
  %6329 = vmatprep.subr.bf16.mxu0 0
  %6330 = vmatpush1.bf16.msra.mxu0 %v6237
  %6331 = vmatprep.subr.bf16.mxu0 0
  %6332 = vmatpush1.bf16.msra.mxu0 %v6238
  %6333 = vmatprep.subr.bf16.mxu0 0
  %6334 = vmatpush1.bf16.msra.mxu0 %v6239
  %6335 = vmatprep.subr.bf16.mxu0 0
  %6336 = vmatpush1.bf16.msra.mxu0 %v6240
  %6337 = vmatprep.subr.bf16.mxu0 0
  %6338 = vmatpush1.bf16.msra.mxu0 %v6241
  %6339 = vmatprep.subr.bf16.mxu0 0
  %6340 = vmatpush1.bf16.msra.mxu0 %v6242
  %6341 = vmatprep.subr.bf16.mxu0 0
  %6342 = vmatpush1.bf16.msra.mxu0 %v6243
  %6343 = vmatprep.subr.bf16.mxu0 0
  %6344 = vmatpush1.bf16.msra.mxu0 %v6244
  %6345 = vmatprep.subr.bf16.mxu0 0
  %6346 = vmatpush1.bf16.msra.mxu0 %v6245
  %6347 = vmatprep.subr.bf16.mxu0 0
  %6348 = vmatpush1.bf16.msra.mxu0 %v6246
  %6349 = vmatprep.subr.bf16.mxu0 0
  %6350 = vmatpush1.bf16.msra.mxu0 %v6247
  %6351 = vmatprep.subr.bf16.mxu0 0
  %6352 = vmatpush1.bf16.msra.mxu0 %v6248
  %6353 = vmatprep.mubr.bf16.mxu0 %v6017
  %6354 = vmatmul.mubr.bf16.gmra.mrb[0].mxu0 %v6016
  %v6355 = vpop.f32.mrb[0].mxu0
  %v6356 = vadd.f32 %v6316, %v6355
  %v6357 = vpop.f32.mrb[0].mxu0
  %v6358 = vpop.f32.mrb[0].mxu0
  %v6359 = vpop.f32.mrb[0].mxu0
  %6360 = vdwg.mxu0
  %6361 = vst [vmem:[%s5] sm:$0xff] %v6356
  // Predicated region
  $region22: #{dqn_forward.7} parent=0 // pred_check
    _
  $region23: #{dqn_forward.7} parent=0 // pred_check_branch
    %6363 = sbr.rel (0) target = $region25
  $region24: #{dqn_forward.7} parent=0 // pred_region
    _
  $region25: #{dqn_forward.7} parent=0 // pred_fallthru
    _
  // Predicated region
  $region26: #{dqn_forward.7} parent=0 // pred_check
    _
  $region27: #{dqn_forward.7} parent=0 // pred_check_branch
    %6365 = sbr.rel (0) target = $region29
  $region28: #{dqn_forward.7} parent=0 // pred_region
    _
  $region29: #{dqn_forward.7} parent=0 // pred_fallthru
    _

</llo_original>
